<compile_context>
chip_gen: v6e
topology: v6e:2x2x1
jax: 0.10.0
libtpu: 0.0.40
codegen_flags: <defaults>
</compile_context>

<pallas_src>
import functools
import math

import jax
import jax.numpy as jnp
from jax import lax
from jax.experimental import pallas as pl
from jax.experimental.pallas import tpu as pltpu

BN_EPS = 1e-5


# ----------------------------- small helpers --------------------------------

def _round_up(x, m):
    return (x + m - 1) // m * m


def _vmem_limit_bytes():
    """Generation-aware scoped-VMEM budget (leave headroom for internal scratch)."""
    try:
        cap = int(pltpu.get_tpu_info().vmem_capacity_bytes)
    except Exception:
        cap = 0
    if cap <= 0:
        cap = 64 * 1024 * 1024            # conservative fallback (v7x-sized VMEM)
    # ~96 MiB on 128-MiB chips (v5e/v6e), ~48 MiB on 64-MiB chips (v7x).
    return int(min(cap - 16 * 1024 * 1024, int(0.75 * cap)))


VMEM_LIMIT = _vmem_limit_bytes()


def _pad_and_tile(dim, unit, max_tile):
    """Pad `dim` to a multiple of `unit` and pick a tile that divides it."""
    p = _round_up(dim, unit)
    t = min(max_tile, p)
    p = _round_up(dim, t)
    return p, t


def _row_softmax(z):
    z = z - jnp.max(z, axis=-1, keepdims=True)
    e = jnp.exp(z)
    return e / jnp.sum(e, axis=-1, keepdims=True)      # exact divide (final output)


# ----------------------------- fused matmul ----------------------------------

def _matmul_kernel1(act, x_ref, w_ref, b_ref, o_ref, acc_ref):
    """Tiled out = act(x @ w + b).  Grid (M/tm, N/tn, K/tk); K is the reduction."""
    @pl.when(pl.program_id(2) == 0)
    def _():
        acc_ref[...] = jnp.zeros_like(acc_ref)

    acc_ref[...] += jnp.dot(x_ref[...], w_ref[...],
                            preferred_element_type=jnp.float32)

    @pl.when(pl.program_id(2) == pl.num_programs(2) - 1)
    def _():
        o_ref[...] = act(acc_ref[...] + b_ref[...]).astype(o_ref.dtype)


def _matmul_kernel2(act, x1_ref, x2_ref, w_ref, b_ref, o_ref, acc_ref):
    """Tiled out = act((x1 + x2) @ w + b) -- fuses the fwd+bwd hidden sum."""
    @pl.when(pl.program_id(2) == 0)
    def _():
        acc_ref[...] = jnp.zeros_like(acc_ref)

    acc_ref[...] += jnp.dot(x1_ref[...] + x2_ref[...], w_ref[...],
                            preferred_element_type=jnp.float32)

    @pl.when(pl.program_id(2) == pl.num_programs(2) - 1)
    def _():
        o_ref[...] = act(acc_ref[...] + b_ref[...]).astype(o_ref.dtype)


def fused_matmul(x, w, shift=None, x2=None, act=None, shift_pad_value=0.0,
                 out_dtype=jnp.bfloat16, act_needs_full_rows=False,
                 tm_max=512, tn_max=None, tk_max=1024):
    """out = act((x [+ x2]) @ w + shift); x:(M,K) w:(K,N) shift:(N,).

    MXU operands are bf16 (f32 accumulation in VMEM scratch).  Inputs/weights
    that are already bf16 and tile-aligned are passed through untouched.
    """
    M, K = x.shape
    Kw, N = w.shape
    assert K == Kw
    if act is None:
        act = lambda z: z
    if tn_max is None:
        tn_max = 1024 if VMEM_LIMIT >= 64 * 1024 * 1024 else 512

    Mp, tm = _pad_and_tile(M, 16, tm_max)
    Npad, tn = _pad_and_tile(N, 128, tn_max)
    Kp, tk = _pad_and_tile(K, 128, tk_max)
    if act_needs_full_rows and tn != Npad:
        # row-reducing activation (softmax) needs the whole row in one tile
        tn = Npad
        tm = min(tm, max(16, (8 * 1024 * 1024 // (4 * tn)) // 16 * 16))
        Mp = _round_up(M, tm)

    def prep_x(a):
        if a.dtype != jnp.bfloat16:
            a = a.astype(jnp.bfloat16)
        if a.shape != (Mp, Kp):
            a = jnp.pad(a, ((0, Mp - M), (0, Kp - K)))
        return a

    wb = w if w.dtype == jnp.bfloat16 else w.astype(jnp.bfloat16)
    if wb.shape != (Kp, Npad):
        wb = jnp.pad(wb, ((0, Kp - K), (0, Npad - N)))
    if shift is None:
        sb = jnp.zeros((1, Npad), jnp.float32)
    else:
        shift = shift.astype(jnp.float32).reshape(-1)
        sb = jnp.pad(shift, (0, Npad - shift.shape[0]),
                     constant_values=shift_pad_value).reshape(1, Npad)

    in_specs = [pl.BlockSpec((tm, tk), lambda i, j, k: (i, k))]
    operands = [prep_x(x)]
    if x2 is not None:
        in_specs.append(pl.BlockSpec((tm, tk), lambda i, j, k: (i, k)))
        operands.append(prep_x(x2))
        kernel = functools.partial(_matmul_kernel2, act)
    else:
        kernel = functools.partial(_matmul_kernel1, act)
    in_specs += [pl.BlockSpec((tk, tn), lambda i, j, k: (k, j)),
                 pl.BlockSpec((1, tn), lambda i, j, k: (0, j))]
    operands += [wb, sb]

    out = pl.pallas_call(
        kernel,
        out_shape=jax.ShapeDtypeStruct((Mp, Npad), out_dtype),
        grid=(Mp // tm, Npad // tn, Kp // tk),
        in_specs=in_specs,
        out_specs=pl.BlockSpec((tm, tn), lambda i, j, k: (i, j)),
        scratch_shapes=[pltpu.VMEM((tm, tn), jnp.float32)],
        compiler_params=pltpu.CompilerParams(
            dimension_semantics=("parallel", "parallel", "arbitrary"),
            vmem_limit_bytes=VMEM_LIMIT),
    )(*operands)
    if (Mp, Npad) != (M, N):
        out = out[:M, :N]
    return out


# ----------------------------- fused bidirectional LSTM ----------------------

def _bilstm_kernel(TB, Hp, T_real, unroll,
                   xf_ref, xb_ref, whh_hbm, of_ref, ob_ref,
                   whh_vmem, h_ref, c_ref, sem):
    """Both LSTM directions, TB time steps per sequential grid step.

    xf_ref: (TB, Npc, 4Hp) bf16 fwd gate projections, natural time order
    xb_ref: (TB, Npc, 4Hp) bf16 bwd gate projections, time-mirrored block
    whh_hbm: (2, Hp, 4Hp) bf16 recurrent weights in HBM (copied once per sweep)
    of/ob:  (TB, Npc, Hp) bf16 per-direction hidden outputs
    whh_vmem / h_ref / c_ref: resident VMEM scratch (persist across grid steps)
    """
    s = pl.program_id(1)
    nblk = pl.num_programs(1)

    @pl.when(s == 0)
    def _():
        # single-buffered, resident recurrent weights + zero state
        cp = pltpu.make_async_copy(whh_hbm, whh_vmem, sem)
        cp.start()
        cp.wait()
        h_ref[...] = jnp.zeros_like(h_ref)
        c_ref[...] = jnp.zeros_like(c_ref)

    def sigmoid(z):
        # tanh form: one EUP push per gate, no exp+divide on the serial chain
        return 0.5 * jnp.tanh(0.5 * z) + 0.5

    def one_dir(xg, h, c, whh):
        gates = xg.astype(jnp.float32) + jnp.dot(
            h.astype(jnp.bfloat16), whh, preferred_element_type=jnp.float32)
        i = sigmoid(gates[:, 0 * Hp:1 * Hp])      # PyTorch gate order: i, f, g, o
        f = sigmoid(gates[:, 1 * Hp:2 * Hp])
        g = jnp.tanh(gates[:, 2 * Hp:3 * Hp])
        o = sigmoid(gates[:, 3 * Hp:4 * Hp])
        c_new = f * c + i * g
        h_new = o * jnp.tanh(c_new)
        return h_new, c_new

    def step(tb, carry):
        hf, cf = one_dir(xf_ref[tb], h_ref[0], c_ref[0], whh_vmem[0])
        tb_r = TB - 1 - tb
        hb, cb = one_dir(xb_ref[tb_r], h_ref[1], c_ref[1], whh_vmem[1])
        # Keep the bwd state at zero while scanning padded time frames
        # (global time >= T_real) so the real reverse scan starts cleanly.
        t_b = (nblk - 1 - s) * TB + tb_r
        mask = (t_b < T_real).astype(jnp.float32)
        hb = hb * mask
        cb = cb * mask
        h_ref[0] = hf
        c_ref[0] = cf
        h_ref[1] = hb
        c_ref[1] = cb
        of_ref[tb] = hf.astype(of_ref.dtype)
        ob_ref[tb_r] = hb.astype(ob_ref.dtype)
        return carry

    lax.fori_loop(0, TB, step, 0, unroll=unroll)


def _bilstm_dims(T, N, Hp):
    """Batch padding / per-core split / time-block size from a VMEM budget."""
    ncores = 2 if N >= 24 else 1          # use the 2nd TensorCore only with enough batch
    Np = _round_up(N, 32) if ncores == 2 else _round_up(N, 8)
    Npc = Np // ncores

    budget = int(0.8 * VMEM_LIMIT)
    fixed = 2 * Hp * (4 * Hp) * 2         # resident W_hh (bf16, single copy)
    fixed += 2 * (2 * Npc * Hp * 4)       # h / c state scratch (f32)
    per_tb = 40 * Npc * Hp                # double-buffered fwd/bwd in+out blocks (bf16)
    TB = int(max(1, min((budget - fixed) // per_tb, 32, T)))
    Tp = _round_up(T, TB)
    return TB, Tp, ncores, Np, Npc


def bilstm(xp, whh, T, Hp, TB, ncores):
    """xp: (Tp, Np, 8*Hp) bf16 gate projections ([fwd gates | bwd gates] columns).
    whh: (2, Hp, 4*Hp) bf16.  Returns per-direction hidden states of/ob, each
    (Tp, Np, Hp) bf16, both aligned to original time order (end-padded)."""
    Tp, Np, _ = xp.shape
    Npc = Np // ncores
    nblk = Tp // TB
    unroll = min(TB, 8)                   # partial unroll: enough latency hiding,
                                          # bounded vreg pressure / compile time
    kernel = functools.partial(_bilstm_kernel, TB, Hp, T, unroll)
    of, ob = pl.pallas_call(
        kernel,
        out_shape=(jax.ShapeDtypeStruct((Tp, Np, Hp), jnp.bfloat16),
                   jax.ShapeDtypeStruct((Tp, Np, Hp), jnp.bfloat16)),
        grid=(ncores, nblk),
        in_specs=[
            # fwd gate columns (block 0 of the last axis), natural time order
            pl.BlockSpec((TB, Npc, 4 * Hp), lambda c, s: (s, c, 0)),
            # bwd gate columns (block 1), time-reversed block order
            pl.BlockSpec((TB, Npc, 4 * Hp),
                         lambda c, s, nblk=nblk: (nblk - 1 - s, c, 1)),
            # recurrent weights stay in HBM; copied once per core sweep
            pl.BlockSpec(memory_space=pl.ANY),
        ],
        out_specs=(
            pl.BlockSpec((TB, Npc, Hp), lambda c, s: (s, c, 0)),
            pl.BlockSpec((TB, Npc, Hp),
                         lambda c, s, nblk=nblk: (nblk - 1 - s, c, 0)),
        ),
        scratch_shapes=[pltpu.VMEM((2, Hp, 4 * Hp), jnp.bfloat16),   # resident W_hh
                        pltpu.VMEM((2, Npc, Hp), jnp.float32),       # h state
                        pltpu.VMEM((2, Npc, Hp), jnp.float32),       # c state
                        pltpu.SemaphoreType.DMA],
        compiler_params=pltpu.CompilerParams(
            dimension_semantics=("parallel", "arbitrary"),
            vmem_limit_bytes=VMEM_LIMIT),
    )(xp, xp, whh)
    return of, ob


# ----------------------------- weight packing (one-time prep) ----------------

def _pack_ih(w_ih, H, Hp):
    """torch W_ih (4H, F) -> (F, 4*Hp): 128-aligned gate slots, zero-padded."""
    F = w_ih.shape[1]
    a = w_ih.reshape(4, H, F).transpose(2, 0, 1)      # (F, gate, H)
    a = jnp.pad(a, ((0, 0), (0, 0), (0, Hp - H)))
    return a.reshape(F, 4 * Hp)


def _pack_hh(w_hh, H, Hp):
    """torch W_hh (4H, H) -> (Hp, 4*Hp): zero rows/cols in padded slots."""
    a = w_hh.reshape(4, H, H).transpose(2, 0, 1)      # (h_in, gate, h_out)
    a = jnp.pad(a, ((0, Hp - H), (0, 0), (0, Hp - H)))
    return a.reshape(Hp, 4 * Hp)


def prepare_params(params, hidden, num_classes, freq_size):
    """One-time parameter prep: BN folding, gate packing, padding, bf16 casts."""
    H = hidden
    Hp = _round_up(H, 128)
    F = freq_size
    Fp = _round_up(F, 128)
    Cp = _round_up(num_classes, 128)

    def fold_conv(w, b, gamma, beta, mean, var):
        scale = gamma / jnp.sqrt(var + BN_EPS)
        shift = beta + (b - mean) * scale
        w_hwio = jnp.transpose(w * scale[:, None, None, None], (2, 3, 1, 0))
        return w_hwio.astype(jnp.float32), shift.astype(jnp.float32)

    prep = {'conv1': fold_conv(*params['conv1']),
            'conv2': fold_conv(*params['conv2'])}

    rnns = []
    in_dim, in_dim_p = F, Fp
    for li, layer in enumerate(params['rnns']):
        wih_f, whh_f = layer['fwd']
        wih_b, whh_b = layer['bwd']
        # one concatenated input projection for both directions: (in_dim, 8*Hp)
        wcat = jnp.concatenate([_pack_ih(wih_f, H, Hp),
                                _pack_ih(wih_b, H, Hp)], axis=1)
        if li > 0:
            g, bta, mean, var = layer['bn']
            s = g / jnp.sqrt(var + BN_EPS)
            sh = bta - mean * s
            shift = (sh @ wcat).astype(jnp.float32)    # fold BN shift through W
            wcat = s[:, None] * wcat                   # fold BN scale into W
        else:
            shift = None
        w_in = jnp.pad(wcat, ((0, in_dim_p - in_dim), (0, 0))).astype(jnp.bfloat16)
        whh = jnp.stack([_pack_hh(whh_f, H, Hp),
                         _pack_hh(whh_b, H, Hp)]).astype(jnp.bfloat16)
        rnns.append({'w_in': w_in, 'shift': shift, 'whh': whh})
        in_dim, in_dim_p = H, Hp
    prep['rnns'] = rnns

    g, bta, mean, var, wfc = params['fc']
    s = g / jnp.sqrt(var + BN_EPS)
    sh = bta - mean * s
    wt = wfc.T                                         # (H, num_classes)
    shift_fc = jnp.pad((sh @ wt).astype(jnp.float32), (0, Cp - num_classes),
                       constant_values=-1e9)           # pad cols -> ~0 after softmax
    w_fc = jnp.pad(s[:, None] * wt,
                   ((0, Hp - H), (0, Cp - num_classes))).astype(jnp.bfloat16)
    prep['fc'] = {'w': w_fc, 'shift': shift_fc}
    prep['dims'] = dict(H=H, Hp=Hp, F=F, Fp=Fp, C=num_classes, Cp=Cp)
    return prep


# ----------------------------- model forward ---------------------------------

def deepspeech_forward(x, prep):
    d = prep['dims']
    Hp, F, Fp, C, Cp = d['Hp'], d['F'], d['Fp'], d['C'], d['Cp']

    # ---- conv stack: XLA conv in NHWC; bias / BN shift / Swish fused by XLA --
    # TODO(synk): replace with a Pallas implicit-GEMM conv (41x11xC_in window as
    # the MXU contraction) so conv + BN + Swish become a single kernel.
    def conv_block(y, wp, stride, pad):
        w_hwio, shift = wp
        y = lax.conv_general_dilated(
            y, w_hwio, window_strides=stride,
            padding=((pad[0], pad[0]), (pad[1], pad[1])),
            dimension_numbers=('NHWC', 'HWIO', 'NHWC'))
        y = y + shift[None, None, None, :]
        return y * jax.nn.sigmoid(y)                   # Swish

    y = jnp.transpose(x, (0, 2, 3, 1))                 # NCHW -> NHWC
    y = conv_block(y, prep['conv1'], (2, 1), (0, 5))
    y = conv_block(y, prep['conv2'], (2, 1), (0, 5))
    Nb, f2, T, Cc = y.shape
    # matches view(N, C*Hf, T) + transpose(1,2) + transpose(0,1) of the NCHW ref
    x_seq = jnp.transpose(y, (2, 0, 3, 1)).reshape(T, Nb, Cc * f2)   # (T, N, F)

    # ---- RNN stack: pad once to (Tp, Np, Fp) bf16 and stay padded ------------
    TB, Tp, ncores, Np, _ = _bilstm_dims(T, Nb, Hp)
    x0 = jnp.pad(x_seq.astype(jnp.bfloat16),
                 ((0, Tp - T), (0, Np - Nb), (0, Fp - F)))
    M = Tp * Np

    x1 = x0.reshape(M, Fp)
    x2 = None
    for layer in prep['rnns']:
        # BN (eval) folded into w_in; fwd+bwd hidden sum fused into the matmul.
        xp = fused_matmul(x1, layer['w_in'], shift=layer['shift'], x2=x2,
                          out_dtype=jnp.bfloat16)
        xp = xp.reshape(Tp, Np, 8 * Hp)
        of, ob = bilstm(xp, layer['whh'], T, Hp, TB, ncores)
        x1 = of.reshape(M, Hp)
        x2 = ob.reshape(M, Hp)

    # ---- fc (BN folded) + softmax; fwd+bwd sum fused into the matmul ---------
    probs = fused_matmul(x1, prep['fc']['w'], shift=prep['fc']['shift'], x2=x2,
                         act=_row_softmax, out_dtype=jnp.float32,
                         act_needs_full_rows=True)
    probs = probs.reshape(Tp, Np, Cp)[:T, :Nb, :C]
    # Lookahead is unused (bidirectional=True in the module defaults).
    return jnp.transpose(probs, (1, 0, 2))             # (N, T, classes)


# ----------------------------- deterministic params --------------------------

def init_params(key, hidden, nb_layers, num_classes, freq_size):
    keys = iter(jax.random.split(key, 128))

    def unif(shape, scale):
        return jax.random.uniform(next(keys), shape, jnp.float32, -scale, scale)

    def bn(c):
        gamma = 1.0 + unif((c,), 0.3)
        beta = unif((c,), 0.1)
        mean = unif((c,), 0.1)
        var = jax.random.uniform(next(keys), (c,), jnp.float32, 0.5, 1.5)
        return gamma, beta, mean, var

    params = {}
    w1 = unif((32, 2, 41, 11), 1.0 / math.sqrt(2 * 41 * 11))
    b1 = unif((32,), 0.1)
    params['conv1'] = (w1, b1) + bn(32)
    w2 = unif((32, 32, 21, 11), 1.0 / math.sqrt(32 * 21 * 11))
    b2 = unif((32,), 0.1)
    params['conv2'] = (w2, b2) + bn(32)

    rnns = []
    in_size = freq_size
    stdv = 1.0 / math.sqrt(hidden)
    for l in range(nb_layers):
        layer = {
            'fwd': (unif((4 * hidden, in_size), stdv),
                    unif((4 * hidden, hidden), stdv)),
            'bwd': (unif((4 * hidden, in_size), stdv),
                    unif((4 * hidden, hidden), stdv)),
        }
        if l > 0:
            layer['bn'] = bn(hidden)
        rnns.append(layer)
        in_size = hidden
    params['rnns'] = rnns

    gfc, bfc, mfc, vfc = bn(hidden)
    wfc = unif((num_classes, hidden), 1.0 / math.sqrt(hidden))
    params['fc'] = (gfc, bfc, mfc, vfc, wfc)
    return params


# ----------------------------- main -------------------------------------------

if __name__ == "__main__":
    # Small, module-consistent shapes: batch=2, in_channels=2, freq=129 (fixed by
    # the module's freq_size arithmetic), time=8, hidden=64, 2 RNN layers, 16 cls.
    N, T = 2, 8
    FREQ = 129
    HIDDEN = 64
    NB_LAYERS = 2
    NUM_CLASSES = 16

    f1 = (FREQ - 41) // 2 + 1
    f2 = (f1 - 21) // 2 + 1
    freq_size = f2 * 32  # = 416

    key = jax.random.PRNGKey(0)
    kparams, kx = jax.random.split(key)
    params = init_params(kparams, HIDDEN, NB_LAYERS, NUM_CLASSES, freq_size)
    prep = prepare_params(params, HIDDEN, NUM_CLASSES, freq_size)   # one-time prep
    x = jax.random.normal(kx, (N, 2, FREQ, T), jnp.float32)

    fwd = jax.jit(lambda xx: deepspeech_forward(xx, prep))
    out = jax.block_until_ready(fwd(x))

    assert out.shape == (N, T, NUM_CLASSES), out.shape
    assert bool(jnp.all(jnp.isfinite(out)))
    # softmax rows sum to 1 (eval-mode InferenceBatchSoftmax, exact f32 divide)
    assert bool(jnp.allclose(jnp.sum(out, axis=-1), 1.0, atol=1e-3))
    print("KERNEL_OK")
</pallas_src>

<mosaic_0001>
module attributes {stable_mosaic.version = 11 : i64} {
  func.func @_matmul_kernel1(%arg0: i32, %arg1: i32, %arg2: i32, %arg3: memref<64x512xbf16, #tpu.memory_space<vmem>>, %arg4: memref<512x512xbf16, #tpu.memory_space<vmem>>, %arg5: memref<1x512xf32, #tpu.memory_space<vmem>>, %arg6: memref<64x512xbf16, #tpu.memory_space<vmem>>, %arg7: memref<64x512xf32, #tpu.memory_space<vmem>>) attributes {dimension_semantics = [#tpu.dimension_semantics<parallel>, #tpu.dimension_semantics<parallel>, #tpu.dimension_semantics<arbitrary>], iteration_bounds = array<i64: 1, 2, 1>, scalar_prefetch = 0 : i64, scratch_operands = 1 : i64, tpu.core_type = #tpu.core_type<tc>, window_params = [{transform_indices = @transform_0, window_bounds = array<i64: 64, 512>}, {transform_indices = @transform_1, window_bounds = array<i64: 512, 512>}, {transform_indices = @transform_2, window_bounds = array<i64: 1, 512>}, {transform_indices = @transform_3, window_bounds = array<i64: 64, 512>}]} {
    %c0_i32 = arith.constant 0 : i32
    %0 = arith.cmpi eq, %arg2, %c0_i32 : i32
    %1 = arith.extui %0 : i1 to i32
    %c0_i32_0 = arith.constant 0 : i32
    %2 = arith.cmpi ne, %1, %c0_i32_0 : i32
    scf.if %2 {
      %cst_10 = arith.constant 0.000000e+00 : f32
      %12 = vector.broadcast %cst_10 : f32 to vector<64x512xf32>
      %c0_11 = arith.constant 0 : index
      %c0_12 = arith.constant 0 : index
      %13 = vector.load %arg7[%c0_11, %c0_12] : memref<64x512xf32, #tpu.memory_space<vmem>>, vector<64x512xf32>
      tpu.vector_store %arg7[%c0_11, %c0_12], %12 {strides = array<i32>} : memref<64x512xf32, #tpu.memory_space<vmem>>, vector<64x512xf32>,
    } else {
    }
    %c0 = arith.constant 0 : index
    %c0_1 = arith.constant 0 : index
    %3 = vector.load %arg7[%c0, %c0_1] : memref<64x512xf32, #tpu.memory_space<vmem>>, vector<64x512xf32>
    %c0_2 = arith.constant 0 : index
    %c0_3 = arith.constant 0 : index
    %4 = vector.load %arg3[%c0_2, %c0_3] : memref<64x512xbf16, #tpu.memory_space<vmem>>, vector<64x512xbf16>
    %c0_4 = arith.constant 0 : index
    %c0_5 = arith.constant 0 : index
    %5 = vector.load %arg4[%c0_4, %c0_5] : memref<512x512xbf16, #tpu.memory_space<vmem>>, vector<512x512xbf16>
    %cst = arith.constant dense<0.000000e+00> : vector<64x512xf32>
    %6 = tpu.matmul %4, %5, %cst {dimension_numbers = #tpu.dot_dimension_numbers<[1], [0], [0], [1], [0, 0, 1, 1], [], []>} : vector<64x512xbf16>, vector<512x512xbf16>, vector<64x512xf32> -> vector<64x512xf32>
    %7 = arith.addf %3, %6 : vector<64x512xf32>
    %c0_6 = arith.constant 0 : index
    %c0_7 = arith.constant 0 : index
    %8 = vector.load %arg7[%c0_6, %c0_7] : memref<64x512xf32, #tpu.memory_space<vmem>>, vector<64x512xf32>
    tpu.vector_store %arg7[%c0_6, %c0_7], %7 {strides = array<i32>} : memref<64x512xf32, #tpu.memory_space<vmem>>, vector<64x512xf32>,
    %c0_i32_8 = arith.constant 0 : i32
    %9 = arith.cmpi eq, %arg2, %c0_i32_8 : i32
    %10 = arith.extui %9 : i1 to i32
    %c0_i32_9 = arith.constant 0 : i32
    %11 = arith.cmpi ne, %10, %c0_i32_9 : i32
    scf.if %11 {
      %c0_10 = arith.constant 0 : index
      %c0_11 = arith.constant 0 : index
      %12 = vector.load %arg7[%c0_10, %c0_11] : memref<64x512xf32, #tpu.memory_space<vmem>>, vector<64x512xf32>
      %c0_12 = arith.constant 0 : index
      %c0_13 = arith.constant 0 : index
      %13 = vector.load %arg5[%c0_12, %c0_13] : memref<1x512xf32, #tpu.memory_space<vmem>>, vector<1x512xf32>
      %14 = vector.broadcast %13 : vector<1x512xf32> to vector<64x512xf32>
      %15 = arith.addf %12, %14 : vector<64x512xf32>
      %16 = arith.truncf %15 : vector<64x512xf32> to vector<64x512xbf16>
      %c0_14 = arith.constant 0 : index
      %c0_15 = arith.constant 0 : index
      %17 = vector.load %arg6[%c0_14, %c0_15] : memref<64x512xbf16, #tpu.memory_space<vmem>>, vector<64x512xbf16>
      tpu.vector_store %arg6[%c0_14, %c0_15], %16 {strides = array<i32>} : memref<64x512xbf16, #tpu.memory_space<vmem>>, vector<64x512xbf16>,
    } else {
    }
    return
  }
  func.func @transform_0(%arg0: i32, %arg1: i32, %arg2: i32) -> (i32, i32) {
    %c0_i32 = arith.constant 0 : i32
    return %arg0, %arg2 : i32, i32
  }
  func.func @transform_1(%arg0: i32, %arg1: i32, %arg2: i32) -> (i32, i32) {
    %c0_i32 = arith.constant 0 : i32
    return %arg2, %arg1 : i32, i32
  }
  func.func @transform_2(%arg0: i32, %arg1: i32, %arg2: i32) -> (i32, i32) {
    %c0_i32 = arith.constant 0 : i32
    %c0_i32_0 = arith.constant 0 : i32
    return %c0_i32, %arg1 : i32, i32
  }
  func.func @transform_3(%arg0: i32, %arg1: i32, %arg2: i32) -> (i32, i32) {
    %c0_i32 = arith.constant 0 : i32
    return %arg0, %arg1 : i32, i32
  }
}

module attributes {stable_mosaic.version = 11 : i64} {
  func.func @_bilstm_kernel(%arg0: i32, %arg1: i32, %arg2: memref<8x8x512xbf16, #tpu.memory_space<vmem>>, %arg3: memref<8x8x512xbf16, #tpu.memory_space<vmem>>, %arg4: memref<2x128x512xbf16, #tpu.memory_space<any>>, %arg5: memref<8x8x128xbf16, #tpu.memory_space<vmem>>, %arg6: memref<8x8x128xbf16, #tpu.memory_space<vmem>>, %arg7: memref<2x128x512xbf16, #tpu.memory_space<vmem>>, %arg8: memref<2x8x128xf32, #tpu.memory_space<vmem>>, %arg9: memref<2x8x128xf32, #tpu.memory_space<vmem>>, %arg10: memref<!tpu.dma_semaphore, #tpu.memory_space<semaphore_mem>>) attributes {dimension_semantics = [#tpu.dimension_semantics<parallel>, #tpu.dimension_semantics<arbitrary>], iteration_bounds = array<i64: 1, 1>, scalar_prefetch = 0 : i64, scratch_operands = 4 : i64, tpu.core_type = #tpu.core_type<tc>, window_params = [{transform_indices = @transform_0, window_bounds = array<i64: 8, 8, 512>}, {transform_indices = @transform_1, window_bounds = array<i64: 8, 8, 512>}, {}, {transform_indices = @transform_3, window_bounds = array<i64: 8, 8, 128>}, {transform_indices = @transform_4, window_bounds = array<i64: 8, 8, 128>}]} {
    %c0_i32 = arith.constant 0 : i32
    %0 = arith.cmpi eq, %arg1, %c0_i32 : i32
    %1 = arith.extui %0 : i1 to i32
    %c0_i32_0 = arith.constant 0 : i32
    %2 = arith.cmpi ne, %1, %c0_i32_0 : i32
    scf.if %2 {
      tpu.enqueue_dma source(%arg4 : memref<2x128x512xbf16, #tpu.memory_space<any>>) target(%arg7 : memref<2x128x512xbf16, #tpu.memory_space<vmem>>) target_semaphore(%arg10 : memref<!tpu.dma_semaphore, #tpu.memory_space<semaphore_mem>>)
      tpu.wait_dma2 semaphore(%arg10 : memref<!tpu.dma_semaphore, #tpu.memory_space<semaphore_mem>>) src(%arg4 : memref<2x128x512xbf16, #tpu.memory_space<any>>) dst(%arg7 : memref<2x128x512xbf16, #tpu.memory_space<vmem>>)
      %cst_495 = arith.constant 0.000000e+00 : f32
      %971 = vector.broadcast %cst_495 : f32 to vector<2x8x128xf32>
      %c0_496 = arith.constant 0 : index
      %c0_497 = arith.constant 0 : index
      %c0_498 = arith.constant 0 : index
      %972 = vector.load %arg8[%c0_496, %c0_497, %c0_498] : memref<2x8x128xf32, #tpu.memory_space<vmem>>, vector<2x8x128xf32>
      tpu.vector_store %arg8[%c0_496, %c0_497, %c0_498], %971 {strides = array<i32>} : memref<2x8x128xf32, #tpu.memory_space<vmem>>, vector<2x8x128xf32>,
      %cst_499 = arith.constant 0.000000e+00 : f32
      %973 = vector.broadcast %cst_499 : f32 to vector<2x8x128xf32>
      %c0_500 = arith.constant 0 : index
      %c0_501 = arith.constant 0 : index
      %c0_502 = arith.constant 0 : index
      %974 = vector.load %arg9[%c0_500, %c0_501, %c0_502] : memref<2x8x128xf32, #tpu.memory_space<vmem>>, vector<2x8x128xf32>
      tpu.vector_store %arg9[%c0_500, %c0_501, %c0_502], %973 {strides = array<i32>} : memref<2x8x128xf32, #tpu.memory_space<vmem>>, vector<2x8x128xf32>,
    } else {
    }
    %c0_i32_1 = arith.constant 0 : i32
    %3 = arith.index_cast %c0_i32_1 : i32 to index
    %c0 = arith.constant 0 : index
    %c0_2 = arith.constant 0 : index
    %4 = vector.load %arg2[%3, %c0, %c0_2] : memref<8x8x512xbf16, #tpu.memory_space<vmem>>, vector<1x8x512xbf16>
    %5 = vector.shape_cast %4 : vector<1x8x512xbf16> to vector<8x512xbf16>
    %c0_3 = arith.constant 0 : index
    %c0_4 = arith.constant 0 : index
    %c0_5 = arith.constant 0 : index
    %6 = vector.load %arg8[%c0_3, %c0_4, %c0_5] : memref<2x8x128xf32, #tpu.memory_space<vmem>>, vector<1x8x128xf32>
    %7 = vector.shape_cast %6 : vector<1x8x128xf32> to vector<8x128xf32>
    %c0_6 = arith.constant 0 : index
    %c0_7 = arith.constant 0 : index
    %c0_8 = arith.constant 0 : index
    %8 = vector.load %arg9[%c0_6, %c0_7, %c0_8] : memref<2x8x128xf32, #tpu.memory_space<vmem>>, vector<1x8x128xf32>
    %9 = vector.shape_cast %8 : vector<1x8x128xf32> to vector<8x128xf32>
    %c0_9 = arith.constant 0 : index
    %c0_10 = arith.constant 0 : index
    %c0_11 = arith.constant 0 : index
    %10 = vector.load %arg7[%c0_9, %c0_10, %c0_11] : memref<2x128x512xbf16, #tpu.memory_space<vmem>>, vector<1x128x512xbf16>
    %11 = vector.shape_cast %10 : vector<1x128x512xbf16> to vector<128x512xbf16>
    %12 = arith.extf %5 : vector<8x512xbf16> to vector<8x512xf32>
    %13 = arith.truncf %7 : vector<8x128xf32> to vector<8x128xbf16>
    %cst = arith.constant dense<0.000000e+00> : vector<8x512xf32>
    %14 = tpu.matmul %13, %11, %cst {dimension_numbers = #tpu.dot_dimension_numbers<[1], [0], [0], [1], [0, 0, 1, 1], [], []>} : vector<8x128xbf16>, vector<128x512xbf16>, vector<8x512xf32> -> vector<8x512xf32>
    %15 = arith.addf %12, %14 : vector<8x512xf32>
    %16 = vector.extract_strided_slice %15 {offsets = [0, 0], sizes = [8, 128], strides = [1, 1]} : vector<8x512xf32> to vector<8x128xf32>
    %cst_12 = arith.constant 5.000000e-01 : f32
    %17 = vector.broadcast %cst_12 : f32 to vector<8x128xf32>
    %18 = arith.mulf %17, %16 : vector<8x128xf32>
    %19 = math.tanh %18 : vector<8x128xf32>
    %cst_13 = arith.constant 5.000000e-01 : f32
    %20 = vector.broadcast %cst_13 : f32 to vector<8x128xf32>
    %21 = arith.mulf %20, %19 : vector<8x128xf32>
    %cst_14 = arith.constant 5.000000e-01 : f32
    %22 = vector.broadcast %cst_14 : f32 to vector<8x128xf32>
    %23 = arith.addf %21, %22 : vector<8x128xf32>
    %24 = vector.extract_strided_slice %15 {offsets = [0, 128], sizes = [8, 128], strides = [1, 1]} : vector<8x512xf32> to vector<8x128xf32>
    %cst_15 = arith.constant 5.000000e-01 : f32
    %25 = vector.broadcast %cst_15 : f32 to vector<8x128xf32>
    %26 = arith.mulf %25, %24 : vector<8x128xf32>
    %27 = math.tanh %26 : vector<8x128xf32>
    %cst_16 = arith.constant 5.000000e-01 : f32
    %28 = vector.broadcast %cst_16 : f32 to vector<8x128xf32>
    %29 = arith.mulf %28, %27 : vector<8x128xf32>
    %cst_17 = arith.constant 5.000000e-01 : f32
    %30 = vector.broadcast %cst_17 : f32 to vector<8x128xf32>
    %31 = arith.addf %29, %30 : vector<8x128xf32>
    %32 = vector.extract_strided_slice %15 {offsets = [0, 256], sizes = [8, 128], strides = [1, 1]} : vector<8x512xf32> to vector<8x128xf32>
    %33 = math.tanh %32 : vector<8x128xf32>
    %34 = vector.extract_strided_slice %15 {offsets = [0, 384], sizes = [8, 128], strides = [1, 1]} : vector<8x512xf32> to vector<8x128xf32>
    %cst_18 = arith.constant 5.000000e-01 : f32
    %35 = vector.broadcast %cst_18 : f32 to vector<8x128xf32>
    %36 = arith.mulf %35, %34 : vector<8x128xf32>
    %37 = math.tanh %36 : vector<8x128xf32>
    %cst_19 = arith.constant 5.000000e-01 : f32
    %38 = vector.broadcast %cst_19 : f32 to vector<8x128xf32>
    %39 = arith.mulf %38, %37 : vector<8x128xf32>
    %cst_20 = arith.constant 5.000000e-01 : f32
    %40 = vector.broadcast %cst_20 : f32 to vector<8x128xf32>
    %41 = arith.addf %39, %40 : vector<8x128xf32>
    %42 = arith.mulf %31, %9 : vector<8x128xf32>
    %43 = arith.mulf %23, %33 : vector<8x128xf32>
    %44 = arith.addf %42, %43 : vector<8x128xf32>
    %45 = math.tanh %44 : vector<8x128xf32>
    %46 = arith.mulf %41, %45 : vector<8x128xf32>
    %c7_i32 = arith.constant 7 : i32
    %47 = arith.subi %c7_i32, %c0_i32_1 : i32
    %48 = arith.index_cast %47 : i32 to index
    %c0_21 = arith.constant 0 : index
    %c0_22 = arith.constant 0 : index
    %49 = vector.load %arg3[%48, %c0_21, %c0_22] : memref<8x8x512xbf16, #tpu.memory_space<vmem>>, vector<1x8x512xbf16>
    %50 = vector.shape_cast %49 : vector<1x8x512xbf16> to vector<8x512xbf16>
    %c1 = arith.constant 1 : index
    %c0_23 = arith.constant 0 : index
    %c0_24 = arith.constant 0 : index
    %51 = vector.load %arg8[%c1, %c0_23, %c0_24] : memref<2x8x128xf32, #tpu.memory_space<vmem>>, vector<1x8x128xf32>
    %52 = vector.shape_cast %51 : vector<1x8x128xf32> to vector<8x128xf32>
    %c1_25 = arith.constant 1 : index
    %c0_26 = arith.constant 0 : index
    %c0_27 = arith.constant 0 : index
    %53 = vector.load %arg9[%c1_25, %c0_26, %c0_27] : memref<2x8x128xf32, #tpu.memory_space<vmem>>, vector<1x8x128xf32>
    %54 = vector.shape_cast %53 : vector<1x8x128xf32> to vector<8x128xf32>
    %c1_28 = arith.constant 1 : index
    %c0_29 = arith.constant 0 : index
    %c0_30 = arith.constant 0 : index
    %55 = vector.load %arg7[%c1_28, %c0_29, %c0_30] : memref<2x128x512xbf16, #tpu.memory_space<vmem>>, vector<1x128x512xbf16>
    %56 = vector.shape_cast %55 : vector<1x128x512xbf16> to vector<128x512xbf16>
    %57 = arith.extf %50 : vector<8x512xbf16> to vector<8x512xf32>
    %58 = arith.truncf %52 : vector<8x128xf32> to vector<8x128xbf16>
    %cst_31 = arith.constant dense<0.000000e+00> : vector<8x512xf32>
    %59 = tpu.matmul %58, %56, %cst_31 {dimension_numbers = #tpu.dot_dimension_numbers<[1], [0], [0], [1], [0, 0, 1, 1], [], []>} : vector<8x128xbf16>, vector<128x512xbf16>, vector<8x512xf32> -> vector<8x512xf32>
    %60 = arith.addf %57, %59 : vector<8x512xf32>
    %61 = vector.extract_strided_slice %60 {offsets = [0, 0], sizes = [8, 128], strides = [1, 1]} : vector<8x512xf32> to vector<8x128xf32>
    %cst_32 = arith.constant 5.000000e-01 : f32
    %62 = vector.broadcast %cst_32 : f32 to vector<8x128xf32>
    %63 = arith.mulf %62, %61 : vector<8x128xf32>
    %64 = math.tanh %63 : vector<8x128xf32>
    %cst_33 = arith.constant 5.000000e-01 : f32
    %65 = vector.broadcast %cst_33 : f32 to vector<8x128xf32>
    %66 = arith.mulf %65, %64 : vector<8x128xf32>
    %cst_34 = arith.constant 5.000000e-01 : f32
    %67 = vector.broadcast %cst_34 : f32 to vector<8x128xf32>
    %68 = arith.addf %66, %67 : vector<8x128xf32>
    %69 = vector.extract_strided_slice %60 {offsets = [0, 128], sizes = [8, 128], strides = [1, 1]} : vector<8x512xf32> to vector<8x128xf32>
    %cst_35 = arith.constant 5.000000e-01 : f32
    %70 = vector.broadcast %cst_35 : f32 to vector<8x128xf32>
    %71 = arith.mulf %70, %69 : vector<8x128xf32>
    %72 = math.tanh %71 : vector<8x128xf32>
    %cst_36 = arith.constant 5.000000e-01 : f32
    %73 = vector.broadcast %cst_36 : f32 to vector<8x128xf32>
    %74 = arith.mulf %73, %72 : vector<8x128xf32>
    %cst_37 = arith.constant 5.000000e-01 : f32
    %75 = vector.broadcast %cst_37 : f32 to vector<8x128xf32>
    %76 = arith.addf %74, %75 : vector<8x128xf32>
    %77 = vector.extract_strided_slice %60 {offsets = [0, 256], sizes = [8, 128], strides = [1, 1]} : vector<8x512xf32> to vector<8x128xf32>
    %78 = math.tanh %77 : vector<8x128xf32>
    %79 = vector.extract_strided_slice %60 {offsets = [0, 384], sizes = [8, 128], strides = [1, 1]} : vector<8x512xf32> to vector<8x128xf32>
    %cst_38 = arith.constant 5.000000e-01 : f32
    %80 = vector.broadcast %cst_38 : f32 to vector<8x128xf32>
    %81 = arith.mulf %80, %79 : vector<8x128xf32>
    %82 = math.tanh %81 : vector<8x128xf32>
    %cst_39 = arith.constant 5.000000e-01 : f32
    %83 = vector.broadcast %cst_39 : f32 to vector<8x128xf32>
    %84 = arith.mulf %83, %82 : vector<8x128xf32>
    %cst_40 = arith.constant 5.000000e-01 : f32
    %85 = vector.broadcast %cst_40 : f32 to vector<8x128xf32>
    %86 = arith.addf %84, %85 : vector<8x128xf32>
    %87 = arith.mulf %76, %54 : vector<8x128xf32>
    %88 = arith.mulf %68, %78 : vector<8x128xf32>
    %89 = arith.addf %87, %88 : vector<8x128xf32>
    %90 = math.tanh %89 : vector<8x128xf32>
    %91 = arith.mulf %86, %90 : vector<8x128xf32>
    %c0_i32_41 = arith.constant 0 : i32
    %92 = arith.subi %c0_i32_41, %arg1 : i32
    %c8_i32 = arith.constant 8 : i32
    %93 = arith.muli %92, %c8_i32 : i32
    %94 = arith.addi %93, %47 : i32
    %c8_i32_42 = arith.constant 8 : i32
    %95 = arith.cmpi slt, %94, %c8_i32_42 : i32
    %96 = arith.extui %95 : i1 to i32
    %97 = arith.sitofp %96 : i32 to f32
    %98 = vector.broadcast %97 : f32 to vector<8x128xf32>
    %99 = arith.mulf %91, %98 : vector<8x128xf32>
    %100 = vector.broadcast %97 : f32 to vector<8x128xf32>
    %101 = arith.mulf %89, %100 : vector<8x128xf32>
    %c0_43 = arith.constant 0 : index
    %c0_44 = arith.constant 0 : index
    %c0_45 = arith.constant 0 : index
    %102 = vector.load %arg8[%c0_43, %c0_44, %c0_45] : memref<2x8x128xf32, #tpu.memory_space<vmem>>, vector<1x8x128xf32>
    %103 = vector.shape_cast %102 : vector<1x8x128xf32> to vector<8x128xf32>
    %104 = vector.shape_cast %46 : vector<8x128xf32> to vector<1x8x128xf32>
    tpu.vector_store %arg8[%c0_43, %c0_44, %c0_45], %104 {strides = array<i32>} : memref<2x8x128xf32, #tpu.memory_space<vmem>>, vector<1x8x128xf32>,
    %c0_46 = arith.constant 0 : index
    %c0_47 = arith.constant 0 : index
    %c0_48 = arith.constant 0 : index
    %105 = vector.load %arg9[%c0_46, %c0_47, %c0_48] : memref<2x8x128xf32, #tpu.memory_space<vmem>>, vector<1x8x128xf32>
    %106 = vector.shape_cast %105 : vector<1x8x128xf32> to vector<8x128xf32>
    %107 = vector.shape_cast %44 : vector<8x128xf32> to vector<1x8x128xf32>
    tpu.vector_store %arg9[%c0_46, %c0_47, %c0_48], %107 {strides = array<i32>} : memref<2x8x128xf32, #tpu.memory_space<vmem>>, vector<1x8x128xf32>,
    %c1_49 = arith.constant 1 : index
    %c0_50 = arith.constant 0 : index
    %c0_51 = arith.constant 0 : index
    %108 = vector.load %arg8[%c1_49, %c0_50, %c0_51] : memref<2x8x128xf32, #tpu.memory_space<vmem>>, vector<1x8x128xf32>
    %109 = vector.shape_cast %108 : vector<1x8x128xf32> to vector<8x128xf32>
    %110 = vector.shape_cast %99 : vector<8x128xf32> to vector<1x8x128xf32>
    tpu.vector_store %arg8[%c1_49, %c0_50, %c0_51], %110 {strides = array<i32>} : memref<2x8x128xf32, #tpu.memory_space<vmem>>, vector<1x8x128xf32>,
    %c1_52 = arith.constant 1 : index
    %c0_53 = arith.constant 0 : index
    %c0_54 = arith.constant 0 : index
    %111 = vector.load %arg9[%c1_52, %c0_53, %c0_54] : memref<2x8x128xf32, #tpu.memory_space<vmem>>, vector<1x8x128xf32>
    %112 = vector.shape_cast %111 : vector<1x8x128xf32> to vector<8x128xf32>
    %113 = vector.shape_cast %101 : vector<8x128xf32> to vector<1x8x128xf32>
    tpu.vector_store %arg9[%c1_52, %c0_53, %c0_54], %113 {strides = array<i32>} : memref<2x8x128xf32, #tpu.memory_space<vmem>>, vector<1x8x128xf32>,
    %114 = arith.truncf %46 : vector<8x128xf32> to vector<8x128xbf16>
    %115 = arith.index_cast %c0_i32_1 : i32 to index
    %c0_55 = arith.constant 0 : index
    %c0_56 = arith.constant 0 : index
    %116 = vector.load %arg5[%115, %c0_55, %c0_56] : memref<8x8x128xbf16, #tpu.memory_space<vmem>>, vector<1x8x128xbf16>
    %117 = vector.shape_cast %116 : vector<1x8x128xbf16> to vector<8x128xbf16>
    %118 = vector.shape_cast %114 : vector<8x128xbf16> to vector<1x8x128xbf16>
    tpu.vector_store %arg5[%115, %c0_55, %c0_56], %118 {strides = array<i32>} : memref<8x8x128xbf16, #tpu.memory_space<vmem>>, vector<1x8x128xbf16>,
    %119 = arith.truncf %99 : vector<8x128xf32> to vector<8x128xbf16>
    %120 = arith.index_cast %47 : i32 to index
    %c0_57 = arith.constant 0 : index
    %c0_58 = arith.constant 0 : index
    %121 = vector.load %arg6[%120, %c0_57, %c0_58] : memref<8x8x128xbf16, #tpu.memory_space<vmem>>, vector<1x8x128xbf16>
    %122 = vector.shape_cast %121 : vector<1x8x128xbf16> to vector<8x128xbf16>
    %123 = vector.shape_cast %119 : vector<8x128xbf16> to vector<1x8x128xbf16>
    tpu.vector_store %arg6[%120, %c0_57, %c0_58], %123 {strides = array<i32>} : memref<8x8x128xbf16, #tpu.memory_space<vmem>>, vector<1x8x128xbf16>,
    %c1_i32 = arith.constant 1 : i32
    %124 = arith.index_cast %c1_i32 : i32 to index
    %c0_59 = arith.constant 0 : index
    %c0_60 = arith.constant 0 : index
    %125 = vector.load %arg2[%124, %c0_59, %c0_60] : memref<8x8x512xbf16, #tpu.memory_space<vmem>>, vector<1x8x512xbf16>
    %126 = vector.shape_cast %125 : vector<1x8x512xbf16> to vector<8x512xbf16>
    %c0_61 = arith.constant 0 : index
    %c0_62 = arith.constant 0 : index
    %c0_63 = arith.constant 0 : index
    %127 = vector.load %arg8[%c0_61, %c0_62, %c0_63] : memref<2x8x128xf32, #tpu.memory_space<vmem>>, vector<1x8x128xf32>
    %128 = vector.shape_cast %127 : vector<1x8x128xf32> to vector<8x128xf32>
    %c0_64 = arith.constant 0 : index
    %c0_65 = arith.constant 0 : index
    %c0_66 = arith.constant 0 : index
    %129 = vector.load %arg9[%c0_64, %c0_65, %c0_66] : memref<2x8x128xf32, #tpu.memory_space<vmem>>, vector<1x8x128xf32>
    %130 = vector.shape_cast %129 : vector<1x8x128xf32> to vector<8x128xf32>
    %c0_67 = arith.constant 0 : index
    %c0_68 = arith.constant 0 : index
    %c0_69 = arith.constant 0 : index
    %131 = vector.load %arg7[%c0_67, %c0_68, %c0_69] : memref<2x128x512xbf16, #tpu.memory_space<vmem>>, vector<1x128x512xbf16>
    %132 = vector.shape_cast %131 : vector<1x128x512xbf16> to vector<128x512xbf16>
    %133 = arith.extf %126 : vector<8x512xbf16> to vector<8x512xf32>
    %134 = arith.truncf %128 : vector<8x128xf32> to vector<8x128xbf16>
    %cst_70 = arith.constant dense<0.000000e+00> : vector<8x512xf32>
    %135 = tpu.matmul %134, %132, %cst_70 {dimension_numbers = #tpu.dot_dimension_numbers<[1], [0], [0], [1], [0, 0, 1, 1], [], []>} : vector<8x128xbf16>, vector<128x512xbf16>, vector<8x512xf32> -> vector<8x512xf32>
    %136 = arith.addf %133, %135 : vector<8x512xf32>
    %137 = vector.extract_strided_slice %136 {offsets = [0, 0], sizes = [8, 128], strides = [1, 1]} : vector<8x512xf32> to vector<8x128xf32>
    %cst_71 = arith.constant 5.000000e-01 : f32
    %138 = vector.broadcast %cst_71 : f32 to vector<8x128xf32>
    %139 = arith.mulf %138, %137 : vector<8x128xf32>
    %140 = math.tanh %139 : vector<8x128xf32>
    %cst_72 = arith.constant 5.000000e-01 : f32
    %141 = vector.broadcast %cst_72 : f32 to vector<8x128xf32>
    %142 = arith.mulf %141, %140 : vector<8x128xf32>
    %cst_73 = arith.constant 5.000000e-01 : f32
    %143 = vector.broadcast %cst_73 : f32 to vector<8x128xf32>
    %144 = arith.addf %142, %143 : vector<8x128xf32>
    %145 = vector.extract_strided_slice %136 {offsets = [0, 128], sizes = [8, 128], strides = [1, 1]} : vector<8x512xf32> to vector<8x128xf32>
    %cst_74 = arith.constant 5.000000e-01 : f32
    %146 = vector.broadcast %cst_74 : f32 to vector<8x128xf32>
    %147 = arith.mulf %146, %145 : vector<8x128xf32>
    %148 = math.tanh %147 : vector<8x128xf32>
    %cst_75 = arith.constant 5.000000e-01 : f32
    %149 = vector.broadcast %cst_75 : f32 to vector<8x128xf32>
    %150 = arith.mulf %149, %148 : vector<8x128xf32>
    %cst_76 = arith.constant 5.000000e-01 : f32
    %151 = vector.broadcast %cst_76 : f32 to vector<8x128xf32>
    %152 = arith.addf %150, %151 : vector<8x128xf32>
    %153 = vector.extract_strided_slice %136 {offsets = [0, 256], sizes = [8, 128], strides = [1, 1]} : vector<8x512xf32> to vector<8x128xf32>
    %154 = math.tanh %153 : vector<8x128xf32>
    %155 = vector.extract_strided_slice %136 {offsets = [0, 384], sizes = [8, 128], strides = [1, 1]} : vector<8x512xf32> to vector<8x128xf32>
    %cst_77 = arith.constant 5.000000e-01 : f32
    %156 = vector.broadcast %cst_77 : f32 to vector<8x128xf32>
    %157 = arith.mulf %156, %155 : vector<8x128xf32>
    %158 = math.tanh %157 : vector<8x128xf32>
    %cst_78 = arith.constant 5.000000e-01 : f32
    %159 = vector.broadcast %cst_78 : f32 to vector<8x128xf32>
    %160 = arith.mulf %159, %158 : vector<8x128xf32>
    %cst_79 = arith.constant 5.000000e-01 : f32
    %161 = vector.broadcast %cst_79 : f32 to vector<8x128xf32>
    %162 = arith.addf %160, %161 : vector<8x128xf32>
    %163 = arith.mulf %152, %130 : vector<8x128xf32>
    %164 = arith.mulf %144, %154 : vector<8x128xf32>
    %165 = arith.addf %163, %164 : vector<8x128xf32>
    %166 = math.tanh %165 : vector<8x128xf32>
    %167 = arith.mulf %162, %166 : vector<8x128xf32>
    %c7_i32_80 = arith.constant 7 : i32
    %168 = arith.subi %c7_i32_80, %c1_i32 : i32
    %169 = arith.index_cast %168 : i32 to index
    %c0_81 = arith.constant 0 : index
    %c0_82 = arith.constant 0 : index
    %170 = vector.load %arg3[%169, %c0_81, %c0_82] : memref<8x8x512xbf16, #tpu.memory_space<vmem>>, vector<1x8x512xbf16>
    %171 = vector.shape_cast %170 : vector<1x8x512xbf16> to vector<8x512xbf16>
    %c1_83 = arith.constant 1 : index
    %c0_84 = arith.constant 0 : index
    %c0_85 = arith.constant 0 : index
    %172 = vector.load %arg8[%c1_83, %c0_84, %c0_85] : memref<2x8x128xf32, #tpu.memory_space<vmem>>, vector<1x8x128xf32>
    %173 = vector.shape_cast %172 : vector<1x8x128xf32> to vector<8x128xf32>
    %c1_86 = arith.constant 1 : index
    %c0_87 = arith.constant 0 : index
    %c0_88 = arith.constant 0 : index
    %174 = vector.load %arg9[%c1_86, %c0_87, %c0_88] : memref<2x8x128xf32, #tpu.memory_space<vmem>>, vector<1x8x128xf32>
    %175 = vector.shape_cast %174 : vector<1x8x128xf32> to vector<8x128xf32>
    %c1_89 = arith.constant 1 : index
    %c0_90 = arith.constant 0 : index
    %c0_91 = arith.constant 0 : index
    %176 = vector.load %arg7[%c1_89, %c0_90, %c0_91] : memref<2x128x512xbf16, #tpu.memory_space<vmem>>, vector<1x128x512xbf16>
    %177 = vector.shape_cast %176 : vector<1x128x512xbf16> to vector<128x512xbf16>
    %178 = arith.extf %171 : vector<8x512xbf16> to vector<8x512xf32>
    %179 = arith.truncf %173 : vector<8x128xf32> to vector<8x128xbf16>
    %cst_92 = arith.constant dense<0.000000e+00> : vector<8x512xf32>
    %180 = tpu.matmul %179, %177, %cst_92 {dimension_numbers = #tpu.dot_dimension_numbers<[1], [0], [0], [1], [0, 0, 1, 1], [], []>} : vector<8x128xbf16>, vector<128x512xbf16>, vector<8x512xf32> -> vector<8x512xf32>
    %181 = arith.addf %178, %180 : vector<8x512xf32>
    %182 = vector.extract_strided_slice %181 {offsets = [0, 0], sizes = [8, 128], strides = [1, 1]} : vector<8x512xf32> to vector<8x128xf32>
    %cst_93 = arith.constant 5.000000e-01 : f32
    %183 = vector.broadcast %cst_93 : f32 to vector<8x128xf32>
    %184 = arith.mulf %183, %182 : vector<8x128xf32>
    %185 = math.tanh %184 : vector<8x128xf32>
    %cst_94 = arith.constant 5.000000e-01 : f32
    %186 = vector.broadcast %cst_94 : f32 to vector<8x128xf32>
    %187 = arith.mulf %186, %185 : vector<8x128xf32>
    %cst_95 = arith.constant 5.000000e-01 : f32
    %188 = vector.broadcast %cst_95 : f32 to vector<8x128xf32>
    %189 = arith.addf %187, %188 : vector<8x128xf32>
    %190 = vector.extract_strided_slice %181 {offsets = [0, 128], sizes = [8, 128], strides = [1, 1]} : vector<8x512xf32> to vector<8x128xf32>
    %cst_96 = arith.constant 5.000000e-01 : f32
    %191 = vector.broadcast %cst_96 : f32 to vector<8x128xf32>
    %192 = arith.mulf %191, %190 : vector<8x128xf32>
    %193 = math.tanh %192 : vector<8x128xf32>
    %cst_97 = arith.constant 5.000000e-01 : f32
    %194 = vector.broadcast %cst_97 : f32 to vector<8x128xf32>
    %195 = arith.mulf %194, %193 : vector<8x128xf32>
    %cst_98 = arith.constant 5.000000e-01 : f32
    %196 = vector.broadcast %cst_98 : f32 to vector<8x128xf32>
    %197 = arith.addf %195, %196 : vector<8x128xf32>
    %198 = vector.extract_strided_slice %181 {offsets = [0, 256], sizes = [8, 128], strides = [1, 1]} : vector<8x512xf32> to vector<8x128xf32>
    %199 = math.tanh %198 : vector<8x128xf32>
    %200 = vector.extract_strided_slice %181 {offsets = [0, 384], sizes = [8, 128], strides = [1, 1]} : vector<8x512xf32> to vector<8x128xf32>
    %cst_99 = arith.constant 5.000000e-01 : f32
    %201 = vector.broadcast %cst_99 : f32 to vector<8x128xf32>
    %202 = arith.mulf %201, %200 : vector<8x128xf32>
    %203 = math.tanh %202 : vector<8x128xf32>
    %cst_100 = arith.constant 5.000000e-01 : f32
    %204 = vector.broadcast %cst_100 : f32 to vector<8x128xf32>
    %205 = arith.mulf %204, %203 : vector<8x128xf32>
    %cst_101 = arith.constant 5.000000e-01 : f32
    %206 = vector.broadcast %cst_101 : f32 to vector<8x128xf32>
    %207 = arith.addf %205, %206 : vector<8x128xf32>
    %208 = arith.mulf %197, %175 : vector<8x128xf32>
    %209 = arith.mulf %189, %199 : vector<8x128xf32>
    %210 = arith.addf %208, %209 : vector<8x128xf32>
    %211 = math.tanh %210 : vector<8x128xf32>
    %212 = arith.mulf %207, %211 : vector<8x128xf32>
    %c0_i32_102 = arith.constant 0 : i32
    %213 = arith.subi %c0_i32_102, %arg1 : i32
    %c8_i32_103 = arith.constant 8 : i32
    %214 = arith.muli %213, %c8_i32_103 : i32
    %215 = arith.addi %214, %168 : i32
    %c8_i32_104 = arith.constant 8 : i32
    %216 = arith.cmpi slt, %215, %c8_i32_104 : i32
    %217 = arith.extui %216 : i1 to i32
    %218 = arith.sitofp %217 : i32 to f32
    %219 = vector.broadcast %218 : f32 to vector<8x128xf32>
    %220 = arith.mulf %212, %219 : vector<8x128xf32>
    %221 = vector.broadcast %218 : f32 to vector<8x128xf32>
    %222 = arith.mulf %210, %221 : vector<8x128xf32>
    %c0_105 = arith.constant 0 : index
    %c0_106 = arith.constant 0 : index
    %c0_107 = arith.constant 0 : index
    %223 = vector.load %arg8[%c0_105, %c0_106, %c0_107] : memref<2x8x128xf32, #tpu.memory_space<vmem>>, vector<1x8x128xf32>
    %224 = vector.shape_cast %223 : vector<1x8x128xf32> to vector<8x128xf32>
    %225 = vector.shape_cast %167 : vector<8x128xf32> to vector<1x8x128xf32>
    tpu.vector_store %arg8[%c0_105, %c0_106, %c0_107], %225 {strides = array<i32>} : memref<2x8x128xf32, #tpu.memory_space<vmem>>, vector<1x8x128xf32>,
    %c0_108 = arith.constant 0 : index
    %c0_109 = arith.constant 0 : index
    %c0_110 = arith.constant 0 : index
    %226 = vector.load %arg9[%c0_108, %c0_109, %c0_110] : memref<2x8x128xf32, #tpu.memory_space<vmem>>, vector<1x8x128xf32>
    %227 = vector.shape_cast %226 : vector<1x8x128xf32> to vector<8x128xf32>
    %228 = vector.shape_cast %165 : vector<8x128xf32> to vector<1x8x128xf32>
    tpu.vector_store %arg9[%c0_108, %c0_109, %c0_110], %228 {strides = array<i32>} : memref<2x8x128xf32, #tpu.memory_space<vmem>>, vector<1x8x128xf32>,
    %c1_111 = arith.constant 1 : index
    %c0_112 = arith.constant 0 : index
    %c0_113 = arith.constant 0 : index
    %229 = vector.load %arg8[%c1_111, %c0_112, %c0_113] : memref<2x8x128xf32, #tpu.memory_space<vmem>>, vector<1x8x128xf32>
    %230 = vector.shape_cast %229 : vector<1x8x128xf32> to vector<8x128xf32>
    %231 = vector.shape_cast %220 : vector<8x128xf32> to vector<1x8x128xf32>
    tpu.vector_store %arg8[%c1_111, %c0_112, %c0_113], %231 {strides = array<i32>} : memref<2x8x128xf32, #tpu.memory_space<vmem>>, vector<1x8x128xf32>,
    %c1_114 = arith.constant 1 : index
    %c0_115 = arith.constant 0 : index
    %c0_116 = arith.constant 0 : index
    %232 = vector.load %arg9[%c1_114, %c0_115, %c0_116] : memref<2x8x128xf32, #tpu.memory_space<vmem>>, vector<1x8x128xf32>
    %233 = vector.shape_cast %232 : vector<1x8x128xf32> to vector<8x128xf32>
    %234 = vector.shape_cast %222 : vector<8x128xf32> to vector<1x8x128xf32>
    tpu.vector_store %arg9[%c1_114, %c0_115, %c0_116], %234 {strides = array<i32>} : memref<2x8x128xf32, #tpu.memory_space<vmem>>, vector<1x8x128xf32>,
    %235 = arith.truncf %167 : vector<8x128xf32> to vector<8x128xbf16>
    %236 = arith.index_cast %c1_i32 : i32 to index
    %c0_117 = arith.constant 0 : index
    %c0_118 = arith.constant 0 : index
    %237 = vector.load %arg5[%236, %c0_117, %c0_118] : memref<8x8x128xbf16, #tpu.memory_space<vmem>>, vector<1x8x128xbf16>
    %238 = vector.shape_cast %237 : vector<1x8x128xbf16> to vector<8x128xbf16>
    %239 = vector.shape_cast %235 : vector<8x128xbf16> to vector<1x8x128xbf16>
    tpu.vector_store %arg5[%236, %c0_117, %c0_118], %239 {strides = array<i32>} : memref<8x8x128xbf16, #tpu.memory_space<vmem>>, vector<1x8x128xbf16>,
    %240 = arith.truncf %220 : vector<8x128xf32> to vector<8x128xbf16>
    %241 = arith.index_cast %168 : i32 to index
    %c0_119 = arith.constant 0 : index
    %c0_120 = arith.constant 0 : index
    %242 = vector.load %arg6[%241, %c0_119, %c0_120] : memref<8x8x128xbf16, #tpu.memory_space<vmem>>, vector<1x8x128xbf16>
    %243 = vector.shape_cast %242 : vector<1x8x128xbf16> to vector<8x128xbf16>
    %244 = vector.shape_cast %240 : vector<8x128xbf16> to vector<1x8x128xbf16>
    tpu.vector_store %arg6[%241, %c0_119, %c0_120], %244 {strides = array<i32>} : memref<8x8x128xbf16, #tpu.memory_space<vmem>>, vector<1x8x128xbf16>,
    %c2_i32 = arith.constant 2 : i32
    %245 = arith.index_cast %c2_i32 : i32 to index
    %c0_121 = arith.constant 0 : index
    %c0_122 = arith.constant 0 : index
    %246 = vector.load %arg2[%245, %c0_121, %c0_122] : memref<8x8x512xbf16, #tpu.memory_space<vmem>>, vector<1x8x512xbf16>
    %247 = vector.shape_cast %246 : vector<1x8x512xbf16> to vector<8x512xbf16>
    %c0_123 = arith.constant 0 : index
    %c0_124 = arith.constant 0 : index
    %c0_125 = arith.constant 0 : index
    %248 = vector.load %arg8[%c0_123, %c0_124, %c0_125] : memref<2x8x128xf32, #tpu.memory_space<vmem>>, vector<1x8x128xf32>
    %249 = vector.shape_cast %248 : vector<1x8x128xf32> to vector<8x128xf32>
    %c0_126 = arith.constant 0 : index
    %c0_127 = arith.constant 0 : index
    %c0_128 = arith.constant 0 : index
    %250 = vector.load %arg9[%c0_126, %c0_127, %c0_128] : memref<2x8x128xf32, #tpu.memory_space<vmem>>, vector<1x8x128xf32>
    %251 = vector.shape_cast %250 : vector<1x8x128xf32> to vector<8x128xf32>
    %c0_129 = arith.constant 0 : index
    %c0_130 = arith.constant 0 : index
    %c0_131 = arith.constant 0 : index
    %252 = vector.load %arg7[%c0_129, %c0_130, %c0_131] : memref<2x128x512xbf16, #tpu.memory_space<vmem>>, vector<1x128x512xbf16>
    %253 = vector.shape_cast %252 : vector<1x128x512xbf16> to vector<128x512xbf16>
    %254 = arith.extf %247 : vector<8x512xbf16> to vector<8x512xf32>
    %255 = arith.truncf %249 : vector<8x128xf32> to vector<8x128xbf16>
    %cst_132 = arith.constant dense<0.000000e+00> : vector<8x512xf32>
    %256 = tpu.matmul %255, %253, %cst_132 {dimension_numbers = #tpu.dot_dimension_numbers<[1], [0], [0], [1], [0, 0, 1, 1], [], []>} : vector<8x128xbf16>, vector<128x512xbf16>, vector<8x512xf32> -> vector<8x512xf32>
    %257 = arith.addf %254, %256 : vector<8x512xf32>
    %258 = vector.extract_strided_slice %257 {offsets = [0, 0], sizes = [8, 128], strides = [1, 1]} : vector<8x512xf32> to vector<8x128xf32>
    %cst_133 = arith.constant 5.000000e-01 : f32
    %259 = vector.broadcast %cst_133 : f32 to vector<8x128xf32>
    %260 = arith.mulf %259, %258 : vector<8x128xf32>
    %261 = math.tanh %260 : vector<8x128xf32>
    %cst_134 = arith.constant 5.000000e-01 : f32
    %262 = vector.broadcast %cst_134 : f32 to vector<8x128xf32>
    %263 = arith.mulf %262, %261 : vector<8x128xf32>
    %cst_135 = arith.constant 5.000000e-01 : f32
    %264 = vector.broadcast %cst_135 : f32 to vector<8x128xf32>
    %265 = arith.addf %263, %264 : vector<8x128xf32>
    %266 = vector.extract_strided_slice %257 {offsets = [0, 128], sizes = [8, 128], strides = [1, 1]} : vector<8x512xf32> to vector<8x128xf32>
    %cst_136 = arith.constant 5.000000e-01 : f32
    %267 = vector.broadcast %cst_136 : f32 to vector<8x128xf32>
    %268 = arith.mulf %267, %266 : vector<8x128xf32>
    %269 = math.tanh %268 : vector<8x128xf32>
    %cst_137 = arith.constant 5.000000e-01 : f32
    %270 = vector.broadcast %cst_137 : f32 to vector<8x128xf32>
    %271 = arith.mulf %270, %269 : vector<8x128xf32>
    %cst_138 = arith.constant 5.000000e-01 : f32
    %272 = vector.broadcast %cst_138 : f32 to vector<8x128xf32>
    %273 = arith.addf %271, %272 : vector<8x128xf32>
    %274 = vector.extract_strided_slice %257 {offsets = [0, 256], sizes = [8, 128], strides = [1, 1]} : vector<8x512xf32> to vector<8x128xf32>
    %275 = math.tanh %274 : vector<8x128xf32>
    %276 = vector.extract_strided_slice %257 {offsets = [0, 384], sizes = [8, 128], strides = [1, 1]} : vector<8x512xf32> to vector<8x128xf32>
    %cst_139 = arith.constant 5.000000e-01 : f32
    %277 = vector.broadcast %cst_139 : f32 to vector<8x128xf32>
    %278 = arith.mulf %277, %276 : vector<8x128xf32>
    %279 = math.tanh %278 : vector<8x128xf32>
    %cst_140 = arith.constant 5.000000e-01 : f32
    %280 = vector.broadcast %cst_140 : f32 to vector<8x128xf32>
    %281 = arith.mulf %280, %279 : vector<8x128xf32>
    %cst_141 = arith.constant 5.000000e-01 : f32
    %282 = vector.broadcast %cst_141 : f32 to vector<8x128xf32>
    %283 = arith.addf %281, %282 : vector<8x128xf32>
    %284 = arith.mulf %273, %251 : vector<8x128xf32>
    %285 = arith.mulf %265, %275 : vector<8x128xf32>
    %286 = arith.addf %284, %285 : vector<8x128xf32>
    %287 = math.tanh %286 : vector<8x128xf32>
    %288 = arith.mulf %283, %287 : vector<8x128xf32>
    %c7_i32_142 = arith.constant 7 : i32
    %289 = arith.subi %c7_i32_142, %c2_i32 : i32
    %290 = arith.index_cast %289 : i32 to index
    %c0_143 = arith.constant 0 : index
    %c0_144 = arith.constant 0 : index
    %291 = vector.load %arg3[%290, %c0_143, %c0_144] : memref<8x8x512xbf16, #tpu.memory_space<vmem>>, vector<1x8x512xbf16>
    %292 = vector.shape_cast %291 : vector<1x8x512xbf16> to vector<8x512xbf16>
    %c1_145 = arith.constant 1 : index
    %c0_146 = arith.constant 0 : index
    %c0_147 = arith.constant 0 : index
    %293 = vector.load %arg8[%c1_145, %c0_146, %c0_147] : memref<2x8x128xf32, #tpu.memory_space<vmem>>, vector<1x8x128xf32>
    %294 = vector.shape_cast %293 : vector<1x8x128xf32> to vector<8x128xf32>
    %c1_148 = arith.constant 1 : index
    %c0_149 = arith.constant 0 : index
    %c0_150 = arith.constant 0 : index
    %295 = vector.load %arg9[%c1_148, %c0_149, %c0_150] : memref<2x8x128xf32, #tpu.memory_space<vmem>>, vector<1x8x128xf32>
    %296 = vector.shape_cast %295 : vector<1x8x128xf32> to vector<8x128xf32>
    %c1_151 = arith.constant 1 : index
    %c0_152 = arith.constant 0 : index
    %c0_153 = arith.constant 0 : index
    %297 = vector.load %arg7[%c1_151, %c0_152, %c0_153] : memref<2x128x512xbf16, #tpu.memory_space<vmem>>, vector<1x128x512xbf16>
    %298 = vector.shape_cast %297 : vector<1x128x512xbf16> to vector<128x512xbf16>
    %299 = arith.extf %292 : vector<8x512xbf16> to vector<8x512xf32>
    %300 = arith.truncf %294 : vector<8x128xf32> to vector<8x128xbf16>
    %cst_154 = arith.constant dense<0.000000e+00> : vector<8x512xf32>
    %301 = tpu.matmul %300, %298, %cst_154 {dimension_numbers = #tpu.dot_dimension_numbers<[1], [0], [0], [1], [0, 0, 1, 1], [], []>} : vector<8x128xbf16>, vector<128x512xbf16>, vector<8x512xf32> -> vector<8x512xf32>
    %302 = arith.addf %299, %301 : vector<8x512xf32>
    %303 = vector.extract_strided_slice %302 {offsets = [0, 0], sizes = [8, 128], strides = [1, 1]} : vector<8x512xf32> to vector<8x128xf32>
    %cst_155 = arith.constant 5.000000e-01 : f32
    %304 = vector.broadcast %cst_155 : f32 to vector<8x128xf32>
    %305 = arith.mulf %304, %303 : vector<8x128xf32>
    %306 = math.tanh %305 : vector<8x128xf32>
    %cst_156 = arith.constant 5.000000e-01 : f32
    %307 = vector.broadcast %cst_156 : f32 to vector<8x128xf32>
    %308 = arith.mulf %307, %306 : vector<8x128xf32>
    %cst_157 = arith.constant 5.000000e-01 : f32
    %309 = vector.broadcast %cst_157 : f32 to vector<8x128xf32>
    %310 = arith.addf %308, %309 : vector<8x128xf32>
    %311 = vector.extract_strided_slice %302 {offsets = [0, 128], sizes = [8, 128], strides = [1, 1]} : vector<8x512xf32> to vector<8x128xf32>
    %cst_158 = arith.constant 5.000000e-01 : f32
    %312 = vector.broadcast %cst_158 : f32 to vector<8x128xf32>
    %313 = arith.mulf %312, %311 : vector<8x128xf32>
    %314 = math.tanh %313 : vector<8x128xf32>
    %cst_159 = arith.constant 5.000000e-01 : f32
    %315 = vector.broadcast %cst_159 : f32 to vector<8x128xf32>
    %316 = arith.mulf %315, %314 : vector<8x128xf32>
    %cst_160 = arith.constant 5.000000e-01 : f32
    %317 = vector.broadcast %cst_160 : f32 to vector<8x128xf32>
    %318 = arith.addf %316, %317 : vector<8x128xf32>
    %319 = vector.extract_strided_slice %302 {offsets = [0, 256], sizes = [8, 128], strides = [1, 1]} : vector<8x512xf32> to vector<8x128xf32>
    %320 = math.tanh %319 : vector<8x128xf32>
    %321 = vector.extract_strided_slice %302 {offsets = [0, 384], sizes = [8, 128], strides = [1, 1]} : vector<8x512xf32> to vector<8x128xf32>
    %cst_161 = arith.constant 5.000000e-01 : f32
    %322 = vector.broadcast %cst_161 : f32 to vector<8x128xf32>
    %323 = arith.mulf %322, %321 : vector<8x128xf32>
    %324 = math.tanh %323 : vector<8x128xf32>
    %cst_162 = arith.constant 5.000000e-01 : f32
    %325 = vector.broadcast %cst_162 : f32 to vector<8x128xf32>
    %326 = arith.mulf %325, %324 : vector<8x128xf32>
    %cst_163 = arith.constant 5.000000e-01 : f32
    %327 = vector.broadcast %cst_163 : f32 to vector<8x128xf32>
    %328 = arith.addf %326, %327 : vector<8x128xf32>
    %329 = arith.mulf %318, %296 : vector<8x128xf32>
    %330 = arith.mulf %310, %320 : vector<8x128xf32>
    %331 = arith.addf %329, %330 : vector<8x128xf32>
    %332 = math.tanh %331 : vector<8x128xf32>
    %333 = arith.mulf %328, %332 : vector<8x128xf32>
    %c0_i32_164 = arith.constant 0 : i32
    %334 = arith.subi %c0_i32_164, %arg1 : i32
    %c8_i32_165 = arith.constant 8 : i32
    %335 = arith.muli %334, %c8_i32_165 : i32
    %336 = arith.addi %335, %289 : i32
    %c8_i32_166 = arith.constant 8 : i32
    %337 = arith.cmpi slt, %336, %c8_i32_166 : i32
    %338 = arith.extui %337 : i1 to i32
    %339 = arith.sitofp %338 : i32 to f32
    %340 = vector.broadcast %339 : f32 to vector<8x128xf32>
    %341 = arith.mulf %333, %340 : vector<8x128xf32>
    %342 = vector.broadcast %339 : f32 to vector<8x128xf32>
    %343 = arith.mulf %331, %342 : vector<8x128xf32>
    %c0_167 = arith.constant 0 : index
    %c0_168 = arith.constant 0 : index
    %c0_169 = arith.constant 0 : index
    %344 = vector.load %arg8[%c0_167, %c0_168, %c0_169] : memref<2x8x128xf32, #tpu.memory_space<vmem>>, vector<1x8x128xf32>
    %345 = vector.shape_cast %344 : vector<1x8x128xf32> to vector<8x128xf32>
    %346 = vector.shape_cast %288 : vector<8x128xf32> to vector<1x8x128xf32>
    tpu.vector_store %arg8[%c0_167, %c0_168, %c0_169], %346 {strides = array<i32>} : memref<2x8x128xf32, #tpu.memory_space<vmem>>, vector<1x8x128xf32>,
    %c0_170 = arith.constant 0 : index
    %c0_171 = arith.constant 0 : index
    %c0_172 = arith.constant 0 : index
    %347 = vector.load %arg9[%c0_170, %c0_171, %c0_172] : memref<2x8x128xf32, #tpu.memory_space<vmem>>, vector<1x8x128xf32>
    %348 = vector.shape_cast %347 : vector<1x8x128xf32> to vector<8x128xf32>
    %349 = vector.shape_cast %286 : vector<8x128xf32> to vector<1x8x128xf32>
    tpu.vector_store %arg9[%c0_170, %c0_171, %c0_172], %349 {strides = array<i32>} : memref<2x8x128xf32, #tpu.memory_space<vmem>>, vector<1x8x128xf32>,
    %c1_173 = arith.constant 1 : index
    %c0_174 = arith.constant 0 : index
    %c0_175 = arith.constant 0 : index
    %350 = vector.load %arg8[%c1_173, %c0_174, %c0_175] : memref<2x8x128xf32, #tpu.memory_space<vmem>>, vector<1x8x128xf32>
    %351 = vector.shape_cast %350 : vector<1x8x128xf32> to vector<8x128xf32>
    %352 = vector.shape_cast %341 : vector<8x128xf32> to vector<1x8x128xf32>
    tpu.vector_store %arg8[%c1_173, %c0_174, %c0_175], %352 {strides = array<i32>} : memref<2x8x128xf32, #tpu.memory_space<vmem>>, vector<1x8x128xf32>,
    %c1_176 = arith.constant 1 : index
    %c0_177 = arith.constant 0 : index
    %c0_178 = arith.constant 0 : index
    %353 = vector.load %arg9[%c1_176, %c0_177, %c0_178] : memref<2x8x128xf32, #tpu.memory_space<vmem>>, vector<1x8x128xf32>
    %354 = vector.shape_cast %353 : vector<1x8x128xf32> to vector<8x128xf32>
    %355 = vector.shape_cast %343 : vector<8x128xf32> to vector<1x8x128xf32>
    tpu.vector_store %arg9[%c1_176, %c0_177, %c0_178], %355 {strides = array<i32>} : memref<2x8x128xf32, #tpu.memory_space<vmem>>, vector<1x8x128xf32>,
    %356 = arith.truncf %288 : vector<8x128xf32> to vector<8x128xbf16>
    %357 = arith.index_cast %c2_i32 : i32 to index
    %c0_179 = arith.constant 0 : index
    %c0_180 = arith.constant 0 : index
    %358 = vector.load %arg5[%357, %c0_179, %c0_180] : memref<8x8x128xbf16, #tpu.memory_space<vmem>>, vector<1x8x128xbf16>
    %359 = vector.shape_cast %358 : vector<1x8x128xbf16> to vector<8x128xbf16>
    %360 = vector.shape_cast %356 : vector<8x128xbf16> to vector<1x8x128xbf16>
    tpu.vector_store %arg5[%357, %c0_179, %c0_180], %360 {strides = array<i32>} : memref<8x8x128xbf16, #tpu.memory_space<vmem>>, vector<1x8x128xbf16>,
    %361 = arith.truncf %341 : vector<8x128xf32> to vector<8x128xbf16>
    %362 = arith.index_cast %289 : i32 to index
    %c0_181 = arith.constant 0 : index
    %c0_182 = arith.constant 0 : index
    %363 = vector.load %arg6[%362, %c0_181, %c0_182] : memref<8x8x128xbf16, #tpu.memory_space<vmem>>, vector<1x8x128xbf16>
    %364 = vector.shape_cast %363 : vector<1x8x128xbf16> to vector<8x128xbf16>
    %365 = vector.shape_cast %361 : vector<8x128xbf16> to vector<1x8x128xbf16>
    tpu.vector_store %arg6[%362, %c0_181, %c0_182], %365 {strides = array<i32>} : memref<8x8x128xbf16, #tpu.memory_space<vmem>>, vector<1x8x128xbf16>,
    %c3_i32 = arith.constant 3 : i32
    %366 = arith.index_cast %c3_i32 : i32 to index
    %c0_183 = arith.constant 0 : index
    %c0_184 = arith.constant 0 : index
    %367 = vector.load %arg2[%366, %c0_183, %c0_184] : memref<8x8x512xbf16, #tpu.memory_space<vmem>>, vector<1x8x512xbf16>
    %368 = vector.shape_cast %367 : vector<1x8x512xbf16> to vector<8x512xbf16>
    %c0_185 = arith.constant 0 : index
    %c0_186 = arith.constant 0 : index
    %c0_187 = arith.constant 0 : index
    %369 = vector.load %arg8[%c0_185, %c0_186, %c0_187] : memref<2x8x128xf32, #tpu.memory_space<vmem>>, vector<1x8x128xf32>
    %370 = vector.shape_cast %369 : vector<1x8x128xf32> to vector<8x128xf32>
    %c0_188 = arith.constant 0 : index
    %c0_189 = arith.constant 0 : index
    %c0_190 = arith.constant 0 : index
    %371 = vector.load %arg9[%c0_188, %c0_189, %c0_190] : memref<2x8x128xf32, #tpu.memory_space<vmem>>, vector<1x8x128xf32>
    %372 = vector.shape_cast %371 : vector<1x8x128xf32> to vector<8x128xf32>
    %c0_191 = arith.constant 0 : index
    %c0_192 = arith.constant 0 : index
    %c0_193 = arith.constant 0 : index
    %373 = vector.load %arg7[%c0_191, %c0_192, %c0_193] : memref<2x128x512xbf16, #tpu.memory_space<vmem>>, vector<1x128x512xbf16>
    %374 = vector.shape_cast %373 : vector<1x128x512xbf16> to vector<128x512xbf16>
    %375 = arith.extf %368 : vector<8x512xbf16> to vector<8x512xf32>
    %376 = arith.truncf %370 : vector<8x128xf32> to vector<8x128xbf16>
    %cst_194 = arith.constant dense<0.000000e+00> : vector<8x512xf32>
    %377 = tpu.matmul %376, %374, %cst_194 {dimension_numbers = #tpu.dot_dimension_numbers<[1], [0], [0], [1], [0, 0, 1, 1], [], []>} : vector<8x128xbf16>, vector<128x512xbf16>, vector<8x512xf32> -> vector<8x512xf32>
    %378 = arith.addf %375, %377 : vector<8x512xf32>
    %379 = vector.extract_strided_slice %378 {offsets = [0, 0], sizes = [8, 128], strides = [1, 1]} : vector<8x512xf32> to vector<8x128xf32>
    %cst_195 = arith.constant 5.000000e-01 : f32
    %380 = vector.broadcast %cst_195 : f32 to vector<8x128xf32>
    %381 = arith.mulf %380, %379 : vector<8x128xf32>
    %382 = math.tanh %381 : vector<8x128xf32>
    %cst_196 = arith.constant 5.000000e-01 : f32
    %383 = vector.broadcast %cst_196 : f32 to vector<8x128xf32>
    %384 = arith.mulf %383, %382 : vector<8x128xf32>
    %cst_197 = arith.constant 5.000000e-01 : f32
    %385 = vector.broadcast %cst_197 : f32 to vector<8x128xf32>
    %386 = arith.addf %384, %385 : vector<8x128xf32>
    %387 = vector.extract_strided_slice %378 {offsets = [0, 128], sizes = [8, 128], strides = [1, 1]} : vector<8x512xf32> to vector<8x128xf32>
    %cst_198 = arith.constant 5.000000e-01 : f32
    %388 = vector.broadcast %cst_198 : f32 to vector<8x128xf32>
    %389 = arith.mulf %388, %387 : vector<8x128xf32>
    %390 = math.tanh %389 : vector<8x128xf32>
    %cst_199 = arith.constant 5.000000e-01 : f32
    %391 = vector.broadcast %cst_199 : f32 to vector<8x128xf32>
    %392 = arith.mulf %391, %390 : vector<8x128xf32>
    %cst_200 = arith.constant 5.000000e-01 : f32
    %393 = vector.broadcast %cst_200 : f32 to vector<8x128xf32>
    %394 = arith.addf %392, %393 : vector<8x128xf32>
    %395 = vector.extract_strided_slice %378 {offsets = [0, 256], sizes = [8, 128], strides = [1, 1]} : vector<8x512xf32> to vector<8x128xf32>
    %396 = math.tanh %395 : vector<8x128xf32>
    %397 = vector.extract_strided_slice %378 {offsets = [0, 384], sizes = [8, 128], strides = [1, 1]} : vector<8x512xf32> to vector<8x128xf32>
    %cst_201 = arith.constant 5.000000e-01 : f32
    %398 = vector.broadcast %cst_201 : f32 to vector<8x128xf32>
    %399 = arith.mulf %398, %397 : vector<8x128xf32>
    %400 = math.tanh %399 : vector<8x128xf32>
    %cst_202 = arith.constant 5.000000e-01 : f32
    %401 = vector.broadcast %cst_202 : f32 to vector<8x128xf32>
    %402 = arith.mulf %401, %400 : vector<8x128xf32>
    %cst_203 = arith.constant 5.000000e-01 : f32
    %403 = vector.broadcast %cst_203 : f32 to vector<8x128xf32>
    %404 = arith.addf %402, %403 : vector<8x128xf32>
    %405 = arith.mulf %394, %372 : vector<8x128xf32>
    %406 = arith.mulf %386, %396 : vector<8x128xf32>
    %407 = arith.addf %405, %406 : vector<8x128xf32>
    %408 = math.tanh %407 : vector<8x128xf32>
    %409 = arith.mulf %404, %408 : vector<8x128xf32>
    %c7_i32_204 = arith.constant 7 : i32
    %410 = arith.subi %c7_i32_204, %c3_i32 : i32
    %411 = arith.index_cast %410 : i32 to index
    %c0_205 = arith.constant 0 : index
    %c0_206 = arith.constant 0 : index
    %412 = vector.load %arg3[%411, %c0_205, %c0_206] : memref<8x8x512xbf16, #tpu.memory_space<vmem>>, vector<1x8x512xbf16>
    %413 = vector.shape_cast %412 : vector<1x8x512xbf16> to vector<8x512xbf16>
    %c1_207 = arith.constant 1 : index
    %c0_208 = arith.constant 0 : index
    %c0_209 = arith.constant 0 : index
    %414 = vector.load %arg8[%c1_207, %c0_208, %c0_209] : memref<2x8x128xf32, #tpu.memory_space<vmem>>, vector<1x8x128xf32>
    %415 = vector.shape_cast %414 : vector<1x8x128xf32> to vector<8x128xf32>
    %c1_210 = arith.constant 1 : index
    %c0_211 = arith.constant 0 : index
    %c0_212 = arith.constant 0 : index
    %416 = vector.load %arg9[%c1_210, %c0_211, %c0_212] : memref<2x8x128xf32, #tpu.memory_space<vmem>>, vector<1x8x128xf32>
    %417 = vector.shape_cast %416 : vector<1x8x128xf32> to vector<8x128xf32>
    %c1_213 = arith.constant 1 : index
    %c0_214 = arith.constant 0 : index
    %c0_215 = arith.constant 0 : index
    %418 = vector.load %arg7[%c1_213, %c0_214, %c0_215] : memref<2x128x512xbf16, #tpu.memory_space<vmem>>, vector<1x128x512xbf16>
    %419 = vector.shape_cast %418 : vector<1x128x512xbf16> to vector<128x512xbf16>
    %420 = arith.extf %413 : vector<8x512xbf16> to vector<8x512xf32>
    %421 = arith.truncf %415 : vector<8x128xf32> to vector<8x128xbf16>
    %cst_216 = arith.constant dense<0.000000e+00> : vector<8x512xf32>
    %422 = tpu.matmul %421, %419, %cst_216 {dimension_numbers = #tpu.dot_dimension_numbers<[1], [0], [0], [1], [0, 0, 1, 1], [], []>} : vector<8x128xbf16>, vector<128x512xbf16>, vector<8x512xf32> -> vector<8x512xf32>
    %423 = arith.addf %420, %422 : vector<8x512xf32>
    %424 = vector.extract_strided_slice %423 {offsets = [0, 0], sizes = [8, 128], strides = [1, 1]} : vector<8x512xf32> to vector<8x128xf32>
    %cst_217 = arith.constant 5.000000e-01 : f32
    %425 = vector.broadcast %cst_217 : f32 to vector<8x128xf32>
    %426 = arith.mulf %425, %424 : vector<8x128xf32>
    %427 = math.tanh %426 : vector<8x128xf32>
    %cst_218 = arith.constant 5.000000e-01 : f32
    %428 = vector.broadcast %cst_218 : f32 to vector<8x128xf32>
    %429 = arith.mulf %428, %427 : vector<8x128xf32>
    %cst_219 = arith.constant 5.000000e-01 : f32
    %430 = vector.broadcast %cst_219 : f32 to vector<8x128xf32>
    %431 = arith.addf %429, %430 : vector<8x128xf32>
    %432 = vector.extract_strided_slice %423 {offsets = [0, 128], sizes = [8, 128], strides = [1, 1]} : vector<8x512xf32> to vector<8x128xf32>
    %cst_220 = arith.constant 5.000000e-01 : f32
    %433 = vector.broadcast %cst_220 : f32 to vector<8x128xf32>
    %434 = arith.mulf %433, %432 : vector<8x128xf32>
    %435 = math.tanh %434 : vector<8x128xf32>
    %cst_221 = arith.constant 5.000000e-01 : f32
    %436 = vector.broadcast %cst_221 : f32 to vector<8x128xf32>
    %437 = arith.mulf %436, %435 : vector<8x128xf32>
    %cst_222 = arith.constant 5.000000e-01 : f32
    %438 = vector.broadcast %cst_222 : f32 to vector<8x128xf32>
    %439 = arith.addf %437, %438 : vector<8x128xf32>
    %440 = vector.extract_strided_slice %423 {offsets = [0, 256], sizes = [8, 128], strides = [1, 1]} : vector<8x512xf32> to vector<8x128xf32>
    %441 = math.tanh %440 : vector<8x128xf32>
    %442 = vector.extract_strided_slice %423 {offsets = [0, 384], sizes = [8, 128], strides = [1, 1]} : vector<8x512xf32> to vector<8x128xf32>
    %cst_223 = arith.constant 5.000000e-01 : f32
    %443 = vector.broadcast %cst_223 : f32 to vector<8x128xf32>
    %444 = arith.mulf %443, %442 : vector<8x128xf32>
    %445 = math.tanh %444 : vector<8x128xf32>
    %cst_224 = arith.constant 5.000000e-01 : f32
    %446 = vector.broadcast %cst_224 : f32 to vector<8x128xf32>
    %447 = arith.mulf %446, %445 : vector<8x128xf32>
    %cst_225 = arith.constant 5.000000e-01 : f32
    %448 = vector.broadcast %cst_225 : f32 to vector<8x128xf32>
    %449 = arith.addf %447, %448 : vector<8x128xf32>
    %450 = arith.mulf %439, %417 : vector<8x128xf32>
    %451 = arith.mulf %431, %441 : vector<8x128xf32>
    %452 = arith.addf %450, %451 : vector<8x128xf32>
    %453 = math.tanh %452 : vector<8x128xf32>
    %454 = arith.mulf %449, %453 : vector<8x128xf32>
    %c0_i32_226 = arith.constant 0 : i32
    %455 = arith.subi %c0_i32_226, %arg1 : i32
    %c8_i32_227 = arith.constant 8 : i32
    %456 = arith.muli %455, %c8_i32_227 : i32
    %457 = arith.addi %456, %410 : i32
    %c8_i32_228 = arith.constant 8 : i32
    %458 = arith.cmpi slt, %457, %c8_i32_228 : i32
    %459 = arith.extui %458 : i1 to i32
    %460 = arith.sitofp %459 : i32 to f32
    %461 = vector.broadcast %460 : f32 to vector<8x128xf32>
    %462 = arith.mulf %454, %461 : vector<8x128xf32>
    %463 = vector.broadcast %460 : f32 to vector<8x128xf32>
    %464 = arith.mulf %452, %463 : vector<8x128xf32>
    %c0_229 = arith.constant 0 : index
    %c0_230 = arith.constant 0 : index
    %c0_231 = arith.constant 0 : index
    %465 = vector.load %arg8[%c0_229, %c0_230, %c0_231] : memref<2x8x128xf32, #tpu.memory_space<vmem>>, vector<1x8x128xf32>
    %466 = vector.shape_cast %465 : vector<1x8x128xf32> to vector<8x128xf32>
    %467 = vector.shape_cast %409 : vector<8x128xf32> to vector<1x8x128xf32>
    tpu.vector_store %arg8[%c0_229, %c0_230, %c0_231], %467 {strides = array<i32>} : memref<2x8x128xf32, #tpu.memory_space<vmem>>, vector<1x8x128xf32>,
    %c0_232 = arith.constant 0 : index
    %c0_233 = arith.constant 0 : index
    %c0_234 = arith.constant 0 : index
    %468 = vector.load %arg9[%c0_232, %c0_233, %c0_234] : memref<2x8x128xf32, #tpu.memory_space<vmem>>, vector<1x8x128xf32>
    %469 = vector.shape_cast %468 : vector<1x8x128xf32> to vector<8x128xf32>
    %470 = vector.shape_cast %407 : vector<8x128xf32> to vector<1x8x128xf32>
    tpu.vector_store %arg9[%c0_232, %c0_233, %c0_234], %470 {strides = array<i32>} : memref<2x8x128xf32, #tpu.memory_space<vmem>>, vector<1x8x128xf32>,
    %c1_235 = arith.constant 1 : index
    %c0_236 = arith.constant 0 : index
    %c0_237 = arith.constant 0 : index
    %471 = vector.load %arg8[%c1_235, %c0_236, %c0_237] : memref<2x8x128xf32, #tpu.memory_space<vmem>>, vector<1x8x128xf32>
    %472 = vector.shape_cast %471 : vector<1x8x128xf32> to vector<8x128xf32>
    %473 = vector.shape_cast %462 : vector<8x128xf32> to vector<1x8x128xf32>
    tpu.vector_store %arg8[%c1_235, %c0_236, %c0_237], %473 {strides = array<i32>} : memref<2x8x128xf32, #tpu.memory_space<vmem>>, vector<1x8x128xf32>,
    %c1_238 = arith.constant 1 : index
    %c0_239 = arith.constant 0 : index
    %c0_240 = arith.constant 0 : index
    %474 = vector.load %arg9[%c1_238, %c0_239, %c0_240] : memref<2x8x128xf32, #tpu.memory_space<vmem>>, vector<1x8x128xf32>
    %475 = vector.shape_cast %474 : vector<1x8x128xf32> to vector<8x128xf32>
    %476 = vector.shape_cast %464 : vector<8x128xf32> to vector<1x8x128xf32>
    tpu.vector_store %arg9[%c1_238, %c0_239, %c0_240], %476 {strides = array<i32>} : memref<2x8x128xf32, #tpu.memory_space<vmem>>, vector<1x8x128xf32>,
    %477 = arith.truncf %409 : vector<8x128xf32> to vector<8x128xbf16>
    %478 = arith.index_cast %c3_i32 : i32 to index
    %c0_241 = arith.constant 0 : index
    %c0_242 = arith.constant 0 : index
    %479 = vector.load %arg5[%478, %c0_241, %c0_242] : memref<8x8x128xbf16, #tpu.memory_space<vmem>>, vector<1x8x128xbf16>
    %480 = vector.shape_cast %479 : vector<1x8x128xbf16> to vector<8x128xbf16>
    %481 = vector.shape_cast %477 : vector<8x128xbf16> to vector<1x8x128xbf16>
    tpu.vector_store %arg5[%478, %c0_241, %c0_242], %481 {strides = array<i32>} : memref<8x8x128xbf16, #tpu.memory_space<vmem>>, vector<1x8x128xbf16>,
    %482 = arith.truncf %462 : vector<8x128xf32> to vector<8x128xbf16>
    %483 = arith.index_cast %410 : i32 to index
    %c0_243 = arith.constant 0 : index
    %c0_244 = arith.constant 0 : index
    %484 = vector.load %arg6[%483, %c0_243, %c0_244] : memref<8x8x128xbf16, #tpu.memory_space<vmem>>, vector<1x8x128xbf16>
    %485 = vector.shape_cast %484 : vector<1x8x128xbf16> to vector<8x128xbf16>
    %486 = vector.shape_cast %482 : vector<8x128xbf16> to vector<1x8x128xbf16>
    tpu.vector_store %arg6[%483, %c0_243, %c0_244], %486 {strides = array<i32>} : memref<8x8x128xbf16, #tpu.memory_space<vmem>>, vector<1x8x128xbf16>,
    %c4_i32 = arith.constant 4 : i32
    %487 = arith.index_cast %c4_i32 : i32 to index
    %c0_245 = arith.constant 0 : index
    %c0_246 = arith.constant 0 : index
    %488 = vector.load %arg2[%487, %c0_245, %c0_246] : memref<8x8x512xbf16, #tpu.memory_space<vmem>>, vector<1x8x512xbf16>
    %489 = vector.shape_cast %488 : vector<1x8x512xbf16> to vector<8x512xbf16>
    %c0_247 = arith.constant 0 : index
    %c0_248 = arith.constant 0 : index
    %c0_249 = arith.constant 0 : index
    %490 = vector.load %arg8[%c0_247, %c0_248, %c0_249] : memref<2x8x128xf32, #tpu.memory_space<vmem>>, vector<1x8x128xf32>
    %491 = vector.shape_cast %490 : vector<1x8x128xf32> to vector<8x128xf32>
    %c0_250 = arith.constant 0 : index
    %c0_251 = arith.constant 0 : index
    %c0_252 = arith.constant 0 : index
    %492 = vector.load %arg9[%c0_250, %c0_251, %c0_252] : memref<2x8x128xf32, #tpu.memory_space<vmem>>, vector<1x8x128xf32>
    %493 = vector.shape_cast %492 : vector<1x8x128xf32> to vector<8x128xf32>
    %c0_253 = arith.constant 0 : index
    %c0_254 = arith.constant 0 : index
    %c0_255 = arith.constant 0 : index
    %494 = vector.load %arg7[%c0_253, %c0_254, %c0_255] : memref<2x128x512xbf16, #tpu.memory_space<vmem>>, vector<1x128x512xbf16>
    %495 = vector.shape_cast %494 : vector<1x128x512xbf16> to vector<128x512xbf16>
    %496 = arith.extf %489 : vector<8x512xbf16> to vector<8x512xf32>
    %497 = arith.truncf %491 : vector<8x128xf32> to vector<8x128xbf16>
    %cst_256 = arith.constant dense<0.000000e+00> : vector<8x512xf32>
    %498 = tpu.matmul %497, %495, %cst_256 {dimension_numbers = #tpu.dot_dimension_numbers<[1], [0], [0], [1], [0, 0, 1, 1], [], []>} : vector<8x128xbf16>, vector<128x512xbf16>, vector<8x512xf32> -> vector<8x512xf32>
    %499 = arith.addf %496, %498 : vector<8x512xf32>
    %500 = vector.extract_strided_slice %499 {offsets = [0, 0], sizes = [8, 128], strides = [1, 1]} : vector<8x512xf32> to vector<8x128xf32>
    %cst_257 = arith.constant 5.000000e-01 : f32
    %501 = vector.broadcast %cst_257 : f32 to vector<8x128xf32>
    %502 = arith.mulf %501, %500 : vector<8x128xf32>
    %503 = math.tanh %502 : vector<8x128xf32>
    %cst_258 = arith.constant 5.000000e-01 : f32
    %504 = vector.broadcast %cst_258 : f32 to vector<8x128xf32>
    %505 = arith.mulf %504, %503 : vector<8x128xf32>
    %cst_259 = arith.constant 5.000000e-01 : f32
    %506 = vector.broadcast %cst_259 : f32 to vector<8x128xf32>
    %507 = arith.addf %505, %506 : vector<8x128xf32>
    %508 = vector.extract_strided_slice %499 {offsets = [0, 128], sizes = [8, 128], strides = [1, 1]} : vector<8x512xf32> to vector<8x128xf32>
    %cst_260 = arith.constant 5.000000e-01 : f32
    %509 = vector.broadcast %cst_260 : f32 to vector<8x128xf32>
    %510 = arith.mulf %509, %508 : vector<8x128xf32>
    %511 = math.tanh %510 : vector<8x128xf32>
    %cst_261 = arith.constant 5.000000e-01 : f32
    %512 = vector.broadcast %cst_261 : f32 to vector<8x128xf32>
    %513 = arith.mulf %512, %511 : vector<8x128xf32>
    %cst_262 = arith.constant 5.000000e-01 : f32
    %514 = vector.broadcast %cst_262 : f32 to vector<8x128xf32>
    %515 = arith.addf %513, %514 : vector<8x128xf32>
    %516 = vector.extract_strided_slice %499 {offsets = [0, 256], sizes = [8, 128], strides = [1, 1]} : vector<8x512xf32> to vector<8x128xf32>
    %517 = math.tanh %516 : vector<8x128xf32>
    %518 = vector.extract_strided_slice %499 {offsets = [0, 384], sizes = [8, 128], strides = [1, 1]} : vector<8x512xf32> to vector<8x128xf32>
    %cst_263 = arith.constant 5.000000e-01 : f32
    %519 = vector.broadcast %cst_263 : f32 to vector<8x128xf32>
    %520 = arith.mulf %519, %518 : vector<8x128xf32>
    %521 = math.tanh %520 : vector<8x128xf32>
    %cst_264 = arith.constant 5.000000e-01 : f32
    %522 = vector.broadcast %cst_264 : f32 to vector<8x128xf32>
    %523 = arith.mulf %522, %521 : vector<8x128xf32>
    %cst_265 = arith.constant 5.000000e-01 : f32
    %524 = vector.broadcast %cst_265 : f32 to vector<8x128xf32>
    %525 = arith.addf %523, %524 : vector<8x128xf32>
    %526 = arith.mulf %515, %493 : vector<8x128xf32>
    %527 = arith.mulf %507, %517 : vector<8x128xf32>
    %528 = arith.addf %526, %527 : vector<8x128xf32>
    %529 = math.tanh %528 : vector<8x128xf32>
    %530 = arith.mulf %525, %529 : vector<8x128xf32>
    %c7_i32_266 = arith.constant 7 : i32
    %531 = arith.subi %c7_i32_266, %c4_i32 : i32
    %532 = arith.index_cast %531 : i32 to index
    %c0_267 = arith.constant 0 : index
    %c0_268 = arith.constant 0 : index
    %533 = vector.load %arg3[%532, %c0_267, %c0_268] : memref<8x8x512xbf16, #tpu.memory_space<vmem>>, vector<1x8x512xbf16>
    %534 = vector.shape_cast %533 : vector<1x8x512xbf16> to vector<8x512xbf16>
    %c1_269 = arith.constant 1 : index
    %c0_270 = arith.constant 0 : index
    %c0_271 = arith.constant 0 : index
    %535 = vector.load %arg8[%c1_269, %c0_270, %c0_271] : memref<2x8x128xf32, #tpu.memory_space<vmem>>, vector<1x8x128xf32>
    %536 = vector.shape_cast %535 : vector<1x8x128xf32> to vector<8x128xf32>
    %c1_272 = arith.constant 1 : index
    %c0_273 = arith.constant 0 : index
    %c0_274 = arith.constant 0 : index
    %537 = vector.load %arg9[%c1_272, %c0_273, %c0_274] : memref<2x8x128xf32, #tpu.memory_space<vmem>>, vector<1x8x128xf32>
    %538 = vector.shape_cast %537 : vector<1x8x128xf32> to vector<8x128xf32>
    %c1_275 = arith.constant 1 : index
    %c0_276 = arith.constant 0 : index
    %c0_277 = arith.constant 0 : index
    %539 = vector.load %arg7[%c1_275, %c0_276, %c0_277] : memref<2x128x512xbf16, #tpu.memory_space<vmem>>, vector<1x128x512xbf16>
    %540 = vector.shape_cast %539 : vector<1x128x512xbf16> to vector<128x512xbf16>
    %541 = arith.extf %534 : vector<8x512xbf16> to vector<8x512xf32>
    %542 = arith.truncf %536 : vector<8x128xf32> to vector<8x128xbf16>
    %cst_278 = arith.constant dense<0.000000e+00> : vector<8x512xf32>
    %543 = tpu.matmul %542, %540, %cst_278 {dimension_numbers = #tpu.dot_dimension_numbers<[1], [0], [0], [1], [0, 0, 1, 1], [], []>} : vector<8x128xbf16>, vector<128x512xbf16>, vector<8x512xf32> -> vector<8x512xf32>
    %544 = arith.addf %541, %543 : vector<8x512xf32>
    %545 = vector.extract_strided_slice %544 {offsets = [0, 0], sizes = [8, 128], strides = [1, 1]} : vector<8x512xf32> to vector<8x128xf32>
    %cst_279 = arith.constant 5.000000e-01 : f32
    %546 = vector.broadcast %cst_279 : f32 to vector<8x128xf32>
    %547 = arith.mulf %546, %545 : vector<8x128xf32>
    %548 = math.tanh %547 : vector<8x128xf32>
    %cst_280 = arith.constant 5.000000e-01 : f32
    %549 = vector.broadcast %cst_280 : f32 to vector<8x128xf32>
    %550 = arith.mulf %549, %548 : vector<8x128xf32>
    %cst_281 = arith.constant 5.000000e-01 : f32
    %551 = vector.broadcast %cst_281 : f32 to vector<8x128xf32>
    %552 = arith.addf %550, %551 : vector<8x128xf32>
    %553 = vector.extract_strided_slice %544 {offsets = [0, 128], sizes = [8, 128], strides = [1, 1]} : vector<8x512xf32> to vector<8x128xf32>
    %cst_282 = arith.constant 5.000000e-01 : f32
    %554 = vector.broadcast %cst_282 : f32 to vector<8x128xf32>
    %555 = arith.mulf %554, %553 : vector<8x128xf32>
    %556 = math.tanh %555 : vector<8x128xf32>
    %cst_283 = arith.constant 5.000000e-01 : f32
    %557 = vector.broadcast %cst_283 : f32 to vector<8x128xf32>
    %558 = arith.mulf %557, %556 : vector<8x128xf32>
    %cst_284 = arith.constant 5.000000e-01 : f32
    %559 = vector.broadcast %cst_284 : f32 to vector<8x128xf32>
    %560 = arith.addf %558, %559 : vector<8x128xf32>
    %561 = vector.extract_strided_slice %544 {offsets = [0, 256], sizes = [8, 128], strides = [1, 1]} : vector<8x512xf32> to vector<8x128xf32>
    %562 = math.tanh %561 : vector<8x128xf32>
    %563 = vector.extract_strided_slice %544 {offsets = [0, 384], sizes = [8, 128], strides = [1, 1]} : vector<8x512xf32> to vector<8x128xf32>
    %cst_285 = arith.constant 5.000000e-01 : f32
    %564 = vector.broadcast %cst_285 : f32 to vector<8x128xf32>
    %565 = arith.mulf %564, %563 : vector<8x128xf32>
    %566 = math.tanh %565 : vector<8x128xf32>
    %cst_286 = arith.constant 5.000000e-01 : f32
    %567 = vector.broadcast %cst_286 : f32 to vector<8x128xf32>
    %568 = arith.mulf %567, %566 : vector<8x128xf32>
    %cst_287 = arith.constant 5.000000e-01 : f32
    %569 = vector.broadcast %cst_287 : f32 to vector<8x128xf32>
    %570 = arith.addf %568, %569 : vector<8x128xf32>
    %571 = arith.mulf %560, %538 : vector<8x128xf32>
    %572 = arith.mulf %552, %562 : vector<8x128xf32>
    %573 = arith.addf %571, %572 : vector<8x128xf32>
    %574 = math.tanh %573 : vector<8x128xf32>
    %575 = arith.mulf %570, %574 : vector<8x128xf32>
    %c0_i32_288 = arith.constant 0 : i32
    %576 = arith.subi %c0_i32_288, %arg1 : i32
    %c8_i32_289 = arith.constant 8 : i32
    %577 = arith.muli %576, %c8_i32_289 : i32
    %578 = arith.addi %577, %531 : i32
    %c8_i32_290 = arith.constant 8 : i32
    %579 = arith.cmpi slt, %578, %c8_i32_290 : i32
    %580 = arith.extui %579 : i1 to i32
    %581 = arith.sitofp %580 : i32 to f32
    %582 = vector.broadcast %581 : f32 to vector<8x128xf32>
    %583 = arith.mulf %575, %582 : vector<8x128xf32>
    %584 = vector.broadcast %581 : f32 to vector<8x128xf32>
    %585 = arith.mulf %573, %584 : vector<8x128xf32>
    %c0_291 = arith.constant 0 : index
    %c0_292 = arith.constant 0 : index
    %c0_293 = arith.constant 0 : index
    %586 = vector.load %arg8[%c0_291, %c0_292, %c0_293] : memref<2x8x128xf32, #tpu.memory_space<vmem>>, vector<1x8x128xf32>
    %587 = vector.shape_cast %586 : vector<1x8x128xf32> to vector<8x128xf32>
    %588 = vector.shape_cast %530 : vector<8x128xf32> to vector<1x8x128xf32>
    tpu.vector_store %arg8[%c0_291, %c0_292, %c0_293], %588 {strides = array<i32>} : memref<2x8x128xf32, #tpu.memory_space<vmem>>, vector<1x8x128xf32>,
    %c0_294 = arith.constant 0 : index
    %c0_295 = arith.constant 0 : index
    %c0_296 = arith.constant 0 : index
    %589 = vector.load %arg9[%c0_294, %c0_295, %c0_296] : memref<2x8x128xf32, #tpu.memory_space<vmem>>, vector<1x8x128xf32>
    %590 = vector.shape_cast %589 : vector<1x8x128xf32> to vector<8x128xf32>
    %591 = vector.shape_cast %528 : vector<8x128xf32> to vector<1x8x128xf32>
    tpu.vector_store %arg9[%c0_294, %c0_295, %c0_296], %591 {strides = array<i32>} : memref<2x8x128xf32, #tpu.memory_space<vmem>>, vector<1x8x128xf32>,
    %c1_297 = arith.constant 1 : index
    %c0_298 = arith.constant 0 : index
    %c0_299 = arith.constant 0 : index
    %592 = vector.load %arg8[%c1_297, %c0_298, %c0_299] : memref<2x8x128xf32, #tpu.memory_space<vmem>>, vector<1x8x128xf32>
    %593 = vector.shape_cast %592 : vector<1x8x128xf32> to vector<8x128xf32>
    %594 = vector.shape_cast %583 : vector<8x128xf32> to vector<1x8x128xf32>
    tpu.vector_store %arg8[%c1_297, %c0_298, %c0_299], %594 {strides = array<i32>} : memref<2x8x128xf32, #tpu.memory_space<vmem>>, vector<1x8x128xf32>,
    %c1_300 = arith.constant 1 : index
    %c0_301 = arith.constant 0 : index
    %c0_302 = arith.constant 0 : index
    %595 = vector.load %arg9[%c1_300, %c0_301, %c0_302] : memref<2x8x128xf32, #tpu.memory_space<vmem>>, vector<1x8x128xf32>
    %596 = vector.shape_cast %595 : vector<1x8x128xf32> to vector<8x128xf32>
    %597 = vector.shape_cast %585 : vector<8x128xf32> to vector<1x8x128xf32>
    tpu.vector_store %arg9[%c1_300, %c0_301, %c0_302], %597 {strides = array<i32>} : memref<2x8x128xf32, #tpu.memory_space<vmem>>, vector<1x8x128xf32>,
    %598 = arith.truncf %530 : vector<8x128xf32> to vector<8x128xbf16>
    %599 = arith.index_cast %c4_i32 : i32 to index
    %c0_303 = arith.constant 0 : index
    %c0_304 = arith.constant 0 : index
    %600 = vector.load %arg5[%599, %c0_303, %c0_304] : memref<8x8x128xbf16, #tpu.memory_space<vmem>>, vector<1x8x128xbf16>
    %601 = vector.shape_cast %600 : vector<1x8x128xbf16> to vector<8x128xbf16>
    %602 = vector.shape_cast %598 : vector<8x128xbf16> to vector<1x8x128xbf16>
    tpu.vector_store %arg5[%599, %c0_303, %c0_304], %602 {strides = array<i32>} : memref<8x8x128xbf16, #tpu.memory_space<vmem>>, vector<1x8x128xbf16>,
    %603 = arith.truncf %583 : vector<8x128xf32> to vector<8x128xbf16>
    %604 = arith.index_cast %531 : i32 to index
    %c0_305 = arith.constant 0 : index
    %c0_306 = arith.constant 0 : index
    %605 = vector.load %arg6[%604, %c0_305, %c0_306] : memref<8x8x128xbf16, #tpu.memory_space<vmem>>, vector<1x8x128xbf16>
    %606 = vector.shape_cast %605 : vector<1x8x128xbf16> to vector<8x128xbf16>
    %607 = vector.shape_cast %603 : vector<8x128xbf16> to vector<1x8x128xbf16>
    tpu.vector_store %arg6[%604, %c0_305, %c0_306], %607 {strides = array<i32>} : memref<8x8x128xbf16, #tpu.memory_space<vmem>>, vector<1x8x128xbf16>,
    %c5_i32 = arith.constant 5 : i32
    %608 = arith.index_cast %c5_i32 : i32 to index
    %c0_307 = arith.constant 0 : index
    %c0_308 = arith.constant 0 : index
    %609 = vector.load %arg2[%608, %c0_307, %c0_308] : memref<8x8x512xbf16, #tpu.memory_space<vmem>>, vector<1x8x512xbf16>
    %610 = vector.shape_cast %609 : vector<1x8x512xbf16> to vector<8x512xbf16>
    %c0_309 = arith.constant 0 : index
    %c0_310 = arith.constant 0 : index
    %c0_311 = arith.constant 0 : index
    %611 = vector.load %arg8[%c0_309, %c0_310, %c0_311] : memref<2x8x128xf32, #tpu.memory_space<vmem>>, vector<1x8x128xf32>
    %612 = vector.shape_cast %611 : vector<1x8x128xf32> to vector<8x128xf32>
    %c0_312 = arith.constant 0 : index
    %c0_313 = arith.constant 0 : index
    %c0_314 = arith.constant 0 : index
    %613 = vector.load %arg9[%c0_312, %c0_313, %c0_314] : memref<2x8x128xf32, #tpu.memory_space<vmem>>, vector<1x8x128xf32>
    %614 = vector.shape_cast %613 : vector<1x8x128xf32> to vector<8x128xf32>
    %c0_315 = arith.constant 0 : index
    %c0_316 = arith.constant 0 : index
    %c0_317 = arith.constant 0 : index
    %615 = vector.load %arg7[%c0_315, %c0_316, %c0_317] : memref<2x128x512xbf16, #tpu.memory_space<vmem>>, vector<1x128x512xbf16>
    %616 = vector.shape_cast %615 : vector<1x128x512xbf16> to vector<128x512xbf16>
    %617 = arith.extf %610 : vector<8x512xbf16> to vector<8x512xf32>
    %618 = arith.truncf %612 : vector<8x128xf32> to vector<8x128xbf16>
    %cst_318 = arith.constant dense<0.000000e+00> : vector<8x512xf32>
    %619 = tpu.matmul %618, %616, %cst_318 {dimension_numbers = #tpu.dot_dimension_numbers<[1], [0], [0], [1], [0, 0, 1, 1], [], []>} : vector<8x128xbf16>, vector<128x512xbf16>, vector<8x512xf32> -> vector<8x512xf32>
    %620 = arith.addf %617, %619 : vector<8x512xf32>
    %621 = vector.extract_strided_slice %620 {offsets = [0, 0], sizes = [8, 128], strides = [1, 1]} : vector<8x512xf32> to vector<8x128xf32>
    %cst_319 = arith.constant 5.000000e-01 : f32
    %622 = vector.broadcast %cst_319 : f32 to vector<8x128xf32>
    %623 = arith.mulf %622, %621 : vector<8x128xf32>
    %624 = math.tanh %623 : vector<8x128xf32>
    %cst_320 = arith.constant 5.000000e-01 : f32
    %625 = vector.broadcast %cst_320 : f32 to vector<8x128xf32>
    %626 = arith.mulf %625, %624 : vector<8x128xf32>
    %cst_321 = arith.constant 5.000000e-01 : f32
    %627 = vector.broadcast %cst_321 : f32 to vector<8x128xf32>
    %628 = arith.addf %626, %627 : vector<8x128xf32>
    %629 = vector.extract_strided_slice %620 {offsets = [0, 128], sizes = [8, 128], strides = [1, 1]} : vector<8x512xf32> to vector<8x128xf32>
    %cst_322 = arith.constant 5.000000e-01 : f32
    %630 = vector.broadcast %cst_322 : f32 to vector<8x128xf32>
    %631 = arith.mulf %630, %629 : vector<8x128xf32>
    %632 = math.tanh %631 : vector<8x128xf32>
    %cst_323 = arith.constant 5.000000e-01 : f32
    %633 = vector.broadcast %cst_323 : f32 to vector<8x128xf32>
    %634 = arith.mulf %633, %632 : vector<8x128xf32>
    %cst_324 = arith.constant 5.000000e-01 : f32
    %635 = vector.broadcast %cst_324 : f32 to vector<8x128xf32>
    %636 = arith.addf %634, %635 : vector<8x128xf32>
    %637 = vector.extract_strided_slice %620 {offsets = [0, 256], sizes = [8, 128], strides = [1, 1]} : vector<8x512xf32> to vector<8x128xf32>
    %638 = math.tanh %637 : vector<8x128xf32>
    %639 = vector.extract_strided_slice %620 {offsets = [0, 384], sizes = [8, 128], strides = [1, 1]} : vector<8x512xf32> to vector<8x128xf32>
    %cst_325 = arith.constant 5.000000e-01 : f32
    %640 = vector.broadcast %cst_325 : f32 to vector<8x128xf32>
    %641 = arith.mulf %640, %639 : vector<8x128xf32>
    %642 = math.tanh %641 : vector<8x128xf32>
    %cst_326 = arith.constant 5.000000e-01 : f32
    %643 = vector.broadcast %cst_326 : f32 to vector<8x128xf32>
    %644 = arith.mulf %643, %642 : vector<8x128xf32>
    %cst_327 = arith.constant 5.000000e-01 : f32
    %645 = vector.broadcast %cst_327 : f32 to vector<8x128xf32>
    %646 = arith.addf %644, %645 : vector<8x128xf32>
    %647 = arith.mulf %636, %614 : vector<8x128xf32>
    %648 = arith.mulf %628, %638 : vector<8x128xf32>
    %649 = arith.addf %647, %648 : vector<8x128xf32>
    %650 = math.tanh %649 : vector<8x128xf32>
    %651 = arith.mulf %646, %650 : vector<8x128xf32>
    %c7_i32_328 = arith.constant 7 : i32
    %652 = arith.subi %c7_i32_328, %c5_i32 : i32
    %653 = arith.index_cast %652 : i32 to index
    %c0_329 = arith.constant 0 : index
    %c0_330 = arith.constant 0 : index
    %654 = vector.load %arg3[%653, %c0_329, %c0_330] : memref<8x8x512xbf16, #tpu.memory_space<vmem>>, vector<1x8x512xbf16>
    %655 = vector.shape_cast %654 : vector<1x8x512xbf16> to vector<8x512xbf16>
    %c1_331 = arith.constant 1 : index
    %c0_332 = arith.constant 0 : index
    %c0_333 = arith.constant 0 : index
    %656 = vector.load %arg8[%c1_331, %c0_332, %c0_333] : memref<2x8x128xf32, #tpu.memory_space<vmem>>, vector<1x8x128xf32>
    %657 = vector.shape_cast %656 : vector<1x8x128xf32> to vector<8x128xf32>
    %c1_334 = arith.constant 1 : index
    %c0_335 = arith.constant 0 : index
    %c0_336 = arith.constant 0 : index
    %658 = vector.load %arg9[%c1_334, %c0_335, %c0_336] : memref<2x8x128xf32, #tpu.memory_space<vmem>>, vector<1x8x128xf32>
    %659 = vector.shape_cast %658 : vector<1x8x128xf32> to vector<8x128xf32>
    %c1_337 = arith.constant 1 : index
    %c0_338 = arith.constant 0 : index
    %c0_339 = arith.constant 0 : index
    %660 = vector.load %arg7[%c1_337, %c0_338, %c0_339] : memref<2x128x512xbf16, #tpu.memory_space<vmem>>, vector<1x128x512xbf16>
    %661 = vector.shape_cast %660 : vector<1x128x512xbf16> to vector<128x512xbf16>
    %662 = arith.extf %655 : vector<8x512xbf16> to vector<8x512xf32>
    %663 = arith.truncf %657 : vector<8x128xf32> to vector<8x128xbf16>
    %cst_340 = arith.constant dense<0.000000e+00> : vector<8x512xf32>
    %664 = tpu.matmul %663, %661, %cst_340 {dimension_numbers = #tpu.dot_dimension_numbers<[1], [0], [0], [1], [0, 0, 1, 1], [], []>} : vector<8x128xbf16>, vector<128x512xbf16>, vector<8x512xf32> -> vector<8x512xf32>
    %665 = arith.addf %662, %664 : vector<8x512xf32>
    %666 = vector.extract_strided_slice %665 {offsets = [0, 0], sizes = [8, 128], strides = [1, 1]} : vector<8x512xf32> to vector<8x128xf32>
    %cst_341 = arith.constant 5.000000e-01 : f32
    %667 = vector.broadcast %cst_341 : f32 to vector<8x128xf32>
    %668 = arith.mulf %667, %666 : vector<8x128xf32>
    %669 = math.tanh %668 : vector<8x128xf32>
    %cst_342 = arith.constant 5.000000e-01 : f32
    %670 = vector.broadcast %cst_342 : f32 to vector<8x128xf32>
    %671 = arith.mulf %670, %669 : vector<8x128xf32>
    %cst_343 = arith.constant 5.000000e-01 : f32
    %672 = vector.broadcast %cst_343 : f32 to vector<8x128xf32>
    %673 = arith.addf %671, %672 : vector<8x128xf32>
    %674 = vector.extract_strided_slice %665 {offsets = [0, 128], sizes = [8, 128], strides = [1, 1]} : vector<8x512xf32> to vector<8x128xf32>
    %cst_344 = arith.constant 5.000000e-01 : f32
    %675 = vector.broadcast %cst_344 : f32 to vector<8x128xf32>
    %676 = arith.mulf %675, %674 : vector<8x128xf32>
    %677 = math.tanh %676 : vector<8x128xf32>
    %cst_345 = arith.constant 5.000000e-01 : f32
    %678 = vector.broadcast %cst_345 : f32 to vector<8x128xf32>
    %679 = arith.mulf %678, %677 : vector<8x128xf32>
    %cst_346 = arith.constant 5.000000e-01 : f32
    %680 = vector.broadcast %cst_346 : f32 to vector<8x128xf32>
    %681 = arith.addf %679, %680 : vector<8x128xf32>
    %682 = vector.extract_strided_slice %665 {offsets = [0, 256], sizes = [8, 128], strides = [1, 1]} : vector<8x512xf32> to vector<8x128xf32>
    %683 = math.tanh %682 : vector<8x128xf32>
    %684 = vector.extract_strided_slice %665 {offsets = [0, 384], sizes = [8, 128], strides = [1, 1]} : vector<8x512xf32> to vector<8x128xf32>
    %cst_347 = arith.constant 5.000000e-01 : f32
    %685 = vector.broadcast %cst_347 : f32 to vector<8x128xf32>
    %686 = arith.mulf %685, %684 : vector<8x128xf32>
    %687 = math.tanh %686 : vector<8x128xf32>
    %cst_348 = arith.constant 5.000000e-01 : f32
    %688 = vector.broadcast %cst_348 : f32 to vector<8x128xf32>
    %689 = arith.mulf %688, %687 : vector<8x128xf32>
    %cst_349 = arith.constant 5.000000e-01 : f32
    %690 = vector.broadcast %cst_349 : f32 to vector<8x128xf32>
    %691 = arith.addf %689, %690 : vector<8x128xf32>
    %692 = arith.mulf %681, %659 : vector<8x128xf32>
    %693 = arith.mulf %673, %683 : vector<8x128xf32>
    %694 = arith.addf %692, %693 : vector<8x128xf32>
    %695 = math.tanh %694 : vector<8x128xf32>
    %696 = arith.mulf %691, %695 : vector<8x128xf32>
    %c0_i32_350 = arith.constant 0 : i32
    %697 = arith.subi %c0_i32_350, %arg1 : i32
    %c8_i32_351 = arith.constant 8 : i32
    %698 = arith.muli %697, %c8_i32_351 : i32
    %699 = arith.addi %698, %652 : i32
    %c8_i32_352 = arith.constant 8 : i32
    %700 = arith.cmpi slt, %699, %c8_i32_352 : i32
    %701 = arith.extui %700 : i1 to i32
    %702 = arith.sitofp %701 : i32 to f32
    %703 = vector.broadcast %702 : f32 to vector<8x128xf32>
    %704 = arith.mulf %696, %703 : vector<8x128xf32>
    %705 = vector.broadcast %702 : f32 to vector<8x128xf32>
    %706 = arith.mulf %694, %705 : vector<8x128xf32>
    %c0_353 = arith.constant 0 : index
    %c0_354 = arith.constant 0 : index
    %c0_355 = arith.constant 0 : index
    %707 = vector.load %arg8[%c0_353, %c0_354, %c0_355] : memref<2x8x128xf32, #tpu.memory_space<vmem>>, vector<1x8x128xf32>
    %708 = vector.shape_cast %707 : vector<1x8x128xf32> to vector<8x128xf32>
    %709 = vector.shape_cast %651 : vector<8x128xf32> to vector<1x8x128xf32>
    tpu.vector_store %arg8[%c0_353, %c0_354, %c0_355], %709 {strides = array<i32>} : memref<2x8x128xf32, #tpu.memory_space<vmem>>, vector<1x8x128xf32>,
    %c0_356 = arith.constant 0 : index
    %c0_357 = arith.constant 0 : index
    %c0_358 = arith.constant 0 : index
    %710 = vector.load %arg9[%c0_356, %c0_357, %c0_358] : memref<2x8x128xf32, #tpu.memory_space<vmem>>, vector<1x8x128xf32>
    %711 = vector.shape_cast %710 : vector<1x8x128xf32> to vector<8x128xf32>
    %712 = vector.shape_cast %649 : vector<8x128xf32> to vector<1x8x128xf32>
    tpu.vector_store %arg9[%c0_356, %c0_357, %c0_358], %712 {strides = array<i32>} : memref<2x8x128xf32, #tpu.memory_space<vmem>>, vector<1x8x128xf32>,
    %c1_359 = arith.constant 1 : index
    %c0_360 = arith.constant 0 : index
    %c0_361 = arith.constant 0 : index
    %713 = vector.load %arg8[%c1_359, %c0_360, %c0_361] : memref<2x8x128xf32, #tpu.memory_space<vmem>>, vector<1x8x128xf32>
    %714 = vector.shape_cast %713 : vector<1x8x128xf32> to vector<8x128xf32>
    %715 = vector.shape_cast %704 : vector<8x128xf32> to vector<1x8x128xf32>
    tpu.vector_store %arg8[%c1_359, %c0_360, %c0_361], %715 {strides = array<i32>} : memref<2x8x128xf32, #tpu.memory_space<vmem>>, vector<1x8x128xf32>,
    %c1_362 = arith.constant 1 : index
    %c0_363 = arith.constant 0 : index
    %c0_364 = arith.constant 0 : index
    %716 = vector.load %arg9[%c1_362, %c0_363, %c0_364] : memref<2x8x128xf32, #tpu.memory_space<vmem>>, vector<1x8x128xf32>
    %717 = vector.shape_cast %716 : vector<1x8x128xf32> to vector<8x128xf32>
    %718 = vector.shape_cast %706 : vector<8x128xf32> to vector<1x8x128xf32>
    tpu.vector_store %arg9[%c1_362, %c0_363, %c0_364], %718 {strides = array<i32>} : memref<2x8x128xf32, #tpu.memory_space<vmem>>, vector<1x8x128xf32>,
    %719 = arith.truncf %651 : vector<8x128xf32> to vector<8x128xbf16>
    %720 = arith.index_cast %c5_i32 : i32 to index
    %c0_365 = arith.constant 0 : index
    %c0_366 = arith.constant 0 : index
    %721 = vector.load %arg5[%720, %c0_365, %c0_366] : memref<8x8x128xbf16, #tpu.memory_space<vmem>>, vector<1x8x128xbf16>
    %722 = vector.shape_cast %721 : vector<1x8x128xbf16> to vector<8x128xbf16>
    %723 = vector.shape_cast %719 : vector<8x128xbf16> to vector<1x8x128xbf16>
    tpu.vector_store %arg5[%720, %c0_365, %c0_366], %723 {strides = array<i32>} : memref<8x8x128xbf16, #tpu.memory_space<vmem>>, vector<1x8x128xbf16>,
    %724 = arith.truncf %704 : vector<8x128xf32> to vector<8x128xbf16>
    %725 = arith.index_cast %652 : i32 to index
    %c0_367 = arith.constant 0 : index
    %c0_368 = arith.constant 0 : index
    %726 = vector.load %arg6[%725, %c0_367, %c0_368] : memref<8x8x128xbf16, #tpu.memory_space<vmem>>, vector<1x8x128xbf16>
    %727 = vector.shape_cast %726 : vector<1x8x128xbf16> to vector<8x128xbf16>
    %728 = vector.shape_cast %724 : vector<8x128xbf16> to vector<1x8x128xbf16>
    tpu.vector_store %arg6[%725, %c0_367, %c0_368], %728 {strides = array<i32>} : memref<8x8x128xbf16, #tpu.memory_space<vmem>>, vector<1x8x128xbf16>,
    %c6_i32 = arith.constant 6 : i32
    %729 = arith.index_cast %c6_i32 : i32 to index
    %c0_369 = arith.constant 0 : index
    %c0_370 = arith.constant 0 : index
    %730 = vector.load %arg2[%729, %c0_369, %c0_370] : memref<8x8x512xbf16, #tpu.memory_space<vmem>>, vector<1x8x512xbf16>
    %731 = vector.shape_cast %730 : vector<1x8x512xbf16> to vector<8x512xbf16>
    %c0_371 = arith.constant 0 : index
    %c0_372 = arith.constant 0 : index
    %c0_373 = arith.constant 0 : index
    %732 = vector.load %arg8[%c0_371, %c0_372, %c0_373] : memref<2x8x128xf32, #tpu.memory_space<vmem>>, vector<1x8x128xf32>
    %733 = vector.shape_cast %732 : vector<1x8x128xf32> to vector<8x128xf32>
    %c0_374 = arith.constant 0 : index
    %c0_375 = arith.constant 0 : index
    %c0_376 = arith.constant 0 : index
    %734 = vector.load %arg9[%c0_374, %c0_375, %c0_376] : memref<2x8x128xf32, #tpu.memory_space<vmem>>, vector<1x8x128xf32>
    %735 = vector.shape_cast %734 : vector<1x8x128xf32> to vector<8x128xf32>
    %c0_377 = arith.constant 0 : index
    %c0_378 = arith.constant 0 : index
    %c0_379 = arith.constant 0 : index
    %736 = vector.load %arg7[%c0_377, %c0_378, %c0_379] : memref<2x128x512xbf16, #tpu.memory_space<vmem>>, vector<1x128x512xbf16>
    %737 = vector.shape_cast %736 : vector<1x128x512xbf16> to vector<128x512xbf16>
    %738 = arith.extf %731 : vector<8x512xbf16> to vector<8x512xf32>
    %739 = arith.truncf %733 : vector<8x128xf32> to vector<8x128xbf16>
    %cst_380 = arith.constant dense<0.000000e+00> : vector<8x512xf32>
    %740 = tpu.matmul %739, %737, %cst_380 {dimension_numbers = #tpu.dot_dimension_numbers<[1], [0], [0], [1], [0, 0, 1, 1], [], []>} : vector<8x128xbf16>, vector<128x512xbf16>, vector<8x512xf32> -> vector<8x512xf32>
    %741 = arith.addf %738, %740 : vector<8x512xf32>
    %742 = vector.extract_strided_slice %741 {offsets = [0, 0], sizes = [8, 128], strides = [1, 1]} : vector<8x512xf32> to vector<8x128xf32>
    %cst_381 = arith.constant 5.000000e-01 : f32
    %743 = vector.broadcast %cst_381 : f32 to vector<8x128xf32>
    %744 = arith.mulf %743, %742 : vector<8x128xf32>
    %745 = math.tanh %744 : vector<8x128xf32>
    %cst_382 = arith.constant 5.000000e-01 : f32
    %746 = vector.broadcast %cst_382 : f32 to vector<8x128xf32>
    %747 = arith.mulf %746, %745 : vector<8x128xf32>
    %cst_383 = arith.constant 5.000000e-01 : f32
    %748 = vector.broadcast %cst_383 : f32 to vector<8x128xf32>
    %749 = arith.addf %747, %748 : vector<8x128xf32>
    %750 = vector.extract_strided_slice %741 {offsets = [0, 128], sizes = [8, 128], strides = [1, 1]} : vector<8x512xf32> to vector<8x128xf32>
    %cst_384 = arith.constant 5.000000e-01 : f32
    %751 = vector.broadcast %cst_384 : f32 to vector<8x128xf32>
    %752 = arith.mulf %751, %750 : vector<8x128xf32>
    %753 = math.tanh %752 : vector<8x128xf32>
    %cst_385 = arith.constant 5.000000e-01 : f32
    %754 = vector.broadcast %cst_385 : f32 to vector<8x128xf32>
    %755 = arith.mulf %754, %753 : vector<8x128xf32>
    %cst_386 = arith.constant 5.000000e-01 : f32
    %756 = vector.broadcast %cst_386 : f32 to vector<8x128xf32>
    %757 = arith.addf %755, %756 : vector<8x128xf32>
    %758 = vector.extract_strided_slice %741 {offsets = [0, 256], sizes = [8, 128], strides = [1, 1]} : vector<8x512xf32> to vector<8x128xf32>
    %759 = math.tanh %758 : vector<8x128xf32>
    %760 = vector.extract_strided_slice %741 {offsets = [0, 384], sizes = [8, 128], strides = [1, 1]} : vector<8x512xf32> to vector<8x128xf32>
    %cst_387 = arith.constant 5.000000e-01 : f32
    %761 = vector.broadcast %cst_387 : f32 to vector<8x128xf32>
    %762 = arith.mulf %761, %760 : vector<8x128xf32>
    %763 = math.tanh %762 : vector<8x128xf32>
    %cst_388 = arith.constant 5.000000e-01 : f32
    %764 = vector.broadcast %cst_388 : f32 to vector<8x128xf32>
    %765 = arith.mulf %764, %763 : vector<8x128xf32>
    %cst_389 = arith.constant 5.000000e-01 : f32
    %766 = vector.broadcast %cst_389 : f32 to vector<8x128xf32>
    %767 = arith.addf %765, %766 : vector<8x128xf32>
    %768 = arith.mulf %757, %735 : vector<8x128xf32>
    %769 = arith.mulf %749, %759 : vector<8x128xf32>
    %770 = arith.addf %768, %769 : vector<8x128xf32>
    %771 = math.tanh %770 : vector<8x128xf32>
    %772 = arith.mulf %767, %771 : vector<8x128xf32>
    %c7_i32_390 = arith.constant 7 : i32
    %773 = arith.subi %c7_i32_390, %c6_i32 : i32
    %774 = arith.index_cast %773 : i32 to index
    %c0_391 = arith.constant 0 : index
    %c0_392 = arith.constant 0 : index
    %775 = vector.load %arg3[%774, %c0_391, %c0_392] : memref<8x8x512xbf16, #tpu.memory_space<vmem>>, vector<1x8x512xbf16>
    %776 = vector.shape_cast %775 : vector<1x8x512xbf16> to vector<8x512xbf16>
    %c1_393 = arith.constant 1 : index
    %c0_394 = arith.constant 0 : index
    %c0_395 = arith.constant 0 : index
    %777 = vector.load %arg8[%c1_393, %c0_394, %c0_395] : memref<2x8x128xf32, #tpu.memory_space<vmem>>, vector<1x8x128xf32>
    %778 = vector.shape_cast %777 : vector<1x8x128xf32> to vector<8x128xf32>
    %c1_396 = arith.constant 1 : index
    %c0_397 = arith.constant 0 : index
    %c0_398 = arith.constant 0 : index
    %779 = vector.load %arg9[%c1_396, %c0_397, %c0_398] : memref<2x8x128xf32, #tpu.memory_space<vmem>>, vector<1x8x128xf32>
    %780 = vector.shape_cast %779 : vector<1x8x128xf32> to vector<8x128xf32>
    %c1_399 = arith.constant 1 : index
    %c0_400 = arith.constant 0 : index
    %c0_401 = arith.constant 0 : index
    %781 = vector.load %arg7[%c1_399, %c0_400, %c0_401] : memref<2x128x512xbf16, #tpu.memory_space<vmem>>, vector<1x128x512xbf16>
    %782 = vector.shape_cast %781 : vector<1x128x512xbf16> to vector<128x512xbf16>
    %783 = arith.extf %776 : vector<8x512xbf16> to vector<8x512xf32>
    %784 = arith.truncf %778 : vector<8x128xf32> to vector<8x128xbf16>
    %cst_402 = arith.constant dense<0.000000e+00> : vector<8x512xf32>
    %785 = tpu.matmul %784, %782, %cst_402 {dimension_numbers = #tpu.dot_dimension_numbers<[1], [0], [0], [1], [0, 0, 1, 1], [], []>} : vector<8x128xbf16>, vector<128x512xbf16>, vector<8x512xf32> -> vector<8x512xf32>
    %786 = arith.addf %783, %785 : vector<8x512xf32>
    %787 = vector.extract_strided_slice %786 {offsets = [0, 0], sizes = [8, 128], strides = [1, 1]} : vector<8x512xf32> to vector<8x128xf32>
    %cst_403 = arith.constant 5.000000e-01 : f32
    %788 = vector.broadcast %cst_403 : f32 to vector<8x128xf32>
    %789 = arith.mulf %788, %787 : vector<8x128xf32>
    %790 = math.tanh %789 : vector<8x128xf32>
    %cst_404 = arith.constant 5.000000e-01 : f32
    %791 = vector.broadcast %cst_404 : f32 to vector<8x128xf32>
    %792 = arith.mulf %791, %790 : vector<8x128xf32>
    %cst_405 = arith.constant 5.000000e-01 : f32
    %793 = vector.broadcast %cst_405 : f32 to vector<8x128xf32>
    %794 = arith.addf %792, %793 : vector<8x128xf32>
    %795 = vector.extract_strided_slice %786 {offsets = [0, 128], sizes = [8, 128], strides = [1, 1]} : vector<8x512xf32> to vector<8x128xf32>
    %cst_406 = arith.constant 5.000000e-01 : f32
    %796 = vector.broadcast %cst_406 : f32 to vector<8x128xf32>
    %797 = arith.mulf %796, %795 : vector<8x128xf32>
    %798 = math.tanh %797 : vector<8x128xf32>
    %cst_407 = arith.constant 5.000000e-01 : f32
    %799 = vector.broadcast %cst_407 : f32 to vector<8x128xf32>
    %800 = arith.mulf %799, %798 : vector<8x128xf32>
    %cst_408 = arith.constant 5.000000e-01 : f32
    %801 = vector.broadcast %cst_408 : f32 to vector<8x128xf32>
    %802 = arith.addf %800, %801 : vector<8x128xf32>
    %803 = vector.extract_strided_slice %786 {offsets = [0, 256], sizes = [8, 128], strides = [1, 1]} : vector<8x512xf32> to vector<8x128xf32>
    %804 = math.tanh %803 : vector<8x128xf32>
    %805 = vector.extract_strided_slice %786 {offsets = [0, 384], sizes = [8, 128], strides = [1, 1]} : vector<8x512xf32> to vector<8x128xf32>
    %cst_409 = arith.constant 5.000000e-01 : f32
    %806 = vector.broadcast %cst_409 : f32 to vector<8x128xf32>
    %807 = arith.mulf %806, %805 : vector<8x128xf32>
    %808 = math.tanh %807 : vector<8x128xf32>
    %cst_410 = arith.constant 5.000000e-01 : f32
    %809 = vector.broadcast %cst_410 : f32 to vector<8x128xf32>
    %810 = arith.mulf %809, %808 : vector<8x128xf32>
    %cst_411 = arith.constant 5.000000e-01 : f32
    %811 = vector.broadcast %cst_411 : f32 to vector<8x128xf32>
    %812 = arith.addf %810, %811 : vector<8x128xf32>
    %813 = arith.mulf %802, %780 : vector<8x128xf32>
    %814 = arith.mulf %794, %804 : vector<8x128xf32>
    %815 = arith.addf %813, %814 : vector<8x128xf32>
    %816 = math.tanh %815 : vector<8x128xf32>
    %817 = arith.mulf %812, %816 : vector<8x128xf32>
    %c0_i32_412 = arith.constant 0 : i32
    %818 = arith.subi %c0_i32_412, %arg1 : i32
    %c8_i32_413 = arith.constant 8 : i32
    %819 = arith.muli %818, %c8_i32_413 : i32
    %820 = arith.addi %819, %773 : i32
    %c8_i32_414 = arith.constant 8 : i32
    %821 = arith.cmpi slt, %820, %c8_i32_414 : i32
    %822 = arith.extui %821 : i1 to i32
    %823 = arith.sitofp %822 : i32 to f32
    %824 = vector.broadcast %823 : f32 to vector<8x128xf32>
    %825 = arith.mulf %817, %824 : vector<8x128xf32>
    %826 = vector.broadcast %823 : f32 to vector<8x128xf32>
    %827 = arith.mulf %815, %826 : vector<8x128xf32>
    %c0_415 = arith.constant 0 : index
    %c0_416 = arith.constant 0 : index
    %c0_417 = arith.constant 0 : index
    %828 = vector.load %arg8[%c0_415, %c0_416, %c0_417] : memref<2x8x128xf32, #tpu.memory_space<vmem>>, vector<1x8x128xf32>
    %829 = vector.shape_cast %828 : vector<1x8x128xf32> to vector<8x128xf32>
    %830 = vector.shape_cast %772 : vector<8x128xf32> to vector<1x8x128xf32>
    tpu.vector_store %arg8[%c0_415, %c0_416, %c0_417], %830 {strides = array<i32>} : memref<2x8x128xf32, #tpu.memory_space<vmem>>, vector<1x8x128xf32>,
    %c0_418 = arith.constant 0 : index
    %c0_419 = arith.constant 0 : index
    %c0_420 = arith.constant 0 : index
    %831 = vector.load %arg9[%c0_418, %c0_419, %c0_420] : memref<2x8x128xf32, #tpu.memory_space<vmem>>, vector<1x8x128xf32>
    %832 = vector.shape_cast %831 : vector<1x8x128xf32> to vector<8x128xf32>
    %833 = vector.shape_cast %770 : vector<8x128xf32> to vector<1x8x128xf32>
    tpu.vector_store %arg9[%c0_418, %c0_419, %c0_420], %833 {strides = array<i32>} : memref<2x8x128xf32, #tpu.memory_space<vmem>>, vector<1x8x128xf32>,
    %c1_421 = arith.constant 1 : index
    %c0_422 = arith.constant 0 : index
    %c0_423 = arith.constant 0 : index
    %834 = vector.load %arg8[%c1_421, %c0_422, %c0_423] : memref<2x8x128xf32, #tpu.memory_space<vmem>>, vector<1x8x128xf32>
    %835 = vector.shape_cast %834 : vector<1x8x128xf32> to vector<8x128xf32>
    %836 = vector.shape_cast %825 : vector<8x128xf32> to vector<1x8x128xf32>
    tpu.vector_store %arg8[%c1_421, %c0_422, %c0_423], %836 {strides = array<i32>} : memref<2x8x128xf32, #tpu.memory_space<vmem>>, vector<1x8x128xf32>,
    %c1_424 = arith.constant 1 : index
    %c0_425 = arith.constant 0 : index
    %c0_426 = arith.constant 0 : index
    %837 = vector.load %arg9[%c1_424, %c0_425, %c0_426] : memref<2x8x128xf32, #tpu.memory_space<vmem>>, vector<1x8x128xf32>
    %838 = vector.shape_cast %837 : vector<1x8x128xf32> to vector<8x128xf32>
    %839 = vector.shape_cast %827 : vector<8x128xf32> to vector<1x8x128xf32>
    tpu.vector_store %arg9[%c1_424, %c0_425, %c0_426], %839 {strides = array<i32>} : memref<2x8x128xf32, #tpu.memory_space<vmem>>, vector<1x8x128xf32>,
    %840 = arith.truncf %772 : vector<8x128xf32> to vector<8x128xbf16>
    %841 = arith.index_cast %c6_i32 : i32 to index
    %c0_427 = arith.constant 0 : index
    %c0_428 = arith.constant 0 : index
    %842 = vector.load %arg5[%841, %c0_427, %c0_428] : memref<8x8x128xbf16, #tpu.memory_space<vmem>>, vector<1x8x128xbf16>
    %843 = vector.shape_cast %842 : vector<1x8x128xbf16> to vector<8x128xbf16>
    %844 = vector.shape_cast %840 : vector<8x128xbf16> to vector<1x8x128xbf16>
    tpu.vector_store %arg5[%841, %c0_427, %c0_428], %844 {strides = array<i32>} : memref<8x8x128xbf16, #tpu.memory_space<vmem>>, vector<1x8x128xbf16>,
    %845 = arith.truncf %825 : vector<8x128xf32> to vector<8x128xbf16>
    %846 = arith.index_cast %773 : i32 to index
    %c0_429 = arith.constant 0 : index
    %c0_430 = arith.constant 0 : index
    %847 = vector.load %arg6[%846, %c0_429, %c0_430] : memref<8x8x128xbf16, #tpu.memory_space<vmem>>, vector<1x8x128xbf16>
    %848 = vector.shape_cast %847 : vector<1x8x128xbf16> to vector<8x128xbf16>
    %849 = vector.shape_cast %845 : vector<8x128xbf16> to vector<1x8x128xbf16>
    tpu.vector_store %arg6[%846, %c0_429, %c0_430], %849 {strides = array<i32>} : memref<8x8x128xbf16, #tpu.memory_space<vmem>>, vector<1x8x128xbf16>,
    %c7_i32_431 = arith.constant 7 : i32
    %850 = arith.index_cast %c7_i32_431 : i32 to index
    %c0_432 = arith.constant 0 : index
    %c0_433 = arith.constant 0 : index
    %851 = vector.load %arg2[%850, %c0_432, %c0_433] : memref<8x8x512xbf16, #tpu.memory_space<vmem>>, vector<1x8x512xbf16>
    %852 = vector.shape_cast %851 : vector<1x8x512xbf16> to vector<8x512xbf16>
    %c0_434 = arith.constant 0 : index
    %c0_435 = arith.constant 0 : index
    %c0_436 = arith.constant 0 : index
    %853 = vector.load %arg8[%c0_434, %c0_435, %c0_436] : memref<2x8x128xf32, #tpu.memory_space<vmem>>, vector<1x8x128xf32>
    %854 = vector.shape_cast %853 : vector<1x8x128xf32> to vector<8x128xf32>
    %c0_437 = arith.constant 0 : index
    %c0_438 = arith.constant 0 : index
    %c0_439 = arith.constant 0 : index
    %855 = vector.load %arg9[%c0_437, %c0_438, %c0_439] : memref<2x8x128xf32, #tpu.memory_space<vmem>>, vector<1x8x128xf32>
    %856 = vector.shape_cast %855 : vector<1x8x128xf32> to vector<8x128xf32>
    %c0_440 = arith.constant 0 : index
    %c0_441 = arith.constant 0 : index
    %c0_442 = arith.constant 0 : index
    %857 = vector.load %arg7[%c0_440, %c0_441, %c0_442] : memref<2x128x512xbf16, #tpu.memory_space<vmem>>, vector<1x128x512xbf16>
    %858 = vector.shape_cast %857 : vector<1x128x512xbf16> to vector<128x512xbf16>
    %859 = arith.extf %852 : vector<8x512xbf16> to vector<8x512xf32>
    %860 = arith.truncf %854 : vector<8x128xf32> to vector<8x128xbf16>
    %cst_443 = arith.constant dense<0.000000e+00> : vector<8x512xf32>
    %861 = tpu.matmul %860, %858, %cst_443 {dimension_numbers = #tpu.dot_dimension_numbers<[1], [0], [0], [1], [0, 0, 1, 1], [], []>} : vector<8x128xbf16>, vector<128x512xbf16>, vector<8x512xf32> -> vector<8x512xf32>
    %862 = arith.addf %859, %861 : vector<8x512xf32>
    %863 = vector.extract_strided_slice %862 {offsets = [0, 0], sizes = [8, 128], strides = [1, 1]} : vector<8x512xf32> to vector<8x128xf32>
    %cst_444 = arith.constant 5.000000e-01 : f32
    %864 = vector.broadcast %cst_444 : f32 to vector<8x128xf32>
    %865 = arith.mulf %864, %863 : vector<8x128xf32>
    %866 = math.tanh %865 : vector<8x128xf32>
    %cst_445 = arith.constant 5.000000e-01 : f32
    %867 = vector.broadcast %cst_445 : f32 to vector<8x128xf32>
    %868 = arith.mulf %867, %866 : vector<8x128xf32>
    %cst_446 = arith.constant 5.000000e-01 : f32
    %869 = vector.broadcast %cst_446 : f32 to vector<8x128xf32>
    %870 = arith.addf %868, %869 : vector<8x128xf32>
    %871 = vector.extract_strided_slice %862 {offsets = [0, 128], sizes = [8, 128], strides = [1, 1]} : vector<8x512xf32> to vector<8x128xf32>
    %cst_447 = arith.constant 5.000000e-01 : f32
    %872 = vector.broadcast %cst_447 : f32 to vector<8x128xf32>
    %873 = arith.mulf %872, %871 : vector<8x128xf32>
    %874 = math.tanh %873 : vector<8x128xf32>
    %cst_448 = arith.constant 5.000000e-01 : f32
    %875 = vector.broadcast %cst_448 : f32 to vector<8x128xf32>
    %876 = arith.mulf %875, %874 : vector<8x128xf32>
    %cst_449 = arith.constant 5.000000e-01 : f32
    %877 = vector.broadcast %cst_449 : f32 to vector<8x128xf32>
    %878 = arith.addf %876, %877 : vector<8x128xf32>
    %879 = vector.extract_strided_slice %862 {offsets = [0, 256], sizes = [8, 128], strides = [1, 1]} : vector<8x512xf32> to vector<8x128xf32>
    %880 = math.tanh %879 : vector<8x128xf32>
    %881 = vector.extract_strided_slice %862 {offsets = [0, 384], sizes = [8, 128], strides = [1, 1]} : vector<8x512xf32> to vector<8x128xf32>
    %cst_450 = arith.constant 5.000000e-01 : f32
    %882 = vector.broadcast %cst_450 : f32 to vector<8x128xf32>
    %883 = arith.mulf %882, %881 : vector<8x128xf32>
    %884 = math.tanh %883 : vector<8x128xf32>
    %cst_451 = arith.constant 5.000000e-01 : f32
    %885 = vector.broadcast %cst_451 : f32 to vector<8x128xf32>
    %886 = arith.mulf %885, %884 : vector<8x128xf32>
    %cst_452 = arith.constant 5.000000e-01 : f32
    %887 = vector.broadcast %cst_452 : f32 to vector<8x128xf32>
    %888 = arith.addf %886, %887 : vector<8x128xf32>
    %889 = arith.mulf %878, %856 : vector<8x128xf32>
    %890 = arith.mulf %870, %880 : vector<8x128xf32>
    %891 = arith.addf %889, %890 : vector<8x128xf32>
    %892 = math.tanh %891 : vector<8x128xf32>
    %893 = arith.mulf %888, %892 : vector<8x128xf32>
    %c7_i32_453 = arith.constant 7 : i32
    %894 = arith.subi %c7_i32_453, %c7_i32_431 : i32
    %895 = arith.index_cast %894 : i32 to index
    %c0_454 = arith.constant 0 : index
    %c0_455 = arith.constant 0 : index
    %896 = vector.load %arg3[%895, %c0_454, %c0_455] : memref<8x8x512xbf16, #tpu.memory_space<vmem>>, vector<1x8x512xbf16>
    %897 = vector.shape_cast %896 : vector<1x8x512xbf16> to vector<8x512xbf16>
    %c1_456 = arith.constant 1 : index
    %c0_457 = arith.constant 0 : index
    %c0_458 = arith.constant 0 : index
    %898 = vector.load %arg8[%c1_456, %c0_457, %c0_458] : memref<2x8x128xf32, #tpu.memory_space<vmem>>, vector<1x8x128xf32>
    %899 = vector.shape_cast %898 : vector<1x8x128xf32> to vector<8x128xf32>
    %c1_459 = arith.constant 1 : index
    %c0_460 = arith.constant 0 : index
    %c0_461 = arith.constant 0 : index
    %900 = vector.load %arg9[%c1_459, %c0_460, %c0_461] : memref<2x8x128xf32, #tpu.memory_space<vmem>>, vector<1x8x128xf32>
    %901 = vector.shape_cast %900 : vector<1x8x128xf32> to vector<8x128xf32>
    %c1_462 = arith.constant 1 : index
    %c0_463 = arith.constant 0 : index
    %c0_464 = arith.constant 0 : index
    %902 = vector.load %arg7[%c1_462, %c0_463, %c0_464] : memref<2x128x512xbf16, #tpu.memory_space<vmem>>, vector<1x128x512xbf16>
    %903 = vector.shape_cast %902 : vector<1x128x512xbf16> to vector<128x512xbf16>
    %904 = arith.extf %897 : vector<8x512xbf16> to vector<8x512xf32>
    %905 = arith.truncf %899 : vector<8x128xf32> to vector<8x128xbf16>
    %cst_465 = arith.constant dense<0.000000e+00> : vector<8x512xf32>
    %906 = tpu.matmul %905, %903, %cst_465 {dimension_numbers = #tpu.dot_dimension_numbers<[1], [0], [0], [1], [0, 0, 1, 1], [], []>} : vector<8x128xbf16>, vector<128x512xbf16>, vector<8x512xf32> -> vector<8x512xf32>
    %907 = arith.addf %904, %906 : vector<8x512xf32>
    %908 = vector.extract_strided_slice %907 {offsets = [0, 0], sizes = [8, 128], strides = [1, 1]} : vector<8x512xf32> to vector<8x128xf32>
    %cst_466 = arith.constant 5.000000e-01 : f32
    %909 = vector.broadcast %cst_466 : f32 to vector<8x128xf32>
    %910 = arith.mulf %909, %908 : vector<8x128xf32>
    %911 = math.tanh %910 : vector<8x128xf32>
    %cst_467 = arith.constant 5.000000e-01 : f32
    %912 = vector.broadcast %cst_467 : f32 to vector<8x128xf32>
    %913 = arith.mulf %912, %911 : vector<8x128xf32>
    %cst_468 = arith.constant 5.000000e-01 : f32
    %914 = vector.broadcast %cst_468 : f32 to vector<8x128xf32>
    %915 = arith.addf %913, %914 : vector<8x128xf32>
    %916 = vector.extract_strided_slice %907 {offsets = [0, 128], sizes = [8, 128], strides = [1, 1]} : vector<8x512xf32> to vector<8x128xf32>
    %cst_469 = arith.constant 5.000000e-01 : f32
    %917 = vector.broadcast %cst_469 : f32 to vector<8x128xf32>
    %918 = arith.mulf %917, %916 : vector<8x128xf32>
    %919 = math.tanh %918 : vector<8x128xf32>
    %cst_470 = arith.constant 5.000000e-01 : f32
    %920 = vector.broadcast %cst_470 : f32 to vector<8x128xf32>
    %921 = arith.mulf %920, %919 : vector<8x128xf32>
    %cst_471 = arith.constant 5.000000e-01 : f32
    %922 = vector.broadcast %cst_471 : f32 to vector<8x128xf32>
    %923 = arith.addf %921, %922 : vector<8x128xf32>
    %924 = vector.extract_strided_slice %907 {offsets = [0, 256], sizes = [8, 128], strides = [1, 1]} : vector<8x512xf32> to vector<8x128xf32>
    %925 = math.tanh %924 : vector<8x128xf32>
    %926 = vector.extract_strided_slice %907 {offsets = [0, 384], sizes = [8, 128], strides = [1, 1]} : vector<8x512xf32> to vector<8x128xf32>
    %cst_472 = arith.constant 5.000000e-01 : f32
    %927 = vector.broadcast %cst_472 : f32 to vector<8x128xf32>
    %928 = arith.mulf %927, %926 : vector<8x128xf32>
    %929 = math.tanh %928 : vector<8x128xf32>
    %cst_473 = arith.constant 5.000000e-01 : f32
    %930 = vector.broadcast %cst_473 : f32 to vector<8x128xf32>
    %931 = arith.mulf %930, %929 : vector<8x128xf32>
    %cst_474 = arith.constant 5.000000e-01 : f32
    %932 = vector.broadcast %cst_474 : f32 to vector<8x128xf32>
    %933 = arith.addf %931, %932 : vector<8x128xf32>
    %934 = arith.mulf %923, %901 : vector<8x128xf32>
    %935 = arith.mulf %915, %925 : vector<8x128xf32>
    %936 = arith.addf %934, %935 : vector<8x128xf32>
    %937 = math.tanh %936 : vector<8x128xf32>
    %938 = arith.mulf %933, %937 : vector<8x128xf32>
    %c0_i32_475 = arith.constant 0 : i32
    %939 = arith.subi %c0_i32_475, %arg1 : i32
    %c8_i32_476 = arith.constant 8 : i32
    %940 = arith.muli %939, %c8_i32_476 : i32
    %941 = arith.addi %940, %894 : i32
    %c8_i32_477 = arith.constant 8 : i32
    %942 = arith.cmpi slt, %941, %c8_i32_477 : i32
    %943 = arith.extui %942 : i1 to i32
    %944 = arith.sitofp %943 : i32 to f32
    %945 = vector.broadcast %944 : f32 to vector<8x128xf32>
    %946 = arith.mulf %938, %945 : vector<8x128xf32>
    %947 = vector.broadcast %944 : f32 to vector<8x128xf32>
    %948 = arith.mulf %936, %947 : vector<8x128xf32>
    %c0_478 = arith.constant 0 : index
    %c0_479 = arith.constant 0 : index
    %c0_480 = arith.constant 0 : index
    %949 = vector.load %arg8[%c0_478, %c0_479, %c0_480] : memref<2x8x128xf32, #tpu.memory_space<vmem>>, vector<1x8x128xf32>
    %950 = vector.shape_cast %949 : vector<1x8x128xf32> to vector<8x128xf32>
    %951 = vector.shape_cast %893 : vector<8x128xf32> to vector<1x8x128xf32>
    tpu.vector_store %arg8[%c0_478, %c0_479, %c0_480], %951 {strides = array<i32>} : memref<2x8x128xf32, #tpu.memory_space<vmem>>, vector<1x8x128xf32>,
    %c0_481 = arith.constant 0 : index
    %c0_482 = arith.constant 0 : index
    %c0_483 = arith.constant 0 : index
    %952 = vector.load %arg9[%c0_481, %c0_482, %c0_483] : memref<2x8x128xf32, #tpu.memory_space<vmem>>, vector<1x8x128xf32>
    %953 = vector.shape_cast %952 : vector<1x8x128xf32> to vector<8x128xf32>
    %954 = vector.shape_cast %891 : vector<8x128xf32> to vector<1x8x128xf32>
    tpu.vector_store %arg9[%c0_481, %c0_482, %c0_483], %954 {strides = array<i32>} : memref<2x8x128xf32, #tpu.memory_space<vmem>>, vector<1x8x128xf32>,
    %c1_484 = arith.constant 1 : index
    %c0_485 = arith.constant 0 : index
    %c0_486 = arith.constant 0 : index
    %955 = vector.load %arg8[%c1_484, %c0_485, %c0_486] : memref<2x8x128xf32, #tpu.memory_space<vmem>>, vector<1x8x128xf32>
    %956 = vector.shape_cast %955 : vector<1x8x128xf32> to vector<8x128xf32>
    %957 = vector.shape_cast %946 : vector<8x128xf32> to vector<1x8x128xf32>
    tpu.vector_store %arg8[%c1_484, %c0_485, %c0_486], %957 {strides = array<i32>} : memref<2x8x128xf32, #tpu.memory_space<vmem>>, vector<1x8x128xf32>,
    %c1_487 = arith.constant 1 : index
    %c0_488 = arith.constant 0 : index
    %c0_489 = arith.constant 0 : index
    %958 = vector.load %arg9[%c1_487, %c0_488, %c0_489] : memref<2x8x128xf32, #tpu.memory_space<vmem>>, vector<1x8x128xf32>
    %959 = vector.shape_cast %958 : vector<1x8x128xf32> to vector<8x128xf32>
    %960 = vector.shape_cast %948 : vector<8x128xf32> to vector<1x8x128xf32>
    tpu.vector_store %arg9[%c1_487, %c0_488, %c0_489], %960 {strides = array<i32>} : memref<2x8x128xf32, #tpu.memory_space<vmem>>, vector<1x8x128xf32>,
    %961 = arith.truncf %893 : vector<8x128xf32> to vector<8x128xbf16>
    %962 = arith.index_cast %c7_i32_431 : i32 to index
    %c0_490 = arith.constant 0 : index
    %c0_491 = arith.constant 0 : index
    %963 = vector.load %arg5[%962, %c0_490, %c0_491] : memref<8x8x128xbf16, #tpu.memory_space<vmem>>, vector<1x8x128xbf16>
    %964 = vector.shape_cast %963 : vector<1x8x128xbf16> to vector<8x128xbf16>
    %965 = vector.shape_cast %961 : vector<8x128xbf16> to vector<1x8x128xbf16>
    tpu.vector_store %arg5[%962, %c0_490, %c0_491], %965 {strides = array<i32>} : memref<8x8x128xbf16, #tpu.memory_space<vmem>>, vector<1x8x128xbf16>,
    %966 = arith.truncf %946 : vector<8x128xf32> to vector<8x128xbf16>
    %967 = arith.index_cast %894 : i32 to index
    %c0_492 = arith.constant 0 : index
    %c0_493 = arith.constant 0 : index
    %968 = vector.load %arg6[%967, %c0_492, %c0_493] : memref<8x8x128xbf16, #tpu.memory_space<vmem>>, vector<1x8x128xbf16>
    %969 = vector.shape_cast %968 : vector<1x8x128xbf16> to vector<8x128xbf16>
    %970 = vector.shape_cast %966 : vector<8x128xbf16> to vector<1x8x128xbf16>
    tpu.vector_store %arg6[%967, %c0_492, %c0_493], %970 {strides = array<i32>} : memref<8x8x128xbf16, #tpu.memory_space<vmem>>, vector<1x8x128xbf16>,
    %c8_i32_494 = arith.constant 8 : i32
    return
  }
  func.func @transform_0(%arg0: i32, %arg1: i32) -> (i32, i32, i32) {
    %c0_i32 = arith.constant 0 : i32
    %c0_i32_0 = arith.constant 0 : i32
    return %arg1, %arg0, %c0_i32 : i32, i32, i32
  }
  func.func @transform_1(%arg0: i32, %arg1: i32) -> (i32, i32, i32) {
    %c0_i32 = arith.constant 0 : i32
    %0 = arith.subi %c0_i32, %arg1 : i32
    %c1_i32 = arith.constant 1 : i32
    %c0_i32_0 = arith.constant 0 : i32
    return %0, %arg0, %c1_i32 : i32, i32, i32
  }
  func.func @transform_3(%arg0: i32, %arg1: i32) -> (i32, i32, i32) {
    %c0_i32 = arith.constant 0 : i32
    %c0_i32_0 = arith.constant 0 : i32
    return %arg1, %arg0, %c0_i32 : i32, i32, i32
  }
  func.func @transform_4(%arg0: i32, %arg1: i32) -> (i32, i32, i32) {
    %c0_i32 = arith.constant 0 : i32
    %0 = arith.subi %c0_i32, %arg1 : i32
    %c0_i32_0 = arith.constant 0 : i32
    %c0_i32_1 = arith.constant 0 : i32
    return %0, %arg0, %c0_i32_0 : i32, i32, i32
  }
}

module attributes {stable_mosaic.version = 11 : i64} {
  func.func @_matmul_kernel2(%arg0: i32, %arg1: i32, %arg2: i32, %arg3: memref<64x128xbf16, #tpu.memory_space<vmem>>, %arg4: memref<64x128xbf16, #tpu.memory_space<vmem>>, %arg5: memref<128x512xbf16, #tpu.memory_space<vmem>>, %arg6: memref<1x512xf32, #tpu.memory_space<vmem>>, %arg7: memref<64x512xbf16, #tpu.memory_space<vmem>>, %arg8: memref<64x512xf32, #tpu.memory_space<vmem>>) attributes {dimension_semantics = [#tpu.dimension_semantics<parallel>, #tpu.dimension_semantics<parallel>, #tpu.dimension_semantics<arbitrary>], iteration_bounds = array<i64: 1, 2, 1>, scalar_prefetch = 0 : i64, scratch_operands = 1 : i64, tpu.core_type = #tpu.core_type<tc>, window_params = [{transform_indices = @transform_0, window_bounds = array<i64: 64, 128>}, {transform_indices = @transform_1, window_bounds = array<i64: 64, 128>}, {transform_indices = @transform_2, window_bounds = array<i64: 128, 512>}, {transform_indices = @transform_3, window_bounds = array<i64: 1, 512>}, {transform_indices = @transform_4, window_bounds = array<i64: 64, 512>}]} {
    %c0_i32 = arith.constant 0 : i32
    %0 = arith.cmpi eq, %arg2, %c0_i32 : i32
    %1 = arith.extui %0 : i1 to i32
    %c0_i32_0 = arith.constant 0 : i32
    %2 = arith.cmpi ne, %1, %c0_i32_0 : i32
    scf.if %2 {
      %cst_12 = arith.constant 0.000000e+00 : f32
      %14 = vector.broadcast %cst_12 : f32 to vector<64x512xf32>
      %c0_13 = arith.constant 0 : index
      %c0_14 = arith.constant 0 : index
      %15 = vector.load %arg8[%c0_13, %c0_14] : memref<64x512xf32, #tpu.memory_space<vmem>>, vector<64x512xf32>
      tpu.vector_store %arg8[%c0_13, %c0_14], %14 {strides = array<i32>} : memref<64x512xf32, #tpu.memory_space<vmem>>, vector<64x512xf32>,
    } else {
    }
    %c0 = arith.constant 0 : index
    %c0_1 = arith.constant 0 : index
    %3 = vector.load %arg8[%c0, %c0_1] : memref<64x512xf32, #tpu.memory_space<vmem>>, vector<64x512xf32>
    %c0_2 = arith.constant 0 : index
    %c0_3 = arith.constant 0 : index
    %4 = vector.load %arg3[%c0_2, %c0_3] : memref<64x128xbf16, #tpu.memory_space<vmem>>, vector<64x128xbf16>
    %c0_4 = arith.constant 0 : index
    %c0_5 = arith.constant 0 : index
    %5 = vector.load %arg4[%c0_4, %c0_5] : memref<64x128xbf16, #tpu.memory_space<vmem>>, vector<64x128xbf16>
    %6 = arith.addf %4, %5 : vector<64x128xbf16>
    %c0_6 = arith.constant 0 : index
    %c0_7 = arith.constant 0 : index
    %7 = vector.load %arg5[%c0_6, %c0_7] : memref<128x512xbf16, #tpu.memory_space<vmem>>, vector<128x512xbf16>
    %cst = arith.constant dense<0.000000e+00> : vector<64x512xf32>
    %8 = tpu.matmul %6, %7, %cst {dimension_numbers = #tpu.dot_dimension_numbers<[1], [0], [0], [1], [0, 0, 1, 1], [], []>} : vector<64x128xbf16>, vector<128x512xbf16>, vector<64x512xf32> -> vector<64x512xf32>
    %9 = arith.addf %3, %8 : vector<64x512xf32>
    %c0_8 = arith.constant 0 : index
    %c0_9 = arith.constant 0 : index
    %10 = vector.load %arg8[%c0_8, %c0_9] : memref<64x512xf32, #tpu.memory_space<vmem>>, vector<64x512xf32>
    tpu.vector_store %arg8[%c0_8, %c0_9], %9 {strides = array<i32>} : memref<64x512xf32, #tpu.memory_space<vmem>>, vector<64x512xf32>,
    %c0_i32_10 = arith.constant 0 : i32
    %11 = arith.cmpi eq, %arg2, %c0_i32_10 : i32
    %12 = arith.extui %11 : i1 to i32
    %c0_i32_11 = arith.constant 0 : i32
    %13 = arith.cmpi ne, %12, %c0_i32_11 : i32
    scf.if %13 {
      %c0_12 = arith.constant 0 : index
      %c0_13 = arith.constant 0 : index
      %14 = vector.load %arg8[%c0_12, %c0_13] : memref<64x512xf32, #tpu.memory_space<vmem>>, vector<64x512xf32>
      %c0_14 = arith.constant 0 : index
      %c0_15 = arith.constant 0 : index
      %15 = vector.load %arg6[%c0_14, %c0_15] : memref<1x512xf32, #tpu.memory_space<vmem>>, vector<1x512xf32>
      %16 = vector.broadcast %15 : vector<1x512xf32> to vector<64x512xf32>
      %17 = arith.addf %14, %16 : vector<64x512xf32>
      %18 = arith.truncf %17 : vector<64x512xf32> to vector<64x512xbf16>
      %c0_16 = arith.constant 0 : index
      %c0_17 = arith.constant 0 : index
      %19 = vector.load %arg7[%c0_16, %c0_17] : memref<64x512xbf16, #tpu.memory_space<vmem>>, vector<64x512xbf16>
      tpu.vector_store %arg7[%c0_16, %c0_17], %18 {strides = array<i32>} : memref<64x512xbf16, #tpu.memory_space<vmem>>, vector<64x512xbf16>,
    } else {
    }
    return
  }
  func.func @transform_0(%arg0: i32, %arg1: i32, %arg2: i32) -> (i32, i32) {
    %c0_i32 = arith.constant 0 : i32
    return %arg0, %arg2 : i32, i32
  }
  func.func @transform_1(%arg0: i32, %arg1: i32, %arg2: i32) -> (i32, i32) {
    %c0_i32 = arith.constant 0 : i32
    return %arg0, %arg2 : i32, i32
  }
  func.func @transform_2(%arg0: i32, %arg1: i32, %arg2: i32) -> (i32, i32) {
    %c0_i32 = arith.constant 0 : i32
    return %arg2, %arg1 : i32, i32
  }
  func.func @transform_3(%arg0: i32, %arg1: i32, %arg2: i32) -> (i32, i32) {
    %c0_i32 = arith.constant 0 : i32
    %c0_i32_0 = arith.constant 0 : i32
    return %c0_i32, %arg1 : i32, i32
  }
  func.func @transform_4(%arg0: i32, %arg1: i32, %arg2: i32) -> (i32, i32) {
    %c0_i32 = arith.constant 0 : i32
    return %arg0, %arg1 : i32, i32
  }
}

module attributes {stable_mosaic.version = 11 : i64} {
  func.func @_matmul_kernel2(%arg0: i32, %arg1: i32, %arg2: i32, %arg3: memref<64x128xbf16, #tpu.memory_space<vmem>>, %arg4: memref<64x128xbf16, #tpu.memory_space<vmem>>, %arg5: memref<128x128xbf16, #tpu.memory_space<vmem>>, %arg6: memref<1x128xf32, #tpu.memory_space<vmem>>, %arg7: memref<64x128xf32, #tpu.memory_space<vmem>>, %arg8: memref<64x128xf32, #tpu.memory_space<vmem>>) attributes {dimension_semantics = [#tpu.dimension_semantics<parallel>, #tpu.dimension_semantics<parallel>, #tpu.dimension_semantics<arbitrary>], iteration_bounds = array<i64: 1, 1, 1>, scalar_prefetch = 0 : i64, scratch_operands = 1 : i64, tpu.core_type = #tpu.core_type<tc>, window_params = [{transform_indices = @transform_0, window_bounds = array<i64: 64, 128>}, {transform_indices = @transform_1, window_bounds = array<i64: 64, 128>}, {transform_indices = @transform_2, window_bounds = array<i64: 128, 128>}, {transform_indices = @transform_3, window_bounds = array<i64: 1, 128>}, {transform_indices = @transform_4, window_bounds = array<i64: 64, 128>}]} {
    %c0_i32 = arith.constant 0 : i32
    %0 = arith.cmpi eq, %arg2, %c0_i32 : i32
    %1 = arith.extui %0 : i1 to i32
    %c0_i32_0 = arith.constant 0 : i32
    %2 = arith.cmpi ne, %1, %c0_i32_0 : i32
    scf.if %2 {
      %cst_12 = arith.constant 0.000000e+00 : f32
      %14 = vector.broadcast %cst_12 : f32 to vector<64x128xf32>
      %c0_13 = arith.constant 0 : index
      %c0_14 = arith.constant 0 : index
      %15 = vector.load %arg8[%c0_13, %c0_14] : memref<64x128xf32, #tpu.memory_space<vmem>>, vector<64x128xf32>
      tpu.vector_store %arg8[%c0_13, %c0_14], %14 {strides = array<i32>} : memref<64x128xf32, #tpu.memory_space<vmem>>, vector<64x128xf32>,
    } else {
    }
    %c0 = arith.constant 0 : index
    %c0_1 = arith.constant 0 : index
    %3 = vector.load %arg8[%c0, %c0_1] : memref<64x128xf32, #tpu.memory_space<vmem>>, vector<64x128xf32>
    %c0_2 = arith.constant 0 : index
    %c0_3 = arith.constant 0 : index
    %4 = vector.load %arg3[%c0_2, %c0_3] : memref<64x128xbf16, #tpu.memory_space<vmem>>, vector<64x128xbf16>
    %c0_4 = arith.constant 0 : index
    %c0_5 = arith.constant 0 : index
    %5 = vector.load %arg4[%c0_4, %c0_5] : memref<64x128xbf16, #tpu.memory_space<vmem>>, vector<64x128xbf16>
    %6 = arith.addf %4, %5 : vector<64x128xbf16>
    %c0_6 = arith.constant 0 : index
    %c0_7 = arith.constant 0 : index
    %7 = vector.load %arg5[%c0_6, %c0_7] : memref<128x128xbf16, #tpu.memory_space<vmem>>, vector<128x128xbf16>
    %cst = arith.constant dense<0.000000e+00> : vector<64x128xf32>
    %8 = tpu.matmul %6, %7, %cst {dimension_numbers = #tpu.dot_dimension_numbers<[1], [0], [0], [1], [0, 0, 1, 1], [], []>} : vector<64x128xbf16>, vector<128x128xbf16>, vector<64x128xf32> -> vector<64x128xf32>
    %9 = arith.addf %3, %8 : vector<64x128xf32>
    %c0_8 = arith.constant 0 : index
    %c0_9 = arith.constant 0 : index
    %10 = vector.load %arg8[%c0_8, %c0_9] : memref<64x128xf32, #tpu.memory_space<vmem>>, vector<64x128xf32>
    tpu.vector_store %arg8[%c0_8, %c0_9], %9 {strides = array<i32>} : memref<64x128xf32, #tpu.memory_space<vmem>>, vector<64x128xf32>,
    %c0_i32_10 = arith.constant 0 : i32
    %11 = arith.cmpi eq, %arg2, %c0_i32_10 : i32
    %12 = arith.extui %11 : i1 to i32
    %c0_i32_11 = arith.constant 0 : i32
    %13 = arith.cmpi ne, %12, %c0_i32_11 : i32
    scf.if %13 {
      %c0_12 = arith.constant 0 : index
      %c0_13 = arith.constant 0 : index
      %14 = vector.load %arg8[%c0_12, %c0_13] : memref<64x128xf32, #tpu.memory_space<vmem>>, vector<64x128xf32>
      %c0_14 = arith.constant 0 : index
      %c0_15 = arith.constant 0 : index
      %15 = vector.load %arg6[%c0_14, %c0_15] : memref<1x128xf32, #tpu.memory_space<vmem>>, vector<1x128xf32>
      %16 = vector.broadcast %15 : vector<1x128xf32> to vector<64x128xf32>
      %17 = arith.addf %14, %16 : vector<64x128xf32>
      %cst_16 = arith.constant dense<0xFF800000> : vector<64xf32>
      %18 = vector.multi_reduction <maximumf>, %17, %cst_16 [1] : vector<64x128xf32> to vector<64xf32>
      %19 = vector.shape_cast %18 : vector<64xf32> to vector<64x1xf32>
      %20 = vector.broadcast %19 : vector<64x1xf32> to vector<64x128xf32>
      %21 = arith.subf %17, %20 : vector<64x128xf32>
      %22 = math.exp %21 : vector<64x128xf32>
      %cst_17 = arith.constant dense<0.000000e+00> : vector<64xf32>
      %23 = vector.multi_reduction <add>, %22, %cst_17 [1] : vector<64x128xf32> to vector<64xf32>
      %24 = vector.shape_cast %23 : vector<64xf32> to vector<64x1xf32>
      %25 = vector.broadcast %24 : vector<64x1xf32> to vector<64x128xf32>
      %26 = arith.divf %22, %25 : vector<64x128xf32>
      %c0_18 = arith.constant 0 : index
      %c0_19 = arith.constant 0 : index
      %27 = vector.load %arg7[%c0_18, %c0_19] : memref<64x128xf32, #tpu.memory_space<vmem>>, vector<64x128xf32>
      tpu.vector_store %arg7[%c0_18, %c0_19], %26 {strides = array<i32>} : memref<64x128xf32, #tpu.memory_space<vmem>>, vector<64x128xf32>,
    } else {
    }
    return
  }
  func.func @transform_0(%arg0: i32, %arg1: i32, %arg2: i32) -> (i32, i32) {
    %c0_i32 = arith.constant 0 : i32
    return %arg0, %arg2 : i32, i32
  }
  func.func @transform_1(%arg0: i32, %arg1: i32, %arg2: i32) -> (i32, i32) {
    %c0_i32 = arith.constant 0 : i32
    return %arg0, %arg2 : i32, i32
  }
  func.func @transform_2(%arg0: i32, %arg1: i32, %arg2: i32) -> (i32, i32) {
    %c0_i32 = arith.constant 0 : i32
    return %arg2, %arg1 : i32, i32
  }
  func.func @transform_3(%arg0: i32, %arg1: i32, %arg2: i32) -> (i32, i32) {
    %c0_i32 = arith.constant 0 : i32
    %c0_i32_0 = arith.constant 0 : i32
    return %c0_i32, %arg1 : i32, i32
  }
  func.func @transform_4(%arg0: i32, %arg1: i32, %arg2: i32) -> (i32, i32) {
    %c0_i32 = arith.constant 0 : i32
    return %arg0, %arg1 : i32, i32
  }
}

</mosaic_0001>

<llo_original>
// kernel: _lambda_.5
$region0: #{_lambda_.5}
  #allocation0 [shape = 'u32[]', space=smem, size = 0x4, offset = 0x4, fixed_abs, tag = 'smem constant byte address 0x4 - core index']
  #allocation1 [shape = 'u32[144,128]{1,0:T(1,128)}', space=vmem, size = 0x12000, scoped, tag = 'internal scratch']
  #allocation2 [shape = 'f32[64,512]{1,0:T(8,128)}', space=vmem, size = 0x20000, scoped, tag = 'scratch operand']
  %s0 = inlined_call_operand.vmem [shape: bf16[64,512], index: 0, kind: input, shape index: {}]
  %s1 = inlined_call_operand.vmem [shape: bf16[512,1024], index: 1, kind: input, shape index: {}]
  %s2 = inlined_call_operand.vmem [shape: f32[1,1024], index: 2, kind: input, shape index: {}]
  %s3 = inlined_call_operand.vmem [shape: bf16[64,1024], index: 3, kind: output, shape index: {}]
  %s4 = sld [smem:[#allocation0]]
  $region95: #{_lambda_.5} parent=0
    _
  %s6 = ssub.s32 1, %s4
  %s7 = scalar_select 0, %s6, %s4
  $region1: #{_lambda_.5} parent=0
    #allocation3 [shape = 'u8[1048576]{0}', space=vmem, size = 0x100000, scoped, tag = 'input window, operand 1']
    #allocation4 [shape = 'u8[131072]{0}', space=vmem, size = 0x20000, scoped, tag = 'output window, operand 0']
    loop: start=0, step=1, limit=4
    $region2: #{_lambda_.5} parent=1 // loop_pre_header
      _
    $region3: #{_lambda_.5} parent=1 // loop_header
      %s9 = sphi 0, %s13
      %p10 = scmp.ge.s32.totalorder %s9, 4
      %s16 = sphi 0, %s35
      %s17 = sphi 0, %s31
      %s18 = sphi 0, %s27
      %s19 = sphi 0, %s16
      %s20 = sphi 0, %s17
      %s21 = sphi 0, %s18
      %s22 = sphi 0, %s19
      %s23 = sphi 0, %s20
      %s24 = sphi 0, %s21
      %s40 = sphi 0, %s42
      %s43 = sphi 0, %s40
      %s44 = sphi 0, %s43
      %s60 = sphi 0, %s44
      %s68 = sphi 0, %s70
      %s71 = sphi 0, %s68
      %s72 = sphi 0, %s71
      %s88 = sphi 0, %s72
      %s94 = sphi 0, %s96
      %s97 = sphi 0, %s94
      %s98 = sphi 0, %s97
      %s114 = sphi 0, %s98
      %s122 = sphi 0, %s124
      %s125 = sphi 0, %s122
      %s126 = sphi 0, %s125
      %s142 = sphi 0, %s126
    $region4: #{_lambda_.5} parent=1 // loop_header_branch
      %12 = sbr.rel (%p10) target = $region8
    $region5: #{_lambda_.5} parent=1 // loop_body
      %s14 = ssub.s32 %s9, 1
      %s15 = ssub.s32 %s9, 2
      %s25 = sadd.s32 1, %s18
      %p26 = scmp.ge.s32.totalorder %s25, 1
      %s27 = scalar_select %p26, 0, %s25
      %s28 = sadd.s32 1, %s17
      %s29 = scalar_select %p26, %s28, %s17
      %p30 = scmp.ge.s32.totalorder %s29, 2
      %s31 = scalar_select %p30, 0, %s29
      %s32 = sadd.s32 1, %s16
      %s33 = scalar_select %p30, %s32, %s16
      %p34 = scmp.ge.s32.totalorder %s33, 1
      %s35 = scalar_select %p34, 0, %s33
      %s36 = ssub.s32 %s16, %s35
      %s37 = ssub.s32 %s18, %s27
      %s38 = sor.u32 %s36, %s37
      %p39 = scmp.eq.s32.totalorder %s38, 0
      %s41 = sadd.s32 %s40, 1
      %s42 = scalar_select %p39, %s40, %s41
      %p45 = pneg %p39
      %p46 = scmp.eq.s32.totalorder %s9, 1
      %p47 = por %p45, %p46
      %p48 = scmp.ne.s32.totalorder %s40, %s43
      %p49 = scmp.eq.s32.totalorder %s9, 0
      %p50 = por %p48, %p49
      %p51 = scmp.ne.s32.totalorder %s40, %s43
      %p52 = scmp.eq.s32.totalorder %s14, 1
      %p53 = por %p51, %p52
      %p54 = scmp.ne.s32.totalorder %s43, %s44
      %p55 = scmp.eq.s32.totalorder %s14, 0
      %p56 = por %p54, %p55
      %p57 = scmp.ne.s32.totalorder %s43, %s44
      %p58 = scmp.eq.s32.totalorder %s15, 1
      %p59 = por %p57, %p58
      %p61 = scmp.ne.s32.totalorder %s44, %s60
      %p62 = scmp.eq.s32.totalorder %s15, 0
      %p63 = por %p61, %p62
      %s64 = ssub.s32 %s18, %s27
      %s65 = ssub.s32 %s17, %s31
      %s66 = sor.u32 %s64, %s65
      %p67 = scmp.eq.s32.totalorder %s66, 0
      %s69 = sadd.s32 %s68, 1
      %s70 = scalar_select %p67, %s68, %s69
      %p73 = pneg %p67
      %p74 = scmp.eq.s32.totalorder %s9, 1
      %p75 = por %p73, %p74
      %p76 = scmp.ne.s32.totalorder %s68, %s71
      %p77 = scmp.eq.s32.totalorder %s9, 0
      %p78 = por %p76, %p77
      %p79 = scmp.ne.s32.totalorder %s68, %s71
      %p80 = scmp.eq.s32.totalorder %s14, 1
      %p81 = por %p79, %p80
      %p82 = scmp.ne.s32.totalorder %s71, %s72
      %p83 = scmp.eq.s32.totalorder %s14, 0
      %p84 = por %p82, %p83
      %p85 = scmp.ne.s32.totalorder %s71, %s72
      %p86 = scmp.eq.s32.totalorder %s15, 1
      %p87 = por %p85, %p86
      %p89 = scmp.ne.s32.totalorder %s72, %s88
      %p90 = scmp.eq.s32.totalorder %s15, 0
      %p91 = por %p89, %p90
      %s92 = ssub.s32 %s17, %s31
      %p93 = scmp.eq.s32.totalorder %s92, 0
      %s95 = sadd.s32 %s94, 1
      %s96 = scalar_select %p93, %s94, %s95
      %p99 = pneg %p93
      %p100 = scmp.eq.s32.totalorder %s9, 1
      %p101 = por %p99, %p100
      %p102 = scmp.ne.s32.totalorder %s94, %s97
      %p103 = scmp.eq.s32.totalorder %s9, 0
      %p104 = por %p102, %p103
      %p105 = scmp.ne.s32.totalorder %s94, %s97
      %p106 = scmp.eq.s32.totalorder %s14, 1
      %p107 = por %p105, %p106
      %p108 = scmp.ne.s32.totalorder %s97, %s98
      %p109 = scmp.eq.s32.totalorder %s14, 0
      %p110 = por %p108, %p109
      %p111 = scmp.ne.s32.totalorder %s97, %s98
      %p112 = scmp.eq.s32.totalorder %s15, 1
      %p113 = por %p111, %p112
      %p115 = scmp.ne.s32.totalorder %s98, %s114
      %p116 = scmp.eq.s32.totalorder %s15, 0
      %p117 = por %p115, %p116
      %s118 = ssub.s32 %s16, %s35
      %s119 = ssub.s32 %s17, %s31
      %s120 = sor.u32 %s118, %s119
      %p121 = scmp.eq.s32.totalorder %s120, 0
      %s123 = sadd.s32 %s122, 1
      %s124 = scalar_select %p121, %s122, %s123
      %p127 = pneg %p121
      %p128 = scmp.eq.s32.totalorder %s9, 1
      %p129 = por %p127, %p128
      %p130 = scmp.ne.s32.totalorder %s122, %s125
      %p131 = scmp.eq.s32.totalorder %s9, 0
      %p132 = por %p130, %p131
      %p133 = scmp.ne.s32.totalorder %s122, %s125
      %p134 = scmp.eq.s32.totalorder %s14, 1
      %p135 = por %p133, %p134
      %p136 = scmp.ne.s32.totalorder %s125, %s126
      %p137 = scmp.eq.s32.totalorder %s14, 0
      %p138 = por %p136, %p137
      %p139 = scmp.ne.s32.totalorder %s125, %s126
      %p140 = scmp.eq.s32.totalorder %s15, 1
      %p141 = por %p139, %p140
      %p143 = scmp.ne.s32.totalorder %s126, %s142
      %p144 = scmp.eq.s32.totalorder %s15, 0
      %p145 = por %p143, %p144
      %p146 = scmp.le.s32.totalorder 1, %s9
      %p147 = scmp.lt.s32.totalorder %s9, 3
      %p148 = pnand %p146, %p147
      %p149 = pneg %p148
      // Predicated region
      $region9: #{_lambda_.5} parent=5 // pred_check
        _
      $region10: #{_lambda_.5} parent=5 // pred_check_branch
        %151 = sbr.rel (%p148) target = $region12
      $region11: #{_lambda_.5} parent=5 // pred_region
        %s152 = ssub.s32 %s9, 1
        // Predicated region
        $region13: #{_lambda_.5} parent=11 // pred_check
          %p153 = pneg %p56
        $region14: #{_lambda_.5} parent=11 // pred_check_branch
          %155 = sbr.rel (%p153) target = $region16
        $region15: #{_lambda_.5} parent=11 // pred_region
          %s156 = smul.u32 8, %s19
          %s157 = smul.u32 4, %s21
          %p158 = scmp.lt.s32.totalorder %s156, 7
          %s159 = scalar_select %p158, %s156, 7
          %p160 = scmp.lt.s32.totalorder %s157, 3
          %s161 = scalar_select %p160, %s157, 3
          %s162 = smul.addr %s159, 4
          %s163 = sadd.s32 %s161, %s162
          %s164 = smul.addr %s163, 4
          %s165 = scalar_lea.vmem %s0, %s164
          %s166 = smul.u32 8, %s19
          %s167 = smul.u32 4, %s21
        $region16: #{_lambda_.5} parent=11 // pred_fallthru
          _
      $region12: #{_lambda_.5} parent=5 // pred_fallthru
        _
      %p168 = scmp.lt.s32.totalorder %s9, 2
      // Predicated region
      $region17: #{_lambda_.5} parent=5 // pred_check
        %p169 = pneg %p168
      $region18: #{_lambda_.5} parent=5 // pred_check_branch
        %171 = sbr.rel (%p169) target = $region20
      $region19: #{_lambda_.5} parent=5 // pred_region
        // Predicated region
        $region21: #{_lambda_.5} parent=19 // pred_check
          %p172 = pneg %p78
        $region22: #{_lambda_.5} parent=19 // pred_check_branch
          %174 = sbr.rel (%p172) target = $region24
        $region23: #{_lambda_.5} parent=19 // pred_region
          %s175 = sand.u32 %s68, 1
          %s176 = sand.u32 %s68, 1
          %s177 = smul.addr %s176, 1024
          %s178 = scalar_lea.vmem [#allocation3], %s177
          %s179 = smul.u32 64, %s18
          %s180 = smul.u32 4, %s17
          %s181 = smul.addr %s179, 8
          %s182 = sadd.s32 %s180, %s181
          %s183 = smul.addr %s182, 4
          %s184 = scalar_lea.vmem %s1, %s183
          // Predicated region
          $region25: #{_lambda_.5} parent=23 // pred_check
            _
          $region26: #{_lambda_.5} parent=23 // pred_check_branch
            %186 = sbr.rel (0) target = $region28
          $region27: #{_lambda_.5} parent=23 // pred_region
            // Predicated region
            $region29: #{_lambda_.5} parent=27 // pred_check
              _
            $region30: #{_lambda_.5} parent=27 // pred_check_branch
              %188 = sbr.rel (0) target = $region32
            $region31: #{_lambda_.5} parent=27 // pred_region
              loop: start=0, step=1, limit=1
              $region33: #{_lambda_.5} parent=31 // loop_pre_header
                _
              $region34: #{_lambda_.5} parent=31 // loop_header
                %s190 = sphi 0, %s194
                %p191 = scmp.ge.s32.totalorder %s190, 1
                %s195 = sphi %s184, %s184
                %s196 = sphi %s178, %s178
              $region35: #{_lambda_.5} parent=31 // loop_header_branch
                %193 = sbr.rel (%p191) target = $region39
              $region36: #{_lambda_.5} parent=31 // loop_body
                %v197 = vld [vmem:[%s195] sm:$0xff]
                %198 = vst [vmem:[%s196] sm:$0xff] %v197
                %v199 = vld [vmem:[%s195 + $0x8] sm:$0xff]
                %200 = vst [vmem:[%s196 + $0x8] sm:$0xff] %v199
                %v201 = vld [vmem:[%s195 + $0x20] sm:$0xff]
                %202 = vst [vmem:[%s196 + $0x10] sm:$0xff] %v201
                %v203 = vld [vmem:[%s195 + $0x28] sm:$0xff]
                %204 = vst [vmem:[%s196 + $0x18] sm:$0xff] %v203
                %v205 = vld [vmem:[%s195 + $0x40] sm:$0xff]
                %206 = vst [vmem:[%s196 + $0x20] sm:$0xff] %v205
                %v207 = vld [vmem:[%s195 + $0x48] sm:$0xff]
                %208 = vst [vmem:[%s196 + $0x28] sm:$0xff] %v207
                %v209 = vld [vmem:[%s195 + $0x60] sm:$0xff]
                %210 = vst [vmem:[%s196 + $0x30] sm:$0xff] %v209
                %v211 = vld [vmem:[%s195 + $0x68] sm:$0xff]
                %212 = vst [vmem:[%s196 + $0x38] sm:$0xff] %v211
                %v213 = vld [vmem:[%s195 + $0x80] sm:$0xff]
                %214 = vst [vmem:[%s196 + $0x40] sm:$0xff] %v213
                %v215 = vld [vmem:[%s195 + $0x88] sm:$0xff]
                %216 = vst [vmem:[%s196 + $0x48] sm:$0xff] %v215
                %v217 = vld [vmem:[%s195 + $0xa0] sm:$0xff]
                %218 = vst [vmem:[%s196 + $0x50] sm:$0xff] %v217
                %v219 = vld [vmem:[%s195 + $0xa8] sm:$0xff]
                %220 = vst [vmem:[%s196 + $0x58] sm:$0xff] %v219
                %v221 = vld [vmem:[%s195 + $0xc0] sm:$0xff]
                %222 = vst [vmem:[%s196 + $0x60] sm:$0xff] %v221
                %v223 = vld [vmem:[%s195 + $0xc8] sm:$0xff]
                %224 = vst [vmem:[%s196 + $0x68] sm:$0xff] %v223
                %v225 = vld [vmem:[%s195 + $0xe0] sm:$0xff]
                %226 = vst [vmem:[%s196 + $0x70] sm:$0xff] %v225
                %v227 = vld [vmem:[%s195 + $0xe8] sm:$0xff]
                %228 = vst [vmem:[%s196 + $0x78] sm:$0xff] %v227
                %v229 = vld [vmem:[%s195 + $0x100] sm:$0xff]
                %230 = vst [vmem:[%s196 + $0x80] sm:$0xff] %v229
                %v231 = vld [vmem:[%s195 + $0x108] sm:$0xff]
                %232 = vst [vmem:[%s196 + $0x88] sm:$0xff] %v231
                %v233 = vld [vmem:[%s195 + $0x120] sm:$0xff]
                %234 = vst [vmem:[%s196 + $0x90] sm:$0xff] %v233
                %v235 = vld [vmem:[%s195 + $0x128] sm:$0xff]
                %236 = vst [vmem:[%s196 + $0x98] sm:$0xff] %v235
                %v237 = vld [vmem:[%s195 + $0x140] sm:$0xff]
                %238 = vst [vmem:[%s196 + $0xa0] sm:$0xff] %v237
                %v239 = vld [vmem:[%s195 + $0x148] sm:$0xff]
                %240 = vst [vmem:[%s196 + $0xa8] sm:$0xff] %v239
                %v241 = vld [vmem:[%s195 + $0x160] sm:$0xff]
                %242 = vst [vmem:[%s196 + $0xb0] sm:$0xff] %v241
                %v243 = vld [vmem:[%s195 + $0x168] sm:$0xff]
                %244 = vst [vmem:[%s196 + $0xb8] sm:$0xff] %v243
                %v245 = vld [vmem:[%s195 + $0x180] sm:$0xff]
                %246 = vst [vmem:[%s196 + $0xc0] sm:$0xff] %v245
                %v247 = vld [vmem:[%s195 + $0x188] sm:$0xff]
                %248 = vst [vmem:[%s196 + $0xc8] sm:$0xff] %v247
                %v249 = vld [vmem:[%s195 + $0x1a0] sm:$0xff]
                %250 = vst [vmem:[%s196 + $0xd0] sm:$0xff] %v249
                %v251 = vld [vmem:[%s195 + $0x1a8] sm:$0xff]
                %252 = vst [vmem:[%s196 + $0xd8] sm:$0xff] %v251
                %v253 = vld [vmem:[%s195 + $0x1c0] sm:$0xff]
                %254 = vst [vmem:[%s196 + $0xe0] sm:$0xff] %v253
                %v255 = vld [vmem:[%s195 + $0x1c8] sm:$0xff]
                %256 = vst [vmem:[%s196 + $0xe8] sm:$0xff] %v255
                %v257 = vld [vmem:[%s195 + $0x1e0] sm:$0xff]
                %258 = vst [vmem:[%s196 + $0xf0] sm:$0xff] %v257
                %v259 = vld [vmem:[%s195 + $0x1e8] sm:$0xff]
                %260 = vst [vmem:[%s196 + $0xf8] sm:$0xff] %v259
                %v261 = vld [vmem:[%s195 + $0x200] sm:$0xff]
                %262 = vst [vmem:[%s196 + $0x100] sm:$0xff] %v261
                %v263 = vld [vmem:[%s195 + $0x208] sm:$0xff]
                %264 = vst [vmem:[%s196 + $0x108] sm:$0xff] %v263
                %v265 = vld [vmem:[%s195 + $0x220] sm:$0xff]
                %266 = vst [vmem:[%s196 + $0x110] sm:$0xff] %v265
                %v267 = vld [vmem:[%s195 + $0x228] sm:$0xff]
                %268 = vst [vmem:[%s196 + $0x118] sm:$0xff] %v267
                %v269 = vld [vmem:[%s195 + $0x240] sm:$0xff]
                %270 = vst [vmem:[%s196 + $0x120] sm:$0xff] %v269
                %v271 = vld [vmem:[%s195 + $0x248] sm:$0xff]
                %272 = vst [vmem:[%s196 + $0x128] sm:$0xff] %v271
                %v273 = vld [vmem:[%s195 + $0x260] sm:$0xff]
                %274 = vst [vmem:[%s196 + $0x130] sm:$0xff] %v273
                %v275 = vld [vmem:[%s195 + $0x268] sm:$0xff]
                %276 = vst [vmem:[%s196 + $0x138] sm:$0xff] %v275
                %v277 = vld [vmem:[%s195 + $0x280] sm:$0xff]
                %278 = vst [vmem:[%s196 + $0x140] sm:$0xff] %v277
                %v279 = vld [vmem:[%s195 + $0x288] sm:$0xff]
                %280 = vst [vmem:[%s196 + $0x148] sm:$0xff] %v279
                %v281 = vld [vmem:[%s195 + $0x2a0] sm:$0xff]
                %282 = vst [vmem:[%s196 + $0x150] sm:$0xff] %v281
                %v283 = vld [vmem:[%s195 + $0x2a8] sm:$0xff]
                %284 = vst [vmem:[%s196 + $0x158] sm:$0xff] %v283
                %v285 = vld [vmem:[%s195 + $0x2c0] sm:$0xff]
                %286 = vst [vmem:[%s196 + $0x160] sm:$0xff] %v285
                %v287 = vld [vmem:[%s195 + $0x2c8] sm:$0xff]
                %288 = vst [vmem:[%s196 + $0x168] sm:$0xff] %v287
                %v289 = vld [vmem:[%s195 + $0x2e0] sm:$0xff]
                %290 = vst [vmem:[%s196 + $0x170] sm:$0xff] %v289
                %v291 = vld [vmem:[%s195 + $0x2e8] sm:$0xff]
                %292 = vst [vmem:[%s196 + $0x178] sm:$0xff] %v291
                %v293 = vld [vmem:[%s195 + $0x300] sm:$0xff]
                %294 = vst [vmem:[%s196 + $0x180] sm:$0xff] %v293
                %v295 = vld [vmem:[%s195 + $0x308] sm:$0xff]
                %296 = vst [vmem:[%s196 + $0x188] sm:$0xff] %v295
                %v297 = vld [vmem:[%s195 + $0x320] sm:$0xff]
                %298 = vst [vmem:[%s196 + $0x190] sm:$0xff] %v297
                %v299 = vld [vmem:[%s195 + $0x328] sm:$0xff]
                %300 = vst [vmem:[%s196 + $0x198] sm:$0xff] %v299
                %v301 = vld [vmem:[%s195 + $0x340] sm:$0xff]
                %302 = vst [vmem:[%s196 + $0x1a0] sm:$0xff] %v301
                %v303 = vld [vmem:[%s195 + $0x348] sm:$0xff]
                %304 = vst [vmem:[%s196 + $0x1a8] sm:$0xff] %v303
                %v305 = vld [vmem:[%s195 + $0x360] sm:$0xff]
                %306 = vst [vmem:[%s196 + $0x1b0] sm:$0xff] %v305
                %v307 = vld [vmem:[%s195 + $0x368] sm:$0xff]
                %308 = vst [vmem:[%s196 + $0x1b8] sm:$0xff] %v307
                %v309 = vld [vmem:[%s195 + $0x380] sm:$0xff]
                %310 = vst [vmem:[%s196 + $0x1c0] sm:$0xff] %v309
                %v311 = vld [vmem:[%s195 + $0x388] sm:$0xff]
                %312 = vst [vmem:[%s196 + $0x1c8] sm:$0xff] %v311
                %v313 = vld [vmem:[%s195 + $0x3a0] sm:$0xff]
                %314 = vst [vmem:[%s196 + $0x1d0] sm:$0xff] %v313
                %v315 = vld [vmem:[%s195 + $0x3a8] sm:$0xff]
                %316 = vst [vmem:[%s196 + $0x1d8] sm:$0xff] %v315
                %v317 = vld [vmem:[%s195 + $0x3c0] sm:$0xff]
                %318 = vst [vmem:[%s196 + $0x1e0] sm:$0xff] %v317
                %v319 = vld [vmem:[%s195 + $0x3c8] sm:$0xff]
                %320 = vst [vmem:[%s196 + $0x1e8] sm:$0xff] %v319
                %v321 = vld [vmem:[%s195 + $0x3e0] sm:$0xff]
                %322 = vst [vmem:[%s196 + $0x1f0] sm:$0xff] %v321
                %v323 = vld [vmem:[%s195 + $0x3e8] sm:$0xff]
                %324 = vst [vmem:[%s196 + $0x1f8] sm:$0xff] %v323
                %v325 = vld [vmem:[%s195 + $0x400] sm:$0xff]
                %326 = vst [vmem:[%s196 + $0x200] sm:$0xff] %v325
                %v327 = vld [vmem:[%s195 + $0x408] sm:$0xff]
                %328 = vst [vmem:[%s196 + $0x208] sm:$0xff] %v327
                %v329 = vld [vmem:[%s195 + $0x420] sm:$0xff]
                %330 = vst [vmem:[%s196 + $0x210] sm:$0xff] %v329
                %v331 = vld [vmem:[%s195 + $0x428] sm:$0xff]
                %332 = vst [vmem:[%s196 + $0x218] sm:$0xff] %v331
                %v333 = vld [vmem:[%s195 + $0x440] sm:$0xff]
                %334 = vst [vmem:[%s196 + $0x220] sm:$0xff] %v333
                %v335 = vld [vmem:[%s195 + $0x448] sm:$0xff]
                %336 = vst [vmem:[%s196 + $0x228] sm:$0xff] %v335
                %v337 = vld [vmem:[%s195 + $0x460] sm:$0xff]
                %338 = vst [vmem:[%s196 + $0x230] sm:$0xff] %v337
                %v339 = vld [vmem:[%s195 + $0x468] sm:$0xff]
                %340 = vst [vmem:[%s196 + $0x238] sm:$0xff] %v339
                %v341 = vld [vmem:[%s195 + $0x480] sm:$0xff]
                %342 = vst [vmem:[%s196 + $0x240] sm:$0xff] %v341
                %v343 = vld [vmem:[%s195 + $0x488] sm:$0xff]
                %344 = vst [vmem:[%s196 + $0x248] sm:$0xff] %v343
                %v345 = vld [vmem:[%s195 + $0x4a0] sm:$0xff]
                %346 = vst [vmem:[%s196 + $0x250] sm:$0xff] %v345
                %v347 = vld [vmem:[%s195 + $0x4a8] sm:$0xff]
                %348 = vst [vmem:[%s196 + $0x258] sm:$0xff] %v347
                %v349 = vld [vmem:[%s195 + $0x4c0] sm:$0xff]
                %350 = vst [vmem:[%s196 + $0x260] sm:$0xff] %v349
                %v351 = vld [vmem:[%s195 + $0x4c8] sm:$0xff]
                %352 = vst [vmem:[%s196 + $0x268] sm:$0xff] %v351
                %v353 = vld [vmem:[%s195 + $0x4e0] sm:$0xff]
                %354 = vst [vmem:[%s196 + $0x270] sm:$0xff] %v353
                %v355 = vld [vmem:[%s195 + $0x4e8] sm:$0xff]
                %356 = vst [vmem:[%s196 + $0x278] sm:$0xff] %v355
                %v357 = vld [vmem:[%s195 + $0x500] sm:$0xff]
                %358 = vst [vmem:[%s196 + $0x280] sm:$0xff] %v357
                %v359 = vld [vmem:[%s195 + $0x508] sm:$0xff]
                %360 = vst [vmem:[%s196 + $0x288] sm:$0xff] %v359
                %v361 = vld [vmem:[%s195 + $0x520] sm:$0xff]
                %362 = vst [vmem:[%s196 + $0x290] sm:$0xff] %v361
                %v363 = vld [vmem:[%s195 + $0x528] sm:$0xff]
                %364 = vst [vmem:[%s196 + $0x298] sm:$0xff] %v363
                %v365 = vld [vmem:[%s195 + $0x540] sm:$0xff]
                %366 = vst [vmem:[%s196 + $0x2a0] sm:$0xff] %v365
                %v367 = vld [vmem:[%s195 + $0x548] sm:$0xff]
                %368 = vst [vmem:[%s196 + $0x2a8] sm:$0xff] %v367
                %v369 = vld [vmem:[%s195 + $0x560] sm:$0xff]
                %370 = vst [vmem:[%s196 + $0x2b0] sm:$0xff] %v369
                %v371 = vld [vmem:[%s195 + $0x568] sm:$0xff]
                %372 = vst [vmem:[%s196 + $0x2b8] sm:$0xff] %v371
                %v373 = vld [vmem:[%s195 + $0x580] sm:$0xff]
                %374 = vst [vmem:[%s196 + $0x2c0] sm:$0xff] %v373
                %v375 = vld [vmem:[%s195 + $0x588] sm:$0xff]
                %376 = vst [vmem:[%s196 + $0x2c8] sm:$0xff] %v375
                %v377 = vld [vmem:[%s195 + $0x5a0] sm:$0xff]
                %378 = vst [vmem:[%s196 + $0x2d0] sm:$0xff] %v377
                %v379 = vld [vmem:[%s195 + $0x5a8] sm:$0xff]
                %380 = vst [vmem:[%s196 + $0x2d8] sm:$0xff] %v379
                %v381 = vld [vmem:[%s195 + $0x5c0] sm:$0xff]
                %382 = vst [vmem:[%s196 + $0x2e0] sm:$0xff] %v381
                %v383 = vld [vmem:[%s195 + $0x5c8] sm:$0xff]
                %384 = vst [vmem:[%s196 + $0x2e8] sm:$0xff] %v383
                %v385 = vld [vmem:[%s195 + $0x5e0] sm:$0xff]
                %386 = vst [vmem:[%s196 + $0x2f0] sm:$0xff] %v385
                %v387 = vld [vmem:[%s195 + $0x5e8] sm:$0xff]
                %388 = vst [vmem:[%s196 + $0x2f8] sm:$0xff] %v387
                %v389 = vld [vmem:[%s195 + $0x600] sm:$0xff]
                %390 = vst [vmem:[%s196 + $0x300] sm:$0xff] %v389
                %v391 = vld [vmem:[%s195 + $0x608] sm:$0xff]
                %392 = vst [vmem:[%s196 + $0x308] sm:$0xff] %v391
                %v393 = vld [vmem:[%s195 + $0x620] sm:$0xff]
                %394 = vst [vmem:[%s196 + $0x310] sm:$0xff] %v393
                %v395 = vld [vmem:[%s195 + $0x628] sm:$0xff]
                %396 = vst [vmem:[%s196 + $0x318] sm:$0xff] %v395
                %v397 = vld [vmem:[%s195 + $0x640] sm:$0xff]
                %398 = vst [vmem:[%s196 + $0x320] sm:$0xff] %v397
                %v399 = vld [vmem:[%s195 + $0x648] sm:$0xff]
                %400 = vst [vmem:[%s196 + $0x328] sm:$0xff] %v399
                %v401 = vld [vmem:[%s195 + $0x660] sm:$0xff]
                %402 = vst [vmem:[%s196 + $0x330] sm:$0xff] %v401
                %v403 = vld [vmem:[%s195 + $0x668] sm:$0xff]
                %404 = vst [vmem:[%s196 + $0x338] sm:$0xff] %v403
                %v405 = vld [vmem:[%s195 + $0x680] sm:$0xff]
                %406 = vst [vmem:[%s196 + $0x340] sm:$0xff] %v405
                %v407 = vld [vmem:[%s195 + $0x688] sm:$0xff]
                %408 = vst [vmem:[%s196 + $0x348] sm:$0xff] %v407
                %v409 = vld [vmem:[%s195 + $0x6a0] sm:$0xff]
                %410 = vst [vmem:[%s196 + $0x350] sm:$0xff] %v409
                %v411 = vld [vmem:[%s195 + $0x6a8] sm:$0xff]
                %412 = vst [vmem:[%s196 + $0x358] sm:$0xff] %v411
                %v413 = vld [vmem:[%s195 + $0x6c0] sm:$0xff]
                %414 = vst [vmem:[%s196 + $0x360] sm:$0xff] %v413
                %v415 = vld [vmem:[%s195 + $0x6c8] sm:$0xff]
                %416 = vst [vmem:[%s196 + $0x368] sm:$0xff] %v415
                %v417 = vld [vmem:[%s195 + $0x6e0] sm:$0xff]
                %418 = vst [vmem:[%s196 + $0x370] sm:$0xff] %v417
                %v419 = vld [vmem:[%s195 + $0x6e8] sm:$0xff]
                %420 = vst [vmem:[%s196 + $0x378] sm:$0xff] %v419
                %v421 = vld [vmem:[%s195 + $0x700] sm:$0xff]
                %422 = vst [vmem:[%s196 + $0x380] sm:$0xff] %v421
                %v423 = vld [vmem:[%s195 + $0x708] sm:$0xff]
                %424 = vst [vmem:[%s196 + $0x388] sm:$0xff] %v423
                %v425 = vld [vmem:[%s195 + $0x720] sm:$0xff]
                %426 = vst [vmem:[%s196 + $0x390] sm:$0xff] %v425
                %v427 = vld [vmem:[%s195 + $0x728] sm:$0xff]
                %428 = vst [vmem:[%s196 + $0x398] sm:$0xff] %v427
                %v429 = vld [vmem:[%s195 + $0x740] sm:$0xff]
                %430 = vst [vmem:[%s196 + $0x3a0] sm:$0xff] %v429
                %v431 = vld [vmem:[%s195 + $0x748] sm:$0xff]
                %432 = vst [vmem:[%s196 + $0x3a8] sm:$0xff] %v431
                %v433 = vld [vmem:[%s195 + $0x760] sm:$0xff]
                %434 = vst [vmem:[%s196 + $0x3b0] sm:$0xff] %v433
                %v435 = vld [vmem:[%s195 + $0x768] sm:$0xff]
                %436 = vst [vmem:[%s196 + $0x3b8] sm:$0xff] %v435
                %v437 = vld [vmem:[%s195 + $0x780] sm:$0xff]
                %438 = vst [vmem:[%s196 + $0x3c0] sm:$0xff] %v437
                %v439 = vld [vmem:[%s195 + $0x788] sm:$0xff]
                %440 = vst [vmem:[%s196 + $0x3c8] sm:$0xff] %v439
                %v441 = vld [vmem:[%s195 + $0x7a0] sm:$0xff]
                %442 = vst [vmem:[%s196 + $0x3d0] sm:$0xff] %v441
                %v443 = vld [vmem:[%s195 + $0x7a8] sm:$0xff]
                %444 = vst [vmem:[%s196 + $0x3d8] sm:$0xff] %v443
                %v445 = vld [vmem:[%s195 + $0x7c0] sm:$0xff]
                %446 = vst [vmem:[%s196 + $0x3e0] sm:$0xff] %v445
                %v447 = vld [vmem:[%s195 + $0x7c8] sm:$0xff]
                %448 = vst [vmem:[%s196 + $0x3e8] sm:$0xff] %v447
                %v449 = vld [vmem:[%s195 + $0x7e0] sm:$0xff]
                %450 = vst [vmem:[%s196 + $0x3f0] sm:$0xff] %v449
                %v451 = vld [vmem:[%s195 + $0x7e8] sm:$0xff]
                %452 = vst [vmem:[%s196 + $0x3f8] sm:$0xff] %v451
              $region37: #{_lambda_.5} parent=31 // loop_footer
                %s194 = sadd.s32 1, %s190
              $region38: #{_lambda_.5} parent=31 // loop_footer_branch
                %189 = sbr.rel target = $region34
              $region39: #{_lambda_.5} parent=31 // loop_exit
                _
            $region32: #{_lambda_.5} parent=27 // pred_fallthru
              _
            // Predicated region
            $region40: #{_lambda_.5} parent=27 // pred_check
              _
            $region41: #{_lambda_.5} parent=27 // pred_check_branch
              %454 = sbr.rel target = $region43
            $region42: #{_lambda_.5} parent=27 // pred_region
              _
            $region43: #{_lambda_.5} parent=27 // pred_fallthru
              _
          $region28: #{_lambda_.5} parent=23 // pred_fallthru
            _
          %455 = vnop
        $region24: #{_lambda_.5} parent=19 // pred_fallthru
          _
        // Predicated region
        $region44: #{_lambda_.5} parent=19 // pred_check
          %p456 = pneg %p104
        $region45: #{_lambda_.5} parent=19 // pred_check_branch
          %458 = sbr.rel (%p456) target = $region47
        $region46: #{_lambda_.5} parent=19 // pred_region
          %s459 = smul.u32 4, %s17
          %p460 = scmp.lt.s32.totalorder %s459, 7
          %s461 = scalar_select %p460, %s459, 7
          %s462 = scalar_lea.vmem %s2, %s461
          %s463 = smul.u32 4, %s17
        $region47: #{_lambda_.5} parent=19 // pred_fallthru
          _
      $region20: #{_lambda_.5} parent=5 // pred_fallthru
        _
      %p464 = scmp.le.s32.totalorder 1, %s9
      %p465 = scmp.lt.s32.totalorder %s9, 3
      %p466 = pnand %p464, %p465
      %p467 = pneg %p466
      // Predicated region
      $region48: #{_lambda_.5} parent=5 // pred_check
        _
      $region49: #{_lambda_.5} parent=5 // pred_check_branch
        %469 = sbr.rel (%p466) target = $region51
      $region50: #{_lambda_.5} parent=5 // pred_region
        %s470 = ssub.s32 %s9, 1
        %s471 = sand.u32 %s71, 1
        %s472 = sand.u32 %s71, 1
        %s473 = smul.addr %s472, 1024
        %s474 = scalar_lea.vmem [#allocation3], %s473
        // Predicated region
        $region52: #{_lambda_.5} parent=50 // pred_check
          %p475 = pneg %p84
        $region53: #{_lambda_.5} parent=50 // pred_check_branch
          %477 = sbr.rel (%p475) target = $region55
        $region54: #{_lambda_.5} parent=50 // pred_region
          _
        $region55: #{_lambda_.5} parent=50 // pred_fallthru
          _
        %s478 = smul.u32 8, %s19
        %s479 = smul.u32 4, %s21
        %p480 = scmp.lt.s32.totalorder %s478, 7
        %s481 = scalar_select %p480, %s478, 7
        %p482 = scmp.lt.s32.totalorder %s479, 3
        %s483 = scalar_select %p482, %s479, 3
        %s484 = smul.addr %s481, 4
        %s485 = sadd.s32 %s483, %s484
        %s486 = smul.addr %s485, 4
        %s487 = scalar_lea.vmem %s0, %s486
        %p488 = pneg %p56
        %p489 = pneg %p53
        %s490 = sand.u32 %s71, 1
        %s491 = sand.u32 %s71, 1
        %s492 = smul.addr %s491, 1024
        %s493 = scalar_lea.vmem [#allocation3], %s492
        %p494 = pneg %p84
        %p495 = pneg %p81
        %s496 = smul.u32 4, %s20
        %p497 = scmp.lt.s32.totalorder %s496, 7
        %s498 = scalar_select %p497, %s496, 7
        %s499 = scalar_lea.vmem %s2, %s498
        %p500 = pneg %p110
        %p501 = pneg %p107
        %p502 = pneg %p138
        %p503 = pneg %p135
        %s504 = sand.u32 %s125, 1
        %s505 = sand.u32 %s125, 1
        %s506 = smul.addr %s505, 128
        %s507 = scalar_lea.vmem [#allocation4], %s506
        %s508 = smul.u32 8, %s19
        %s509 = smul.u32 4, %s21
        %p510 = scmp.lt.s32.totalorder %s508, 7
        %s511 = scalar_select %p510, %s508, 7
        %p512 = scmp.lt.s32.totalorder %s509, 3
        %s513 = scalar_select %p512, %s509, 3
        %s514 = smul.addr %s511, 4
        %s515 = sadd.s32 %s513, %s514
        %s516 = smul.addr %s515, 4
        %s517 = scalar_lea.vmem %s0, %s516
        %s518 = smul.u32 8, %s19
        %s519 = smul.u32 4, %s21
        %s520 = smul.u32 64, %s21
        %s521 = smul.u32 4, %s20
        %s522 = smul.u32 4, %s20
        %p523 = scmp.lt.s32.totalorder %s522, 7
        %s524 = scalar_select %p523, %s522, 7
        %s525 = scalar_lea.vmem %s2, %s524
        %s526 = smul.u32 4, %s20
        %s527 = smul.u32 8, %s19
        %s528 = smul.u32 4, %s20
        %p529 = scmp.eq.s32.totalorder %s21, 0
        // Predicated region
        $region56: #{_lambda_.5} parent=50 // pred_check
          %p530 = pneg %p529
        $region57: #{_lambda_.5} parent=50 // pred_check_branch
          %532 = sbr.rel (%p530) target = $region59
        $region58: #{_lambda_.5} parent=50 // pred_region
          %533 = vst [vmem:[#allocation2] sm:$0xff] 0.0
          %534 = vst [vmem:[#allocation2 + $0x8] sm:$0xff] 0.0
          %535 = vst [vmem:[#allocation2 + $0x10] sm:$0xff] 0.0
          %536 = vst [vmem:[#allocation2 + $0x18] sm:$0xff] 0.0
          %537 = vst [vmem:[#allocation2 + $0x20] sm:$0xff] 0.0
          %538 = vst [vmem:[#allocation2 + $0x28] sm:$0xff] 0.0
          %539 = vst [vmem:[#allocation2 + $0x30] sm:$0xff] 0.0
          %540 = vst [vmem:[#allocation2 + $0x38] sm:$0xff] 0.0
          %541 = vst [vmem:[#allocation2 + $0x40] sm:$0xff] 0.0
          %542 = vst [vmem:[#allocation2 + $0x48] sm:$0xff] 0.0
          %543 = vst [vmem:[#allocation2 + $0x50] sm:$0xff] 0.0
          %544 = vst [vmem:[#allocation2 + $0x58] sm:$0xff] 0.0
          %545 = vst [vmem:[#allocation2 + $0x60] sm:$0xff] 0.0
          %546 = vst [vmem:[#allocation2 + $0x68] sm:$0xff] 0.0
          %547 = vst [vmem:[#allocation2 + $0x70] sm:$0xff] 0.0
          %548 = vst [vmem:[#allocation2 + $0x78] sm:$0xff] 0.0
          %549 = vst [vmem:[#allocation2 + $0x80] sm:$0xff] 0.0
          %550 = vst [vmem:[#allocation2 + $0x88] sm:$0xff] 0.0
          %551 = vst [vmem:[#allocation2 + $0x90] sm:$0xff] 0.0
          %552 = vst [vmem:[#allocation2 + $0x98] sm:$0xff] 0.0
          %553 = vst [vmem:[#allocation2 + $0xa0] sm:$0xff] 0.0
          %554 = vst [vmem:[#allocation2 + $0xa8] sm:$0xff] 0.0
          %555 = vst [vmem:[#allocation2 + $0xb0] sm:$0xff] 0.0
          %556 = vst [vmem:[#allocation2 + $0xb8] sm:$0xff] 0.0
          %557 = vst [vmem:[#allocation2 + $0xc0] sm:$0xff] 0.0
          %558 = vst [vmem:[#allocation2 + $0xc8] sm:$0xff] 0.0
          %559 = vst [vmem:[#allocation2 + $0xd0] sm:$0xff] 0.0
          %560 = vst [vmem:[#allocation2 + $0xd8] sm:$0xff] 0.0
          %561 = vst [vmem:[#allocation2 + $0xe0] sm:$0xff] 0.0
          %562 = vst [vmem:[#allocation2 + $0xe8] sm:$0xff] 0.0
          %563 = vst [vmem:[#allocation2 + $0xf0] sm:$0xff] 0.0
          %564 = vst [vmem:[#allocation2 + $0xf8] sm:$0xff] 0.0
        $region59: #{_lambda_.5} parent=50 // pred_fallthru
          _
        %v565 = vld [vmem:[#allocation2] sm:$0xff]
        %v566 = vld [vmem:[#allocation2 + $0x8] sm:$0xff]
        %v567 = vld [vmem:[#allocation2 + $0x10] sm:$0xff]
        %v568 = vld [vmem:[#allocation2 + $0x18] sm:$0xff]
        %v569 = vld [vmem:[#allocation2 + $0x20] sm:$0xff]
        %v570 = vld [vmem:[#allocation2 + $0x28] sm:$0xff]
        %v571 = vld [vmem:[#allocation2 + $0x30] sm:$0xff]
        %v572 = vld [vmem:[#allocation2 + $0x38] sm:$0xff]
        %v573 = vld [vmem:[#allocation2 + $0x40] sm:$0xff]
        %v574 = vld [vmem:[#allocation2 + $0x48] sm:$0xff]
        %v575 = vld [vmem:[#allocation2 + $0x50] sm:$0xff]
        %v576 = vld [vmem:[#allocation2 + $0x58] sm:$0xff]
        %v577 = vld [vmem:[#allocation2 + $0x60] sm:$0xff]
        %v578 = vld [vmem:[#allocation2 + $0x68] sm:$0xff]
        %v579 = vld [vmem:[#allocation2 + $0x70] sm:$0xff]
        %v580 = vld [vmem:[#allocation2 + $0x78] sm:$0xff]
        %v581 = vld [vmem:[#allocation2 + $0x80] sm:$0xff]
        %v582 = vld [vmem:[#allocation2 + $0x88] sm:$0xff]
        %v583 = vld [vmem:[#allocation2 + $0x90] sm:$0xff]
        %v584 = vld [vmem:[#allocation2 + $0x98] sm:$0xff]
        %v585 = vld [vmem:[#allocation2 + $0xa0] sm:$0xff]
        %v586 = vld [vmem:[#allocation2 + $0xa8] sm:$0xff]
        %v587 = vld [vmem:[#allocation2 + $0xb0] sm:$0xff]
        %v588 = vld [vmem:[#allocation2 + $0xb8] sm:$0xff]
        %v589 = vld [vmem:[#allocation2 + $0xc0] sm:$0xff]
        %v590 = vld [vmem:[#allocation2 + $0xc8] sm:$0xff]
        %v591 = vld [vmem:[#allocation2 + $0xd0] sm:$0xff]
        %v592 = vld [vmem:[#allocation2 + $0xd8] sm:$0xff]
        %v593 = vld [vmem:[#allocation2 + $0xe0] sm:$0xff]
        %v594 = vld [vmem:[#allocation2 + $0xe8] sm:$0xff]
        %v595 = vld [vmem:[#allocation2 + $0xf0] sm:$0xff]
        %v596 = vld [vmem:[#allocation2 + $0xf8] sm:$0xff]
        %v597 = vld [vmem:[%s517] sm:$0xff]
        %v598 = vld [vmem:[%s517 + $0x8] sm:$0xff]
        %v599 = vld [vmem:[%s517 + $0x10] sm:$0xff]
        %v600 = vld [vmem:[%s517 + $0x18] sm:$0xff]
        %v601 = vld [vmem:[%s517 + $0x20] sm:$0xff]
        %v602 = vld [vmem:[%s517 + $0x28] sm:$0xff]
        %v603 = vld [vmem:[%s517 + $0x30] sm:$0xff]
        %v604 = vld [vmem:[%s517 + $0x38] sm:$0xff]
        %v605 = vld [vmem:[%s517 + $0x40] sm:$0xff]
        %v606 = vld [vmem:[%s517 + $0x48] sm:$0xff]
        %v607 = vld [vmem:[%s517 + $0x50] sm:$0xff]
        %v608 = vld [vmem:[%s517 + $0x58] sm:$0xff]
        %v609 = vld [vmem:[%s517 + $0x60] sm:$0xff]
        %v610 = vld [vmem:[%s517 + $0x68] sm:$0xff]
        %v611 = vld [vmem:[%s517 + $0x70] sm:$0xff]
        %v612 = vld [vmem:[%s517 + $0x78] sm:$0xff]
        %v613 = vld [vmem:[%s474] sm:$0xff]
        %v614 = vld [vmem:[%s474 + $0x8] sm:$0xff]
        %v615 = vld [vmem:[%s474 + $0x10] sm:$0xff]
        %v616 = vld [vmem:[%s474 + $0x18] sm:$0xff]
        %v617 = vld [vmem:[%s474 + $0x20] sm:$0xff]
        %v618 = vld [vmem:[%s474 + $0x28] sm:$0xff]
        %v619 = vld [vmem:[%s474 + $0x30] sm:$0xff]
        %v620 = vld [vmem:[%s474 + $0x38] sm:$0xff]
        %v621 = vld [vmem:[%s474 + $0x40] sm:$0xff]
        %v622 = vld [vmem:[%s474 + $0x48] sm:$0xff]
        %v623 = vld [vmem:[%s474 + $0x50] sm:$0xff]
        %v624 = vld [vmem:[%s474 + $0x58] sm:$0xff]
        %v625 = vld [vmem:[%s474 + $0x60] sm:$0xff]
        %v626 = vld [vmem:[%s474 + $0x68] sm:$0xff]
        %v627 = vld [vmem:[%s474 + $0x70] sm:$0xff]
        %v628 = vld [vmem:[%s474 + $0x78] sm:$0xff]
        %v629 = vld [vmem:[%s474 + $0x80] sm:$0xff]
        %v630 = vld [vmem:[%s474 + $0x88] sm:$0xff]
        %v631 = vld [vmem:[%s474 + $0x90] sm:$0xff]
        %v632 = vld [vmem:[%s474 + $0x98] sm:$0xff]
        %v633 = vld [vmem:[%s474 + $0xa0] sm:$0xff]
        %v634 = vld [vmem:[%s474 + $0xa8] sm:$0xff]
        %v635 = vld [vmem:[%s474 + $0xb0] sm:$0xff]
        %v636 = vld [vmem:[%s474 + $0xb8] sm:$0xff]
        %v637 = vld [vmem:[%s474 + $0xc0] sm:$0xff]
        %v638 = vld [vmem:[%s474 + $0xc8] sm:$0xff]
        %v639 = vld [vmem:[%s474 + $0xd0] sm:$0xff]
        %v640 = vld [vmem:[%s474 + $0xd8] sm:$0xff]
        %v641 = vld [vmem:[%s474 + $0xe0] sm:$0xff]
        %v642 = vld [vmem:[%s474 + $0xe8] sm:$0xff]
        %v643 = vld [vmem:[%s474 + $0xf0] sm:$0xff]
        %v644 = vld [vmem:[%s474 + $0xf8] sm:$0xff]
        %v645 = vld [vmem:[%s474 + $0x100] sm:$0xff]
        %v646 = vld [vmem:[%s474 + $0x108] sm:$0xff]
        %v647 = vld [vmem:[%s474 + $0x110] sm:$0xff]
        %v648 = vld [vmem:[%s474 + $0x118] sm:$0xff]
        %v649 = vld [vmem:[%s474 + $0x120] sm:$0xff]
        %v650 = vld [vmem:[%s474 + $0x128] sm:$0xff]
        %v651 = vld [vmem:[%s474 + $0x130] sm:$0xff]
        %v652 = vld [vmem:[%s474 + $0x138] sm:$0xff]
        %v653 = vld [vmem:[%s474 + $0x140] sm:$0xff]
        %v654 = vld [vmem:[%s474 + $0x148] sm:$0xff]
        %v655 = vld [vmem:[%s474 + $0x150] sm:$0xff]
        %v656 = vld [vmem:[%s474 + $0x158] sm:$0xff]
        %v657 = vld [vmem:[%s474 + $0x160] sm:$0xff]
        %v658 = vld [vmem:[%s474 + $0x168] sm:$0xff]
        %v659 = vld [vmem:[%s474 + $0x170] sm:$0xff]
        %v660 = vld [vmem:[%s474 + $0x178] sm:$0xff]
        %v661 = vld [vmem:[%s474 + $0x180] sm:$0xff]
        %v662 = vld [vmem:[%s474 + $0x188] sm:$0xff]
        %v663 = vld [vmem:[%s474 + $0x190] sm:$0xff]
        %v664 = vld [vmem:[%s474 + $0x198] sm:$0xff]
        %v665 = vld [vmem:[%s474 + $0x1a0] sm:$0xff]
        %v666 = vld [vmem:[%s474 + $0x1a8] sm:$0xff]
        %v667 = vld [vmem:[%s474 + $0x1b0] sm:$0xff]
        %v668 = vld [vmem:[%s474 + $0x1b8] sm:$0xff]
        %v669 = vld [vmem:[%s474 + $0x1c0] sm:$0xff]
        %v670 = vld [vmem:[%s474 + $0x1c8] sm:$0xff]
        %v671 = vld [vmem:[%s474 + $0x1d0] sm:$0xff]
        %v672 = vld [vmem:[%s474 + $0x1d8] sm:$0xff]
        %v673 = vld [vmem:[%s474 + $0x1e0] sm:$0xff]
        %v674 = vld [vmem:[%s474 + $0x1e8] sm:$0xff]
        %v675 = vld [vmem:[%s474 + $0x1f0] sm:$0xff]
        %v676 = vld [vmem:[%s474 + $0x1f8] sm:$0xff]
        %v677 = vld [vmem:[%s474 + $0x200] sm:$0xff]
        %v678 = vld [vmem:[%s474 + $0x208] sm:$0xff]
        %v679 = vld [vmem:[%s474 + $0x210] sm:$0xff]
        %v680 = vld [vmem:[%s474 + $0x218] sm:$0xff]
        %v681 = vld [vmem:[%s474 + $0x220] sm:$0xff]
        %v682 = vld [vmem:[%s474 + $0x228] sm:$0xff]
        %v683 = vld [vmem:[%s474 + $0x230] sm:$0xff]
        %v684 = vld [vmem:[%s474 + $0x238] sm:$0xff]
        %v685 = vld [vmem:[%s474 + $0x240] sm:$0xff]
        %v686 = vld [vmem:[%s474 + $0x248] sm:$0xff]
        %v687 = vld [vmem:[%s474 + $0x250] sm:$0xff]
        %v688 = vld [vmem:[%s474 + $0x258] sm:$0xff]
        %v689 = vld [vmem:[%s474 + $0x260] sm:$0xff]
        %v690 = vld [vmem:[%s474 + $0x268] sm:$0xff]
        %v691 = vld [vmem:[%s474 + $0x270] sm:$0xff]
        %v692 = vld [vmem:[%s474 + $0x278] sm:$0xff]
        %v693 = vld [vmem:[%s474 + $0x280] sm:$0xff]
        %v694 = vld [vmem:[%s474 + $0x288] sm:$0xff]
        %v695 = vld [vmem:[%s474 + $0x290] sm:$0xff]
        %v696 = vld [vmem:[%s474 + $0x298] sm:$0xff]
        %v697 = vld [vmem:[%s474 + $0x2a0] sm:$0xff]
        %v698 = vld [vmem:[%s474 + $0x2a8] sm:$0xff]
        %v699 = vld [vmem:[%s474 + $0x2b0] sm:$0xff]
        %v700 = vld [vmem:[%s474 + $0x2b8] sm:$0xff]
        %v701 = vld [vmem:[%s474 + $0x2c0] sm:$0xff]
        %v702 = vld [vmem:[%s474 + $0x2c8] sm:$0xff]
        %v703 = vld [vmem:[%s474 + $0x2d0] sm:$0xff]
        %v704 = vld [vmem:[%s474 + $0x2d8] sm:$0xff]
        %v705 = vld [vmem:[%s474 + $0x2e0] sm:$0xff]
        %v706 = vld [vmem:[%s474 + $0x2e8] sm:$0xff]
        %v707 = vld [vmem:[%s474 + $0x2f0] sm:$0xff]
        %v708 = vld [vmem:[%s474 + $0x2f8] sm:$0xff]
        %v709 = vld [vmem:[%s474 + $0x300] sm:$0xff]
        %v710 = vld [vmem:[%s474 + $0x308] sm:$0xff]
        %v711 = vld [vmem:[%s474 + $0x310] sm:$0xff]
        %v712 = vld [vmem:[%s474 + $0x318] sm:$0xff]
        %v713 = vld [vmem:[%s474 + $0x320] sm:$0xff]
        %v714 = vld [vmem:[%s474 + $0x328] sm:$0xff]
        %v715 = vld [vmem:[%s474 + $0x330] sm:$0xff]
        %v716 = vld [vmem:[%s474 + $0x338] sm:$0xff]
        %v717 = vld [vmem:[%s474 + $0x340] sm:$0xff]
        %v718 = vld [vmem:[%s474 + $0x348] sm:$0xff]
        %v719 = vld [vmem:[%s474 + $0x350] sm:$0xff]
        %v720 = vld [vmem:[%s474 + $0x358] sm:$0xff]
        %v721 = vld [vmem:[%s474 + $0x360] sm:$0xff]
        %v722 = vld [vmem:[%s474 + $0x368] sm:$0xff]
        %v723 = vld [vmem:[%s474 + $0x370] sm:$0xff]
        %v724 = vld [vmem:[%s474 + $0x378] sm:$0xff]
        %v725 = vld [vmem:[%s474 + $0x380] sm:$0xff]
        %v726 = vld [vmem:[%s474 + $0x388] sm:$0xff]
        %v727 = vld [vmem:[%s474 + $0x390] sm:$0xff]
        %v728 = vld [vmem:[%s474 + $0x398] sm:$0xff]
        %v729 = vld [vmem:[%s474 + $0x3a0] sm:$0xff]
        %v730 = vld [vmem:[%s474 + $0x3a8] sm:$0xff]
        %v731 = vld [vmem:[%s474 + $0x3b0] sm:$0xff]
        %v732 = vld [vmem:[%s474 + $0x3b8] sm:$0xff]
        %v733 = vld [vmem:[%s474 + $0x3c0] sm:$0xff]
        %v734 = vld [vmem:[%s474 + $0x3c8] sm:$0xff]
        %v735 = vld [vmem:[%s474 + $0x3d0] sm:$0xff]
        %v736 = vld [vmem:[%s474 + $0x3d8] sm:$0xff]
        %v737 = vld [vmem:[%s474 + $0x3e0] sm:$0xff]
        %v738 = vld [vmem:[%s474 + $0x3e8] sm:$0xff]
        %v739 = vld [vmem:[%s474 + $0x3f0] sm:$0xff]
        %v740 = vld [vmem:[%s474 + $0x3f8] sm:$0xff]
        %v757 = vunpack.c.l.b16 %v597
        %v758 = vunpack.c.h.b16 %v597
        %v759 = vunpack.c.l.b16 %v598
        %v760 = vunpack.c.h.b16 %v598
        %v761 = vunpack.c.l.b16 %v599
        %v762 = vunpack.c.h.b16 %v599
        %v763 = vunpack.c.l.b16 %v600
        %v764 = vunpack.c.h.b16 %v600
        %v765 = vunpack.c.l.b16 %v601
        %v766 = vunpack.c.h.b16 %v601
        %v767 = vunpack.c.l.b16 %v602
        %v768 = vunpack.c.h.b16 %v602
        %v769 = vunpack.c.l.b16 %v603
        %v770 = vunpack.c.h.b16 %v603
        %v771 = vunpack.c.l.b16 %v604
        %v772 = vunpack.c.h.b16 %v604
        %v773 = vunpack.c.l.b16 %v605
        %v774 = vunpack.c.h.b16 %v605
        %v775 = vunpack.c.l.b16 %v606
        %v776 = vunpack.c.h.b16 %v606
        %v777 = vunpack.c.l.b16 %v607
        %v778 = vunpack.c.h.b16 %v607
        %v779 = vunpack.c.l.b16 %v608
        %v780 = vunpack.c.h.b16 %v608
        %v781 = vunpack.c.l.b16 %v609
        %v782 = vunpack.c.h.b16 %v609
        %v783 = vunpack.c.l.b16 %v610
        %v784 = vunpack.c.h.b16 %v610
        %v785 = vunpack.c.l.b16 %v611
        %v786 = vunpack.c.h.b16 %v611
        %v787 = vunpack.c.l.b16 %v612
        %v788 = vunpack.c.h.b16 %v612
        %v789 = vpack.c.b16 %v761, %v757
        %v790 = vpack.c.b16 %v762, %v758
        %v791 = vpack.c.b16 %v763, %v759
        %v792 = vpack.c.b16 %v764, %v760
        %v793 = vpack.c.b16 %v769, %v765
        %v794 = vpack.c.b16 %v770, %v766
        %v795 = vpack.c.b16 %v771, %v767
        %v796 = vpack.c.b16 %v772, %v768
        %v797 = vpack.c.b16 %v777, %v773
        %v798 = vpack.c.b16 %v778, %v774
        %v799 = vpack.c.b16 %v779, %v775
        %v800 = vpack.c.b16 %v780, %v776
        %v801 = vpack.c.b16 %v785, %v781
        %v802 = vpack.c.b16 %v786, %v782
        %v803 = vpack.c.b16 %v787, %v783
        %v804 = vpack.c.b16 %v788, %v784
        %v949 = vunpack.c.l.b16 %v613
        %v950 = vunpack.c.h.b16 %v613
        %v951 = vunpack.c.l.b16 %v614
        %v952 = vunpack.c.h.b16 %v614
        %v953 = vunpack.c.l.b16 %v615
        %v954 = vunpack.c.h.b16 %v615
        %v955 = vunpack.c.l.b16 %v616
        %v956 = vunpack.c.h.b16 %v616
        %v957 = vunpack.c.l.b16 %v617
        %v958 = vunpack.c.h.b16 %v617
        %v959 = vunpack.c.l.b16 %v618
        %v960 = vunpack.c.h.b16 %v618
        %v961 = vunpack.c.l.b16 %v619
        %v962 = vunpack.c.h.b16 %v619
        %v963 = vunpack.c.l.b16 %v620
        %v964 = vunpack.c.h.b16 %v620
        %v965 = vunpack.c.l.b16 %v621
        %v966 = vunpack.c.h.b16 %v621
        %v967 = vunpack.c.l.b16 %v622
        %v968 = vunpack.c.h.b16 %v622
        %v969 = vunpack.c.l.b16 %v623
        %v970 = vunpack.c.h.b16 %v623
        %v971 = vunpack.c.l.b16 %v624
        %v972 = vunpack.c.h.b16 %v624
        %v973 = vunpack.c.l.b16 %v625
        %v974 = vunpack.c.h.b16 %v625
        %v975 = vunpack.c.l.b16 %v626
        %v976 = vunpack.c.h.b16 %v626
        %v977 = vunpack.c.l.b16 %v627
        %v978 = vunpack.c.h.b16 %v627
        %v979 = vunpack.c.l.b16 %v628
        %v980 = vunpack.c.h.b16 %v628
        %v981 = vunpack.c.l.b16 %v629
        %v982 = vunpack.c.h.b16 %v629
        %v983 = vunpack.c.l.b16 %v630
        %v984 = vunpack.c.h.b16 %v630
        %v985 = vunpack.c.l.b16 %v631
        %v986 = vunpack.c.h.b16 %v631
        %v987 = vunpack.c.l.b16 %v632
        %v988 = vunpack.c.h.b16 %v632
        %v989 = vunpack.c.l.b16 %v633
        %v990 = vunpack.c.h.b16 %v633
        %v991 = vunpack.c.l.b16 %v634
        %v992 = vunpack.c.h.b16 %v634
        %v993 = vunpack.c.l.b16 %v635
        %v994 = vunpack.c.h.b16 %v635
        %v995 = vunpack.c.l.b16 %v636
        %v996 = vunpack.c.h.b16 %v636
        %v997 = vunpack.c.l.b16 %v637
        %v998 = vunpack.c.h.b16 %v637
        %v999 = vunpack.c.l.b16 %v638
        %v1000 = vunpack.c.h.b16 %v638
        %v1001 = vunpack.c.l.b16 %v639
        %v1002 = vunpack.c.h.b16 %v639
        %v1003 = vunpack.c.l.b16 %v640
        %v1004 = vunpack.c.h.b16 %v640
        %v1005 = vunpack.c.l.b16 %v641
        %v1006 = vunpack.c.h.b16 %v641
        %v1007 = vunpack.c.l.b16 %v642
        %v1008 = vunpack.c.h.b16 %v642
        %v1009 = vunpack.c.l.b16 %v643
        %v1010 = vunpack.c.h.b16 %v643
        %v1011 = vunpack.c.l.b16 %v644
        %v1012 = vunpack.c.h.b16 %v644
        %v1013 = vunpack.c.l.b16 %v645
        %v1014 = vunpack.c.h.b16 %v645
        %v1015 = vunpack.c.l.b16 %v646
        %v1016 = vunpack.c.h.b16 %v646
        %v1017 = vunpack.c.l.b16 %v647
        %v1018 = vunpack.c.h.b16 %v647
        %v1019 = vunpack.c.l.b16 %v648
        %v1020 = vunpack.c.h.b16 %v648
        %v1021 = vunpack.c.l.b16 %v649
        %v1022 = vunpack.c.h.b16 %v649
        %v1023 = vunpack.c.l.b16 %v650
        %v1024 = vunpack.c.h.b16 %v650
        %v1025 = vunpack.c.l.b16 %v651
        %v1026 = vunpack.c.h.b16 %v651
        %v1027 = vunpack.c.l.b16 %v652
        %v1028 = vunpack.c.h.b16 %v652
        %v1029 = vunpack.c.l.b16 %v653
        %v1030 = vunpack.c.h.b16 %v653
        %v1031 = vunpack.c.l.b16 %v654
        %v1032 = vunpack.c.h.b16 %v654
        %v1033 = vunpack.c.l.b16 %v655
        %v1034 = vunpack.c.h.b16 %v655
        %v1035 = vunpack.c.l.b16 %v656
        %v1036 = vunpack.c.h.b16 %v656
        %v1037 = vunpack.c.l.b16 %v657
        %v1038 = vunpack.c.h.b16 %v657
        %v1039 = vunpack.c.l.b16 %v658
        %v1040 = vunpack.c.h.b16 %v658
        %v1041 = vunpack.c.l.b16 %v659
        %v1042 = vunpack.c.h.b16 %v659
        %v1043 = vunpack.c.l.b16 %v660
        %v1044 = vunpack.c.h.b16 %v660
        %v1045 = vunpack.c.l.b16 %v661
        %v1046 = vunpack.c.h.b16 %v661
        %v1047 = vunpack.c.l.b16 %v662
        %v1048 = vunpack.c.h.b16 %v662
        %v1049 = vunpack.c.l.b16 %v663
        %v1050 = vunpack.c.h.b16 %v663
        %v1051 = vunpack.c.l.b16 %v664
        %v1052 = vunpack.c.h.b16 %v664
        %v1053 = vunpack.c.l.b16 %v665
        %v1054 = vunpack.c.h.b16 %v665
        %v1055 = vunpack.c.l.b16 %v666
        %v1056 = vunpack.c.h.b16 %v666
        %v1057 = vunpack.c.l.b16 %v667
        %v1058 = vunpack.c.h.b16 %v667
        %v1059 = vunpack.c.l.b16 %v668
        %v1060 = vunpack.c.h.b16 %v668
        %v1061 = vunpack.c.l.b16 %v669
        %v1062 = vunpack.c.h.b16 %v669
        %v1063 = vunpack.c.l.b16 %v670
        %v1064 = vunpack.c.h.b16 %v670
        %v1065 = vunpack.c.l.b16 %v671
        %v1066 = vunpack.c.h.b16 %v671
        %v1067 = vunpack.c.l.b16 %v672
        %v1068 = vunpack.c.h.b16 %v672
        %v1069 = vunpack.c.l.b16 %v673
        %v1070 = vunpack.c.h.b16 %v673
        %v1071 = vunpack.c.l.b16 %v674
        %v1072 = vunpack.c.h.b16 %v674
        %v1073 = vunpack.c.l.b16 %v675
        %v1074 = vunpack.c.h.b16 %v675
        %v1075 = vunpack.c.l.b16 %v676
        %v1076 = vunpack.c.h.b16 %v676
        %v1077 = vunpack.c.l.b16 %v677
        %v1078 = vunpack.c.h.b16 %v677
        %v1079 = vunpack.c.l.b16 %v678
        %v1080 = vunpack.c.h.b16 %v678
        %v1081 = vunpack.c.l.b16 %v679
        %v1082 = vunpack.c.h.b16 %v679
        %v1083 = vunpack.c.l.b16 %v680
        %v1084 = vunpack.c.h.b16 %v680
        %v1085 = vunpack.c.l.b16 %v681
        %v1086 = vunpack.c.h.b16 %v681
        %v1087 = vunpack.c.l.b16 %v682
        %v1088 = vunpack.c.h.b16 %v682
        %v1089 = vunpack.c.l.b16 %v683
        %v1090 = vunpack.c.h.b16 %v683
        %v1091 = vunpack.c.l.b16 %v684
        %v1092 = vunpack.c.h.b16 %v684
        %v1093 = vunpack.c.l.b16 %v685
        %v1094 = vunpack.c.h.b16 %v685
        %v1095 = vunpack.c.l.b16 %v686
        %v1096 = vunpack.c.h.b16 %v686
        %v1097 = vunpack.c.l.b16 %v687
        %v1098 = vunpack.c.h.b16 %v687
        %v1099 = vunpack.c.l.b16 %v688
        %v1100 = vunpack.c.h.b16 %v688
        %v1101 = vunpack.c.l.b16 %v689
        %v1102 = vunpack.c.h.b16 %v689
        %v1103 = vunpack.c.l.b16 %v690
        %v1104 = vunpack.c.h.b16 %v690
        %v1105 = vunpack.c.l.b16 %v691
        %v1106 = vunpack.c.h.b16 %v691
        %v1107 = vunpack.c.l.b16 %v692
        %v1108 = vunpack.c.h.b16 %v692
        %v1109 = vunpack.c.l.b16 %v693
        %v1110 = vunpack.c.h.b16 %v693
        %v1111 = vunpack.c.l.b16 %v694
        %v1112 = vunpack.c.h.b16 %v694
        %v1113 = vunpack.c.l.b16 %v695
        %v1114 = vunpack.c.h.b16 %v695
        %v1115 = vunpack.c.l.b16 %v696
        %v1116 = vunpack.c.h.b16 %v696
        %v1117 = vunpack.c.l.b16 %v697
        %v1118 = vunpack.c.h.b16 %v697
        %v1119 = vunpack.c.l.b16 %v698
        %v1120 = vunpack.c.h.b16 %v698
        %v1121 = vunpack.c.l.b16 %v699
        %v1122 = vunpack.c.h.b16 %v699
        %v1123 = vunpack.c.l.b16 %v700
        %v1124 = vunpack.c.h.b16 %v700
        %v1125 = vunpack.c.l.b16 %v701
        %v1126 = vunpack.c.h.b16 %v701
        %v1127 = vunpack.c.l.b16 %v702
        %v1128 = vunpack.c.h.b16 %v702
        %v1129 = vunpack.c.l.b16 %v703
        %v1130 = vunpack.c.h.b16 %v703
        %v1131 = vunpack.c.l.b16 %v704
        %v1132 = vunpack.c.h.b16 %v704
        %v1133 = vunpack.c.l.b16 %v705
        %v1134 = vunpack.c.h.b16 %v705
        %v1135 = vunpack.c.l.b16 %v706
        %v1136 = vunpack.c.h.b16 %v706
        %v1137 = vunpack.c.l.b16 %v707
        %v1138 = vunpack.c.h.b16 %v707
        %v1139 = vunpack.c.l.b16 %v708
        %v1140 = vunpack.c.h.b16 %v708
        %v1141 = vunpack.c.l.b16 %v709
        %v1142 = vunpack.c.h.b16 %v709
        %v1143 = vunpack.c.l.b16 %v710
        %v1144 = vunpack.c.h.b16 %v710
        %v1145 = vunpack.c.l.b16 %v711
        %v1146 = vunpack.c.h.b16 %v711
        %v1147 = vunpack.c.l.b16 %v712
        %v1148 = vunpack.c.h.b16 %v712
        %v1149 = vunpack.c.l.b16 %v713
        %v1150 = vunpack.c.h.b16 %v713
        %v1151 = vunpack.c.l.b16 %v714
        %v1152 = vunpack.c.h.b16 %v714
        %v1153 = vunpack.c.l.b16 %v715
        %v1154 = vunpack.c.h.b16 %v715
        %v1155 = vunpack.c.l.b16 %v716
        %v1156 = vunpack.c.h.b16 %v716
        %v1157 = vunpack.c.l.b16 %v717
        %v1158 = vunpack.c.h.b16 %v717
        %v1159 = vunpack.c.l.b16 %v718
        %v1160 = vunpack.c.h.b16 %v718
        %v1161 = vunpack.c.l.b16 %v719
        %v1162 = vunpack.c.h.b16 %v719
        %v1163 = vunpack.c.l.b16 %v720
        %v1164 = vunpack.c.h.b16 %v720
        %v1165 = vunpack.c.l.b16 %v721
        %v1166 = vunpack.c.h.b16 %v721
        %v1167 = vunpack.c.l.b16 %v722
        %v1168 = vunpack.c.h.b16 %v722
        %v1169 = vunpack.c.l.b16 %v723
        %v1170 = vunpack.c.h.b16 %v723
        %v1171 = vunpack.c.l.b16 %v724
        %v1172 = vunpack.c.h.b16 %v724
        %v1173 = vunpack.c.l.b16 %v725
        %v1174 = vunpack.c.h.b16 %v725
        %v1175 = vunpack.c.l.b16 %v726
        %v1176 = vunpack.c.h.b16 %v726
        %v1177 = vunpack.c.l.b16 %v727
        %v1178 = vunpack.c.h.b16 %v727
        %v1179 = vunpack.c.l.b16 %v728
        %v1180 = vunpack.c.h.b16 %v728
        %v1181 = vunpack.c.l.b16 %v729
        %v1182 = vunpack.c.h.b16 %v729
        %v1183 = vunpack.c.l.b16 %v730
        %v1184 = vunpack.c.h.b16 %v730
        %v1185 = vunpack.c.l.b16 %v731
        %v1186 = vunpack.c.h.b16 %v731
        %v1187 = vunpack.c.l.b16 %v732
        %v1188 = vunpack.c.h.b16 %v732
        %v1189 = vunpack.c.l.b16 %v733
        %v1190 = vunpack.c.h.b16 %v733
        %v1191 = vunpack.c.l.b16 %v734
        %v1192 = vunpack.c.h.b16 %v734
        %v1193 = vunpack.c.l.b16 %v735
        %v1194 = vunpack.c.h.b16 %v735
        %v1195 = vunpack.c.l.b16 %v736
        %v1196 = vunpack.c.h.b16 %v736
        %v1197 = vunpack.c.l.b16 %v737
        %v1198 = vunpack.c.h.b16 %v737
        %v1199 = vunpack.c.l.b16 %v738
        %v1200 = vunpack.c.h.b16 %v738
        %v1201 = vunpack.c.l.b16 %v739
        %v1202 = vunpack.c.h.b16 %v739
        %v1203 = vunpack.c.l.b16 %v740
        %v1204 = vunpack.c.h.b16 %v740
        %v1205 = vpack.c.b16 %v953, %v949
        %v1206 = vpack.c.b16 %v954, %v950
        %v1207 = vpack.c.b16 %v955, %v951
        %v1208 = vpack.c.b16 %v956, %v952
        %v1209 = vpack.c.b16 %v961, %v957
        %v1210 = vpack.c.b16 %v962, %v958
        %v1211 = vpack.c.b16 %v963, %v959
        %v1212 = vpack.c.b16 %v964, %v960
        %v1213 = vpack.c.b16 %v969, %v965
        %v1214 = vpack.c.b16 %v970, %v966
        %v1215 = vpack.c.b16 %v971, %v967
        %v1216 = vpack.c.b16 %v972, %v968
        %v1217 = vpack.c.b16 %v977, %v973
        %v1218 = vpack.c.b16 %v978, %v974
        %v1219 = vpack.c.b16 %v979, %v975
        %v1220 = vpack.c.b16 %v980, %v976
        %v1221 = vpack.c.b16 %v985, %v981
        %v1222 = vpack.c.b16 %v986, %v982
        %v1223 = vpack.c.b16 %v987, %v983
        %v1224 = vpack.c.b16 %v988, %v984
        %v1225 = vpack.c.b16 %v993, %v989
        %v1226 = vpack.c.b16 %v994, %v990
        %v1227 = vpack.c.b16 %v995, %v991
        %v1228 = vpack.c.b16 %v996, %v992
        %v1229 = vpack.c.b16 %v1001, %v997
        %v1230 = vpack.c.b16 %v1002, %v998
        %v1231 = vpack.c.b16 %v1003, %v999
        %v1232 = vpack.c.b16 %v1004, %v1000
        %v1233 = vpack.c.b16 %v1009, %v1005
        %v1234 = vpack.c.b16 %v1010, %v1006
        %v1235 = vpack.c.b16 %v1011, %v1007
        %v1236 = vpack.c.b16 %v1012, %v1008
        %v1237 = vpack.c.b16 %v1017, %v1013
        %v1238 = vpack.c.b16 %v1018, %v1014
        %v1239 = vpack.c.b16 %v1019, %v1015
        %v1240 = vpack.c.b16 %v1020, %v1016
        %v1241 = vpack.c.b16 %v1025, %v1021
        %v1242 = vpack.c.b16 %v1026, %v1022
        %v1243 = vpack.c.b16 %v1027, %v1023
        %v1244 = vpack.c.b16 %v1028, %v1024
        %v1245 = vpack.c.b16 %v1033, %v1029
        %v1246 = vpack.c.b16 %v1034, %v1030
        %v1247 = vpack.c.b16 %v1035, %v1031
        %v1248 = vpack.c.b16 %v1036, %v1032
        %v1249 = vpack.c.b16 %v1041, %v1037
        %v1250 = vpack.c.b16 %v1042, %v1038
        %v1251 = vpack.c.b16 %v1043, %v1039
        %v1252 = vpack.c.b16 %v1044, %v1040
        %v1253 = vpack.c.b16 %v1049, %v1045
        %v1254 = vpack.c.b16 %v1050, %v1046
        %v1255 = vpack.c.b16 %v1051, %v1047
        %v1256 = vpack.c.b16 %v1052, %v1048
        %v1257 = vpack.c.b16 %v1057, %v1053
        %v1258 = vpack.c.b16 %v1058, %v1054
        %v1259 = vpack.c.b16 %v1059, %v1055
        %v1260 = vpack.c.b16 %v1060, %v1056
        %v1261 = vpack.c.b16 %v1065, %v1061
        %v1262 = vpack.c.b16 %v1066, %v1062
        %v1263 = vpack.c.b16 %v1067, %v1063
        %v1264 = vpack.c.b16 %v1068, %v1064
        %v1265 = vpack.c.b16 %v1073, %v1069
        %v1266 = vpack.c.b16 %v1074, %v1070
        %v1267 = vpack.c.b16 %v1075, %v1071
        %v1268 = vpack.c.b16 %v1076, %v1072
        %v1269 = vpack.c.b16 %v1081, %v1077
        %v1270 = vpack.c.b16 %v1082, %v1078
        %v1271 = vpack.c.b16 %v1083, %v1079
        %v1272 = vpack.c.b16 %v1084, %v1080
        %v1273 = vpack.c.b16 %v1089, %v1085
        %v1274 = vpack.c.b16 %v1090, %v1086
        %v1275 = vpack.c.b16 %v1091, %v1087
        %v1276 = vpack.c.b16 %v1092, %v1088
        %v1277 = vpack.c.b16 %v1097, %v1093
        %v1278 = vpack.c.b16 %v1098, %v1094
        %v1279 = vpack.c.b16 %v1099, %v1095
        %v1280 = vpack.c.b16 %v1100, %v1096
        %v1281 = vpack.c.b16 %v1105, %v1101
        %v1282 = vpack.c.b16 %v1106, %v1102
        %v1283 = vpack.c.b16 %v1107, %v1103
        %v1284 = vpack.c.b16 %v1108, %v1104
        %v1285 = vpack.c.b16 %v1113, %v1109
        %v1286 = vpack.c.b16 %v1114, %v1110
        %v1287 = vpack.c.b16 %v1115, %v1111
        %v1288 = vpack.c.b16 %v1116, %v1112
        %v1289 = vpack.c.b16 %v1121, %v1117
        %v1290 = vpack.c.b16 %v1122, %v1118
        %v1291 = vpack.c.b16 %v1123, %v1119
        %v1292 = vpack.c.b16 %v1124, %v1120
        %v1293 = vpack.c.b16 %v1129, %v1125
        %v1294 = vpack.c.b16 %v1130, %v1126
        %v1295 = vpack.c.b16 %v1131, %v1127
        %v1296 = vpack.c.b16 %v1132, %v1128
        %v1297 = vpack.c.b16 %v1137, %v1133
        %v1298 = vpack.c.b16 %v1138, %v1134
        %v1299 = vpack.c.b16 %v1139, %v1135
        %v1300 = vpack.c.b16 %v1140, %v1136
        %v1301 = vpack.c.b16 %v1145, %v1141
        %v1302 = vpack.c.b16 %v1146, %v1142
        %v1303 = vpack.c.b16 %v1147, %v1143
        %v1304 = vpack.c.b16 %v1148, %v1144
        %v1305 = vpack.c.b16 %v1153, %v1149
        %v1306 = vpack.c.b16 %v1154, %v1150
        %v1307 = vpack.c.b16 %v1155, %v1151
        %v1308 = vpack.c.b16 %v1156, %v1152
        %v1309 = vpack.c.b16 %v1161, %v1157
        %v1310 = vpack.c.b16 %v1162, %v1158
        %v1311 = vpack.c.b16 %v1163, %v1159
        %v1312 = vpack.c.b16 %v1164, %v1160
        %v1313 = vpack.c.b16 %v1169, %v1165
        %v1314 = vpack.c.b16 %v1170, %v1166
        %v1315 = vpack.c.b16 %v1171, %v1167
        %v1316 = vpack.c.b16 %v1172, %v1168
        %v1317 = vpack.c.b16 %v1177, %v1173
        %v1318 = vpack.c.b16 %v1178, %v1174
        %v1319 = vpack.c.b16 %v1179, %v1175
        %v1320 = vpack.c.b16 %v1180, %v1176
        %v1321 = vpack.c.b16 %v1185, %v1181
        %v1322 = vpack.c.b16 %v1186, %v1182
        %v1323 = vpack.c.b16 %v1187, %v1183
        %v1324 = vpack.c.b16 %v1188, %v1184
        %v1325 = vpack.c.b16 %v1193, %v1189
        %v1326 = vpack.c.b16 %v1194, %v1190
        %v1327 = vpack.c.b16 %v1195, %v1191
        %v1328 = vpack.c.b16 %v1196, %v1192
        %v1329 = vpack.c.b16 %v1201, %v1197
        %v1330 = vpack.c.b16 %v1202, %v1198
        %v1331 = vpack.c.b16 %v1203, %v1199
        %v1332 = vpack.c.b16 %v1204, %v1200
        %1461 = vmatprep.subr.bf16.mxu0 %v1234
        %1462 = vmatpush1.bf16.msra.mxu0 %v1233
        %1463 = vmatprep.subr.bf16.mxu0 %v1230
        %1464 = vmatpush1.bf16.msra.mxu0 %v1229
        %1465 = vmatprep.subr.bf16.mxu0 %v1226
        %1466 = vmatpush1.bf16.msra.mxu0 %v1225
        %1467 = vmatprep.subr.bf16.mxu0 %v1222
        %1468 = vmatpush1.bf16.msra.mxu0 %v1221
        %1469 = vmatprep.subr.bf16.mxu0 %v1218
        %1470 = vmatpush1.bf16.msra.mxu0 %v1217
        %1471 = vmatprep.subr.bf16.mxu0 %v1214
        %1472 = vmatpush1.bf16.msra.mxu0 %v1213
        %1473 = vmatprep.subr.bf16.mxu0 %v1210
        %1474 = vmatpush1.bf16.msra.mxu0 %v1209
        %1475 = vmatprep.subr.bf16.mxu0 %v1206
        %1476 = vmatpush1.bf16.msra.mxu0 %v1205
        %1477 = vmatprep.subr.bf16.mxu0 %v1266
        %1478 = vmatpush2.bf16.msra.mxu0 %v1265
        %1479 = vmatprep.subr.bf16.mxu0 %v1262
        %1480 = vmatpush2.bf16.msra.mxu0 %v1261
        %1481 = vmatprep.subr.bf16.mxu0 %v1258
        %1482 = vmatpush2.bf16.msra.mxu0 %v1257
        %1483 = vmatprep.subr.bf16.mxu0 %v1254
        %1484 = vmatpush2.bf16.msra.mxu0 %v1253
        %1485 = vmatprep.subr.bf16.mxu0 %v1250
        %1486 = vmatpush2.bf16.msra.mxu0 %v1249
        %1487 = vmatprep.subr.bf16.mxu0 %v1246
        %1488 = vmatpush2.bf16.msra.mxu0 %v1245
        %1489 = vmatprep.subr.bf16.mxu0 %v1242
        %1490 = vmatpush2.bf16.msra.mxu0 %v1241
        %1491 = vmatprep.subr.bf16.mxu0 %v1238
        %1492 = vmatpush2.bf16.msra.mxu0 %v1237
        %1493 = vmatprep.mubr.bf16.mxu0 %v790
        %1494 = vmatmul.mubr.bf16.gmra.mxu0 %v789
        %v1495 = vpop.f32.mrf.mxu0
        %v1496 = vadd.f32 0.0, %v1495
        %v1497 = vpop.f32.mrf.mxu0
        %v1498 = vadd.f32 0.0, %v1497
        %v1499 = vpop.f32.mrf.mxu0
        %v1500 = vadd.f32 0.0, %v1499
        %v1501 = vpop.f32.mrf.mxu0
        %v1502 = vadd.f32 0.0, %v1501
        %1503 = vmatprep.mubr.bf16.mxu0 %v794
        %1504 = vmatmul.mubr.bf16.gmra.mxu0 %v793
        %v1505 = vpop.f32.mrf.mxu0
        %v1506 = vadd.f32 0.0, %v1505
        %v1507 = vpop.f32.mrf.mxu0
        %v1508 = vadd.f32 0.0, %v1507
        %v1509 = vpop.f32.mrf.mxu0
        %v1510 = vadd.f32 0.0, %v1509
        %v1511 = vpop.f32.mrf.mxu0
        %v1512 = vadd.f32 0.0, %v1511
        %1513 = vmatprep.mubr.bf16.mxu0 %v798
        %1514 = vmatmul.mubr.bf16.gmra.mxu0 %v797
        %v1515 = vpop.f32.mrf.mxu0
        %v1516 = vadd.f32 0.0, %v1515
        %v1517 = vpop.f32.mrf.mxu0
        %v1518 = vadd.f32 0.0, %v1517
        %v1519 = vpop.f32.mrf.mxu0
        %v1520 = vadd.f32 0.0, %v1519
        %v1521 = vpop.f32.mrf.mxu0
        %v1522 = vadd.f32 0.0, %v1521
        %1523 = vmatprep.mubr.bf16.mxu0 %v802
        %1524 = vmatmul.mubr.bf16.gmra.mxu0 %v801
        %v1525 = vpop.f32.mrf.mxu0
        %v1526 = vadd.f32 0.0, %v1525
        %v1527 = vpop.f32.mrf.mxu0
        %v1528 = vadd.f32 0.0, %v1527
        %v1529 = vpop.f32.mrf.mxu0
        %v1530 = vadd.f32 0.0, %v1529
        %v1531 = vpop.f32.mrf.mxu0
        %v1532 = vadd.f32 0.0, %v1531
        %1533 = vdwg.mxu0
        %1534 = vmatprep.subr.bf16.mxu0 %v1298
        %1535 = vmatpush1.bf16.msra.mxu0 %v1297
        %1536 = vmatprep.subr.bf16.mxu0 %v1294
        %1537 = vmatpush1.bf16.msra.mxu0 %v1293
        %1538 = vmatprep.subr.bf16.mxu0 %v1290
        %1539 = vmatpush1.bf16.msra.mxu0 %v1289
        %1540 = vmatprep.subr.bf16.mxu0 %v1286
        %1541 = vmatpush1.bf16.msra.mxu0 %v1285
        %1542 = vmatprep.subr.bf16.mxu0 %v1282
        %1543 = vmatpush1.bf16.msra.mxu0 %v1281
        %1544 = vmatprep.subr.bf16.mxu0 %v1278
        %1545 = vmatpush1.bf16.msra.mxu0 %v1277
        %1546 = vmatprep.subr.bf16.mxu0 %v1274
        %1547 = vmatpush1.bf16.msra.mxu0 %v1273
        %1548 = vmatprep.subr.bf16.mxu0 %v1270
        %1549 = vmatpush1.bf16.msra.mxu0 %v1269
        %1550 = vmatprep.subr.bf16.mxu0 %v1330
        %1551 = vmatpush2.bf16.msra.mxu0 %v1329
        %1552 = vmatprep.subr.bf16.mxu0 %v1326
        %1553 = vmatpush2.bf16.msra.mxu0 %v1325
        %1554 = vmatprep.subr.bf16.mxu0 %v1322
        %1555 = vmatpush2.bf16.msra.mxu0 %v1321
        %1556 = vmatprep.subr.bf16.mxu0 %v1318
        %1557 = vmatpush2.bf16.msra.mxu0 %v1317
        %1558 = vmatprep.subr.bf16.mxu0 %v1314
        %1559 = vmatpush2.bf16.msra.mxu0 %v1313
        %1560 = vmatprep.subr.bf16.mxu0 %v1310
        %1561 = vmatpush2.bf16.msra.mxu0 %v1309
        %1562 = vmatprep.subr.bf16.mxu0 %v1306
        %1563 = vmatpush2.bf16.msra.mxu0 %v1305
        %1564 = vmatprep.subr.bf16.mxu0 %v1302
        %1565 = vmatpush2.bf16.msra.mxu0 %v1301
        %1566 = vmatprep.mubr.bf16.mxu0 %v792
        %1567 = vmatmul.mubr.bf16.gmra.mxu0 %v791
        %v1568 = vpop.f32.mrf.mxu0
        %v1569 = vadd.f32 %v1496, %v1568
        %v1570 = vpop.f32.mrf.mxu0
        %v1571 = vadd.f32 %v1498, %v1570
        %v1572 = vpop.f32.mrf.mxu0
        %v1573 = vadd.f32 %v1500, %v1572
        %v1574 = vpop.f32.mrf.mxu0
        %v1575 = vadd.f32 %v1502, %v1574
        %1576 = vmatprep.mubr.bf16.mxu0 %v796
        %1577 = vmatmul.mubr.bf16.gmra.mxu0 %v795
        %v1578 = vpop.f32.mrf.mxu0
        %v1579 = vadd.f32 %v1506, %v1578
        %v1580 = vpop.f32.mrf.mxu0
        %v1581 = vadd.f32 %v1508, %v1580
        %v1582 = vpop.f32.mrf.mxu0
        %v1583 = vadd.f32 %v1510, %v1582
        %v1584 = vpop.f32.mrf.mxu0
        %v1585 = vadd.f32 %v1512, %v1584
        %1586 = vmatprep.mubr.bf16.mxu0 %v800
        %1587 = vmatmul.mubr.bf16.gmra.mxu0 %v799
        %v1588 = vpop.f32.mrf.mxu0
        %v1589 = vadd.f32 %v1516, %v1588
        %v1590 = vpop.f32.mrf.mxu0
        %v1591 = vadd.f32 %v1518, %v1590
        %v1592 = vpop.f32.mrf.mxu0
        %v1593 = vadd.f32 %v1520, %v1592
        %v1594 = vpop.f32.mrf.mxu0
        %v1595 = vadd.f32 %v1522, %v1594
        %1596 = vmatprep.mubr.bf16.mxu0 %v804
        %1597 = vmatmul.mubr.bf16.gmra.mxu0 %v803
        %v1598 = vpop.f32.mrf.mxu0
        %v1599 = vadd.f32 %v1526, %v1598
        %v1600 = vpop.f32.mrf.mxu0
        %v1601 = vadd.f32 %v1528, %v1600
        %v1602 = vpop.f32.mrf.mxu0
        %v1603 = vadd.f32 %v1530, %v1602
        %v1604 = vpop.f32.mrf.mxu0
        %v1605 = vadd.f32 %v1532, %v1604
        %1606 = vdwg.mxu0
        %1607 = vmatprep.subr.bf16.mxu0 %v1236
        %1608 = vmatpush1.bf16.msra.mxu0 %v1235
        %1609 = vmatprep.subr.bf16.mxu0 %v1232
        %1610 = vmatpush1.bf16.msra.mxu0 %v1231
        %1611 = vmatprep.subr.bf16.mxu0 %v1228
        %1612 = vmatpush1.bf16.msra.mxu0 %v1227
        %1613 = vmatprep.subr.bf16.mxu0 %v1224
        %1614 = vmatpush1.bf16.msra.mxu0 %v1223
        %1615 = vmatprep.subr.bf16.mxu0 %v1220
        %1616 = vmatpush1.bf16.msra.mxu0 %v1219
        %1617 = vmatprep.subr.bf16.mxu0 %v1216
        %1618 = vmatpush1.bf16.msra.mxu0 %v1215
        %1619 = vmatprep.subr.bf16.mxu0 %v1212
        %1620 = vmatpush1.bf16.msra.mxu0 %v1211
        %1621 = vmatprep.subr.bf16.mxu0 %v1208
        %1622 = vmatpush1.bf16.msra.mxu0 %v1207
        %1623 = vmatprep.subr.bf16.mxu0 %v1268
        %1624 = vmatpush2.bf16.msra.mxu0 %v1267
        %1625 = vmatprep.subr.bf16.mxu0 %v1264
        %1626 = vmatpush2.bf16.msra.mxu0 %v1263
        %1627 = vmatprep.subr.bf16.mxu0 %v1260
        %1628 = vmatpush2.bf16.msra.mxu0 %v1259
        %1629 = vmatprep.subr.bf16.mxu0 %v1256
        %1630 = vmatpush2.bf16.msra.mxu0 %v1255
        %1631 = vmatprep.subr.bf16.mxu0 %v1252
        %1632 = vmatpush2.bf16.msra.mxu0 %v1251
        %1633 = vmatprep.subr.bf16.mxu0 %v1248
        %1634 = vmatpush2.bf16.msra.mxu0 %v1247
        %1635 = vmatprep.subr.bf16.mxu0 %v1244
        %1636 = vmatpush2.bf16.msra.mxu0 %v1243
        %1637 = vmatprep.subr.bf16.mxu0 %v1240
        %1638 = vmatpush2.bf16.msra.mxu0 %v1239
        %1639 = vmatprep.mubr.bf16.mxu0 %v790
        %1640 = vmatmul.mubr.bf16.gmra.mxu0 %v789
        %v1641 = vpop.f32.mrf.mxu0
        %v1642 = vadd.f32 0.0, %v1641
        %v1643 = vpop.f32.mrf.mxu0
        %v1644 = vadd.f32 0.0, %v1643
        %v1645 = vpop.f32.mrf.mxu0
        %v1646 = vadd.f32 0.0, %v1645
        %v1647 = vpop.f32.mrf.mxu0
        %v1648 = vadd.f32 0.0, %v1647
        %1649 = vmatprep.mubr.bf16.mxu0 %v794
        %1650 = vmatmul.mubr.bf16.gmra.mxu0 %v793
        %v1651 = vpop.f32.mrf.mxu0
        %v1652 = vadd.f32 0.0, %v1651
        %v1653 = vpop.f32.mrf.mxu0
        %v1654 = vadd.f32 0.0, %v1653
        %v1655 = vpop.f32.mrf.mxu0
        %v1656 = vadd.f32 0.0, %v1655
        %v1657 = vpop.f32.mrf.mxu0
        %v1658 = vadd.f32 0.0, %v1657
        %1659 = vmatprep.mubr.bf16.mxu0 %v798
        %1660 = vmatmul.mubr.bf16.gmra.mxu0 %v797
        %v1661 = vpop.f32.mrf.mxu0
        %v1662 = vadd.f32 0.0, %v1661
        %v1663 = vpop.f32.mrf.mxu0
        %v1664 = vadd.f32 0.0, %v1663
        %v1665 = vpop.f32.mrf.mxu0
        %v1666 = vadd.f32 0.0, %v1665
        %v1667 = vpop.f32.mrf.mxu0
        %v1668 = vadd.f32 0.0, %v1667
        %1669 = vmatprep.mubr.bf16.mxu0 %v802
        %1670 = vmatmul.mubr.bf16.gmra.mxu0 %v801
        %v1671 = vpop.f32.mrf.mxu0
        %v1672 = vadd.f32 0.0, %v1671
        %v1673 = vpop.f32.mrf.mxu0
        %v1674 = vadd.f32 0.0, %v1673
        %v1675 = vpop.f32.mrf.mxu0
        %v1676 = vadd.f32 0.0, %v1675
        %v1677 = vpop.f32.mrf.mxu0
        %v1678 = vadd.f32 0.0, %v1677
        %1679 = vdwg.mxu0
        %1680 = vmatprep.subr.bf16.mxu0 %v1300
        %1681 = vmatpush1.bf16.msra.mxu0 %v1299
        %1682 = vmatprep.subr.bf16.mxu0 %v1296
        %1683 = vmatpush1.bf16.msra.mxu0 %v1295
        %1684 = vmatprep.subr.bf16.mxu0 %v1292
        %1685 = vmatpush1.bf16.msra.mxu0 %v1291
        %1686 = vmatprep.subr.bf16.mxu0 %v1288
        %1687 = vmatpush1.bf16.msra.mxu0 %v1287
        %1688 = vmatprep.subr.bf16.mxu0 %v1284
        %1689 = vmatpush1.bf16.msra.mxu0 %v1283
        %1690 = vmatprep.subr.bf16.mxu0 %v1280
        %1691 = vmatpush1.bf16.msra.mxu0 %v1279
        %1692 = vmatprep.subr.bf16.mxu0 %v1276
        %1693 = vmatpush1.bf16.msra.mxu0 %v1275
        %1694 = vmatprep.subr.bf16.mxu0 %v1272
        %1695 = vmatpush1.bf16.msra.mxu0 %v1271
        %1696 = vmatprep.subr.bf16.mxu0 %v1332
        %1697 = vmatpush2.bf16.msra.mxu0 %v1331
        %1698 = vmatprep.subr.bf16.mxu0 %v1328
        %1699 = vmatpush2.bf16.msra.mxu0 %v1327
        %1700 = vmatprep.subr.bf16.mxu0 %v1324
        %1701 = vmatpush2.bf16.msra.mxu0 %v1323
        %1702 = vmatprep.subr.bf16.mxu0 %v1320
        %1703 = vmatpush2.bf16.msra.mxu0 %v1319
        %1704 = vmatprep.subr.bf16.mxu0 %v1316
        %1705 = vmatpush2.bf16.msra.mxu0 %v1315
        %1706 = vmatprep.subr.bf16.mxu0 %v1312
        %1707 = vmatpush2.bf16.msra.mxu0 %v1311
        %1708 = vmatprep.subr.bf16.mxu0 %v1308
        %1709 = vmatpush2.bf16.msra.mxu0 %v1307
        %1710 = vmatprep.subr.bf16.mxu0 %v1304
        %1711 = vmatpush2.bf16.msra.mxu0 %v1303
        %1712 = vmatprep.mubr.bf16.mxu0 %v792
        %1713 = vmatmul.mubr.bf16.gmra.mxu0 %v791
        %v1714 = vpop.f32.mrf.mxu0
        %v1715 = vadd.f32 %v1642, %v1714
        %v1716 = vpop.f32.mrf.mxu0
        %v1717 = vadd.f32 %v1644, %v1716
        %v1718 = vpop.f32.mrf.mxu0
        %v1719 = vadd.f32 %v1646, %v1718
        %v1720 = vpop.f32.mrf.mxu0
        %v1721 = vadd.f32 %v1648, %v1720
        %1722 = vmatprep.mubr.bf16.mxu0 %v796
        %1723 = vmatmul.mubr.bf16.gmra.mxu0 %v795
        %v1724 = vpop.f32.mrf.mxu0
        %v1725 = vadd.f32 %v1652, %v1724
        %v1726 = vpop.f32.mrf.mxu0
        %v1727 = vadd.f32 %v1654, %v1726
        %v1728 = vpop.f32.mrf.mxu0
        %v1729 = vadd.f32 %v1656, %v1728
        %v1730 = vpop.f32.mrf.mxu0
        %v1731 = vadd.f32 %v1658, %v1730
        %1732 = vmatprep.mubr.bf16.mxu0 %v800
        %1733 = vmatmul.mubr.bf16.gmra.mxu0 %v799
        %v1734 = vpop.f32.mrf.mxu0
        %v1735 = vadd.f32 %v1662, %v1734
        %v1736 = vpop.f32.mrf.mxu0
        %v1737 = vadd.f32 %v1664, %v1736
        %v1738 = vpop.f32.mrf.mxu0
        %v1739 = vadd.f32 %v1666, %v1738
        %v1740 = vpop.f32.mrf.mxu0
        %v1741 = vadd.f32 %v1668, %v1740
        %1742 = vmatprep.mubr.bf16.mxu0 %v804
        %1743 = vmatmul.mubr.bf16.gmra.mxu0 %v803
        %v1744 = vpop.f32.mrf.mxu0
        %v1745 = vadd.f32 %v1672, %v1744
        %v1746 = vpop.f32.mrf.mxu0
        %v1747 = vadd.f32 %v1674, %v1746
        %v1748 = vpop.f32.mrf.mxu0
        %v1749 = vadd.f32 %v1676, %v1748
        %v1750 = vpop.f32.mrf.mxu0
        %v1751 = vadd.f32 %v1678, %v1750
        %1752 = vdwg.mxu0
        %v1753 = vadd.f32 %v565, %v1569
        %v1754 = vadd.f32 %v566, %v1571
        %v1755 = vadd.f32 %v567, %v1715
        %v1756 = vadd.f32 %v568, %v1717
        %v1757 = vadd.f32 %v569, %v1573
        %v1758 = vadd.f32 %v570, %v1575
        %v1759 = vadd.f32 %v571, %v1719
        %v1760 = vadd.f32 %v572, %v1721
        %v1761 = vadd.f32 %v573, %v1579
        %v1762 = vadd.f32 %v574, %v1581
        %v1763 = vadd.f32 %v575, %v1725
        %v1764 = vadd.f32 %v576, %v1727
        %v1765 = vadd.f32 %v577, %v1583
        %v1766 = vadd.f32 %v578, %v1585
        %v1767 = vadd.f32 %v579, %v1729
        %v1768 = vadd.f32 %v580, %v1731
        %v1769 = vadd.f32 %v581, %v1589
        %v1770 = vadd.f32 %v582, %v1591
        %v1771 = vadd.f32 %v583, %v1735
        %v1772 = vadd.f32 %v584, %v1737
        %v1773 = vadd.f32 %v585, %v1593
        %v1774 = vadd.f32 %v586, %v1595
        %v1775 = vadd.f32 %v587, %v1739
        %v1776 = vadd.f32 %v588, %v1741
        %v1777 = vadd.f32 %v589, %v1599
        %v1778 = vadd.f32 %v590, %v1601
        %v1779 = vadd.f32 %v591, %v1745
        %v1780 = vadd.f32 %v592, %v1747
        %v1781 = vadd.f32 %v593, %v1603
        %v1782 = vadd.f32 %v594, %v1605
        %v1783 = vadd.f32 %v595, %v1749
        %v1784 = vadd.f32 %v596, %v1751
        %1785 = vst [vmem:[#allocation2] sm:$0xff] %v1753
        %1786 = vst [vmem:[#allocation2 + $0x8] sm:$0xff] %v1754
        %1787 = vst [vmem:[#allocation2 + $0x10] sm:$0xff] %v1755
        %1788 = vst [vmem:[#allocation2 + $0x18] sm:$0xff] %v1756
        %1789 = vst [vmem:[#allocation2 + $0x20] sm:$0xff] %v1757
        %1790 = vst [vmem:[#allocation2 + $0x28] sm:$0xff] %v1758
        %1791 = vst [vmem:[#allocation2 + $0x30] sm:$0xff] %v1759
        %1792 = vst [vmem:[#allocation2 + $0x38] sm:$0xff] %v1760
        %1793 = vst [vmem:[#allocation2 + $0x40] sm:$0xff] %v1761
        %1794 = vst [vmem:[#allocation2 + $0x48] sm:$0xff] %v1762
        %1795 = vst [vmem:[#allocation2 + $0x50] sm:$0xff] %v1763
        %1796 = vst [vmem:[#allocation2 + $0x58] sm:$0xff] %v1764
        %1797 = vst [vmem:[#allocation2 + $0x60] sm:$0xff] %v1765
        %1798 = vst [vmem:[#allocation2 + $0x68] sm:$0xff] %v1766
        %1799 = vst [vmem:[#allocation2 + $0x70] sm:$0xff] %v1767
        %1800 = vst [vmem:[#allocation2 + $0x78] sm:$0xff] %v1768
        %1801 = vst [vmem:[#allocation2 + $0x80] sm:$0xff] %v1769
        %1802 = vst [vmem:[#allocation2 + $0x88] sm:$0xff] %v1770
        %1803 = vst [vmem:[#allocation2 + $0x90] sm:$0xff] %v1771
        %1804 = vst [vmem:[#allocation2 + $0x98] sm:$0xff] %v1772
        %1805 = vst [vmem:[#allocation2 + $0xa0] sm:$0xff] %v1773
        %1806 = vst [vmem:[#allocation2 + $0xa8] sm:$0xff] %v1774
        %1807 = vst [vmem:[#allocation2 + $0xb0] sm:$0xff] %v1775
        %1808 = vst [vmem:[#allocation2 + $0xb8] sm:$0xff] %v1776
        %1809 = vst [vmem:[#allocation2 + $0xc0] sm:$0xff] %v1777
        %1810 = vst [vmem:[#allocation2 + $0xc8] sm:$0xff] %v1778
        %1811 = vst [vmem:[#allocation2 + $0xd0] sm:$0xff] %v1779
        %1812 = vst [vmem:[#allocation2 + $0xd8] sm:$0xff] %v1780
        %1813 = vst [vmem:[#allocation2 + $0xe0] sm:$0xff] %v1781
        %1814 = vst [vmem:[#allocation2 + $0xe8] sm:$0xff] %v1782
        %1815 = vst [vmem:[#allocation2 + $0xf0] sm:$0xff] %v1783
        %1816 = vst [vmem:[#allocation2 + $0xf8] sm:$0xff] %v1784
        // Predicated region
        $region60: #{_lambda_.5} parent=50 // pred_check
          %p1817 = pneg %p529
        $region61: #{_lambda_.5} parent=50 // pred_check_branch
          %1819 = sbr.rel (%p1817) target = $region63
        $region62: #{_lambda_.5} parent=50 // pred_region
          %v1820 = vld [vmem:[#allocation2] sm:$0xff]
          %v1821 = vld [vmem:[#allocation2 + $0x8] sm:$0xff]
          %v1822 = vld [vmem:[#allocation2 + $0x10] sm:$0xff]
          %v1823 = vld [vmem:[#allocation2 + $0x18] sm:$0xff]
          %v1824 = vld [vmem:[#allocation2 + $0x20] sm:$0xff]
          %v1825 = vld [vmem:[#allocation2 + $0x28] sm:$0xff]
          %v1826 = vld [vmem:[#allocation2 + $0x30] sm:$0xff]
          %v1827 = vld [vmem:[#allocation2 + $0x38] sm:$0xff]
          %v1828 = vld [vmem:[#allocation2 + $0x40] sm:$0xff]
          %v1829 = vld [vmem:[#allocation2 + $0x48] sm:$0xff]
          %v1830 = vld [vmem:[#allocation2 + $0x50] sm:$0xff]
          %v1831 = vld [vmem:[#allocation2 + $0x58] sm:$0xff]
          %v1832 = vld [vmem:[#allocation2 + $0x60] sm:$0xff]
          %v1833 = vld [vmem:[#allocation2 + $0x68] sm:$0xff]
          %v1834 = vld [vmem:[#allocation2 + $0x70] sm:$0xff]
          %v1835 = vld [vmem:[#allocation2 + $0x78] sm:$0xff]
          %v1836 = vld [vmem:[#allocation2 + $0x80] sm:$0xff]
          %v1837 = vld [vmem:[#allocation2 + $0x88] sm:$0xff]
          %v1838 = vld [vmem:[#allocation2 + $0x90] sm:$0xff]
          %v1839 = vld [vmem:[#allocation2 + $0x98] sm:$0xff]
          %v1840 = vld [vmem:[#allocation2 + $0xa0] sm:$0xff]
          %v1841 = vld [vmem:[#allocation2 + $0xa8] sm:$0xff]
          %v1842 = vld [vmem:[#allocation2 + $0xb0] sm:$0xff]
          %v1843 = vld [vmem:[#allocation2 + $0xb8] sm:$0xff]
          %v1844 = vld [vmem:[#allocation2 + $0xc0] sm:$0xff]
          %v1845 = vld [vmem:[#allocation2 + $0xc8] sm:$0xff]
          %v1846 = vld [vmem:[#allocation2 + $0xd0] sm:$0xff]
          %v1847 = vld [vmem:[#allocation2 + $0xd8] sm:$0xff]
          %v1848 = vld [vmem:[#allocation2 + $0xe0] sm:$0xff]
          %v1849 = vld [vmem:[#allocation2 + $0xe8] sm:$0xff]
          %v1850 = vld [vmem:[#allocation2 + $0xf0] sm:$0xff]
          %v1851 = vld [vmem:[#allocation2 + $0xf8] sm:$0xff]
          %v1852 = vld [vmem:[%s525] sm:$0xf]
          %v1854 = vlaneseq
          %v1855 = vshrl.u32 %v1854, 7
          %v1856 = vsub.s32 0, %v1855
          %v1857 = vrot.slane %v1852, %v1856
          %v1858 = vlaneseq
          %v1859 = vshrl.u32 %v1858, 7
          %v1860 = vsub.s32 1, %v1859
          %v1861 = vrot.slane %v1852, %v1860
          %v1862 = vlaneseq
          %v1863 = vshrl.u32 %v1862, 7
          %v1864 = vsub.s32 2, %v1863
          %v1865 = vrot.slane %v1852, %v1864
          %v1866 = vlaneseq
          %v1867 = vshrl.u32 %v1866, 7
          %v1868 = vsub.s32 3, %v1867
          %v1869 = vrot.slane %v1852, %v1868
          %v1874 = vadd.f32 %v1820, %v1857
          %v1875 = vadd.f32 %v1821, %v1861
          %v1876 = vadd.f32 %v1822, %v1865
          %v1877 = vadd.f32 %v1823, %v1869
          %v1878 = vadd.f32 %v1824, %v1857
          %v1879 = vadd.f32 %v1825, %v1861
          %v1880 = vadd.f32 %v1826, %v1865
          %v1881 = vadd.f32 %v1827, %v1869
          %v1882 = vadd.f32 %v1828, %v1857
          %v1883 = vadd.f32 %v1829, %v1861
          %v1884 = vadd.f32 %v1830, %v1865
          %v1885 = vadd.f32 %v1831, %v1869
          %v1886 = vadd.f32 %v1832, %v1857
          %v1887 = vadd.f32 %v1833, %v1861
          %v1888 = vadd.f32 %v1834, %v1865
          %v1889 = vadd.f32 %v1835, %v1869
          %v1890 = vadd.f32 %v1836, %v1857
          %v1891 = vadd.f32 %v1837, %v1861
          %v1892 = vadd.f32 %v1838, %v1865
          %v1893 = vadd.f32 %v1839, %v1869
          %v1894 = vadd.f32 %v1840, %v1857
          %v1895 = vadd.f32 %v1841, %v1861
          %v1896 = vadd.f32 %v1842, %v1865
          %v1897 = vadd.f32 %v1843, %v1869
          %v1898 = vadd.f32 %v1844, %v1857
          %v1899 = vadd.f32 %v1845, %v1861
          %v1900 = vadd.f32 %v1846, %v1865
          %v1901 = vadd.f32 %v1847, %v1869
          %v1902 = vadd.f32 %v1848, %v1857
          %v1903 = vadd.f32 %v1849, %v1861
          %v1904 = vadd.f32 %v1850, %v1865
          %v1905 = vadd.f32 %v1851, %v1869
          %v1906 = vpack.c.bf16 %v1878, %v1874
          %v1907 = vpack.c.bf16 %v1879, %v1875
          %v1908 = vpack.c.bf16 %v1880, %v1876
          %v1909 = vpack.c.bf16 %v1881, %v1877
          %v1910 = vpack.c.bf16 %v1886, %v1882
          %v1911 = vpack.c.bf16 %v1887, %v1883
          %v1912 = vpack.c.bf16 %v1888, %v1884
          %v1913 = vpack.c.bf16 %v1889, %v1885
          %v1914 = vpack.c.bf16 %v1894, %v1890
          %v1915 = vpack.c.bf16 %v1895, %v1891
          %v1916 = vpack.c.bf16 %v1896, %v1892
          %v1917 = vpack.c.bf16 %v1897, %v1893
          %v1918 = vpack.c.bf16 %v1902, %v1898
          %v1919 = vpack.c.bf16 %v1903, %v1899
          %v1920 = vpack.c.bf16 %v1904, %v1900
          %v1921 = vpack.c.bf16 %v1905, %v1901
          %v1938 = vunpack.c.l.b16 %v1906
          %v1939 = vunpack.c.l.b16 %v1907
          %v1940 = vunpack.c.l.b16 %v1908
          %v1941 = vunpack.c.l.b16 %v1909
          %v1942 = vunpack.c.h.b16 %v1906
          %v1943 = vunpack.c.h.b16 %v1907
          %v1944 = vunpack.c.h.b16 %v1908
          %v1945 = vunpack.c.h.b16 %v1909
          %v1946 = vunpack.c.l.b16 %v1910
          %v1947 = vunpack.c.l.b16 %v1911
          %v1948 = vunpack.c.l.b16 %v1912
          %v1949 = vunpack.c.l.b16 %v1913
          %v1950 = vunpack.c.h.b16 %v1910
          %v1951 = vunpack.c.h.b16 %v1911
          %v1952 = vunpack.c.h.b16 %v1912
          %v1953 = vunpack.c.h.b16 %v1913
          %v1954 = vunpack.c.l.b16 %v1914
          %v1955 = vunpack.c.l.b16 %v1915
          %v1956 = vunpack.c.l.b16 %v1916
          %v1957 = vunpack.c.l.b16 %v1917
          %v1958 = vunpack.c.h.b16 %v1914
          %v1959 = vunpack.c.h.b16 %v1915
          %v1960 = vunpack.c.h.b16 %v1916
          %v1961 = vunpack.c.h.b16 %v1917
          %v1962 = vunpack.c.l.b16 %v1918
          %v1963 = vunpack.c.l.b16 %v1919
          %v1964 = vunpack.c.l.b16 %v1920
          %v1965 = vunpack.c.l.b16 %v1921
          %v1966 = vunpack.c.h.b16 %v1918
          %v1967 = vunpack.c.h.b16 %v1919
          %v1968 = vunpack.c.h.b16 %v1920
          %v1969 = vunpack.c.h.b16 %v1921
          %v1970 = vpack.c.b16 %v1939, %v1938
          %v1971 = vpack.c.b16 %v1941, %v1940
          %v1972 = vpack.c.b16 %v1943, %v1942
          %v1973 = vpack.c.b16 %v1945, %v1944
          %v1974 = vpack.c.b16 %v1947, %v1946
          %v1975 = vpack.c.b16 %v1949, %v1948
          %v1976 = vpack.c.b16 %v1951, %v1950
          %v1977 = vpack.c.b16 %v1953, %v1952
          %v1978 = vpack.c.b16 %v1955, %v1954
          %v1979 = vpack.c.b16 %v1957, %v1956
          %v1980 = vpack.c.b16 %v1959, %v1958
          %v1981 = vpack.c.b16 %v1961, %v1960
          %v1982 = vpack.c.b16 %v1963, %v1962
          %v1983 = vpack.c.b16 %v1965, %v1964
          %v1984 = vpack.c.b16 %v1967, %v1966
          %v1985 = vpack.c.b16 %v1969, %v1968
          %2002 = vst [vmem:[%s507] sm:$0xff] %v1970
          %2003 = vst [vmem:[%s507 + $0x8] sm:$0xff] %v1971
          %2004 = vst [vmem:[%s507 + $0x10] sm:$0xff] %v1972
          %2005 = vst [vmem:[%s507 + $0x18] sm:$0xff] %v1973
          %2006 = vst [vmem:[%s507 + $0x20] sm:$0xff] %v1974
          %2007 = vst [vmem:[%s507 + $0x28] sm:$0xff] %v1975
          %2008 = vst [vmem:[%s507 + $0x30] sm:$0xff] %v1976
          %2009 = vst [vmem:[%s507 + $0x38] sm:$0xff] %v1977
          %2010 = vst [vmem:[%s507 + $0x40] sm:$0xff] %v1978
          %2011 = vst [vmem:[%s507 + $0x48] sm:$0xff] %v1979
          %2012 = vst [vmem:[%s507 + $0x50] sm:$0xff] %v1980
          %2013 = vst [vmem:[%s507 + $0x58] sm:$0xff] %v1981
          %2014 = vst [vmem:[%s507 + $0x60] sm:$0xff] %v1982
          %2015 = vst [vmem:[%s507 + $0x68] sm:$0xff] %v1983
          %2016 = vst [vmem:[%s507 + $0x70] sm:$0xff] %v1984
          %2017 = vst [vmem:[%s507 + $0x78] sm:$0xff] %v1985
        $region63: #{_lambda_.5} parent=50 // pred_fallthru
          _
        %s2018 = sand.u32 %s125, 1
        %s2019 = sand.u32 %s125, 1
        %s2020 = smul.addr %s2019, 128
        %s2021 = scalar_lea.vmem [#allocation4], %s2020
        // Predicated region
        $region64: #{_lambda_.5} parent=50 // pred_check
          %p2022 = pneg %p135
        $region65: #{_lambda_.5} parent=50 // pred_check_branch
          %2024 = sbr.rel (%p2022) target = $region67
        $region66: #{_lambda_.5} parent=50 // pred_region
          %s2025 = smul.u32 8, %s19
          %s2026 = smul.u32 4, %s20
          %s2027 = smul.addr %s2025, 8
          %s2028 = sadd.s32 %s2026, %s2027
          %s2029 = smul.addr %s2028, 4
          %s2030 = scalar_lea.vmem %s3, %s2029
          // Predicated region
          $region68: #{_lambda_.5} parent=66 // pred_check
            _
          $region69: #{_lambda_.5} parent=66 // pred_check_branch
            %2032 = sbr.rel (0) target = $region71
          $region70: #{_lambda_.5} parent=66 // pred_region
            // Predicated region
            $region72: #{_lambda_.5} parent=70 // pred_check
              _
            $region73: #{_lambda_.5} parent=70 // pred_check_branch
              %2034 = sbr.rel (0) target = $region75
            $region74: #{_lambda_.5} parent=70 // pred_region
              loop: start=0, step=1, limit=1
              $region76: #{_lambda_.5} parent=74 // loop_pre_header
                _
              $region77: #{_lambda_.5} parent=74 // loop_header
                %s2036 = sphi 0, %s2040
                %p2037 = scmp.ge.s32.totalorder %s2036, 1
                %s2041 = sphi %s2021, %s2021
                %s2042 = sphi %s2030, %s2030
              $region78: #{_lambda_.5} parent=74 // loop_header_branch
                %2039 = sbr.rel (%p2037) target = $region82
              $region79: #{_lambda_.5} parent=74 // loop_body
                %v2043 = vld [vmem:[%s2041] sm:$0xff]
                %2044 = vst [vmem:[%s2042] sm:$0xff] %v2043
                %v2045 = vld [vmem:[%s2041 + $0x8] sm:$0xff]
                %2046 = vst [vmem:[%s2042 + $0x8] sm:$0xff] %v2045
                %v2047 = vld [vmem:[%s2041 + $0x10] sm:$0xff]
                %2048 = vst [vmem:[%s2042 + $0x20] sm:$0xff] %v2047
                %v2049 = vld [vmem:[%s2041 + $0x18] sm:$0xff]
                %2050 = vst [vmem:[%s2042 + $0x28] sm:$0xff] %v2049
                %v2051 = vld [vmem:[%s2041 + $0x20] sm:$0xff]
                %2052 = vst [vmem:[%s2042 + $0x40] sm:$0xff] %v2051
                %v2053 = vld [vmem:[%s2041 + $0x28] sm:$0xff]
                %2054 = vst [vmem:[%s2042 + $0x48] sm:$0xff] %v2053
                %v2055 = vld [vmem:[%s2041 + $0x30] sm:$0xff]
                %2056 = vst [vmem:[%s2042 + $0x60] sm:$0xff] %v2055
                %v2057 = vld [vmem:[%s2041 + $0x38] sm:$0xff]
                %2058 = vst [vmem:[%s2042 + $0x68] sm:$0xff] %v2057
                %v2059 = vld [vmem:[%s2041 + $0x40] sm:$0xff]
                %2060 = vst [vmem:[%s2042 + $0x80] sm:$0xff] %v2059
                %v2061 = vld [vmem:[%s2041 + $0x48] sm:$0xff]
                %2062 = vst [vmem:[%s2042 + $0x88] sm:$0xff] %v2061
                %v2063 = vld [vmem:[%s2041 + $0x50] sm:$0xff]
                %2064 = vst [vmem:[%s2042 + $0xa0] sm:$0xff] %v2063
                %v2065 = vld [vmem:[%s2041 + $0x58] sm:$0xff]
                %2066 = vst [vmem:[%s2042 + $0xa8] sm:$0xff] %v2065
                %v2067 = vld [vmem:[%s2041 + $0x60] sm:$0xff]
                %2068 = vst [vmem:[%s2042 + $0xc0] sm:$0xff] %v2067
                %v2069 = vld [vmem:[%s2041 + $0x68] sm:$0xff]
                %2070 = vst [vmem:[%s2042 + $0xc8] sm:$0xff] %v2069
                %v2071 = vld [vmem:[%s2041 + $0x70] sm:$0xff]
                %2072 = vst [vmem:[%s2042 + $0xe0] sm:$0xff] %v2071
                %v2073 = vld [vmem:[%s2041 + $0x78] sm:$0xff]
                %2074 = vst [vmem:[%s2042 + $0xe8] sm:$0xff] %v2073
              $region80: #{_lambda_.5} parent=74 // loop_footer
                %s2040 = sadd.s32 1, %s2036
              $region81: #{_lambda_.5} parent=74 // loop_footer_branch
                %2035 = sbr.rel target = $region77
              $region82: #{_lambda_.5} parent=74 // loop_exit
                _
            $region75: #{_lambda_.5} parent=70 // pred_fallthru
              _
            // Predicated region
            $region83: #{_lambda_.5} parent=70 // pred_check
              _
            $region84: #{_lambda_.5} parent=70 // pred_check_branch
              %2076 = sbr.rel target = $region86
            $region85: #{_lambda_.5} parent=70 // pred_region
              _
            $region86: #{_lambda_.5} parent=70 // pred_fallthru
              _
          $region71: #{_lambda_.5} parent=66 // pred_fallthru
            _
          %2077 = vnop
        $region67: #{_lambda_.5} parent=50 // pred_fallthru
          _
      $region51: #{_lambda_.5} parent=5 // pred_fallthru
        _
      %p2078 = scmp.le.s32.totalorder 2, %s9
      // Predicated region
      $region87: #{_lambda_.5} parent=5 // pred_check
        %p2079 = pneg %p2078
      $region88: #{_lambda_.5} parent=5 // pred_check_branch
        %2081 = sbr.rel (%p2079) target = $region90
      $region89: #{_lambda_.5} parent=5 // pred_region
        %s2082 = ssub.s32 %s9, 2
        // Predicated region
        $region91: #{_lambda_.5} parent=89 // pred_check
          %p2083 = pneg %p141
        $region92: #{_lambda_.5} parent=89 // pred_check_branch
          %2085 = sbr.rel (%p2083) target = $region94
        $region93: #{_lambda_.5} parent=89 // pred_region
          %s2086 = sand.u32 %s126, 1
          %s2087 = sand.u32 %s126, 1
          %s2088 = smul.addr %s2087, 128
          %s2089 = scalar_lea.vmem [#allocation4], %s2088
        $region94: #{_lambda_.5} parent=89 // pred_fallthru
          _
      $region90: #{_lambda_.5} parent=5 // pred_fallthru
        _
    $region6: #{_lambda_.5} parent=1 // loop_footer
      %s13 = sadd.s32 1, %s9
    $region7: #{_lambda_.5} parent=1 // loop_footer_branch
      %8 = sbr.rel target = $region3
    $region8: #{_lambda_.5} parent=1 // loop_exit
      _

// kernel: _lambda_.7
$region0: #{_lambda_.7}
  #allocation0 [shape = 'u32[]', space=smem, size = 0x4, offset = 0x4, fixed_abs, tag = 'smem constant byte address 0x4 - core index']
  #allocation1 [shape = 'u32[144,128]{1,0:T(1,128)}', space=vmem, size = 0x12000, scoped, tag = 'internal scratch']
  #allocation2 [shape = 'f32[64,512]{1,0:T(8,128)}', space=vmem, size = 0x20000, scoped, tag = 'scratch operand']
  %s0 = inlined_call_operand.vmem [shape: bf16[64,128], index: 0, kind: input, shape index: {}]
  %s1 = inlined_call_operand.vmem [shape: bf16[64,128], index: 1, kind: input, shape index: {}]
  %s2 = inlined_call_operand.vmem [shape: bf16[128,1024], index: 2, kind: input, shape index: {}]
  %s3 = inlined_call_operand.vmem [shape: f32[1,1024], index: 3, kind: input, shape index: {}]
  %s4 = inlined_call_operand.vmem [shape: bf16[64,1024], index: 4, kind: output, shape index: {}]
  %s5 = sld [smem:[#allocation0]]
  $region99: #{_lambda_.7} parent=0
    _
  %s7 = ssub.s32 1, %s5
  %s8 = scalar_select 0, %s7, %s5
  $region1: #{_lambda_.7} parent=0
    #allocation3 [shape = 'u8[262144]{0}', space=vmem, size = 0x40000, scoped, tag = 'input window, operand 2']
    #allocation4 [shape = 'u8[131072]{0}', space=vmem, size = 0x20000, scoped, tag = 'output window, operand 0']
    loop: start=0, step=1, limit=4
    $region2: #{_lambda_.7} parent=1 // loop_pre_header
      _
    $region3: #{_lambda_.7} parent=1 // loop_header
      %s10 = sphi 0, %s14
      %p11 = scmp.ge.s32.totalorder %s10, 4
      %s17 = sphi 0, %s36
      %s18 = sphi 0, %s32
      %s19 = sphi 0, %s28
      %s20 = sphi 0, %s17
      %s21 = sphi 0, %s18
      %s22 = sphi 0, %s19
      %s23 = sphi 0, %s20
      %s24 = sphi 0, %s21
      %s25 = sphi 0, %s22
      %s41 = sphi 0, %s43
      %s44 = sphi 0, %s41
      %s45 = sphi 0, %s44
      %s61 = sphi 0, %s45
      %s69 = sphi 0, %s71
      %s72 = sphi 0, %s69
      %s73 = sphi 0, %s72
      %s89 = sphi 0, %s73
      %s97 = sphi 0, %s99
      %s100 = sphi 0, %s97
      %s101 = sphi 0, %s100
      %s117 = sphi 0, %s101
      %s123 = sphi 0, %s125
      %s126 = sphi 0, %s123
      %s127 = sphi 0, %s126
      %s143 = sphi 0, %s127
      %s151 = sphi 0, %s153
      %s154 = sphi 0, %s151
      %s155 = sphi 0, %s154
      %s171 = sphi 0, %s155
    $region4: #{_lambda_.7} parent=1 // loop_header_branch
      %13 = sbr.rel (%p11) target = $region8
    $region5: #{_lambda_.7} parent=1 // loop_body
      %s15 = ssub.s32 %s10, 1
      %s16 = ssub.s32 %s10, 2
      %s26 = sadd.s32 1, %s19
      %p27 = scmp.ge.s32.totalorder %s26, 1
      %s28 = scalar_select %p27, 0, %s26
      %s29 = sadd.s32 1, %s18
      %s30 = scalar_select %p27, %s29, %s18
      %p31 = scmp.ge.s32.totalorder %s30, 2
      %s32 = scalar_select %p31, 0, %s30
      %s33 = sadd.s32 1, %s17
      %s34 = scalar_select %p31, %s33, %s17
      %p35 = scmp.ge.s32.totalorder %s34, 1
      %s36 = scalar_select %p35, 0, %s34
      %s37 = ssub.s32 %s17, %s36
      %s38 = ssub.s32 %s19, %s28
      %s39 = sor.u32 %s37, %s38
      %p40 = scmp.eq.s32.totalorder %s39, 0
      %s42 = sadd.s32 %s41, 1
      %s43 = scalar_select %p40, %s41, %s42
      %p46 = pneg %p40
      %p47 = scmp.eq.s32.totalorder %s10, 1
      %p48 = por %p46, %p47
      %p49 = scmp.ne.s32.totalorder %s41, %s44
      %p50 = scmp.eq.s32.totalorder %s10, 0
      %p51 = por %p49, %p50
      %p52 = scmp.ne.s32.totalorder %s41, %s44
      %p53 = scmp.eq.s32.totalorder %s15, 1
      %p54 = por %p52, %p53
      %p55 = scmp.ne.s32.totalorder %s44, %s45
      %p56 = scmp.eq.s32.totalorder %s15, 0
      %p57 = por %p55, %p56
      %p58 = scmp.ne.s32.totalorder %s44, %s45
      %p59 = scmp.eq.s32.totalorder %s16, 1
      %p60 = por %p58, %p59
      %p62 = scmp.ne.s32.totalorder %s45, %s61
      %p63 = scmp.eq.s32.totalorder %s16, 0
      %p64 = por %p62, %p63
      %s65 = ssub.s32 %s17, %s36
      %s66 = ssub.s32 %s19, %s28
      %s67 = sor.u32 %s65, %s66
      %p68 = scmp.eq.s32.totalorder %s67, 0
      %s70 = sadd.s32 %s69, 1
      %s71 = scalar_select %p68, %s69, %s70
      %p74 = pneg %p68
      %p75 = scmp.eq.s32.totalorder %s10, 1
      %p76 = por %p74, %p75
      %p77 = scmp.ne.s32.totalorder %s69, %s72
      %p78 = scmp.eq.s32.totalorder %s10, 0
      %p79 = por %p77, %p78
      %p80 = scmp.ne.s32.totalorder %s69, %s72
      %p81 = scmp.eq.s32.totalorder %s15, 1
      %p82 = por %p80, %p81
      %p83 = scmp.ne.s32.totalorder %s72, %s73
      %p84 = scmp.eq.s32.totalorder %s15, 0
      %p85 = por %p83, %p84
      %p86 = scmp.ne.s32.totalorder %s72, %s73
      %p87 = scmp.eq.s32.totalorder %s16, 1
      %p88 = por %p86, %p87
      %p90 = scmp.ne.s32.totalorder %s73, %s89
      %p91 = scmp.eq.s32.totalorder %s16, 0
      %p92 = por %p90, %p91
      %s93 = ssub.s32 %s19, %s28
      %s94 = ssub.s32 %s18, %s32
      %s95 = sor.u32 %s93, %s94
      %p96 = scmp.eq.s32.totalorder %s95, 0
      %s98 = sadd.s32 %s97, 1
      %s99 = scalar_select %p96, %s97, %s98
      %p102 = pneg %p96
      %p103 = scmp.eq.s32.totalorder %s10, 1
      %p104 = por %p102, %p103
      %p105 = scmp.ne.s32.totalorder %s97, %s100
      %p106 = scmp.eq.s32.totalorder %s10, 0
      %p107 = por %p105, %p106
      %p108 = scmp.ne.s32.totalorder %s97, %s100
      %p109 = scmp.eq.s32.totalorder %s15, 1
      %p110 = por %p108, %p109
      %p111 = scmp.ne.s32.totalorder %s100, %s101
      %p112 = scmp.eq.s32.totalorder %s15, 0
      %p113 = por %p111, %p112
      %p114 = scmp.ne.s32.totalorder %s100, %s101
      %p115 = scmp.eq.s32.totalorder %s16, 1
      %p116 = por %p114, %p115
      %p118 = scmp.ne.s32.totalorder %s101, %s117
      %p119 = scmp.eq.s32.totalorder %s16, 0
      %p120 = por %p118, %p119
      %s121 = ssub.s32 %s18, %s32
      %p122 = scmp.eq.s32.totalorder %s121, 0
      %s124 = sadd.s32 %s123, 1
      %s125 = scalar_select %p122, %s123, %s124
      %p128 = pneg %p122
      %p129 = scmp.eq.s32.totalorder %s10, 1
      %p130 = por %p128, %p129
      %p131 = scmp.ne.s32.totalorder %s123, %s126
      %p132 = scmp.eq.s32.totalorder %s10, 0
      %p133 = por %p131, %p132
      %p134 = scmp.ne.s32.totalorder %s123, %s126
      %p135 = scmp.eq.s32.totalorder %s15, 1
      %p136 = por %p134, %p135
      %p137 = scmp.ne.s32.totalorder %s126, %s127
      %p138 = scmp.eq.s32.totalorder %s15, 0
      %p139 = por %p137, %p138
      %p140 = scmp.ne.s32.totalorder %s126, %s127
      %p141 = scmp.eq.s32.totalorder %s16, 1
      %p142 = por %p140, %p141
      %p144 = scmp.ne.s32.totalorder %s127, %s143
      %p145 = scmp.eq.s32.totalorder %s16, 0
      %p146 = por %p144, %p145
      %s147 = ssub.s32 %s17, %s36
      %s148 = ssub.s32 %s18, %s32
      %s149 = sor.u32 %s147, %s148
      %p150 = scmp.eq.s32.totalorder %s149, 0
      %s152 = sadd.s32 %s151, 1
      %s153 = scalar_select %p150, %s151, %s152
      %p156 = pneg %p150
      %p157 = scmp.eq.s32.totalorder %s10, 1
      %p158 = por %p156, %p157
      %p159 = scmp.ne.s32.totalorder %s151, %s154
      %p160 = scmp.eq.s32.totalorder %s10, 0
      %p161 = por %p159, %p160
      %p162 = scmp.ne.s32.totalorder %s151, %s154
      %p163 = scmp.eq.s32.totalorder %s15, 1
      %p164 = por %p162, %p163
      %p165 = scmp.ne.s32.totalorder %s154, %s155
      %p166 = scmp.eq.s32.totalorder %s15, 0
      %p167 = por %p165, %p166
      %p168 = scmp.ne.s32.totalorder %s154, %s155
      %p169 = scmp.eq.s32.totalorder %s16, 1
      %p170 = por %p168, %p169
      %p172 = scmp.ne.s32.totalorder %s155, %s171
      %p173 = scmp.eq.s32.totalorder %s16, 0
      %p174 = por %p172, %p173
      %p175 = scmp.le.s32.totalorder 1, %s10
      %p176 = scmp.lt.s32.totalorder %s10, 3
      %p177 = pnand %p175, %p176
      %p178 = pneg %p177
      // Predicated region
      $region9: #{_lambda_.7} parent=5 // pred_check
        _
      $region10: #{_lambda_.7} parent=5 // pred_check_branch
        %180 = sbr.rel (%p177) target = $region12
      $region11: #{_lambda_.7} parent=5 // pred_region
        %s181 = ssub.s32 %s10, 1
        // Predicated region
        $region13: #{_lambda_.7} parent=11 // pred_check
          %p182 = pneg %p57
        $region14: #{_lambda_.7} parent=11 // pred_check_branch
          %184 = sbr.rel (%p182) target = $region16
        $region15: #{_lambda_.7} parent=11 // pred_region
          %s185 = smul.u32 8, %s20
          %p186 = scmp.lt.s32.totalorder %s185, 7
          %s187 = scalar_select %p186, %s185, 7
          %p188 = scmp.lt.s32.totalorder %s22, 0
          %s189 = scalar_select %p188, %s22, 0
          %s190 = sadd.s32 %s189, %s187
          %s191 = smul.addr %s190, 4
          %s192 = scalar_lea.vmem %s0, %s191
          %s193 = smul.u32 8, %s20
        $region16: #{_lambda_.7} parent=11 // pred_fallthru
          _
        // Predicated region
        $region17: #{_lambda_.7} parent=11 // pred_check
          %p194 = pneg %p85
        $region18: #{_lambda_.7} parent=11 // pred_check_branch
          %196 = sbr.rel (%p194) target = $region20
        $region19: #{_lambda_.7} parent=11 // pred_region
          %s197 = smul.u32 8, %s20
          %p198 = scmp.lt.s32.totalorder %s197, 7
          %s199 = scalar_select %p198, %s197, 7
          %p200 = scmp.lt.s32.totalorder %s22, 0
          %s201 = scalar_select %p200, %s22, 0
          %s202 = sadd.s32 %s201, %s199
          %s203 = smul.addr %s202, 4
          %s204 = scalar_lea.vmem %s1, %s203
          %s205 = smul.u32 8, %s20
        $region20: #{_lambda_.7} parent=11 // pred_fallthru
          _
      $region12: #{_lambda_.7} parent=5 // pred_fallthru
        _
      %p206 = scmp.lt.s32.totalorder %s10, 2
      // Predicated region
      $region21: #{_lambda_.7} parent=5 // pred_check
        %p207 = pneg %p206
      $region22: #{_lambda_.7} parent=5 // pred_check_branch
        %209 = sbr.rel (%p207) target = $region24
      $region23: #{_lambda_.7} parent=5 // pred_region
        // Predicated region
        $region25: #{_lambda_.7} parent=23 // pred_check
          %p210 = pneg %p107
        $region26: #{_lambda_.7} parent=23 // pred_check_branch
          %212 = sbr.rel (%p210) target = $region28
        $region27: #{_lambda_.7} parent=23 // pred_region
          %s213 = sand.u32 %s97, 1
          %s214 = sand.u32 %s97, 1
          %s215 = smul.addr %s214, 256
          %s216 = scalar_lea.vmem [#allocation3], %s215
          %s217 = smul.u32 16, %s19
          %s218 = smul.u32 4, %s18
          %s219 = smul.addr %s217, 8
          %s220 = sadd.s32 %s218, %s219
          %s221 = smul.addr %s220, 4
          %s222 = scalar_lea.vmem %s2, %s221
          // Predicated region
          $region29: #{_lambda_.7} parent=27 // pred_check
            _
          $region30: #{_lambda_.7} parent=27 // pred_check_branch
            %224 = sbr.rel (0) target = $region32
          $region31: #{_lambda_.7} parent=27 // pred_region
            // Predicated region
            $region33: #{_lambda_.7} parent=31 // pred_check
              _
            $region34: #{_lambda_.7} parent=31 // pred_check_branch
              %226 = sbr.rel (0) target = $region36
            $region35: #{_lambda_.7} parent=31 // pred_region
              loop: start=0, step=1, limit=1
              $region37: #{_lambda_.7} parent=35 // loop_pre_header
                _
              $region38: #{_lambda_.7} parent=35 // loop_header
                %s228 = sphi 0, %s232
                %p229 = scmp.ge.s32.totalorder %s228, 1
                %s233 = sphi %s222, %s222
                %s234 = sphi %s216, %s216
              $region39: #{_lambda_.7} parent=35 // loop_header_branch
                %231 = sbr.rel (%p229) target = $region43
              $region40: #{_lambda_.7} parent=35 // loop_body
                %v235 = vld [vmem:[%s233] sm:$0xff]
                %236 = vst [vmem:[%s234] sm:$0xff] %v235
                %v237 = vld [vmem:[%s233 + $0x8] sm:$0xff]
                %238 = vst [vmem:[%s234 + $0x8] sm:$0xff] %v237
                %v239 = vld [vmem:[%s233 + $0x20] sm:$0xff]
                %240 = vst [vmem:[%s234 + $0x10] sm:$0xff] %v239
                %v241 = vld [vmem:[%s233 + $0x28] sm:$0xff]
                %242 = vst [vmem:[%s234 + $0x18] sm:$0xff] %v241
                %v243 = vld [vmem:[%s233 + $0x40] sm:$0xff]
                %244 = vst [vmem:[%s234 + $0x20] sm:$0xff] %v243
                %v245 = vld [vmem:[%s233 + $0x48] sm:$0xff]
                %246 = vst [vmem:[%s234 + $0x28] sm:$0xff] %v245
                %v247 = vld [vmem:[%s233 + $0x60] sm:$0xff]
                %248 = vst [vmem:[%s234 + $0x30] sm:$0xff] %v247
                %v249 = vld [vmem:[%s233 + $0x68] sm:$0xff]
                %250 = vst [vmem:[%s234 + $0x38] sm:$0xff] %v249
                %v251 = vld [vmem:[%s233 + $0x80] sm:$0xff]
                %252 = vst [vmem:[%s234 + $0x40] sm:$0xff] %v251
                %v253 = vld [vmem:[%s233 + $0x88] sm:$0xff]
                %254 = vst [vmem:[%s234 + $0x48] sm:$0xff] %v253
                %v255 = vld [vmem:[%s233 + $0xa0] sm:$0xff]
                %256 = vst [vmem:[%s234 + $0x50] sm:$0xff] %v255
                %v257 = vld [vmem:[%s233 + $0xa8] sm:$0xff]
                %258 = vst [vmem:[%s234 + $0x58] sm:$0xff] %v257
                %v259 = vld [vmem:[%s233 + $0xc0] sm:$0xff]
                %260 = vst [vmem:[%s234 + $0x60] sm:$0xff] %v259
                %v261 = vld [vmem:[%s233 + $0xc8] sm:$0xff]
                %262 = vst [vmem:[%s234 + $0x68] sm:$0xff] %v261
                %v263 = vld [vmem:[%s233 + $0xe0] sm:$0xff]
                %264 = vst [vmem:[%s234 + $0x70] sm:$0xff] %v263
                %v265 = vld [vmem:[%s233 + $0xe8] sm:$0xff]
                %266 = vst [vmem:[%s234 + $0x78] sm:$0xff] %v265
                %v267 = vld [vmem:[%s233 + $0x100] sm:$0xff]
                %268 = vst [vmem:[%s234 + $0x80] sm:$0xff] %v267
                %v269 = vld [vmem:[%s233 + $0x108] sm:$0xff]
                %270 = vst [vmem:[%s234 + $0x88] sm:$0xff] %v269
                %v271 = vld [vmem:[%s233 + $0x120] sm:$0xff]
                %272 = vst [vmem:[%s234 + $0x90] sm:$0xff] %v271
                %v273 = vld [vmem:[%s233 + $0x128] sm:$0xff]
                %274 = vst [vmem:[%s234 + $0x98] sm:$0xff] %v273
                %v275 = vld [vmem:[%s233 + $0x140] sm:$0xff]
                %276 = vst [vmem:[%s234 + $0xa0] sm:$0xff] %v275
                %v277 = vld [vmem:[%s233 + $0x148] sm:$0xff]
                %278 = vst [vmem:[%s234 + $0xa8] sm:$0xff] %v277
                %v279 = vld [vmem:[%s233 + $0x160] sm:$0xff]
                %280 = vst [vmem:[%s234 + $0xb0] sm:$0xff] %v279
                %v281 = vld [vmem:[%s233 + $0x168] sm:$0xff]
                %282 = vst [vmem:[%s234 + $0xb8] sm:$0xff] %v281
                %v283 = vld [vmem:[%s233 + $0x180] sm:$0xff]
                %284 = vst [vmem:[%s234 + $0xc0] sm:$0xff] %v283
                %v285 = vld [vmem:[%s233 + $0x188] sm:$0xff]
                %286 = vst [vmem:[%s234 + $0xc8] sm:$0xff] %v285
                %v287 = vld [vmem:[%s233 + $0x1a0] sm:$0xff]
                %288 = vst [vmem:[%s234 + $0xd0] sm:$0xff] %v287
                %v289 = vld [vmem:[%s233 + $0x1a8] sm:$0xff]
                %290 = vst [vmem:[%s234 + $0xd8] sm:$0xff] %v289
                %v291 = vld [vmem:[%s233 + $0x1c0] sm:$0xff]
                %292 = vst [vmem:[%s234 + $0xe0] sm:$0xff] %v291
                %v293 = vld [vmem:[%s233 + $0x1c8] sm:$0xff]
                %294 = vst [vmem:[%s234 + $0xe8] sm:$0xff] %v293
                %v295 = vld [vmem:[%s233 + $0x1e0] sm:$0xff]
                %296 = vst [vmem:[%s234 + $0xf0] sm:$0xff] %v295
                %v297 = vld [vmem:[%s233 + $0x1e8] sm:$0xff]
                %298 = vst [vmem:[%s234 + $0xf8] sm:$0xff] %v297
              $region41: #{_lambda_.7} parent=35 // loop_footer
                %s232 = sadd.s32 1, %s228
              $region42: #{_lambda_.7} parent=35 // loop_footer_branch
                %227 = sbr.rel target = $region38
              $region43: #{_lambda_.7} parent=35 // loop_exit
                _
            $region36: #{_lambda_.7} parent=31 // pred_fallthru
              _
            // Predicated region
            $region44: #{_lambda_.7} parent=31 // pred_check
              _
            $region45: #{_lambda_.7} parent=31 // pred_check_branch
              %300 = sbr.rel target = $region47
            $region46: #{_lambda_.7} parent=31 // pred_region
              _
            $region47: #{_lambda_.7} parent=31 // pred_fallthru
              _
          $region32: #{_lambda_.7} parent=27 // pred_fallthru
            _
          %301 = vnop
        $region28: #{_lambda_.7} parent=23 // pred_fallthru
          _
        // Predicated region
        $region48: #{_lambda_.7} parent=23 // pred_check
          %p302 = pneg %p133
        $region49: #{_lambda_.7} parent=23 // pred_check_branch
          %304 = sbr.rel (%p302) target = $region51
        $region50: #{_lambda_.7} parent=23 // pred_region
          %s305 = smul.u32 4, %s18
          %p306 = scmp.lt.s32.totalorder %s305, 7
          %s307 = scalar_select %p306, %s305, 7
          %s308 = scalar_lea.vmem %s3, %s307
          %s309 = smul.u32 4, %s18
        $region51: #{_lambda_.7} parent=23 // pred_fallthru
          _
      $region24: #{_lambda_.7} parent=5 // pred_fallthru
        _
      %p310 = scmp.le.s32.totalorder 1, %s10
      %p311 = scmp.lt.s32.totalorder %s10, 3
      %p312 = pnand %p310, %p311
      %p313 = pneg %p312
      // Predicated region
      $region52: #{_lambda_.7} parent=5 // pred_check
        _
      $region53: #{_lambda_.7} parent=5 // pred_check_branch
        %315 = sbr.rel (%p312) target = $region55
      $region54: #{_lambda_.7} parent=5 // pred_region
        %s316 = ssub.s32 %s10, 1
        %s317 = sand.u32 %s100, 1
        %s318 = sand.u32 %s100, 1
        %s319 = smul.addr %s318, 256
        %s320 = scalar_lea.vmem [#allocation3], %s319
        // Predicated region
        $region56: #{_lambda_.7} parent=54 // pred_check
          %p321 = pneg %p113
        $region57: #{_lambda_.7} parent=54 // pred_check_branch
          %323 = sbr.rel (%p321) target = $region59
        $region58: #{_lambda_.7} parent=54 // pred_region
          _
        $region59: #{_lambda_.7} parent=54 // pred_fallthru
          _
        %s324 = smul.u32 8, %s20
        %p325 = scmp.lt.s32.totalorder %s324, 7
        %s326 = scalar_select %p325, %s324, 7
        %p327 = scmp.lt.s32.totalorder %s22, 0
        %s328 = scalar_select %p327, %s22, 0
        %s329 = sadd.s32 %s328, %s326
        %s330 = smul.addr %s329, 4
        %s331 = scalar_lea.vmem %s0, %s330
        %p332 = pneg %p57
        %p333 = pneg %p54
        %s334 = smul.u32 8, %s20
        %p335 = scmp.lt.s32.totalorder %s334, 7
        %s336 = scalar_select %p335, %s334, 7
        %p337 = scmp.lt.s32.totalorder %s22, 0
        %s338 = scalar_select %p337, %s22, 0
        %s339 = sadd.s32 %s338, %s336
        %s340 = smul.addr %s339, 4
        %s341 = scalar_lea.vmem %s1, %s340
        %p342 = pneg %p85
        %p343 = pneg %p82
        %s344 = sand.u32 %s100, 1
        %s345 = sand.u32 %s100, 1
        %s346 = smul.addr %s345, 256
        %s347 = scalar_lea.vmem [#allocation3], %s346
        %p348 = pneg %p113
        %p349 = pneg %p110
        %s350 = smul.u32 4, %s21
        %p351 = scmp.lt.s32.totalorder %s350, 7
        %s352 = scalar_select %p351, %s350, 7
        %s353 = scalar_lea.vmem %s3, %s352
        %p354 = pneg %p139
        %p355 = pneg %p136
        %p356 = pneg %p167
        %p357 = pneg %p164
        %s358 = sand.u32 %s154, 1
        %s359 = sand.u32 %s154, 1
        %s360 = smul.addr %s359, 128
        %s361 = scalar_lea.vmem [#allocation4], %s360
        %s362 = smul.u32 8, %s20
        %p363 = scmp.lt.s32.totalorder %s362, 7
        %s364 = scalar_select %p363, %s362, 7
        %p365 = scmp.lt.s32.totalorder %s22, 0
        %s366 = scalar_select %p365, %s22, 0
        %s367 = sadd.s32 %s366, %s364
        %s368 = smul.addr %s367, 4
        %s369 = scalar_lea.vmem %s0, %s368
        %s370 = smul.u32 8, %s20
        %s371 = smul.u32 8, %s20
        %p372 = scmp.lt.s32.totalorder %s371, 7
        %s373 = scalar_select %p372, %s371, 7
        %p374 = scmp.lt.s32.totalorder %s22, 0
        %s375 = scalar_select %p374, %s22, 0
        %s376 = sadd.s32 %s375, %s373
        %s377 = smul.addr %s376, 4
        %s378 = scalar_lea.vmem %s1, %s377
        %s379 = smul.u32 8, %s20
        %s380 = smul.u32 16, %s22
        %s381 = smul.u32 4, %s21
        %s382 = smul.u32 4, %s21
        %p383 = scmp.lt.s32.totalorder %s382, 7
        %s384 = scalar_select %p383, %s382, 7
        %s385 = scalar_lea.vmem %s3, %s384
        %s386 = smul.u32 4, %s21
        %s387 = smul.u32 8, %s20
        %s388 = smul.u32 4, %s21
        %p390 = scmp.eq.s32.totalorder %s22, 0
        // Predicated region
        $region60: #{_lambda_.7} parent=54 // pred_check
          %p391 = pneg %p390
        $region61: #{_lambda_.7} parent=54 // pred_check_branch
          %393 = sbr.rel (%p391) target = $region63
        $region62: #{_lambda_.7} parent=54 // pred_region
          %394 = vst [vmem:[#allocation2] sm:$0xff] 0.0
          %395 = vst [vmem:[#allocation2 + $0x8] sm:$0xff] 0.0
          %396 = vst [vmem:[#allocation2 + $0x10] sm:$0xff] 0.0
          %397 = vst [vmem:[#allocation2 + $0x18] sm:$0xff] 0.0
          %398 = vst [vmem:[#allocation2 + $0x20] sm:$0xff] 0.0
          %399 = vst [vmem:[#allocation2 + $0x28] sm:$0xff] 0.0
          %400 = vst [vmem:[#allocation2 + $0x30] sm:$0xff] 0.0
          %401 = vst [vmem:[#allocation2 + $0x38] sm:$0xff] 0.0
          %402 = vst [vmem:[#allocation2 + $0x40] sm:$0xff] 0.0
          %403 = vst [vmem:[#allocation2 + $0x48] sm:$0xff] 0.0
          %404 = vst [vmem:[#allocation2 + $0x50] sm:$0xff] 0.0
          %405 = vst [vmem:[#allocation2 + $0x58] sm:$0xff] 0.0
          %406 = vst [vmem:[#allocation2 + $0x60] sm:$0xff] 0.0
          %407 = vst [vmem:[#allocation2 + $0x68] sm:$0xff] 0.0
          %408 = vst [vmem:[#allocation2 + $0x70] sm:$0xff] 0.0
          %409 = vst [vmem:[#allocation2 + $0x78] sm:$0xff] 0.0
          %410 = vst [vmem:[#allocation2 + $0x80] sm:$0xff] 0.0
          %411 = vst [vmem:[#allocation2 + $0x88] sm:$0xff] 0.0
          %412 = vst [vmem:[#allocation2 + $0x90] sm:$0xff] 0.0
          %413 = vst [vmem:[#allocation2 + $0x98] sm:$0xff] 0.0
          %414 = vst [vmem:[#allocation2 + $0xa0] sm:$0xff] 0.0
          %415 = vst [vmem:[#allocation2 + $0xa8] sm:$0xff] 0.0
          %416 = vst [vmem:[#allocation2 + $0xb0] sm:$0xff] 0.0
          %417 = vst [vmem:[#allocation2 + $0xb8] sm:$0xff] 0.0
          %418 = vst [vmem:[#allocation2 + $0xc0] sm:$0xff] 0.0
          %419 = vst [vmem:[#allocation2 + $0xc8] sm:$0xff] 0.0
          %420 = vst [vmem:[#allocation2 + $0xd0] sm:$0xff] 0.0
          %421 = vst [vmem:[#allocation2 + $0xd8] sm:$0xff] 0.0
          %422 = vst [vmem:[#allocation2 + $0xe0] sm:$0xff] 0.0
          %423 = vst [vmem:[#allocation2 + $0xe8] sm:$0xff] 0.0
          %424 = vst [vmem:[#allocation2 + $0xf0] sm:$0xff] 0.0
          %425 = vst [vmem:[#allocation2 + $0xf8] sm:$0xff] 0.0
        $region63: #{_lambda_.7} parent=54 // pred_fallthru
          _
        %v426 = vld [vmem:[#allocation2] sm:$0xff]
        %v427 = vld [vmem:[#allocation2 + $0x8] sm:$0xff]
        %v428 = vld [vmem:[#allocation2 + $0x10] sm:$0xff]
        %v429 = vld [vmem:[#allocation2 + $0x18] sm:$0xff]
        %v430 = vld [vmem:[#allocation2 + $0x20] sm:$0xff]
        %v431 = vld [vmem:[#allocation2 + $0x28] sm:$0xff]
        %v432 = vld [vmem:[#allocation2 + $0x30] sm:$0xff]
        %v433 = vld [vmem:[#allocation2 + $0x38] sm:$0xff]
        %v434 = vld [vmem:[#allocation2 + $0x40] sm:$0xff]
        %v435 = vld [vmem:[#allocation2 + $0x48] sm:$0xff]
        %v436 = vld [vmem:[#allocation2 + $0x50] sm:$0xff]
        %v437 = vld [vmem:[#allocation2 + $0x58] sm:$0xff]
        %v438 = vld [vmem:[#allocation2 + $0x60] sm:$0xff]
        %v439 = vld [vmem:[#allocation2 + $0x68] sm:$0xff]
        %v440 = vld [vmem:[#allocation2 + $0x70] sm:$0xff]
        %v441 = vld [vmem:[#allocation2 + $0x78] sm:$0xff]
        %v442 = vld [vmem:[#allocation2 + $0x80] sm:$0xff]
        %v443 = vld [vmem:[#allocation2 + $0x88] sm:$0xff]
        %v444 = vld [vmem:[#allocation2 + $0x90] sm:$0xff]
        %v445 = vld [vmem:[#allocation2 + $0x98] sm:$0xff]
        %v446 = vld [vmem:[#allocation2 + $0xa0] sm:$0xff]
        %v447 = vld [vmem:[#allocation2 + $0xa8] sm:$0xff]
        %v448 = vld [vmem:[#allocation2 + $0xb0] sm:$0xff]
        %v449 = vld [vmem:[#allocation2 + $0xb8] sm:$0xff]
        %v450 = vld [vmem:[#allocation2 + $0xc0] sm:$0xff]
        %v451 = vld [vmem:[#allocation2 + $0xc8] sm:$0xff]
        %v452 = vld [vmem:[#allocation2 + $0xd0] sm:$0xff]
        %v453 = vld [vmem:[#allocation2 + $0xd8] sm:$0xff]
        %v454 = vld [vmem:[#allocation2 + $0xe0] sm:$0xff]
        %v455 = vld [vmem:[#allocation2 + $0xe8] sm:$0xff]
        %v456 = vld [vmem:[#allocation2 + $0xf0] sm:$0xff]
        %v457 = vld [vmem:[#allocation2 + $0xf8] sm:$0xff]
        %v458 = vld [vmem:[%s369] sm:$0xf]
        %v459 = vld [vmem:[%s369 + $0x4] sm:$0xf]
        %v460 = vld [vmem:[%s369 + $0x8] sm:$0xf]
        %v461 = vld [vmem:[%s369 + $0xc] sm:$0xf]
        %v462 = vld [vmem:[%s369 + $0x10] sm:$0xf]
        %v463 = vld [vmem:[%s369 + $0x14] sm:$0xf]
        %v464 = vld [vmem:[%s369 + $0x18] sm:$0xf]
        %v465 = vld [vmem:[%s369 + $0x1c] sm:$0xf]
        %v466 = vld [vmem:[%s378] sm:$0xf]
        %v467 = vld [vmem:[%s378 + $0x4] sm:$0xf]
        %v468 = vld [vmem:[%s378 + $0x8] sm:$0xf]
        %v469 = vld [vmem:[%s378 + $0xc] sm:$0xf]
        %v470 = vld [vmem:[%s378 + $0x10] sm:$0xf]
        %v471 = vld [vmem:[%s378 + $0x14] sm:$0xf]
        %v472 = vld [vmem:[%s378 + $0x18] sm:$0xf]
        %v473 = vld [vmem:[%s378 + $0x1c] sm:$0xf]
        %v474 = vadd.bf16 %v458, %v466
        %v475 = vadd.bf16 %v459, %v467
        %v476 = vadd.bf16 %v460, %v468
        %v477 = vadd.bf16 %v461, %v469
        %v478 = vadd.bf16 %v462, %v470
        %v479 = vadd.bf16 %v463, %v471
        %v480 = vadd.bf16 %v464, %v472
        %v481 = vadd.bf16 %v465, %v473
        %v482 = vld [vmem:[%s320] sm:$0xff]
        %v483 = vld [vmem:[%s320 + $0x8] sm:$0xff]
        %v484 = vld [vmem:[%s320 + $0x10] sm:$0xff]
        %v485 = vld [vmem:[%s320 + $0x18] sm:$0xff]
        %v486 = vld [vmem:[%s320 + $0x20] sm:$0xff]
        %v487 = vld [vmem:[%s320 + $0x28] sm:$0xff]
        %v488 = vld [vmem:[%s320 + $0x30] sm:$0xff]
        %v489 = vld [vmem:[%s320 + $0x38] sm:$0xff]
        %v490 = vld [vmem:[%s320 + $0x40] sm:$0xff]
        %v491 = vld [vmem:[%s320 + $0x48] sm:$0xff]
        %v492 = vld [vmem:[%s320 + $0x50] sm:$0xff]
        %v493 = vld [vmem:[%s320 + $0x58] sm:$0xff]
        %v494 = vld [vmem:[%s320 + $0x60] sm:$0xff]
        %v495 = vld [vmem:[%s320 + $0x68] sm:$0xff]
        %v496 = vld [vmem:[%s320 + $0x70] sm:$0xff]
        %v497 = vld [vmem:[%s320 + $0x78] sm:$0xff]
        %v498 = vld [vmem:[%s320 + $0x80] sm:$0xff]
        %v499 = vld [vmem:[%s320 + $0x88] sm:$0xff]
        %v500 = vld [vmem:[%s320 + $0x90] sm:$0xff]
        %v501 = vld [vmem:[%s320 + $0x98] sm:$0xff]
        %v502 = vld [vmem:[%s320 + $0xa0] sm:$0xff]
        %v503 = vld [vmem:[%s320 + $0xa8] sm:$0xff]
        %v504 = vld [vmem:[%s320 + $0xb0] sm:$0xff]
        %v505 = vld [vmem:[%s320 + $0xb8] sm:$0xff]
        %v506 = vld [vmem:[%s320 + $0xc0] sm:$0xff]
        %v507 = vld [vmem:[%s320 + $0xc8] sm:$0xff]
        %v508 = vld [vmem:[%s320 + $0xd0] sm:$0xff]
        %v509 = vld [vmem:[%s320 + $0xd8] sm:$0xff]
        %v510 = vld [vmem:[%s320 + $0xe0] sm:$0xff]
        %v511 = vld [vmem:[%s320 + $0xe8] sm:$0xff]
        %v512 = vld [vmem:[%s320 + $0xf0] sm:$0xff]
        %v513 = vld [vmem:[%s320 + $0xf8] sm:$0xff]
        %v522 = vunpack.c.l.b16 %v474
        %v523 = vunpack.c.l.b16 %v475
        %v524 = vunpack.c.l.b16 %v476
        %v525 = vunpack.c.l.b16 %v477
        %v526 = vunpack.c.l.b16 %v478
        %v527 = vunpack.c.l.b16 %v479
        %v528 = vunpack.c.l.b16 %v480
        %v529 = vunpack.c.l.b16 %v481
        %v530 = vpack.c.b16 %v523, %v522
        %v531 = vpack.c.b16 %v525, %v524
        %v532 = vpack.c.b16 %v527, %v526
        %v533 = vpack.c.b16 %v529, %v528
        %v570 = vunpack.c.l.b16 %v482
        %v571 = vunpack.c.h.b16 %v482
        %v572 = vunpack.c.l.b16 %v483
        %v573 = vunpack.c.h.b16 %v483
        %v574 = vunpack.c.l.b16 %v484
        %v575 = vunpack.c.h.b16 %v484
        %v576 = vunpack.c.l.b16 %v485
        %v577 = vunpack.c.h.b16 %v485
        %v578 = vunpack.c.l.b16 %v486
        %v579 = vunpack.c.h.b16 %v486
        %v580 = vunpack.c.l.b16 %v487
        %v581 = vunpack.c.h.b16 %v487
        %v582 = vunpack.c.l.b16 %v488
        %v583 = vunpack.c.h.b16 %v488
        %v584 = vunpack.c.l.b16 %v489
        %v585 = vunpack.c.h.b16 %v489
        %v586 = vunpack.c.l.b16 %v490
        %v587 = vunpack.c.h.b16 %v490
        %v588 = vunpack.c.l.b16 %v491
        %v589 = vunpack.c.h.b16 %v491
        %v590 = vunpack.c.l.b16 %v492
        %v591 = vunpack.c.h.b16 %v492
        %v592 = vunpack.c.l.b16 %v493
        %v593 = vunpack.c.h.b16 %v493
        %v594 = vunpack.c.l.b16 %v494
        %v595 = vunpack.c.h.b16 %v494
        %v596 = vunpack.c.l.b16 %v495
        %v597 = vunpack.c.h.b16 %v495
        %v598 = vunpack.c.l.b16 %v496
        %v599 = vunpack.c.h.b16 %v496
        %v600 = vunpack.c.l.b16 %v497
        %v601 = vunpack.c.h.b16 %v497
        %v602 = vunpack.c.l.b16 %v498
        %v603 = vunpack.c.h.b16 %v498
        %v604 = vunpack.c.l.b16 %v499
        %v605 = vunpack.c.h.b16 %v499
        %v606 = vunpack.c.l.b16 %v500
        %v607 = vunpack.c.h.b16 %v500
        %v608 = vunpack.c.l.b16 %v501
        %v609 = vunpack.c.h.b16 %v501
        %v610 = vunpack.c.l.b16 %v502
        %v611 = vunpack.c.h.b16 %v502
        %v612 = vunpack.c.l.b16 %v503
        %v613 = vunpack.c.h.b16 %v503
        %v614 = vunpack.c.l.b16 %v504
        %v615 = vunpack.c.h.b16 %v504
        %v616 = vunpack.c.l.b16 %v505
        %v617 = vunpack.c.h.b16 %v505
        %v618 = vunpack.c.l.b16 %v506
        %v619 = vunpack.c.h.b16 %v506
        %v620 = vunpack.c.l.b16 %v507
        %v621 = vunpack.c.h.b16 %v507
        %v622 = vunpack.c.l.b16 %v508
        %v623 = vunpack.c.h.b16 %v508
        %v624 = vunpack.c.l.b16 %v509
        %v625 = vunpack.c.h.b16 %v509
        %v626 = vunpack.c.l.b16 %v510
        %v627 = vunpack.c.h.b16 %v510
        %v628 = vunpack.c.l.b16 %v511
        %v629 = vunpack.c.h.b16 %v511
        %v630 = vunpack.c.l.b16 %v512
        %v631 = vunpack.c.h.b16 %v512
        %v632 = vunpack.c.l.b16 %v513
        %v633 = vunpack.c.h.b16 %v513
        %v634 = vpack.c.b16 %v574, %v570
        %v635 = vpack.c.b16 %v575, %v571
        %v636 = vpack.c.b16 %v576, %v572
        %v637 = vpack.c.b16 %v577, %v573
        %v638 = vpack.c.b16 %v582, %v578
        %v639 = vpack.c.b16 %v583, %v579
        %v640 = vpack.c.b16 %v584, %v580
        %v641 = vpack.c.b16 %v585, %v581
        %v642 = vpack.c.b16 %v590, %v586
        %v643 = vpack.c.b16 %v591, %v587
        %v644 = vpack.c.b16 %v592, %v588
        %v645 = vpack.c.b16 %v593, %v589
        %v646 = vpack.c.b16 %v598, %v594
        %v647 = vpack.c.b16 %v599, %v595
        %v648 = vpack.c.b16 %v600, %v596
        %v649 = vpack.c.b16 %v601, %v597
        %v650 = vpack.c.b16 %v606, %v602
        %v651 = vpack.c.b16 %v607, %v603
        %v652 = vpack.c.b16 %v608, %v604
        %v653 = vpack.c.b16 %v609, %v605
        %v654 = vpack.c.b16 %v614, %v610
        %v655 = vpack.c.b16 %v615, %v611
        %v656 = vpack.c.b16 %v616, %v612
        %v657 = vpack.c.b16 %v617, %v613
        %v658 = vpack.c.b16 %v622, %v618
        %v659 = vpack.c.b16 %v623, %v619
        %v660 = vpack.c.b16 %v624, %v620
        %v661 = vpack.c.b16 %v625, %v621
        %v662 = vpack.c.b16 %v630, %v626
        %v663 = vpack.c.b16 %v631, %v627
        %v664 = vpack.c.b16 %v632, %v628
        %v665 = vpack.c.b16 %v633, %v629
        %698 = vmatprep.subr.bf16.mxu0 %v663
        %699 = vmatpush1.bf16.msra.mxu0 %v662
        %700 = vmatprep.subr.bf16.mxu0 %v659
        %701 = vmatpush1.bf16.msra.mxu0 %v658
        %702 = vmatprep.subr.bf16.mxu0 %v655
        %703 = vmatpush1.bf16.msra.mxu0 %v654
        %704 = vmatprep.subr.bf16.mxu0 %v651
        %705 = vmatpush1.bf16.msra.mxu0 %v650
        %706 = vmatprep.subr.bf16.mxu0 %v647
        %707 = vmatpush1.bf16.msra.mxu0 %v646
        %708 = vmatprep.subr.bf16.mxu0 %v643
        %709 = vmatpush1.bf16.msra.mxu0 %v642
        %710 = vmatprep.subr.bf16.mxu0 %v639
        %711 = vmatpush1.bf16.msra.mxu0 %v638
        %712 = vmatprep.subr.bf16.mxu0 %v635
        %713 = vmatpush1.bf16.msra.mxu0 %v634
        %714 = vmatprep.subr.bf16.mxu0 0
        %715 = vmatpush2.bf16.msra.mxu0 0
        %716 = vmatprep.subr.bf16.mxu0 0
        %717 = vmatpush2.bf16.msra.mxu0 0
        %718 = vmatprep.subr.bf16.mxu0 0
        %719 = vmatpush2.bf16.msra.mxu0 0
        %720 = vmatprep.subr.bf16.mxu0 0
        %721 = vmatpush2.bf16.msra.mxu0 0
        %722 = vmatprep.subr.bf16.mxu0 0
        %723 = vmatpush2.bf16.msra.mxu0 0
        %724 = vmatprep.subr.bf16.mxu0 0
        %725 = vmatpush2.bf16.msra.mxu0 0
        %726 = vmatprep.subr.bf16.mxu0 0
        %727 = vmatpush2.bf16.msra.mxu0 0
        %728 = vmatprep.subr.bf16.mxu0 0
        %729 = vmatpush2.bf16.msra.mxu0 0
        %730 = vmatprep.mubr.bf16.mxu0 0
        %731 = vmatmul.mubr.bf16.gmra.mxu0 %v530
        %v732 = vpop.f32.mrf.mxu0
        %v733 = vadd.f32 0.0, %v732
        %v734 = vpop.f32.mrf.mxu0
        %v735 = vadd.f32 0.0, %v734
        %v736 = vpop.f32.mrf.mxu0
        %v737 = vadd.f32 0.0, %v736
        %v738 = vpop.f32.mrf.mxu0
        %v739 = vadd.f32 0.0, %v738
        %740 = vmatprep.mubr.bf16.mxu0 0
        %741 = vmatmul.mubr.bf16.gmra.mxu0 %v531
        %v742 = vpop.f32.mrf.mxu0
        %v743 = vadd.f32 0.0, %v742
        %v744 = vpop.f32.mrf.mxu0
        %v745 = vadd.f32 0.0, %v744
        %v746 = vpop.f32.mrf.mxu0
        %v747 = vadd.f32 0.0, %v746
        %v748 = vpop.f32.mrf.mxu0
        %v749 = vadd.f32 0.0, %v748
        %750 = vmatprep.mubr.bf16.mxu0 0
        %751 = vmatmul.mubr.bf16.gmra.mxu0 %v532
        %v752 = vpop.f32.mrf.mxu0
        %v753 = vadd.f32 0.0, %v752
        %v754 = vpop.f32.mrf.mxu0
        %v755 = vadd.f32 0.0, %v754
        %v756 = vpop.f32.mrf.mxu0
        %v757 = vadd.f32 0.0, %v756
        %v758 = vpop.f32.mrf.mxu0
        %v759 = vadd.f32 0.0, %v758
        %760 = vmatprep.mubr.bf16.mxu0 0
        %761 = vmatmul.mubr.bf16.gmra.mxu0 %v533
        %v762 = vpop.f32.mrf.mxu0
        %v763 = vadd.f32 0.0, %v762
        %v764 = vpop.f32.mrf.mxu0
        %v765 = vadd.f32 0.0, %v764
        %v766 = vpop.f32.mrf.mxu0
        %v767 = vadd.f32 0.0, %v766
        %v768 = vpop.f32.mrf.mxu0
        %v769 = vadd.f32 0.0, %v768
        %770 = vdwg.mxu0
        %771 = vmatprep.subr.bf16.mxu0 %v665
        %772 = vmatpush1.bf16.msra.mxu0 %v664
        %773 = vmatprep.subr.bf16.mxu0 %v661
        %774 = vmatpush1.bf16.msra.mxu0 %v660
        %775 = vmatprep.subr.bf16.mxu0 %v657
        %776 = vmatpush1.bf16.msra.mxu0 %v656
        %777 = vmatprep.subr.bf16.mxu0 %v653
        %778 = vmatpush1.bf16.msra.mxu0 %v652
        %779 = vmatprep.subr.bf16.mxu0 %v649
        %780 = vmatpush1.bf16.msra.mxu0 %v648
        %781 = vmatprep.subr.bf16.mxu0 %v645
        %782 = vmatpush1.bf16.msra.mxu0 %v644
        %783 = vmatprep.subr.bf16.mxu0 %v641
        %784 = vmatpush1.bf16.msra.mxu0 %v640
        %785 = vmatprep.subr.bf16.mxu0 %v637
        %786 = vmatpush1.bf16.msra.mxu0 %v636
        %787 = vmatprep.subr.bf16.mxu0 0
        %788 = vmatpush2.bf16.msra.mxu0 0
        %789 = vmatprep.subr.bf16.mxu0 0
        %790 = vmatpush2.bf16.msra.mxu0 0
        %791 = vmatprep.subr.bf16.mxu0 0
        %792 = vmatpush2.bf16.msra.mxu0 0
        %793 = vmatprep.subr.bf16.mxu0 0
        %794 = vmatpush2.bf16.msra.mxu0 0
        %795 = vmatprep.subr.bf16.mxu0 0
        %796 = vmatpush2.bf16.msra.mxu0 0
        %797 = vmatprep.subr.bf16.mxu0 0
        %798 = vmatpush2.bf16.msra.mxu0 0
        %799 = vmatprep.subr.bf16.mxu0 0
        %800 = vmatpush2.bf16.msra.mxu0 0
        %801 = vmatprep.subr.bf16.mxu0 0
        %802 = vmatpush2.bf16.msra.mxu0 0
        %803 = vmatprep.mubr.bf16.mxu0 0
        %804 = vmatmul.mubr.bf16.gmra.mxu0 %v530
        %v805 = vpop.f32.mrf.mxu0
        %v806 = vadd.f32 0.0, %v805
        %v807 = vpop.f32.mrf.mxu0
        %v808 = vadd.f32 0.0, %v807
        %v809 = vpop.f32.mrf.mxu0
        %v810 = vadd.f32 0.0, %v809
        %v811 = vpop.f32.mrf.mxu0
        %v812 = vadd.f32 0.0, %v811
        %813 = vmatprep.mubr.bf16.mxu0 0
        %814 = vmatmul.mubr.bf16.gmra.mxu0 %v531
        %v815 = vpop.f32.mrf.mxu0
        %v816 = vadd.f32 0.0, %v815
        %v817 = vpop.f32.mrf.mxu0
        %v818 = vadd.f32 0.0, %v817
        %v819 = vpop.f32.mrf.mxu0
        %v820 = vadd.f32 0.0, %v819
        %v821 = vpop.f32.mrf.mxu0
        %v822 = vadd.f32 0.0, %v821
        %823 = vmatprep.mubr.bf16.mxu0 0
        %824 = vmatmul.mubr.bf16.gmra.mxu0 %v532
        %v825 = vpop.f32.mrf.mxu0
        %v826 = vadd.f32 0.0, %v825
        %v827 = vpop.f32.mrf.mxu0
        %v828 = vadd.f32 0.0, %v827
        %v829 = vpop.f32.mrf.mxu0
        %v830 = vadd.f32 0.0, %v829
        %v831 = vpop.f32.mrf.mxu0
        %v832 = vadd.f32 0.0, %v831
        %833 = vmatprep.mubr.bf16.mxu0 0
        %834 = vmatmul.mubr.bf16.gmra.mxu0 %v533
        %v835 = vpop.f32.mrf.mxu0
        %v836 = vadd.f32 0.0, %v835
        %v837 = vpop.f32.mrf.mxu0
        %v838 = vadd.f32 0.0, %v837
        %v839 = vpop.f32.mrf.mxu0
        %v840 = vadd.f32 0.0, %v839
        %v841 = vpop.f32.mrf.mxu0
        %v842 = vadd.f32 0.0, %v841
        %843 = vdwg.mxu0
        %v844 = vadd.f32 %v426, %v733
        %v845 = vadd.f32 %v427, %v735
        %v846 = vadd.f32 %v428, %v806
        %v847 = vadd.f32 %v429, %v808
        %v848 = vadd.f32 %v430, %v737
        %v849 = vadd.f32 %v431, %v739
        %v850 = vadd.f32 %v432, %v810
        %v851 = vadd.f32 %v433, %v812
        %v852 = vadd.f32 %v434, %v743
        %v853 = vadd.f32 %v435, %v745
        %v854 = vadd.f32 %v436, %v816
        %v855 = vadd.f32 %v437, %v818
        %v856 = vadd.f32 %v438, %v747
        %v857 = vadd.f32 %v439, %v749
        %v858 = vadd.f32 %v440, %v820
        %v859 = vadd.f32 %v441, %v822
        %v860 = vadd.f32 %v442, %v753
        %v861 = vadd.f32 %v443, %v755
        %v862 = vadd.f32 %v444, %v826
        %v863 = vadd.f32 %v445, %v828
        %v864 = vadd.f32 %v446, %v757
        %v865 = vadd.f32 %v447, %v759
        %v866 = vadd.f32 %v448, %v830
        %v867 = vadd.f32 %v449, %v832
        %v868 = vadd.f32 %v450, %v763
        %v869 = vadd.f32 %v451, %v765
        %v870 = vadd.f32 %v452, %v836
        %v871 = vadd.f32 %v453, %v838
        %v872 = vadd.f32 %v454, %v767
        %v873 = vadd.f32 %v455, %v769
        %v874 = vadd.f32 %v456, %v840
        %v875 = vadd.f32 %v457, %v842
        %876 = vst [vmem:[#allocation2] sm:$0xff] %v844
        %877 = vst [vmem:[#allocation2 + $0x8] sm:$0xff] %v845
        %878 = vst [vmem:[#allocation2 + $0x10] sm:$0xff] %v846
        %879 = vst [vmem:[#allocation2 + $0x18] sm:$0xff] %v847
        %880 = vst [vmem:[#allocation2 + $0x20] sm:$0xff] %v848
        %881 = vst [vmem:[#allocation2 + $0x28] sm:$0xff] %v849
        %882 = vst [vmem:[#allocation2 + $0x30] sm:$0xff] %v850
        %883 = vst [vmem:[#allocation2 + $0x38] sm:$0xff] %v851
        %884 = vst [vmem:[#allocation2 + $0x40] sm:$0xff] %v852
        %885 = vst [vmem:[#allocation2 + $0x48] sm:$0xff] %v853
        %886 = vst [vmem:[#allocation2 + $0x50] sm:$0xff] %v854
        %887 = vst [vmem:[#allocation2 + $0x58] sm:$0xff] %v855
        %888 = vst [vmem:[#allocation2 + $0x60] sm:$0xff] %v856
        %889 = vst [vmem:[#allocation2 + $0x68] sm:$0xff] %v857
        %890 = vst [vmem:[#allocation2 + $0x70] sm:$0xff] %v858
        %891 = vst [vmem:[#allocation2 + $0x78] sm:$0xff] %v859
        %892 = vst [vmem:[#allocation2 + $0x80] sm:$0xff] %v860
        %893 = vst [vmem:[#allocation2 + $0x88] sm:$0xff] %v861
        %894 = vst [vmem:[#allocation2 + $0x90] sm:$0xff] %v862
        %895 = vst [vmem:[#allocation2 + $0x98] sm:$0xff] %v863
        %896 = vst [vmem:[#allocation2 + $0xa0] sm:$0xff] %v864
        %897 = vst [vmem:[#allocation2 + $0xa8] sm:$0xff] %v865
        %898 = vst [vmem:[#allocation2 + $0xb0] sm:$0xff] %v866
        %899 = vst [vmem:[#allocation2 + $0xb8] sm:$0xff] %v867
        %900 = vst [vmem:[#allocation2 + $0xc0] sm:$0xff] %v868
        %901 = vst [vmem:[#allocation2 + $0xc8] sm:$0xff] %v869
        %902 = vst [vmem:[#allocation2 + $0xd0] sm:$0xff] %v870
        %903 = vst [vmem:[#allocation2 + $0xd8] sm:$0xff] %v871
        %904 = vst [vmem:[#allocation2 + $0xe0] sm:$0xff] %v872
        %905 = vst [vmem:[#allocation2 + $0xe8] sm:$0xff] %v873
        %906 = vst [vmem:[#allocation2 + $0xf0] sm:$0xff] %v874
        %907 = vst [vmem:[#allocation2 + $0xf8] sm:$0xff] %v875
        // Predicated region
        $region64: #{_lambda_.7} parent=54 // pred_check
          %p908 = pneg %p390
        $region65: #{_lambda_.7} parent=54 // pred_check_branch
          %910 = sbr.rel (%p908) target = $region67
        $region66: #{_lambda_.7} parent=54 // pred_region
          %v911 = vld [vmem:[#allocation2] sm:$0xff]
          %v912 = vld [vmem:[#allocation2 + $0x8] sm:$0xff]
          %v913 = vld [vmem:[#allocation2 + $0x10] sm:$0xff]
          %v914 = vld [vmem:[#allocation2 + $0x18] sm:$0xff]
          %v915 = vld [vmem:[#allocation2 + $0x20] sm:$0xff]
          %v916 = vld [vmem:[#allocation2 + $0x28] sm:$0xff]
          %v917 = vld [vmem:[#allocation2 + $0x30] sm:$0xff]
          %v918 = vld [vmem:[#allocation2 + $0x38] sm:$0xff]
          %v919 = vld [vmem:[#allocation2 + $0x40] sm:$0xff]
          %v920 = vld [vmem:[#allocation2 + $0x48] sm:$0xff]
          %v921 = vld [vmem:[#allocation2 + $0x50] sm:$0xff]
          %v922 = vld [vmem:[#allocation2 + $0x58] sm:$0xff]
          %v923 = vld [vmem:[#allocation2 + $0x60] sm:$0xff]
          %v924 = vld [vmem:[#allocation2 + $0x68] sm:$0xff]
          %v925 = vld [vmem:[#allocation2 + $0x70] sm:$0xff]
          %v926 = vld [vmem:[#allocation2 + $0x78] sm:$0xff]
          %v927 = vld [vmem:[#allocation2 + $0x80] sm:$0xff]
          %v928 = vld [vmem:[#allocation2 + $0x88] sm:$0xff]
          %v929 = vld [vmem:[#allocation2 + $0x90] sm:$0xff]
          %v930 = vld [vmem:[#allocation2 + $0x98] sm:$0xff]
          %v931 = vld [vmem:[#allocation2 + $0xa0] sm:$0xff]
          %v932 = vld [vmem:[#allocation2 + $0xa8] sm:$0xff]
          %v933 = vld [vmem:[#allocation2 + $0xb0] sm:$0xff]
          %v934 = vld [vmem:[#allocation2 + $0xb8] sm:$0xff]
          %v935 = vld [vmem:[#allocation2 + $0xc0] sm:$0xff]
          %v936 = vld [vmem:[#allocation2 + $0xc8] sm:$0xff]
          %v937 = vld [vmem:[#allocation2 + $0xd0] sm:$0xff]
          %v938 = vld [vmem:[#allocation2 + $0xd8] sm:$0xff]
          %v939 = vld [vmem:[#allocation2 + $0xe0] sm:$0xff]
          %v940 = vld [vmem:[#allocation2 + $0xe8] sm:$0xff]
          %v941 = vld [vmem:[#allocation2 + $0xf0] sm:$0xff]
          %v942 = vld [vmem:[#allocation2 + $0xf8] sm:$0xff]
          %v943 = vld [vmem:[%s385] sm:$0xf]
          %v945 = vlaneseq
          %v946 = vshrl.u32 %v945, 7
          %v947 = vsub.s32 0, %v946
          %v948 = vrot.slane %v943, %v947
          %v949 = vlaneseq
          %v950 = vshrl.u32 %v949, 7
          %v951 = vsub.s32 1, %v950
          %v952 = vrot.slane %v943, %v951
          %v953 = vlaneseq
          %v954 = vshrl.u32 %v953, 7
          %v955 = vsub.s32 2, %v954
          %v956 = vrot.slane %v943, %v955
          %v957 = vlaneseq
          %v958 = vshrl.u32 %v957, 7
          %v959 = vsub.s32 3, %v958
          %v960 = vrot.slane %v943, %v959
          %v965 = vadd.f32 %v911, %v948
          %v966 = vadd.f32 %v912, %v952
          %v967 = vadd.f32 %v913, %v956
          %v968 = vadd.f32 %v914, %v960
          %v969 = vadd.f32 %v915, %v948
          %v970 = vadd.f32 %v916, %v952
          %v971 = vadd.f32 %v917, %v956
          %v972 = vadd.f32 %v918, %v960
          %v973 = vadd.f32 %v919, %v948
          %v974 = vadd.f32 %v920, %v952
          %v975 = vadd.f32 %v921, %v956
          %v976 = vadd.f32 %v922, %v960
          %v977 = vadd.f32 %v923, %v948
          %v978 = vadd.f32 %v924, %v952
          %v979 = vadd.f32 %v925, %v956
          %v980 = vadd.f32 %v926, %v960
          %v981 = vadd.f32 %v927, %v948
          %v982 = vadd.f32 %v928, %v952
          %v983 = vadd.f32 %v929, %v956
          %v984 = vadd.f32 %v930, %v960
          %v985 = vadd.f32 %v931, %v948
          %v986 = vadd.f32 %v932, %v952
          %v987 = vadd.f32 %v933, %v956
          %v988 = vadd.f32 %v934, %v960
          %v989 = vadd.f32 %v935, %v948
          %v990 = vadd.f32 %v936, %v952
          %v991 = vadd.f32 %v937, %v956
          %v992 = vadd.f32 %v938, %v960
          %v993 = vadd.f32 %v939, %v948
          %v994 = vadd.f32 %v940, %v952
          %v995 = vadd.f32 %v941, %v956
          %v996 = vadd.f32 %v942, %v960
          %v997 = vpack.c.bf16 %v969, %v965
          %v998 = vpack.c.bf16 %v970, %v966
          %v999 = vpack.c.bf16 %v971, %v967
          %v1000 = vpack.c.bf16 %v972, %v968
          %v1001 = vpack.c.bf16 %v977, %v973
          %v1002 = vpack.c.bf16 %v978, %v974
          %v1003 = vpack.c.bf16 %v979, %v975
          %v1004 = vpack.c.bf16 %v980, %v976
          %v1005 = vpack.c.bf16 %v985, %v981
          %v1006 = vpack.c.bf16 %v986, %v982
          %v1007 = vpack.c.bf16 %v987, %v983
          %v1008 = vpack.c.bf16 %v988, %v984
          %v1009 = vpack.c.bf16 %v993, %v989
          %v1010 = vpack.c.bf16 %v994, %v990
          %v1011 = vpack.c.bf16 %v995, %v991
          %v1012 = vpack.c.bf16 %v996, %v992
          %v1029 = vunpack.c.l.b16 %v997
          %v1030 = vunpack.c.l.b16 %v998
          %v1031 = vunpack.c.l.b16 %v999
          %v1032 = vunpack.c.l.b16 %v1000
          %v1033 = vunpack.c.h.b16 %v997
          %v1034 = vunpack.c.h.b16 %v998
          %v1035 = vunpack.c.h.b16 %v999
          %v1036 = vunpack.c.h.b16 %v1000
          %v1037 = vunpack.c.l.b16 %v1001
          %v1038 = vunpack.c.l.b16 %v1002
          %v1039 = vunpack.c.l.b16 %v1003
          %v1040 = vunpack.c.l.b16 %v1004
          %v1041 = vunpack.c.h.b16 %v1001
          %v1042 = vunpack.c.h.b16 %v1002
          %v1043 = vunpack.c.h.b16 %v1003
          %v1044 = vunpack.c.h.b16 %v1004
          %v1045 = vunpack.c.l.b16 %v1005
          %v1046 = vunpack.c.l.b16 %v1006
          %v1047 = vunpack.c.l.b16 %v1007
          %v1048 = vunpack.c.l.b16 %v1008
          %v1049 = vunpack.c.h.b16 %v1005
          %v1050 = vunpack.c.h.b16 %v1006
          %v1051 = vunpack.c.h.b16 %v1007
          %v1052 = vunpack.c.h.b16 %v1008
          %v1053 = vunpack.c.l.b16 %v1009
          %v1054 = vunpack.c.l.b16 %v1010
          %v1055 = vunpack.c.l.b16 %v1011
          %v1056 = vunpack.c.l.b16 %v1012
          %v1057 = vunpack.c.h.b16 %v1009
          %v1058 = vunpack.c.h.b16 %v1010
          %v1059 = vunpack.c.h.b16 %v1011
          %v1060 = vunpack.c.h.b16 %v1012
          %v1061 = vpack.c.b16 %v1030, %v1029
          %v1062 = vpack.c.b16 %v1032, %v1031
          %v1063 = vpack.c.b16 %v1034, %v1033
          %v1064 = vpack.c.b16 %v1036, %v1035
          %v1065 = vpack.c.b16 %v1038, %v1037
          %v1066 = vpack.c.b16 %v1040, %v1039
          %v1067 = vpack.c.b16 %v1042, %v1041
          %v1068 = vpack.c.b16 %v1044, %v1043
          %v1069 = vpack.c.b16 %v1046, %v1045
          %v1070 = vpack.c.b16 %v1048, %v1047
          %v1071 = vpack.c.b16 %v1050, %v1049
          %v1072 = vpack.c.b16 %v1052, %v1051
          %v1073 = vpack.c.b16 %v1054, %v1053
          %v1074 = vpack.c.b16 %v1056, %v1055
          %v1075 = vpack.c.b16 %v1058, %v1057
          %v1076 = vpack.c.b16 %v1060, %v1059
          %1093 = vst [vmem:[%s361] sm:$0xff] %v1061
          %1094 = vst [vmem:[%s361 + $0x8] sm:$0xff] %v1062
          %1095 = vst [vmem:[%s361 + $0x10] sm:$0xff] %v1063
          %1096 = vst [vmem:[%s361 + $0x18] sm:$0xff] %v1064
          %1097 = vst [vmem:[%s361 + $0x20] sm:$0xff] %v1065
          %1098 = vst [vmem:[%s361 + $0x28] sm:$0xff] %v1066
          %1099 = vst [vmem:[%s361 + $0x30] sm:$0xff] %v1067
          %1100 = vst [vmem:[%s361 + $0x38] sm:$0xff] %v1068
          %1101 = vst [vmem:[%s361 + $0x40] sm:$0xff] %v1069
          %1102 = vst [vmem:[%s361 + $0x48] sm:$0xff] %v1070
          %1103 = vst [vmem:[%s361 + $0x50] sm:$0xff] %v1071
          %1104 = vst [vmem:[%s361 + $0x58] sm:$0xff] %v1072
          %1105 = vst [vmem:[%s361 + $0x60] sm:$0xff] %v1073
          %1106 = vst [vmem:[%s361 + $0x68] sm:$0xff] %v1074
          %1107 = vst [vmem:[%s361 + $0x70] sm:$0xff] %v1075
          %1108 = vst [vmem:[%s361 + $0x78] sm:$0xff] %v1076
        $region67: #{_lambda_.7} parent=54 // pred_fallthru
          _
        %s1109 = sand.u32 %s154, 1
        %s1110 = sand.u32 %s154, 1
        %s1111 = smul.addr %s1110, 128
        %s1112 = scalar_lea.vmem [#allocation4], %s1111
        // Predicated region
        $region68: #{_lambda_.7} parent=54 // pred_check
          %p1113 = pneg %p164
        $region69: #{_lambda_.7} parent=54 // pred_check_branch
          %1115 = sbr.rel (%p1113) target = $region71
        $region70: #{_lambda_.7} parent=54 // pred_region
          %s1116 = smul.u32 8, %s20
          %s1117 = smul.u32 4, %s21
          %s1118 = smul.addr %s1116, 8
          %s1119 = sadd.s32 %s1117, %s1118
          %s1120 = smul.addr %s1119, 4
          %s1121 = scalar_lea.vmem %s4, %s1120
          // Predicated region
          $region72: #{_lambda_.7} parent=70 // pred_check
            _
          $region73: #{_lambda_.7} parent=70 // pred_check_branch
            %1123 = sbr.rel (0) target = $region75
          $region74: #{_lambda_.7} parent=70 // pred_region
            // Predicated region
            $region76: #{_lambda_.7} parent=74 // pred_check
              _
            $region77: #{_lambda_.7} parent=74 // pred_check_branch
              %1125 = sbr.rel (0) target = $region79
            $region78: #{_lambda_.7} parent=74 // pred_region
              loop: start=0, step=1, limit=1
              $region80: #{_lambda_.7} parent=78 // loop_pre_header
                _
              $region81: #{_lambda_.7} parent=78 // loop_header
                %s1127 = sphi 0, %s1131
                %p1128 = scmp.ge.s32.totalorder %s1127, 1
                %s1132 = sphi %s1112, %s1112
                %s1133 = sphi %s1121, %s1121
              $region82: #{_lambda_.7} parent=78 // loop_header_branch
                %1130 = sbr.rel (%p1128) target = $region86
              $region83: #{_lambda_.7} parent=78 // loop_body
                %v1134 = vld [vmem:[%s1132] sm:$0xff]
                %1135 = vst [vmem:[%s1133] sm:$0xff] %v1134
                %v1136 = vld [vmem:[%s1132 + $0x8] sm:$0xff]
                %1137 = vst [vmem:[%s1133 + $0x8] sm:$0xff] %v1136
                %v1138 = vld [vmem:[%s1132 + $0x10] sm:$0xff]
                %1139 = vst [vmem:[%s1133 + $0x20] sm:$0xff] %v1138
                %v1140 = vld [vmem:[%s1132 + $0x18] sm:$0xff]
                %1141 = vst [vmem:[%s1133 + $0x28] sm:$0xff] %v1140
                %v1142 = vld [vmem:[%s1132 + $0x20] sm:$0xff]
                %1143 = vst [vmem:[%s1133 + $0x40] sm:$0xff] %v1142
                %v1144 = vld [vmem:[%s1132 + $0x28] sm:$0xff]
                %1145 = vst [vmem:[%s1133 + $0x48] sm:$0xff] %v1144
                %v1146 = vld [vmem:[%s1132 + $0x30] sm:$0xff]
                %1147 = vst [vmem:[%s1133 + $0x60] sm:$0xff] %v1146
                %v1148 = vld [vmem:[%s1132 + $0x38] sm:$0xff]
                %1149 = vst [vmem:[%s1133 + $0x68] sm:$0xff] %v1148
                %v1150 = vld [vmem:[%s1132 + $0x40] sm:$0xff]
                %1151 = vst [vmem:[%s1133 + $0x80] sm:$0xff] %v1150
                %v1152 = vld [vmem:[%s1132 + $0x48] sm:$0xff]
                %1153 = vst [vmem:[%s1133 + $0x88] sm:$0xff] %v1152
                %v1154 = vld [vmem:[%s1132 + $0x50] sm:$0xff]
                %1155 = vst [vmem:[%s1133 + $0xa0] sm:$0xff] %v1154
                %v1156 = vld [vmem:[%s1132 + $0x58] sm:$0xff]
                %1157 = vst [vmem:[%s1133 + $0xa8] sm:$0xff] %v1156
                %v1158 = vld [vmem:[%s1132 + $0x60] sm:$0xff]
                %1159 = vst [vmem:[%s1133 + $0xc0] sm:$0xff] %v1158
                %v1160 = vld [vmem:[%s1132 + $0x68] sm:$0xff]
                %1161 = vst [vmem:[%s1133 + $0xc8] sm:$0xff] %v1160
                %v1162 = vld [vmem:[%s1132 + $0x70] sm:$0xff]
                %1163 = vst [vmem:[%s1133 + $0xe0] sm:$0xff] %v1162
                %v1164 = vld [vmem:[%s1132 + $0x78] sm:$0xff]
                %1165 = vst [vmem:[%s1133 + $0xe8] sm:$0xff] %v1164
              $region84: #{_lambda_.7} parent=78 // loop_footer
                %s1131 = sadd.s32 1, %s1127
              $region85: #{_lambda_.7} parent=78 // loop_footer_branch
                %1126 = sbr.rel target = $region81
              $region86: #{_lambda_.7} parent=78 // loop_exit
                _
            $region79: #{_lambda_.7} parent=74 // pred_fallthru
              _
            // Predicated region
            $region87: #{_lambda_.7} parent=74 // pred_check
              _
            $region88: #{_lambda_.7} parent=74 // pred_check_branch
              %1167 = sbr.rel target = $region90
            $region89: #{_lambda_.7} parent=74 // pred_region
              _
            $region90: #{_lambda_.7} parent=74 // pred_fallthru
              _
          $region75: #{_lambda_.7} parent=70 // pred_fallthru
            _
          %1168 = vnop
        $region71: #{_lambda_.7} parent=54 // pred_fallthru
          _
      $region55: #{_lambda_.7} parent=5 // pred_fallthru
        _
      %p1169 = scmp.le.s32.totalorder 2, %s10
      // Predicated region
      $region91: #{_lambda_.7} parent=5 // pred_check
        %p1170 = pneg %p1169
      $region92: #{_lambda_.7} parent=5 // pred_check_branch
        %1172 = sbr.rel (%p1170) target = $region94
      $region93: #{_lambda_.7} parent=5 // pred_region
        %s1173 = ssub.s32 %s10, 2
        // Predicated region
        $region95: #{_lambda_.7} parent=93 // pred_check
          %p1174 = pneg %p170
        $region96: #{_lambda_.7} parent=93 // pred_check_branch
          %1176 = sbr.rel (%p1174) target = $region98
        $region97: #{_lambda_.7} parent=93 // pred_region
          %s1177 = sand.u32 %s155, 1
          %s1178 = sand.u32 %s155, 1
          %s1179 = smul.addr %s1178, 128
          %s1180 = scalar_lea.vmem [#allocation4], %s1179
        $region98: #{_lambda_.7} parent=93 // pred_fallthru
          _
      $region94: #{_lambda_.7} parent=5 // pred_fallthru
        _
    $region6: #{_lambda_.7} parent=1 // loop_footer
      %s14 = sadd.s32 1, %s10
    $region7: #{_lambda_.7} parent=1 // loop_footer_branch
      %9 = sbr.rel target = $region3
    $region8: #{_lambda_.7} parent=1 // loop_exit
      _

// kernel: _lambda_.9
$region0: #{_lambda_.9}
  #allocation0 [shape = 'u32[]', space=smem, size = 0x4, offset = 0x4, fixed_abs, tag = 'smem constant byte address 0x4 - core index']
  #allocation1 [shape = 'u32[144,128]{1,0:T(1,128)}', space=vmem, size = 0x12000, scoped, tag = 'internal scratch']
  #allocation2 [shape = 'f32[64,128]{1,0:T(8,128)}', space=vmem, size = 0x8000, scoped, tag = 'scratch operand']
  %s0 = inlined_call_operand.vmem [shape: bf16[64,128], index: 0, kind: input, shape index: {}]
  %s1 = inlined_call_operand.vmem [shape: bf16[64,128], index: 1, kind: input, shape index: {}]
  %s2 = inlined_call_operand.vmem [shape: bf16[128,128], index: 2, kind: input, shape index: {}]
  %s3 = inlined_call_operand.vmem [shape: f32[1,128], index: 3, kind: input, shape index: {}]
  %s4 = inlined_call_operand.vmem [shape: f32[64,128], index: 4, kind: output, shape index: {}]
  %s5 = sld [smem:[#allocation0]]
  $region34: #{_lambda_.9} parent=0
    _
  %s7 = ssub.s32 1, %s5
  %s8 = scalar_select 0, %s7, %s5
  // Predicated region
  $region2: #{_lambda_.9} parent=0 // pred_check
    _
  $region3: #{_lambda_.9} parent=0 // pred_check_branch
    %10 = sbr.rel (0) target = $region5
  $region4: #{_lambda_.9} parent=0 // pred_region
    _
  $region5: #{_lambda_.9} parent=0 // pred_fallthru
    _
  // Predicated region
  $region6: #{_lambda_.9} parent=0 // pred_check
    _
  $region7: #{_lambda_.9} parent=0 // pred_check_branch
    %12 = sbr.rel (0) target = $region9
  $region8: #{_lambda_.9} parent=0 // pred_region
    _
  $region9: #{_lambda_.9} parent=0 // pred_fallthru
    _
  // Predicated region
  $region10: #{_lambda_.9} parent=0 // pred_check
    _
  $region11: #{_lambda_.9} parent=0 // pred_check_branch
    %14 = sbr.rel (0) target = $region13
  $region12: #{_lambda_.9} parent=0 // pred_region
    _
  $region13: #{_lambda_.9} parent=0 // pred_fallthru
    _
  // Predicated region
  $region14: #{_lambda_.9} parent=0 // pred_check
    _
  $region15: #{_lambda_.9} parent=0 // pred_check_branch
    %16 = sbr.rel (0) target = $region17
  $region16: #{_lambda_.9} parent=0 // pred_region
    _
  $region17: #{_lambda_.9} parent=0 // pred_fallthru
    _
  %p18 = scmp.eq.s32.totalorder 0, 0
  // Predicated region
  $region18: #{_lambda_.9} parent=0 // pred_check
    %p19 = pneg %p18
  $region19: #{_lambda_.9} parent=0 // pred_check_branch
    %21 = sbr.rel (%p19) target = $region21
  $region20: #{_lambda_.9} parent=0 // pred_region
    %22 = vst [vmem:[#allocation2] sm:$0xff] 0.0
    %23 = vst [vmem:[#allocation2 + $0x8] sm:$0xff] 0.0
    %24 = vst [vmem:[#allocation2 + $0x10] sm:$0xff] 0.0
    %25 = vst [vmem:[#allocation2 + $0x18] sm:$0xff] 0.0
    %26 = vst [vmem:[#allocation2 + $0x20] sm:$0xff] 0.0
    %27 = vst [vmem:[#allocation2 + $0x28] sm:$0xff] 0.0
    %28 = vst [vmem:[#allocation2 + $0x30] sm:$0xff] 0.0
    %29 = vst [vmem:[#allocation2 + $0x38] sm:$0xff] 0.0
  $region21: #{_lambda_.9} parent=0 // pred_fallthru
    _
  %v30 = vld [vmem:[#allocation2] sm:$0xff]
  %v31 = vld [vmem:[#allocation2 + $0x8] sm:$0xff]
  %v32 = vld [vmem:[#allocation2 + $0x10] sm:$0xff]
  %v33 = vld [vmem:[#allocation2 + $0x18] sm:$0xff]
  %v34 = vld [vmem:[#allocation2 + $0x20] sm:$0xff]
  %v35 = vld [vmem:[#allocation2 + $0x28] sm:$0xff]
  %v36 = vld [vmem:[#allocation2 + $0x30] sm:$0xff]
  %v37 = vld [vmem:[#allocation2 + $0x38] sm:$0xff]
  %v38 = vld [vmem:[%s0] sm:$0xf]
  %v39 = vld [vmem:[%s0 + $0x4] sm:$0xf]
  %v40 = vld [vmem:[%s0 + $0x8] sm:$0xf]
  %v41 = vld [vmem:[%s0 + $0xc] sm:$0xf]
  %v42 = vld [vmem:[%s0 + $0x10] sm:$0xf]
  %v43 = vld [vmem:[%s0 + $0x14] sm:$0xf]
  %v44 = vld [vmem:[%s0 + $0x18] sm:$0xf]
  %v45 = vld [vmem:[%s0 + $0x1c] sm:$0xf]
  %v46 = vld [vmem:[%s1] sm:$0xf]
  %v47 = vld [vmem:[%s1 + $0x4] sm:$0xf]
  %v48 = vld [vmem:[%s1 + $0x8] sm:$0xf]
  %v49 = vld [vmem:[%s1 + $0xc] sm:$0xf]
  %v50 = vld [vmem:[%s1 + $0x10] sm:$0xf]
  %v51 = vld [vmem:[%s1 + $0x14] sm:$0xf]
  %v52 = vld [vmem:[%s1 + $0x18] sm:$0xf]
  %v53 = vld [vmem:[%s1 + $0x1c] sm:$0xf]
  %v54 = vadd.bf16 %v38, %v46
  %v55 = vadd.bf16 %v39, %v47
  %v56 = vadd.bf16 %v40, %v48
  %v57 = vadd.bf16 %v41, %v49
  %v58 = vadd.bf16 %v42, %v50
  %v59 = vadd.bf16 %v43, %v51
  %v60 = vadd.bf16 %v44, %v52
  %v61 = vadd.bf16 %v45, %v53
  %v62 = vld [vmem:[%s2] sm:$0xf]
  %v63 = vld [vmem:[%s2 + $0x4] sm:$0xf]
  %v64 = vld [vmem:[%s2 + $0x8] sm:$0xf]
  %v65 = vld [vmem:[%s2 + $0xc] sm:$0xf]
  %v66 = vld [vmem:[%s2 + $0x10] sm:$0xf]
  %v67 = vld [vmem:[%s2 + $0x14] sm:$0xf]
  %v68 = vld [vmem:[%s2 + $0x18] sm:$0xf]
  %v69 = vld [vmem:[%s2 + $0x1c] sm:$0xf]
  %v70 = vld [vmem:[%s2 + $0x20] sm:$0xf]
  %v71 = vld [vmem:[%s2 + $0x24] sm:$0xf]
  %v72 = vld [vmem:[%s2 + $0x28] sm:$0xf]
  %v73 = vld [vmem:[%s2 + $0x2c] sm:$0xf]
  %v74 = vld [vmem:[%s2 + $0x30] sm:$0xf]
  %v75 = vld [vmem:[%s2 + $0x34] sm:$0xf]
  %v76 = vld [vmem:[%s2 + $0x38] sm:$0xf]
  %v77 = vld [vmem:[%s2 + $0x3c] sm:$0xf]
  %v86 = vunpack.c.l.b16 %v54
  %v87 = vunpack.c.l.b16 %v55
  %v88 = vunpack.c.l.b16 %v56
  %v89 = vunpack.c.l.b16 %v57
  %v90 = vunpack.c.l.b16 %v58
  %v91 = vunpack.c.l.b16 %v59
  %v92 = vunpack.c.l.b16 %v60
  %v93 = vunpack.c.l.b16 %v61
  %v94 = vpack.c.b16 %v87, %v86
  %v95 = vpack.c.b16 %v89, %v88
  %v96 = vpack.c.b16 %v91, %v90
  %v97 = vpack.c.b16 %v93, %v92
  %v118 = vunpack.c.l.b16 %v62
  %v119 = vunpack.c.l.b16 %v63
  %v120 = vunpack.c.l.b16 %v64
  %v121 = vunpack.c.l.b16 %v65
  %v122 = vunpack.c.l.b16 %v66
  %v123 = vunpack.c.l.b16 %v67
  %v124 = vunpack.c.l.b16 %v68
  %v125 = vunpack.c.l.b16 %v69
  %v126 = vunpack.c.l.b16 %v70
  %v127 = vunpack.c.l.b16 %v71
  %v128 = vunpack.c.l.b16 %v72
  %v129 = vunpack.c.l.b16 %v73
  %v130 = vunpack.c.l.b16 %v74
  %v131 = vunpack.c.l.b16 %v75
  %v132 = vunpack.c.l.b16 %v76
  %v133 = vunpack.c.l.b16 %v77
  %v134 = vpack.c.b16 %v119, %v118
  %v135 = vpack.c.b16 %v121, %v120
  %v136 = vpack.c.b16 %v123, %v122
  %v137 = vpack.c.b16 %v125, %v124
  %v138 = vpack.c.b16 %v127, %v126
  %v139 = vpack.c.b16 %v129, %v128
  %v140 = vpack.c.b16 %v131, %v130
  %v141 = vpack.c.b16 %v133, %v132
  %150 = vmatprep.subr.bf16.mxu0 0
  %151 = vmatpush1.bf16.msra.mxu0 %v141
  %152 = vmatprep.subr.bf16.mxu0 0
  %153 = vmatpush1.bf16.msra.mxu0 %v140
  %154 = vmatprep.subr.bf16.mxu0 0
  %155 = vmatpush1.bf16.msra.mxu0 %v139
  %156 = vmatprep.subr.bf16.mxu0 0
  %157 = vmatpush1.bf16.msra.mxu0 %v138
  %158 = vmatprep.subr.bf16.mxu0 0
  %159 = vmatpush1.bf16.msra.mxu0 %v137
  %160 = vmatprep.subr.bf16.mxu0 0
  %161 = vmatpush1.bf16.msra.mxu0 %v136
  %162 = vmatprep.subr.bf16.mxu0 0
  %163 = vmatpush1.bf16.msra.mxu0 %v135
  %164 = vmatprep.subr.bf16.mxu0 0
  %165 = vmatpush1.bf16.msra.mxu0 %v134
  %166 = vmatprep.subr.bf16.mxu0 0
  %167 = vmatpush2.bf16.msra.mxu0 0
  %168 = vmatprep.subr.bf16.mxu0 0
  %169 = vmatpush2.bf16.msra.mxu0 0
  %170 = vmatprep.subr.bf16.mxu0 0
  %171 = vmatpush2.bf16.msra.mxu0 0
  %172 = vmatprep.subr.bf16.mxu0 0
  %173 = vmatpush2.bf16.msra.mxu0 0
  %174 = vmatprep.subr.bf16.mxu0 0
  %175 = vmatpush2.bf16.msra.mxu0 0
  %176 = vmatprep.subr.bf16.mxu0 0
  %177 = vmatpush2.bf16.msra.mxu0 0
  %178 = vmatprep.subr.bf16.mxu0 0
  %179 = vmatpush2.bf16.msra.mxu0 0
  %180 = vmatprep.subr.bf16.mxu0 0
  %181 = vmatpush2.bf16.msra.mxu0 0
  %182 = vmatprep.mubr.bf16.mxu0 0
  %183 = vmatmul.mubr.bf16.gmra.mxu0 %v94
  %v184 = vpop.f32.mrf.mxu0
  %v185 = vadd.f32 0.0, %v184
  %v186 = vpop.f32.mrf.mxu0
  %v187 = vpop.f32.mrf.mxu0
  %v188 = vadd.f32 0.0, %v187
  %v189 = vpop.f32.mrf.mxu0
  %190 = vmatprep.mubr.bf16.mxu0 0
  %191 = vmatmul.mubr.bf16.gmra.mxu0 %v95
  %v192 = vpop.f32.mrf.mxu0
  %v193 = vadd.f32 0.0, %v192
  %v194 = vpop.f32.mrf.mxu0
  %v195 = vpop.f32.mrf.mxu0
  %v196 = vadd.f32 0.0, %v195
  %v197 = vpop.f32.mrf.mxu0
  %198 = vmatprep.mubr.bf16.mxu0 0
  %199 = vmatmul.mubr.bf16.gmra.mxu0 %v96
  %v200 = vpop.f32.mrf.mxu0
  %v201 = vadd.f32 0.0, %v200
  %v202 = vpop.f32.mrf.mxu0
  %v203 = vpop.f32.mrf.mxu0
  %v204 = vadd.f32 0.0, %v203
  %v205 = vpop.f32.mrf.mxu0
  %206 = vmatprep.mubr.bf16.mxu0 0
  %207 = vmatmul.mubr.bf16.gmra.mxu0 %v97
  %v208 = vpop.f32.mrf.mxu0
  %v209 = vadd.f32 0.0, %v208
  %v210 = vpop.f32.mrf.mxu0
  %v211 = vpop.f32.mrf.mxu0
  %v212 = vadd.f32 0.0, %v211
  %v213 = vpop.f32.mrf.mxu0
  %214 = vdwg.mxu0
  %v215 = vadd.f32 %v30, %v185
  %v216 = vadd.f32 %v31, %v188
  %v217 = vadd.f32 %v32, %v193
  %v218 = vadd.f32 %v33, %v196
  %v219 = vadd.f32 %v34, %v201
  %v220 = vadd.f32 %v35, %v204
  %v221 = vadd.f32 %v36, %v209
  %v222 = vadd.f32 %v37, %v212
  %223 = vst [vmem:[#allocation2] sm:$0xff] %v215
  %224 = vst [vmem:[#allocation2 + $0x8] sm:$0xff] %v216
  %225 = vst [vmem:[#allocation2 + $0x10] sm:$0xff] %v217
  %226 = vst [vmem:[#allocation2 + $0x18] sm:$0xff] %v218
  %227 = vst [vmem:[#allocation2 + $0x20] sm:$0xff] %v219
  %228 = vst [vmem:[#allocation2 + $0x28] sm:$0xff] %v220
  %229 = vst [vmem:[#allocation2 + $0x30] sm:$0xff] %v221
  %230 = vst [vmem:[#allocation2 + $0x38] sm:$0xff] %v222
  // Predicated region
  $region22: #{_lambda_.9} parent=0 // pred_check
    %p231 = pneg %p18
  $region23: #{_lambda_.9} parent=0 // pred_check_branch
    %233 = sbr.rel (%p231) target = $region25
  $region24: #{_lambda_.9} parent=0 // pred_region
    %v234 = vld [vmem:[#allocation2] sm:$0xff]
    %v235 = vld [vmem:[#allocation2 + $0x8] sm:$0xff]
    %v236 = vld [vmem:[#allocation2 + $0x10] sm:$0xff]
    %v237 = vld [vmem:[#allocation2 + $0x18] sm:$0xff]
    %v238 = vld [vmem:[#allocation2 + $0x20] sm:$0xff]
    %v239 = vld [vmem:[#allocation2 + $0x28] sm:$0xff]
    %v240 = vld [vmem:[#allocation2 + $0x30] sm:$0xff]
    %v241 = vld [vmem:[#allocation2 + $0x38] sm:$0xff]
    %v242 = vld [vmem:[%s3] sm:$0x1]
    %v244 = vlaneseq
    %v245 = vshrl.u32 %v244, 7
    %v246 = vsub.s32 0, %v245
    %v247 = vrot.slane %v242, %v246
    %v249 = vadd.f32 %v234, %v247
    %v250 = vadd.f32 %v235, %v247
    %v251 = vadd.f32 %v236, %v247
    %v252 = vadd.f32 %v237, %v247
    %v253 = vadd.f32 %v238, %v247
    %v254 = vadd.f32 %v239, %v247
    %v255 = vadd.f32 %v240, %v247
    %v256 = vadd.f32 %v241, %v247
    %257 = vmax.xlane.f32.xlu0 %v249
    %v258 = vpop.xlane.xlu0 %257
    %259 = vmax.xlane.f32.xlu0 %v250
    %v260 = vpop.xlane.xlu0 %259
    %261 = vmax.xlane.f32.xlu0 %v251
    %v262 = vpop.xlane.xlu0 %261
    %263 = vmax.xlane.f32.xlu0 %v252
    %v264 = vpop.xlane.xlu0 %263
    %265 = vmax.xlane.f32.xlu0 %v253
    %v266 = vpop.xlane.xlu0 %265
    %267 = vmax.xlane.f32.xlu0 %v254
    %v268 = vpop.xlane.xlu0 %267
    %269 = vmax.xlane.f32.xlu0 %v255
    %v270 = vpop.xlane.xlu0 %269
    %271 = vmax.xlane.f32.xlu0 %v256
    %v272 = vpop.xlane.xlu0 %271
    %v273 = vsub.f32 %v249, %v258
    %v274 = vsub.f32 %v250, %v260
    %v275 = vsub.f32 %v251, %v262
    %v276 = vsub.f32 %v252, %v264
    %v277 = vsub.f32 %v253, %v266
    %v278 = vsub.f32 %v254, %v268
    %v279 = vsub.f32 %v255, %v270
    %v280 = vsub.f32 %v256, %v272
    %v281 = vmul.f32 %v273, 1.442695
    %v282 = vpow.pop %v281
    %v283 = vmul.f32 %v274, 1.442695
    %v284 = vpow.pop %v283
    %v285 = vmul.f32 %v275, 1.442695
    %v286 = vpow.pop %v285
    %v287 = vmul.f32 %v276, 1.442695
    %v288 = vpow.pop %v287
    %v289 = vmul.f32 %v277, 1.442695
    %v290 = vpow.pop %v289
    %v291 = vmul.f32 %v278, 1.442695
    %v292 = vpow.pop %v291
    %v293 = vmul.f32 %v279, 1.442695
    %v294 = vpow.pop %v293
    %v295 = vmul.f32 %v280, 1.442695
    %v296 = vpow.pop %v295
    %297 = vadd.xlane.f32.xlu0 %v282
    %v298 = vpop.xlane.xlu0 %297
    %299 = vadd.xlane.f32.xlu0 %v284
    %v300 = vpop.xlane.xlu0 %299
    %301 = vadd.xlane.f32.xlu0 %v286
    %v302 = vpop.xlane.xlu0 %301
    %303 = vadd.xlane.f32.xlu0 %v288
    %v304 = vpop.xlane.xlu0 %303
    %305 = vadd.xlane.f32.xlu0 %v290
    %v306 = vpop.xlane.xlu0 %305
    %307 = vadd.xlane.f32.xlu0 %v292
    %v308 = vpop.xlane.xlu0 %307
    %309 = vadd.xlane.f32.xlu0 %v294
    %v310 = vpop.xlane.xlu0 %309
    %311 = vadd.xlane.f32.xlu0 %v296
    %v312 = vpop.xlane.xlu0 %311
    %v313 = vrcp.pop %v298
    %v314 = vmul.f32 %v282, %v313
    %v315 = vrcp.pop %v300
    %v316 = vmul.f32 %v284, %v315
    %v317 = vrcp.pop %v302
    %v318 = vmul.f32 %v286, %v317
    %v319 = vrcp.pop %v304
    %v320 = vmul.f32 %v288, %v319
    %v321 = vrcp.pop %v306
    %v322 = vmul.f32 %v290, %v321
    %v323 = vrcp.pop %v308
    %v324 = vmul.f32 %v292, %v323
    %v325 = vrcp.pop %v310
    %v326 = vmul.f32 %v294, %v325
    %v327 = vrcp.pop %v312
    %v328 = vmul.f32 %v296, %v327
    %329 = vst [vmem:[%s4] sm:$0xff] %v314
    %330 = vst [vmem:[%s4 + $0x8] sm:$0xff] %v316
    %331 = vst [vmem:[%s4 + $0x10] sm:$0xff] %v318
    %332 = vst [vmem:[%s4 + $0x18] sm:$0xff] %v320
    %333 = vst [vmem:[%s4 + $0x20] sm:$0xff] %v322
    %334 = vst [vmem:[%s4 + $0x28] sm:$0xff] %v324
    %335 = vst [vmem:[%s4 + $0x30] sm:$0xff] %v326
    %336 = vst [vmem:[%s4 + $0x38] sm:$0xff] %v328
  $region25: #{_lambda_.9} parent=0 // pred_fallthru
    _
  // Predicated region
  $region26: #{_lambda_.9} parent=0 // pred_check
    _
  $region27: #{_lambda_.9} parent=0 // pred_check_branch
    %338 = sbr.rel (0) target = $region29
  $region28: #{_lambda_.9} parent=0 // pred_region
    _
  $region29: #{_lambda_.9} parent=0 // pred_fallthru
    _
  // Predicated region
  $region30: #{_lambda_.9} parent=0 // pred_check
    _
  $region31: #{_lambda_.9} parent=0 // pred_check_branch
    %340 = sbr.rel (0) target = $region33
  $region32: #{_lambda_.9} parent=0 // pred_region
    _
  $region33: #{_lambda_.9} parent=0 // pred_fallthru
    _

// kernel: _lambda_.6
$region0: #{_lambda_.6}
  #allocation0 [shape = 'u32[]', space=smem, size = 0x4, offset = 0x4, fixed_abs, tag = 'smem constant byte address 0x4 - core index']
  #allocation1 [shape = 'u32[144,128]{1,0:T(1,128)}', space=vmem, size = 0x12000, scoped, tag = 'internal scratch']
  #allocation2 [shape = 'bf16[2,128,512]{2,1,0:T(8,128)(2,1)}', space=vmem, size = 0x40000, scoped, tag = 'scratch operand']
  #allocation3 [shape = 'f32[2,8,128]{2,1,0:T(8,128)}', space=vmem, size = 0x2000, scoped, tag = 'scratch operand']
  #allocation4 [shape = 'f32[2,8,128]{2,1,0:T(8,128)}', space=vmem, size = 0x2000, scoped, tag = 'scratch operand']
  #allocation5 [shape = 's32[1]{0}', space=sflag, size = 0x4, scoped, tag = 'scratch operand']
  #allocation8 [shape = 's32[]', space=sflag, size = 0x4, offset = 0, fixed_abs, tag = 'sflag constant byte address 0x0 - dummy sync flag']
  %s0 = inlined_call_operand.vmem [shape: bf16[8,8,1024], index: 0, kind: input, shape index: {}, may-alias: {0,1}]
  %s1 = inlined_call_operand.vmem [shape: bf16[8,8,1024], index: 1, kind: input, shape index: {}, may-alias: {0,1}]
  %s2 = inlined_call_operand.vmem [shape: bf16[2,128,512], index: 2, kind: input, shape index: {}]
  %s3 = inlined_call_operand.vmem [shape: bf16[8,8,128], index: 3, kind: output, shape index: {0}]
  %s4 = inlined_call_operand.vmem [shape: bf16[8,8,128], index: 4, kind: output, shape index: {1}]
  %5 = xla_tuple %s3, %s4
  %s6 = sld [smem:[#allocation0]]
  $region110: #{_lambda_.6} parent=0
    _
  %s8 = ssub.s32 1, %s6
  %s9 = scalar_select 0, %s8, %s6
  $region1: #{_lambda_.6} parent=0
    #allocation6 [shape = 'u8[65536]{0}', space=vmem, size = 0x10000, scoped, tag = 'input window, operand 0, single buffered']
    #allocation7 [shape = 'u8[65536]{0}', space=vmem, size = 0x10000, scoped, tag = 'input window, operand 1, single buffered']
    // Predicated region
    $region2: #{_lambda_.6} parent=1 // pred_check
      _
    $region3: #{_lambda_.6} parent=1 // pred_check_branch
      %11 = sbr.rel (0) target = $region5
    $region4: #{_lambda_.6} parent=1 // pred_region
      // Predicated region
      $region6: #{_lambda_.6} parent=4 // pred_check
        _
      $region7: #{_lambda_.6} parent=4 // pred_check_branch
        %13 = sbr.rel (0) target = $region9
      $region8: #{_lambda_.6} parent=4 // pred_region
        // Predicated region
        $region10: #{_lambda_.6} parent=8 // pred_check
          _
        $region11: #{_lambda_.6} parent=8 // pred_check_branch
          %15 = sbr.rel (0) target = $region13
        $region12: #{_lambda_.6} parent=8 // pred_region
          loop: start=0, step=1, limit=1
          $region14: #{_lambda_.6} parent=12 // loop_pre_header
            _
          $region15: #{_lambda_.6} parent=12 // loop_header
            %s17 = sphi 0, %s21
            %p18 = scmp.ge.s32.totalorder %s17, 1
            %s22 = sphi %s0, %s0
            %s23 = sphi [#allocation6], [#allocation6]
          $region16: #{_lambda_.6} parent=12 // loop_header_branch
            %20 = sbr.rel (%p18) target = $region20
          $region17: #{_lambda_.6} parent=12 // loop_body
            %v24 = vld [vmem:[%s22] sm:$0xff]
            %25 = vst [vmem:[%s23] sm:$0xff] %v24
            %v26 = vld [vmem:[%s22 + $0x8] sm:$0xff]
            %27 = vst [vmem:[%s23 + $0x8] sm:$0xff] %v26
            %v28 = vld [vmem:[%s22 + $0x20] sm:$0xff]
            %29 = vst [vmem:[%s23 + $0x10] sm:$0xff] %v28
            %v30 = vld [vmem:[%s22 + $0x28] sm:$0xff]
            %31 = vst [vmem:[%s23 + $0x18] sm:$0xff] %v30
            %v32 = vld [vmem:[%s22 + $0x40] sm:$0xff]
            %33 = vst [vmem:[%s23 + $0x20] sm:$0xff] %v32
            %v34 = vld [vmem:[%s22 + $0x48] sm:$0xff]
            %35 = vst [vmem:[%s23 + $0x28] sm:$0xff] %v34
            %v36 = vld [vmem:[%s22 + $0x60] sm:$0xff]
            %37 = vst [vmem:[%s23 + $0x30] sm:$0xff] %v36
            %v38 = vld [vmem:[%s22 + $0x68] sm:$0xff]
            %39 = vst [vmem:[%s23 + $0x38] sm:$0xff] %v38
            %v40 = vld [vmem:[%s22 + $0x80] sm:$0xff]
            %41 = vst [vmem:[%s23 + $0x40] sm:$0xff] %v40
            %v42 = vld [vmem:[%s22 + $0x88] sm:$0xff]
            %43 = vst [vmem:[%s23 + $0x48] sm:$0xff] %v42
            %v44 = vld [vmem:[%s22 + $0xa0] sm:$0xff]
            %45 = vst [vmem:[%s23 + $0x50] sm:$0xff] %v44
            %v46 = vld [vmem:[%s22 + $0xa8] sm:$0xff]
            %47 = vst [vmem:[%s23 + $0x58] sm:$0xff] %v46
            %v48 = vld [vmem:[%s22 + $0xc0] sm:$0xff]
            %49 = vst [vmem:[%s23 + $0x60] sm:$0xff] %v48
            %v50 = vld [vmem:[%s22 + $0xc8] sm:$0xff]
            %51 = vst [vmem:[%s23 + $0x68] sm:$0xff] %v50
            %v52 = vld [vmem:[%s22 + $0xe0] sm:$0xff]
            %53 = vst [vmem:[%s23 + $0x70] sm:$0xff] %v52
            %v54 = vld [vmem:[%s22 + $0xe8] sm:$0xff]
            %55 = vst [vmem:[%s23 + $0x78] sm:$0xff] %v54
          $region18: #{_lambda_.6} parent=12 // loop_footer
            %s21 = sadd.s32 1, %s17
          $region19: #{_lambda_.6} parent=12 // loop_footer_branch
            %16 = sbr.rel target = $region15
          $region20: #{_lambda_.6} parent=12 // loop_exit
            _
        $region13: #{_lambda_.6} parent=8 // pred_fallthru
          _
        // Predicated region
        $region21: #{_lambda_.6} parent=8 // pred_check
          _
        $region22: #{_lambda_.6} parent=8 // pred_check_branch
          %57 = sbr.rel target = $region24
        $region23: #{_lambda_.6} parent=8 // pred_region
          _
        $region24: #{_lambda_.6} parent=8 // pred_fallthru
          _
      $region9: #{_lambda_.6} parent=4 // pred_fallthru
        _
      %58 = vnop
    $region5: #{_lambda_.6} parent=1 // pred_fallthru
      _
    // Predicated region
    $region25: #{_lambda_.6} parent=1 // pred_check
      _
    $region26: #{_lambda_.6} parent=1 // pred_check_branch
      %60 = sbr.rel (0) target = $region28
    $region27: #{_lambda_.6} parent=1 // pred_region
      %s61 = ssub.s32 0, 0
      %s62 = smul.u32 8, %s61
      %s63 = smul.addr %s62, 8
      %s64 = sadd.s32 4, %s63
      %s65 = smul.addr %s64, 4
      %s66 = scalar_lea.vmem %s1, %s65
      // Predicated region
      $region29: #{_lambda_.6} parent=27 // pred_check
        _
      $region30: #{_lambda_.6} parent=27 // pred_check_branch
        %68 = sbr.rel (0) target = $region32
      $region31: #{_lambda_.6} parent=27 // pred_region
        // Predicated region
        $region33: #{_lambda_.6} parent=31 // pred_check
          _
        $region34: #{_lambda_.6} parent=31 // pred_check_branch
          %70 = sbr.rel (0) target = $region36
        $region35: #{_lambda_.6} parent=31 // pred_region
          loop: start=0, step=1, limit=1
          $region37: #{_lambda_.6} parent=35 // loop_pre_header
            _
          $region38: #{_lambda_.6} parent=35 // loop_header
            %s72 = sphi 0, %s76
            %p73 = scmp.ge.s32.totalorder %s72, 1
            %s77 = sphi %s66, %s66
            %s78 = sphi [#allocation7], [#allocation7]
          $region39: #{_lambda_.6} parent=35 // loop_header_branch
            %75 = sbr.rel (%p73) target = $region43
          $region40: #{_lambda_.6} parent=35 // loop_body
            %v79 = vld [vmem:[%s77] sm:$0xff]
            %80 = vst [vmem:[%s78] sm:$0xff] %v79
            %v81 = vld [vmem:[%s77 + $0x8] sm:$0xff]
            %82 = vst [vmem:[%s78 + $0x8] sm:$0xff] %v81
            %v83 = vld [vmem:[%s77 + $0x20] sm:$0xff]
            %84 = vst [vmem:[%s78 + $0x10] sm:$0xff] %v83
            %v85 = vld [vmem:[%s77 + $0x28] sm:$0xff]
            %86 = vst [vmem:[%s78 + $0x18] sm:$0xff] %v85
            %v87 = vld [vmem:[%s77 + $0x40] sm:$0xff]
            %88 = vst [vmem:[%s78 + $0x20] sm:$0xff] %v87
            %v89 = vld [vmem:[%s77 + $0x48] sm:$0xff]
            %90 = vst [vmem:[%s78 + $0x28] sm:$0xff] %v89
            %v91 = vld [vmem:[%s77 + $0x60] sm:$0xff]
            %92 = vst [vmem:[%s78 + $0x30] sm:$0xff] %v91
            %v93 = vld [vmem:[%s77 + $0x68] sm:$0xff]
            %94 = vst [vmem:[%s78 + $0x38] sm:$0xff] %v93
            %v95 = vld [vmem:[%s77 + $0x80] sm:$0xff]
            %96 = vst [vmem:[%s78 + $0x40] sm:$0xff] %v95
            %v97 = vld [vmem:[%s77 + $0x88] sm:$0xff]
            %98 = vst [vmem:[%s78 + $0x48] sm:$0xff] %v97
            %v99 = vld [vmem:[%s77 + $0xa0] sm:$0xff]
            %100 = vst [vmem:[%s78 + $0x50] sm:$0xff] %v99
            %v101 = vld [vmem:[%s77 + $0xa8] sm:$0xff]
            %102 = vst [vmem:[%s78 + $0x58] sm:$0xff] %v101
            %v103 = vld [vmem:[%s77 + $0xc0] sm:$0xff]
            %104 = vst [vmem:[%s78 + $0x60] sm:$0xff] %v103
            %v105 = vld [vmem:[%s77 + $0xc8] sm:$0xff]
            %106 = vst [vmem:[%s78 + $0x68] sm:$0xff] %v105
            %v107 = vld [vmem:[%s77 + $0xe0] sm:$0xff]
            %108 = vst [vmem:[%s78 + $0x70] sm:$0xff] %v107
            %v109 = vld [vmem:[%s77 + $0xe8] sm:$0xff]
            %110 = vst [vmem:[%s78 + $0x78] sm:$0xff] %v109
          $region41: #{_lambda_.6} parent=35 // loop_footer
            %s76 = sadd.s32 1, %s72
          $region42: #{_lambda_.6} parent=35 // loop_footer_branch
            %71 = sbr.rel target = $region38
          $region43: #{_lambda_.6} parent=35 // loop_exit
            _
        $region36: #{_lambda_.6} parent=31 // pred_fallthru
          _
        // Predicated region
        $region44: #{_lambda_.6} parent=31 // pred_check
          _
        $region45: #{_lambda_.6} parent=31 // pred_check_branch
          %112 = sbr.rel target = $region47
        $region46: #{_lambda_.6} parent=31 // pred_region
          _
        $region47: #{_lambda_.6} parent=31 // pred_fallthru
          _
      $region32: #{_lambda_.6} parent=27 // pred_fallthru
        _
      %113 = vnop
    $region28: #{_lambda_.6} parent=1 // pred_fallthru
      _
    // Predicated region
    $region48: #{_lambda_.6} parent=1 // pred_check
      _
    $region49: #{_lambda_.6} parent=1 // pred_check_branch
      %115 = sbr.rel (0) target = $region51
    $region50: #{_lambda_.6} parent=1 // pred_region
      _
    $region51: #{_lambda_.6} parent=1 // pred_fallthru
      _
    // Predicated region
    $region52: #{_lambda_.6} parent=1 // pred_check
      _
    $region53: #{_lambda_.6} parent=1 // pred_check_branch
      %117 = sbr.rel (0) target = $region55
    $region54: #{_lambda_.6} parent=1 // pred_region
      _
    $region55: #{_lambda_.6} parent=1 // pred_fallthru
      _
    %s118 = ssub.s32 0, 0
    %s119 = smul.u32 8, %s118
    %p120 = scmp.lt.s32.totalorder %s119, 7
    %s121 = scalar_select %p120, %s119, 7
    %s122 = smul.addr %s121, 4
    %s123 = scalar_lea.vmem %s4, %s122
    %s124 = ssub.s32 0, 0
    %s125 = smul.u32 8, %s124
    %s126 = ssub.s32 0, 0
    %s127 = smul.u32 8, %s126
    %p128 = scmp.lt.s32.totalorder %s127, 7
    %s129 = scalar_select %p128, %s127, 7
    %s130 = smul.addr %s129, 4
    %s131 = scalar_lea.vmem %s4, %s130
    %s132 = ssub.s32 0, 0
    %s133 = smul.u32 8, %s132
    %p135 = scmp.eq.s32.totalorder 0, 0
    // Predicated region
    $region56: #{_lambda_.6} parent=1 // pred_check
      %p136 = pneg %p135
    $region57: #{_lambda_.6} parent=1 // pred_check_branch
      %138 = sbr.rel (%p136) target = $region59
    $region58: #{_lambda_.6} parent=1 // pred_region
      %p140 = scmp.lt.u32.totalorder 512, 8
      %p141 = pneg %p140
      // Predicated region
      $region60: #{_lambda_.6} parent=58 // pred_check
        _
      $region61: #{_lambda_.6} parent=58 // pred_check_branch
        %143 = sbr.rel (%p140) target = $region63
      $region62: #{_lambda_.6} parent=58 // pred_region
        %s159 = sand.u32 512, 7
        %p160 = scmp.eq.s32.totalorder %s159, 0
        // Predicated region
        $region75: #{_lambda_.6} parent=62 // pred_check
          %p161 = pneg %p160
        $region76: #{_lambda_.6} parent=62 // pred_check_branch
          %163 = sbr.rel (%p161) target = $region78
        $region77: #{_lambda_.6} parent=62 // pred_region
          loop: start=0, step=1, limit=1
          $region79: #{_lambda_.6} parent=77 // loop_pre_header
            _
          $region80: #{_lambda_.6} parent=77 // loop_header
            %s165 = sphi 0, %s169
            %p166 = scmp.ge.s32.totalorder %s165, 1
            %s170 = sphi %s2, %s2
            %s171 = sphi [#allocation2], [#allocation2]
          $region81: #{_lambda_.6} parent=77 // loop_header_branch
            %168 = sbr.rel (%p166) target = $region85
          $region82: #{_lambda_.6} parent=77 // loop_body
            %v172 = vld [vmem:[%s170] sm:$0xff]
            %173 = vst [vmem:[%s171] sm:$0xff] %v172
            %v174 = vld [vmem:[%s170 + $0x8] sm:$0xff]
            %175 = vst [vmem:[%s171 + $0x8] sm:$0xff] %v174
            %v176 = vld [vmem:[%s170 + $0x10] sm:$0xff]
            %177 = vst [vmem:[%s171 + $0x10] sm:$0xff] %v176
            %v178 = vld [vmem:[%s170 + $0x18] sm:$0xff]
            %179 = vst [vmem:[%s171 + $0x18] sm:$0xff] %v178
            %v180 = vld [vmem:[%s170 + $0x20] sm:$0xff]
            %181 = vst [vmem:[%s171 + $0x20] sm:$0xff] %v180
            %v182 = vld [vmem:[%s170 + $0x28] sm:$0xff]
            %183 = vst [vmem:[%s171 + $0x28] sm:$0xff] %v182
            %v184 = vld [vmem:[%s170 + $0x30] sm:$0xff]
            %185 = vst [vmem:[%s171 + $0x30] sm:$0xff] %v184
            %v186 = vld [vmem:[%s170 + $0x38] sm:$0xff]
            %187 = vst [vmem:[%s171 + $0x38] sm:$0xff] %v186
            %v188 = vld [vmem:[%s170 + $0x40] sm:$0xff]
            %189 = vst [vmem:[%s171 + $0x40] sm:$0xff] %v188
            %v190 = vld [vmem:[%s170 + $0x48] sm:$0xff]
            %191 = vst [vmem:[%s171 + $0x48] sm:$0xff] %v190
            %v192 = vld [vmem:[%s170 + $0x50] sm:$0xff]
            %193 = vst [vmem:[%s171 + $0x50] sm:$0xff] %v192
            %v194 = vld [vmem:[%s170 + $0x58] sm:$0xff]
            %195 = vst [vmem:[%s171 + $0x58] sm:$0xff] %v194
            %v196 = vld [vmem:[%s170 + $0x60] sm:$0xff]
            %197 = vst [vmem:[%s171 + $0x60] sm:$0xff] %v196
            %v198 = vld [vmem:[%s170 + $0x68] sm:$0xff]
            %199 = vst [vmem:[%s171 + $0x68] sm:$0xff] %v198
            %v200 = vld [vmem:[%s170 + $0x70] sm:$0xff]
            %201 = vst [vmem:[%s171 + $0x70] sm:$0xff] %v200
            %v202 = vld [vmem:[%s170 + $0x78] sm:$0xff]
            %203 = vst [vmem:[%s171 + $0x78] sm:$0xff] %v202
            %v204 = vld [vmem:[%s170 + $0x80] sm:$0xff]
            %205 = vst [vmem:[%s171 + $0x80] sm:$0xff] %v204
            %v206 = vld [vmem:[%s170 + $0x88] sm:$0xff]
            %207 = vst [vmem:[%s171 + $0x88] sm:$0xff] %v206
            %v208 = vld [vmem:[%s170 + $0x90] sm:$0xff]
            %209 = vst [vmem:[%s171 + $0x90] sm:$0xff] %v208
            %v210 = vld [vmem:[%s170 + $0x98] sm:$0xff]
            %211 = vst [vmem:[%s171 + $0x98] sm:$0xff] %v210
            %v212 = vld [vmem:[%s170 + $0xa0] sm:$0xff]
            %213 = vst [vmem:[%s171 + $0xa0] sm:$0xff] %v212
            %v214 = vld [vmem:[%s170 + $0xa8] sm:$0xff]
            %215 = vst [vmem:[%s171 + $0xa8] sm:$0xff] %v214
            %v216 = vld [vmem:[%s170 + $0xb0] sm:$0xff]
            %217 = vst [vmem:[%s171 + $0xb0] sm:$0xff] %v216
            %v218 = vld [vmem:[%s170 + $0xb8] sm:$0xff]
            %219 = vst [vmem:[%s171 + $0xb8] sm:$0xff] %v218
            %v220 = vld [vmem:[%s170 + $0xc0] sm:$0xff]
            %221 = vst [vmem:[%s171 + $0xc0] sm:$0xff] %v220
            %v222 = vld [vmem:[%s170 + $0xc8] sm:$0xff]
            %223 = vst [vmem:[%s171 + $0xc8] sm:$0xff] %v222
            %v224 = vld [vmem:[%s170 + $0xd0] sm:$0xff]
            %225 = vst [vmem:[%s171 + $0xd0] sm:$0xff] %v224
            %v226 = vld [vmem:[%s170 + $0xd8] sm:$0xff]
            %227 = vst [vmem:[%s171 + $0xd8] sm:$0xff] %v226
            %v228 = vld [vmem:[%s170 + $0xe0] sm:$0xff]
            %229 = vst [vmem:[%s171 + $0xe0] sm:$0xff] %v228
            %v230 = vld [vmem:[%s170 + $0xe8] sm:$0xff]
            %231 = vst [vmem:[%s171 + $0xe8] sm:$0xff] %v230
            %v232 = vld [vmem:[%s170 + $0xf0] sm:$0xff]
            %233 = vst [vmem:[%s171 + $0xf0] sm:$0xff] %v232
            %v234 = vld [vmem:[%s170 + $0xf8] sm:$0xff]
            %235 = vst [vmem:[%s171 + $0xf8] sm:$0xff] %v234
            %v236 = vld [vmem:[%s170 + $0x100] sm:$0xff]
            %237 = vst [vmem:[%s171 + $0x100] sm:$0xff] %v236
            %v238 = vld [vmem:[%s170 + $0x108] sm:$0xff]
            %239 = vst [vmem:[%s171 + $0x108] sm:$0xff] %v238
            %v240 = vld [vmem:[%s170 + $0x110] sm:$0xff]
            %241 = vst [vmem:[%s171 + $0x110] sm:$0xff] %v240
            %v242 = vld [vmem:[%s170 + $0x118] sm:$0xff]
            %243 = vst [vmem:[%s171 + $0x118] sm:$0xff] %v242
            %v244 = vld [vmem:[%s170 + $0x120] sm:$0xff]
            %245 = vst [vmem:[%s171 + $0x120] sm:$0xff] %v244
            %v246 = vld [vmem:[%s170 + $0x128] sm:$0xff]
            %247 = vst [vmem:[%s171 + $0x128] sm:$0xff] %v246
            %v248 = vld [vmem:[%s170 + $0x130] sm:$0xff]
            %249 = vst [vmem:[%s171 + $0x130] sm:$0xff] %v248
            %v250 = vld [vmem:[%s170 + $0x138] sm:$0xff]
            %251 = vst [vmem:[%s171 + $0x138] sm:$0xff] %v250
            %v252 = vld [vmem:[%s170 + $0x140] sm:$0xff]
            %253 = vst [vmem:[%s171 + $0x140] sm:$0xff] %v252
            %v254 = vld [vmem:[%s170 + $0x148] sm:$0xff]
            %255 = vst [vmem:[%s171 + $0x148] sm:$0xff] %v254
            %v256 = vld [vmem:[%s170 + $0x150] sm:$0xff]
            %257 = vst [vmem:[%s171 + $0x150] sm:$0xff] %v256
            %v258 = vld [vmem:[%s170 + $0x158] sm:$0xff]
            %259 = vst [vmem:[%s171 + $0x158] sm:$0xff] %v258
            %v260 = vld [vmem:[%s170 + $0x160] sm:$0xff]
            %261 = vst [vmem:[%s171 + $0x160] sm:$0xff] %v260
            %v262 = vld [vmem:[%s170 + $0x168] sm:$0xff]
            %263 = vst [vmem:[%s171 + $0x168] sm:$0xff] %v262
            %v264 = vld [vmem:[%s170 + $0x170] sm:$0xff]
            %265 = vst [vmem:[%s171 + $0x170] sm:$0xff] %v264
            %v266 = vld [vmem:[%s170 + $0x178] sm:$0xff]
            %267 = vst [vmem:[%s171 + $0x178] sm:$0xff] %v266
            %v268 = vld [vmem:[%s170 + $0x180] sm:$0xff]
            %269 = vst [vmem:[%s171 + $0x180] sm:$0xff] %v268
            %v270 = vld [vmem:[%s170 + $0x188] sm:$0xff]
            %271 = vst [vmem:[%s171 + $0x188] sm:$0xff] %v270
            %v272 = vld [vmem:[%s170 + $0x190] sm:$0xff]
            %273 = vst [vmem:[%s171 + $0x190] sm:$0xff] %v272
            %v274 = vld [vmem:[%s170 + $0x198] sm:$0xff]
            %275 = vst [vmem:[%s171 + $0x198] sm:$0xff] %v274
            %v276 = vld [vmem:[%s170 + $0x1a0] sm:$0xff]
            %277 = vst [vmem:[%s171 + $0x1a0] sm:$0xff] %v276
            %v278 = vld [vmem:[%s170 + $0x1a8] sm:$0xff]
            %279 = vst [vmem:[%s171 + $0x1a8] sm:$0xff] %v278
            %v280 = vld [vmem:[%s170 + $0x1b0] sm:$0xff]
            %281 = vst [vmem:[%s171 + $0x1b0] sm:$0xff] %v280
            %v282 = vld [vmem:[%s170 + $0x1b8] sm:$0xff]
            %283 = vst [vmem:[%s171 + $0x1b8] sm:$0xff] %v282
            %v284 = vld [vmem:[%s170 + $0x1c0] sm:$0xff]
            %285 = vst [vmem:[%s171 + $0x1c0] sm:$0xff] %v284
            %v286 = vld [vmem:[%s170 + $0x1c8] sm:$0xff]
            %287 = vst [vmem:[%s171 + $0x1c8] sm:$0xff] %v286
            %v288 = vld [vmem:[%s170 + $0x1d0] sm:$0xff]
            %289 = vst [vmem:[%s171 + $0x1d0] sm:$0xff] %v288
            %v290 = vld [vmem:[%s170 + $0x1d8] sm:$0xff]
            %291 = vst [vmem:[%s171 + $0x1d8] sm:$0xff] %v290
            %v292 = vld [vmem:[%s170 + $0x1e0] sm:$0xff]
            %293 = vst [vmem:[%s171 + $0x1e0] sm:$0xff] %v292
            %v294 = vld [vmem:[%s170 + $0x1e8] sm:$0xff]
            %295 = vst [vmem:[%s171 + $0x1e8] sm:$0xff] %v294
            %v296 = vld [vmem:[%s170 + $0x1f0] sm:$0xff]
            %297 = vst [vmem:[%s171 + $0x1f0] sm:$0xff] %v296
            %v298 = vld [vmem:[%s170 + $0x1f8] sm:$0xff]
            %299 = vst [vmem:[%s171 + $0x1f8] sm:$0xff] %v298
          $region83: #{_lambda_.6} parent=77 // loop_footer
            %s169 = sadd.s32 1, %s165
          $region84: #{_lambda_.6} parent=77 // loop_footer_branch
            %164 = sbr.rel target = $region80
          $region85: #{_lambda_.6} parent=77 // loop_exit
            _
        $region78: #{_lambda_.6} parent=62 // pred_fallthru
          _
        %p300 = pneg %p160
        // Predicated region
        $region86: #{_lambda_.6} parent=62 // pred_check
          _
        $region87: #{_lambda_.6} parent=62 // pred_check_branch
          %302 = sbr.rel (%p160) target = $region89
        $region88: #{_lambda_.6} parent=62 // pred_region
          %s303 = sand.u32 512, 7
        $region89: #{_lambda_.6} parent=62 // pred_fallthru
          _
      $region63: #{_lambda_.6} parent=58 // pred_fallthru
        _
      // Predicated region
      $region64: #{_lambda_.6} parent=58 // pred_check
        %p144 = pneg %p140
      $region65: #{_lambda_.6} parent=58 // pred_check_branch
        %146 = sbr.rel (%p144) target = $region67
      $region66: #{_lambda_.6} parent=58 // pred_region
        %s147 = sshll.u32 1, 512
        %s148 = ssub.s32 %s147, 1
        loop: start=0, step=1, limit=1
        $region68: #{_lambda_.6} parent=66 // loop_pre_header
          _
        $region69: #{_lambda_.6} parent=66 // loop_header
          %s150 = sphi 0, %s154
          %p151 = scmp.ge.s32.totalorder %s150, 1
          %s155 = sphi %s2, %s2
          %s156 = sphi [#allocation2], [#allocation2]
        $region70: #{_lambda_.6} parent=66 // loop_header_branch
          %153 = sbr.rel (%p151) target = $region74
        $region71: #{_lambda_.6} parent=66 // loop_body
          %v157 = vld [vmem:[%s155] sm:%s148]
          %158 = vst [vmem:[%s156] sm:%s148] %v157
        $region72: #{_lambda_.6} parent=66 // loop_footer
          %s154 = sadd.s32 1, %s150
        $region73: #{_lambda_.6} parent=66 // loop_footer_branch
          %149 = sbr.rel target = $region69
        $region74: #{_lambda_.6} parent=66 // loop_exit
          _
      $region67: #{_lambda_.6} parent=58 // pred_fallthru
        _
      // Predicated region
      $region90: #{_lambda_.6} parent=58 // pred_check
        _
      $region91: #{_lambda_.6} parent=58 // pred_check_branch
        %306 = sbr.rel (0) target = $region93
      $region92: #{_lambda_.6} parent=58 // pred_region
        %307 = vsyncadd [#allocation5], 8192
      $region93: #{_lambda_.6} parent=58 // pred_fallthru
        _
      %s308 = smul.u32 4, 2
      %s309 = smul.u32 %s308, 16
      %s310 = smul.u32 %s309, 4
      %s311 = sshll.u32 %s310, 4
      %312 = dma.done [#allocation5], %s311
      %313 = vst [vmem:[#allocation3] sm:$0xff] 0.0
      %314 = vst [vmem:[#allocation3 + $0x8] sm:$0xff] 0.0
      %315 = vst [vmem:[#allocation4] sm:$0xff] 0.0
      %316 = vst [vmem:[#allocation4 + $0x8] sm:$0xff] 0.0
    $region59: #{_lambda_.6} parent=1 // pred_fallthru
      _
    %v317 = vld [vmem:[#allocation6] sm:$0xff]
    %v318 = vld [vmem:[#allocation6 + $0x8] sm:$0xff]
    %v319 = vld [vmem:[#allocation3] sm:$0xff]
    %v320 = vld [vmem:[#allocation4] sm:$0xff]
    %v321 = vld [vmem:[#allocation2] sm:$0xff]
    %v322 = vld [vmem:[#allocation2 + $0x8] sm:$0xff]
    %v323 = vld [vmem:[#allocation2 + $0x10] sm:$0xff]
    %v324 = vld [vmem:[#allocation2 + $0x18] sm:$0xff]
    %v325 = vld [vmem:[#allocation2 + $0x20] sm:$0xff]
    %v326 = vld [vmem:[#allocation2 + $0x28] sm:$0xff]
    %v327 = vld [vmem:[#allocation2 + $0x30] sm:$0xff]
    %v328 = vld [vmem:[#allocation2 + $0x38] sm:$0xff]
    %v329 = vld [vmem:[#allocation2 + $0x40] sm:$0xff]
    %v330 = vld [vmem:[#allocation2 + $0x48] sm:$0xff]
    %v331 = vld [vmem:[#allocation2 + $0x50] sm:$0xff]
    %v332 = vld [vmem:[#allocation2 + $0x58] sm:$0xff]
    %v333 = vld [vmem:[#allocation2 + $0x60] sm:$0xff]
    %v334 = vld [vmem:[#allocation2 + $0x68] sm:$0xff]
    %v335 = vld [vmem:[#allocation2 + $0x70] sm:$0xff]
    %v336 = vld [vmem:[#allocation2 + $0x78] sm:$0xff]
    %v337 = vld [vmem:[#allocation2 + $0x80] sm:$0xff]
    %v338 = vld [vmem:[#allocation2 + $0x88] sm:$0xff]
    %v339 = vld [vmem:[#allocation2 + $0x90] sm:$0xff]
    %v340 = vld [vmem:[#allocation2 + $0x98] sm:$0xff]
    %v341 = vld [vmem:[#allocation2 + $0xa0] sm:$0xff]
    %v342 = vld [vmem:[#allocation2 + $0xa8] sm:$0xff]
    %v343 = vld [vmem:[#allocation2 + $0xb0] sm:$0xff]
    %v344 = vld [vmem:[#allocation2 + $0xb8] sm:$0xff]
    %v345 = vld [vmem:[#allocation2 + $0xc0] sm:$0xff]
    %v346 = vld [vmem:[#allocation2 + $0xc8] sm:$0xff]
    %v347 = vld [vmem:[#allocation2 + $0xd0] sm:$0xff]
    %v348 = vld [vmem:[#allocation2 + $0xd8] sm:$0xff]
    %v349 = vld [vmem:[#allocation2 + $0xe0] sm:$0xff]
    %v350 = vld [vmem:[#allocation2 + $0xe8] sm:$0xff]
    %v351 = vld [vmem:[#allocation2 + $0xf0] sm:$0xff]
    %v352 = vld [vmem:[#allocation2 + $0xf8] sm:$0xff]
    %v353 = vunpack.c.l.bf16 %v317
    %v354 = vunpack.c.h.bf16 %v317
    %v355 = vunpack.c.l.bf16 %v318
    %v356 = vunpack.c.h.bf16 %v318
    %v357 = vpack.c.bf16 %v319, %v319
    %v390 = vunpack.c.l.b16 %v321
    %v391 = vunpack.c.h.b16 %v321
    %v392 = vunpack.c.l.b16 %v322
    %v393 = vunpack.c.h.b16 %v322
    %v394 = vunpack.c.l.b16 %v323
    %v395 = vunpack.c.h.b16 %v323
    %v396 = vunpack.c.l.b16 %v324
    %v397 = vunpack.c.h.b16 %v324
    %v398 = vunpack.c.l.b16 %v325
    %v399 = vunpack.c.h.b16 %v325
    %v400 = vunpack.c.l.b16 %v326
    %v401 = vunpack.c.h.b16 %v326
    %v402 = vunpack.c.l.b16 %v327
    %v403 = vunpack.c.h.b16 %v327
    %v404 = vunpack.c.l.b16 %v328
    %v405 = vunpack.c.h.b16 %v328
    %v406 = vunpack.c.l.b16 %v329
    %v407 = vunpack.c.h.b16 %v329
    %v408 = vunpack.c.l.b16 %v330
    %v409 = vunpack.c.h.b16 %v330
    %v410 = vunpack.c.l.b16 %v331
    %v411 = vunpack.c.h.b16 %v331
    %v412 = vunpack.c.l.b16 %v332
    %v413 = vunpack.c.h.b16 %v332
    %v414 = vunpack.c.l.b16 %v333
    %v415 = vunpack.c.h.b16 %v333
    %v416 = vunpack.c.l.b16 %v334
    %v417 = vunpack.c.h.b16 %v334
    %v418 = vunpack.c.l.b16 %v335
    %v419 = vunpack.c.h.b16 %v335
    %v420 = vunpack.c.l.b16 %v336
    %v421 = vunpack.c.h.b16 %v336
    %v422 = vunpack.c.l.b16 %v337
    %v423 = vunpack.c.h.b16 %v337
    %v424 = vunpack.c.l.b16 %v338
    %v425 = vunpack.c.h.b16 %v338
    %v426 = vunpack.c.l.b16 %v339
    %v427 = vunpack.c.h.b16 %v339
    %v428 = vunpack.c.l.b16 %v340
    %v429 = vunpack.c.h.b16 %v340
    %v430 = vunpack.c.l.b16 %v341
    %v431 = vunpack.c.h.b16 %v341
    %v432 = vunpack.c.l.b16 %v342
    %v433 = vunpack.c.h.b16 %v342
    %v434 = vunpack.c.l.b16 %v343
    %v435 = vunpack.c.h.b16 %v343
    %v436 = vunpack.c.l.b16 %v344
    %v437 = vunpack.c.h.b16 %v344
    %v438 = vunpack.c.l.b16 %v345
    %v439 = vunpack.c.h.b16 %v345
    %v440 = vunpack.c.l.b16 %v346
    %v441 = vunpack.c.h.b16 %v346
    %v442 = vunpack.c.l.b16 %v347
    %v443 = vunpack.c.h.b16 %v347
    %v444 = vunpack.c.l.b16 %v348
    %v445 = vunpack.c.h.b16 %v348
    %v446 = vunpack.c.l.b16 %v349
    %v447 = vunpack.c.h.b16 %v349
    %v448 = vunpack.c.l.b16 %v350
    %v449 = vunpack.c.h.b16 %v350
    %v450 = vunpack.c.l.b16 %v351
    %v451 = vunpack.c.h.b16 %v351
    %v452 = vunpack.c.l.b16 %v352
    %v453 = vunpack.c.h.b16 %v352
    %v454 = vpack.c.b16 %v394, %v390
    %v455 = vpack.c.b16 %v395, %v391
    %v456 = vpack.c.b16 %v396, %v392
    %v457 = vpack.c.b16 %v397, %v393
    %v458 = vpack.c.b16 %v402, %v398
    %v459 = vpack.c.b16 %v403, %v399
    %v460 = vpack.c.b16 %v404, %v400
    %v461 = vpack.c.b16 %v405, %v401
    %v462 = vpack.c.b16 %v410, %v406
    %v463 = vpack.c.b16 %v411, %v407
    %v464 = vpack.c.b16 %v412, %v408
    %v465 = vpack.c.b16 %v413, %v409
    %v466 = vpack.c.b16 %v418, %v414
    %v467 = vpack.c.b16 %v419, %v415
    %v468 = vpack.c.b16 %v420, %v416
    %v469 = vpack.c.b16 %v421, %v417
    %v470 = vpack.c.b16 %v426, %v422
    %v471 = vpack.c.b16 %v427, %v423
    %v472 = vpack.c.b16 %v428, %v424
    %v473 = vpack.c.b16 %v429, %v425
    %v474 = vpack.c.b16 %v434, %v430
    %v475 = vpack.c.b16 %v435, %v431
    %v476 = vpack.c.b16 %v436, %v432
    %v477 = vpack.c.b16 %v437, %v433
    %v478 = vpack.c.b16 %v442, %v438
    %v479 = vpack.c.b16 %v443, %v439
    %v480 = vpack.c.b16 %v444, %v440
    %v481 = vpack.c.b16 %v445, %v441
    %v482 = vpack.c.b16 %v450, %v446
    %v483 = vpack.c.b16 %v451, %v447
    %v484 = vpack.c.b16 %v452, %v448
    %v485 = vpack.c.b16 %v453, %v449
    %518 = vmatprep.subr.bf16.mxu0 %v483
    %519 = vmatpush1.bf16.msra.mxu0 %v482
    %520 = vmatprep.subr.bf16.mxu0 %v479
    %521 = vmatpush1.bf16.msra.mxu0 %v478
    %522 = vmatprep.subr.bf16.mxu0 %v475
    %523 = vmatpush1.bf16.msra.mxu0 %v474
    %524 = vmatprep.subr.bf16.mxu0 %v471
    %525 = vmatpush1.bf16.msra.mxu0 %v470
    %526 = vmatprep.subr.bf16.mxu0 %v467
    %527 = vmatpush1.bf16.msra.mxu0 %v466
    %528 = vmatprep.subr.bf16.mxu0 %v463
    %529 = vmatpush1.bf16.msra.mxu0 %v462
    %530 = vmatprep.subr.bf16.mxu0 %v459
    %531 = vmatpush1.bf16.msra.mxu0 %v458
    %532 = vmatprep.subr.bf16.mxu0 %v455
    %533 = vmatpush1.bf16.msra.mxu0 %v454
    %534 = vmatprep.subr.bf16.mxu0 0
    %535 = vmatpush2.bf16.msra.mxu0 0
    %536 = vmatprep.subr.bf16.mxu0 0
    %537 = vmatpush2.bf16.msra.mxu0 0
    %538 = vmatprep.subr.bf16.mxu0 0
    %539 = vmatpush2.bf16.msra.mxu0 0
    %540 = vmatprep.subr.bf16.mxu0 0
    %541 = vmatpush2.bf16.msra.mxu0 0
    %542 = vmatprep.subr.bf16.mxu0 0
    %543 = vmatpush2.bf16.msra.mxu0 0
    %544 = vmatprep.subr.bf16.mxu0 0
    %545 = vmatpush2.bf16.msra.mxu0 0
    %546 = vmatprep.subr.bf16.mxu0 0
    %547 = vmatpush2.bf16.msra.mxu0 0
    %548 = vmatprep.subr.bf16.mxu0 0
    %549 = vmatpush2.bf16.msra.mxu0 0
    %550 = vmatprep.mubr.bf16.mxu0 0
    %551 = vmatmul.mubr.bf16.gmra.mxu0 %v357
    %v552 = vpop.f32.mrf.mxu0
    %v553 = vadd.f32 0.0, %v552
    %v554 = vpop.f32.mrf.mxu0
    %v555 = vadd.f32 0.0, %v554
    %v556 = vpop.f32.mrf.mxu0
    %v557 = vpop.f32.mrf.mxu0
    %558 = vdwg.mxu0
    %559 = vmatprep.subr.bf16.mxu0 %v485
    %560 = vmatpush1.bf16.msra.mxu0 %v484
    %561 = vmatprep.subr.bf16.mxu0 %v481
    %562 = vmatpush1.bf16.msra.mxu0 %v480
    %563 = vmatprep.subr.bf16.mxu0 %v477
    %564 = vmatpush1.bf16.msra.mxu0 %v476
    %565 = vmatprep.subr.bf16.mxu0 %v473
    %566 = vmatpush1.bf16.msra.mxu0 %v472
    %567 = vmatprep.subr.bf16.mxu0 %v469
    %568 = vmatpush1.bf16.msra.mxu0 %v468
    %569 = vmatprep.subr.bf16.mxu0 %v465
    %570 = vmatpush1.bf16.msra.mxu0 %v464
    %571 = vmatprep.subr.bf16.mxu0 %v461
    %572 = vmatpush1.bf16.msra.mxu0 %v460
    %573 = vmatprep.subr.bf16.mxu0 %v457
    %574 = vmatpush1.bf16.msra.mxu0 %v456
    %575 = vmatprep.subr.bf16.mxu0 0
    %576 = vmatpush2.bf16.msra.mxu0 0
    %577 = vmatprep.subr.bf16.mxu0 0
    %578 = vmatpush2.bf16.msra.mxu0 0
    %579 = vmatprep.subr.bf16.mxu0 0
    %580 = vmatpush2.bf16.msra.mxu0 0
    %581 = vmatprep.subr.bf16.mxu0 0
    %582 = vmatpush2.bf16.msra.mxu0 0
    %583 = vmatprep.subr.bf16.mxu0 0
    %584 = vmatpush2.bf16.msra.mxu0 0
    %585 = vmatprep.subr.bf16.mxu0 0
    %586 = vmatpush2.bf16.msra.mxu0 0
    %587 = vmatprep.subr.bf16.mxu0 0
    %588 = vmatpush2.bf16.msra.mxu0 0
    %589 = vmatprep.subr.bf16.mxu0 0
    %590 = vmatpush2.bf16.msra.mxu0 0
    %591 = vmatprep.mubr.bf16.mxu0 0
    %592 = vmatmul.mubr.bf16.gmra.mxu0 %v357
    %v593 = vpop.f32.mrf.mxu0
    %v594 = vadd.f32 0.0, %v593
    %v595 = vpop.f32.mrf.mxu0
    %v596 = vadd.f32 0.0, %v595
    %v597 = vpop.f32.mrf.mxu0
    %v598 = vpop.f32.mrf.mxu0
    %599 = vdwg.mxu0
    %v600 = vadd.f32 %v353, %v553
    %v601 = vadd.f32 %v354, %v555
    %v602 = vadd.f32 %v355, %v594
    %v603 = vadd.f32 %v356, %v596
    %v604 = vmul.f32 %v600, 0.5
    %v605 = vtanh.pop %v604
    %v606 = vmul.f32 %v605, 0.5
    %v607 = vadd.f32 %v606, 0.5
    %v608 = vmul.f32 %v601, 0.5
    %v609 = vtanh.pop %v608
    %v610 = vmul.f32 %v609, 0.5
    %v611 = vadd.f32 %v610, 0.5
    %v612 = vtanh.pop %v602
    %v613 = vmul.f32 %v603, 0.5
    %v614 = vtanh.pop %v613
    %v615 = vmul.f32 %v614, 0.5
    %v616 = vadd.f32 %v615, 0.5
    %v617 = vmul.f32 %v611, %v320
    %v618 = vmul.f32 %v607, %v612
    %v619 = vadd.f32 %v617, %v618
    %v620 = vtanh.pop %v619
    %v621 = vmul.f32 %v616, %v620
    %s622 = scalar_lea.vmem [#allocation7], 112
    %v623 = vld [vmem:[%s622] sm:$0xff]
    %v624 = vld [vmem:[%s622 + $0x8] sm:$0xff]
    %s625 = scalar_lea.vmem [#allocation3], 8
    %v626 = vld [vmem:[%s625] sm:$0xff]
    %s627 = scalar_lea.vmem [#allocation4], 8
    %v628 = vld [vmem:[%s627] sm:$0xff]
    %s629 = scalar_lea.vmem [#allocation2], 256
    %v630 = vld [vmem:[%s629] sm:$0xff]
    %v631 = vld [vmem:[%s629 + $0x8] sm:$0xff]
    %v632 = vld [vmem:[%s629 + $0x10] sm:$0xff]
    %v633 = vld [vmem:[%s629 + $0x18] sm:$0xff]
    %v634 = vld [vmem:[%s629 + $0x20] sm:$0xff]
    %v635 = vld [vmem:[%s629 + $0x28] sm:$0xff]
    %v636 = vld [vmem:[%s629 + $0x30] sm:$0xff]
    %v637 = vld [vmem:[%s629 + $0x38] sm:$0xff]
    %v638 = vld [vmem:[%s629 + $0x40] sm:$0xff]
    %v639 = vld [vmem:[%s629 + $0x48] sm:$0xff]
    %v640 = vld [vmem:[%s629 + $0x50] sm:$0xff]
    %v641 = vld [vmem:[%s629 + $0x58] sm:$0xff]
    %v642 = vld [vmem:[%s629 + $0x60] sm:$0xff]
    %v643 = vld [vmem:[%s629 + $0x68] sm:$0xff]
    %v644 = vld [vmem:[%s629 + $0x70] sm:$0xff]
    %v645 = vld [vmem:[%s629 + $0x78] sm:$0xff]
    %v646 = vld [vmem:[%s629 + $0x80] sm:$0xff]
    %v647 = vld [vmem:[%s629 + $0x88] sm:$0xff]
    %v648 = vld [vmem:[%s629 + $0x90] sm:$0xff]
    %v649 = vld [vmem:[%s629 + $0x98] sm:$0xff]
    %v650 = vld [vmem:[%s629 + $0xa0] sm:$0xff]
    %v651 = vld [vmem:[%s629 + $0xa8] sm:$0xff]
    %v652 = vld [vmem:[%s629 + $0xb0] sm:$0xff]
    %v653 = vld [vmem:[%s629 + $0xb8] sm:$0xff]
    %v654 = vld [vmem:[%s629 + $0xc0] sm:$0xff]
    %v655 = vld [vmem:[%s629 + $0xc8] sm:$0xff]
    %v656 = vld [vmem:[%s629 + $0xd0] sm:$0xff]
    %v657 = vld [vmem:[%s629 + $0xd8] sm:$0xff]
    %v658 = vld [vmem:[%s629 + $0xe0] sm:$0xff]
    %v659 = vld [vmem:[%s629 + $0xe8] sm:$0xff]
    %v660 = vld [vmem:[%s629 + $0xf0] sm:$0xff]
    %v661 = vld [vmem:[%s629 + $0xf8] sm:$0xff]
    %v662 = vunpack.c.l.bf16 %v623
    %v663 = vunpack.c.h.bf16 %v623
    %v664 = vunpack.c.l.bf16 %v624
    %v665 = vunpack.c.h.bf16 %v624
    %v666 = vpack.c.bf16 %v626, %v626
    %v699 = vunpack.c.l.b16 %v630
    %v700 = vunpack.c.h.b16 %v630
    %v701 = vunpack.c.l.b16 %v631
    %v702 = vunpack.c.h.b16 %v631
    %v703 = vunpack.c.l.b16 %v632
    %v704 = vunpack.c.h.b16 %v632
    %v705 = vunpack.c.l.b16 %v633
    %v706 = vunpack.c.h.b16 %v633
    %v707 = vunpack.c.l.b16 %v634
    %v708 = vunpack.c.h.b16 %v634
    %v709 = vunpack.c.l.b16 %v635
    %v710 = vunpack.c.h.b16 %v635
    %v711 = vunpack.c.l.b16 %v636
    %v712 = vunpack.c.h.b16 %v636
    %v713 = vunpack.c.l.b16 %v637
    %v714 = vunpack.c.h.b16 %v637
    %v715 = vunpack.c.l.b16 %v638
    %v716 = vunpack.c.h.b16 %v638
    %v717 = vunpack.c.l.b16 %v639
    %v718 = vunpack.c.h.b16 %v639
    %v719 = vunpack.c.l.b16 %v640
    %v720 = vunpack.c.h.b16 %v640
    %v721 = vunpack.c.l.b16 %v641
    %v722 = vunpack.c.h.b16 %v641
    %v723 = vunpack.c.l.b16 %v642
    %v724 = vunpack.c.h.b16 %v642
    %v725 = vunpack.c.l.b16 %v643
    %v726 = vunpack.c.h.b16 %v643
    %v727 = vunpack.c.l.b16 %v644
    %v728 = vunpack.c.h.b16 %v644
    %v729 = vunpack.c.l.b16 %v645
    %v730 = vunpack.c.h.b16 %v645
    %v731 = vunpack.c.l.b16 %v646
    %v732 = vunpack.c.h.b16 %v646
    %v733 = vunpack.c.l.b16 %v647
    %v734 = vunpack.c.h.b16 %v647
    %v735 = vunpack.c.l.b16 %v648
    %v736 = vunpack.c.h.b16 %v648
    %v737 = vunpack.c.l.b16 %v649
    %v738 = vunpack.c.h.b16 %v649
    %v739 = vunpack.c.l.b16 %v650
    %v740 = vunpack.c.h.b16 %v650
    %v741 = vunpack.c.l.b16 %v651
    %v742 = vunpack.c.h.b16 %v651
    %v743 = vunpack.c.l.b16 %v652
    %v744 = vunpack.c.h.b16 %v652
    %v745 = vunpack.c.l.b16 %v653
    %v746 = vunpack.c.h.b16 %v653
    %v747 = vunpack.c.l.b16 %v654
    %v748 = vunpack.c.h.b16 %v654
    %v749 = vunpack.c.l.b16 %v655
    %v750 = vunpack.c.h.b16 %v655
    %v751 = vunpack.c.l.b16 %v656
    %v752 = vunpack.c.h.b16 %v656
    %v753 = vunpack.c.l.b16 %v657
    %v754 = vunpack.c.h.b16 %v657
    %v755 = vunpack.c.l.b16 %v658
    %v756 = vunpack.c.h.b16 %v658
    %v757 = vunpack.c.l.b16 %v659
    %v758 = vunpack.c.h.b16 %v659
    %v759 = vunpack.c.l.b16 %v660
    %v760 = vunpack.c.h.b16 %v660
    %v761 = vunpack.c.l.b16 %v661
    %v762 = vunpack.c.h.b16 %v661
    %v763 = vpack.c.b16 %v703, %v699
    %v764 = vpack.c.b16 %v704, %v700
    %v765 = vpack.c.b16 %v705, %v701
    %v766 = vpack.c.b16 %v706, %v702
    %v767 = vpack.c.b16 %v711, %v707
    %v768 = vpack.c.b16 %v712, %v708
    %v769 = vpack.c.b16 %v713, %v709
    %v770 = vpack.c.b16 %v714, %v710
    %v771 = vpack.c.b16 %v719, %v715
    %v772 = vpack.c.b16 %v720, %v716
    %v773 = vpack.c.b16 %v721, %v717
    %v774 = vpack.c.b16 %v722, %v718
    %v775 = vpack.c.b16 %v727, %v723
    %v776 = vpack.c.b16 %v728, %v724
    %v777 = vpack.c.b16 %v729, %v725
    %v778 = vpack.c.b16 %v730, %v726
    %v779 = vpack.c.b16 %v735, %v731
    %v780 = vpack.c.b16 %v736, %v732
    %v781 = vpack.c.b16 %v737, %v733
    %v782 = vpack.c.b16 %v738, %v734
    %v783 = vpack.c.b16 %v743, %v739
    %v784 = vpack.c.b16 %v744, %v740
    %v785 = vpack.c.b16 %v745, %v741
    %v786 = vpack.c.b16 %v746, %v742
    %v787 = vpack.c.b16 %v751, %v747
    %v788 = vpack.c.b16 %v752, %v748
    %v789 = vpack.c.b16 %v753, %v749
    %v790 = vpack.c.b16 %v754, %v750
    %v791 = vpack.c.b16 %v759, %v755
    %v792 = vpack.c.b16 %v760, %v756
    %v793 = vpack.c.b16 %v761, %v757
    %v794 = vpack.c.b16 %v762, %v758
    %827 = vmatprep.subr.bf16.mxu0 %v792
    %828 = vmatpush1.bf16.msra.mxu0 %v791
    %829 = vmatprep.subr.bf16.mxu0 %v788
    %830 = vmatpush1.bf16.msra.mxu0 %v787
    %831 = vmatprep.subr.bf16.mxu0 %v784
    %832 = vmatpush1.bf16.msra.mxu0 %v783
    %833 = vmatprep.subr.bf16.mxu0 %v780
    %834 = vmatpush1.bf16.msra.mxu0 %v779
    %835 = vmatprep.subr.bf16.mxu0 %v776
    %836 = vmatpush1.bf16.msra.mxu0 %v775
    %837 = vmatprep.subr.bf16.mxu0 %v772
    %838 = vmatpush1.bf16.msra.mxu0 %v771
    %839 = vmatprep.subr.bf16.mxu0 %v768
    %840 = vmatpush1.bf16.msra.mxu0 %v767
    %841 = vmatprep.subr.bf16.mxu0 %v764
    %842 = vmatpush1.bf16.msra.mxu0 %v763
    %843 = vmatprep.subr.bf16.mxu0 0
    %844 = vmatpush2.bf16.msra.mxu0 0
    %845 = vmatprep.subr.bf16.mxu0 0
    %846 = vmatpush2.bf16.msra.mxu0 0
    %847 = vmatprep.subr.bf16.mxu0 0
    %848 = vmatpush2.bf16.msra.mxu0 0
    %849 = vmatprep.subr.bf16.mxu0 0
    %850 = vmatpush2.bf16.msra.mxu0 0
    %851 = vmatprep.subr.bf16.mxu0 0
    %852 = vmatpush2.bf16.msra.mxu0 0
    %853 = vmatprep.subr.bf16.mxu0 0
    %854 = vmatpush2.bf16.msra.mxu0 0
    %855 = vmatprep.subr.bf16.mxu0 0
    %856 = vmatpush2.bf16.msra.mxu0 0
    %857 = vmatprep.subr.bf16.mxu0 0
    %858 = vmatpush2.bf16.msra.mxu0 0
    %859 = vmatprep.mubr.bf16.mxu0 0
    %860 = vmatmul.mubr.bf16.gmra.mxu0 %v666
    %v861 = vpop.f32.mrf.mxu0
    %v862 = vadd.f32 0.0, %v861
    %v863 = vpop.f32.mrf.mxu0
    %v864 = vadd.f32 0.0, %v863
    %v865 = vpop.f32.mrf.mxu0
    %v866 = vpop.f32.mrf.mxu0
    %867 = vdwg.mxu0
    %868 = vmatprep.subr.bf16.mxu0 %v794
    %869 = vmatpush1.bf16.msra.mxu0 %v793
    %870 = vmatprep.subr.bf16.mxu0 %v790
    %871 = vmatpush1.bf16.msra.mxu0 %v789
    %872 = vmatprep.subr.bf16.mxu0 %v786
    %873 = vmatpush1.bf16.msra.mxu0 %v785
    %874 = vmatprep.subr.bf16.mxu0 %v782
    %875 = vmatpush1.bf16.msra.mxu0 %v781
    %876 = vmatprep.subr.bf16.mxu0 %v778
    %877 = vmatpush1.bf16.msra.mxu0 %v777
    %878 = vmatprep.subr.bf16.mxu0 %v774
    %879 = vmatpush1.bf16.msra.mxu0 %v773
    %880 = vmatprep.subr.bf16.mxu0 %v770
    %881 = vmatpush1.bf16.msra.mxu0 %v769
    %882 = vmatprep.subr.bf16.mxu0 %v766
    %883 = vmatpush1.bf16.msra.mxu0 %v765
    %884 = vmatprep.subr.bf16.mxu0 0
    %885 = vmatpush2.bf16.msra.mxu0 0
    %886 = vmatprep.subr.bf16.mxu0 0
    %887 = vmatpush2.bf16.msra.mxu0 0
    %888 = vmatprep.subr.bf16.mxu0 0
    %889 = vmatpush2.bf16.msra.mxu0 0
    %890 = vmatprep.subr.bf16.mxu0 0
    %891 = vmatpush2.bf16.msra.mxu0 0
    %892 = vmatprep.subr.bf16.mxu0 0
    %893 = vmatpush2.bf16.msra.mxu0 0
    %894 = vmatprep.subr.bf16.mxu0 0
    %895 = vmatpush2.bf16.msra.mxu0 0
    %896 = vmatprep.subr.bf16.mxu0 0
    %897 = vmatpush2.bf16.msra.mxu0 0
    %898 = vmatprep.subr.bf16.mxu0 0
    %899 = vmatpush2.bf16.msra.mxu0 0
    %900 = vmatprep.mubr.bf16.mxu0 0
    %901 = vmatmul.mubr.bf16.gmra.mxu0 %v666
    %v902 = vpop.f32.mrf.mxu0
    %v903 = vadd.f32 0.0, %v902
    %v904 = vpop.f32.mrf.mxu0
    %v905 = vadd.f32 0.0, %v904
    %v906 = vpop.f32.mrf.mxu0
    %v907 = vpop.f32.mrf.mxu0
    %908 = vdwg.mxu0
    %v909 = vadd.f32 %v662, %v862
    %v910 = vadd.f32 %v663, %v864
    %v911 = vadd.f32 %v664, %v903
    %v912 = vadd.f32 %v665, %v905
    %v913 = vmul.f32 %v909, 0.5
    %v914 = vtanh.pop %v913
    %v915 = vmul.f32 %v914, 0.5
    %v916 = vadd.f32 %v915, 0.5
    %v917 = vmul.f32 %v910, 0.5
    %v918 = vtanh.pop %v917
    %v919 = vmul.f32 %v918, 0.5
    %v920 = vadd.f32 %v919, 0.5
    %v921 = vtanh.pop %v911
    %v922 = vmul.f32 %v912, 0.5
    %v923 = vtanh.pop %v922
    %v924 = vmul.f32 %v923, 0.5
    %v925 = vadd.f32 %v924, 0.5
    %v926 = vmul.f32 %v920, %v628
    %v927 = vmul.f32 %v916, %v921
    %v928 = vadd.f32 %v926, %v927
    %v929 = vtanh.pop %v928
    %v930 = vmul.f32 %v925, %v929
    %s931 = ssub.s32 0, 0
    %s932 = smul.u32 %s931, 8
    %s933 = sadd.s32 %s932, 7
    %p934 = scmp.lt.s32.totalorder %s933, 8
    %s935 = scalar_select %p934, 1, 0
    %s936 = scvt.s32.f32 %s935
    %v937 = vstv %s936
    %v938 = vmul.f32 %v930, %v937
    %v939 = vmul.f32 %v928, %v937
    %940 = vst [vmem:[#allocation3] sm:$0xff] %v621
    %941 = vst [vmem:[#allocation4] sm:$0xff] %v619
    %942 = vst [vmem:[%s625] sm:$0xff] %v938
    %943 = vst [vmem:[%s627] sm:$0xff] %v939
    %v944 = vpack.c.bf16 %v621, %v621
    %945 = vst [vmem:[%s3] sm:$0xf] %v944
    %v946 = vpack.c.bf16 %v938, %v938
    %s947 = scalar_lea.vmem %s131, 28
    %948 = vst [vmem:[%s947] sm:$0xf] %v946
    %s949 = scalar_lea.vmem [#allocation6], 16
    %v950 = vld [vmem:[%s949] sm:$0xff]
    %v951 = vld [vmem:[%s949 + $0x8] sm:$0xff]
    %v952 = vld [vmem:[#allocation3] sm:$0xff]
    %v953 = vld [vmem:[#allocation4] sm:$0xff]
    %v954 = vld [vmem:[#allocation2] sm:$0xff]
    %v955 = vld [vmem:[#allocation2 + $0x8] sm:$0xff]
    %v956 = vld [vmem:[#allocation2 + $0x10] sm:$0xff]
    %v957 = vld [vmem:[#allocation2 + $0x18] sm:$0xff]
    %v958 = vld [vmem:[#allocation2 + $0x20] sm:$0xff]
    %v959 = vld [vmem:[#allocation2 + $0x28] sm:$0xff]
    %v960 = vld [vmem:[#allocation2 + $0x30] sm:$0xff]
    %v961 = vld [vmem:[#allocation2 + $0x38] sm:$0xff]
    %v962 = vld [vmem:[#allocation2 + $0x40] sm:$0xff]
    %v963 = vld [vmem:[#allocation2 + $0x48] sm:$0xff]
    %v964 = vld [vmem:[#allocation2 + $0x50] sm:$0xff]
    %v965 = vld [vmem:[#allocation2 + $0x58] sm:$0xff]
    %v966 = vld [vmem:[#allocation2 + $0x60] sm:$0xff]
    %v967 = vld [vmem:[#allocation2 + $0x68] sm:$0xff]
    %v968 = vld [vmem:[#allocation2 + $0x70] sm:$0xff]
    %v969 = vld [vmem:[#allocation2 + $0x78] sm:$0xff]
    %v970 = vld [vmem:[#allocation2 + $0x80] sm:$0xff]
    %v971 = vld [vmem:[#allocation2 + $0x88] sm:$0xff]
    %v972 = vld [vmem:[#allocation2 + $0x90] sm:$0xff]
    %v973 = vld [vmem:[#allocation2 + $0x98] sm:$0xff]
    %v974 = vld [vmem:[#allocation2 + $0xa0] sm:$0xff]
    %v975 = vld [vmem:[#allocation2 + $0xa8] sm:$0xff]
    %v976 = vld [vmem:[#allocation2 + $0xb0] sm:$0xff]
    %v977 = vld [vmem:[#allocation2 + $0xb8] sm:$0xff]
    %v978 = vld [vmem:[#allocation2 + $0xc0] sm:$0xff]
    %v979 = vld [vmem:[#allocation2 + $0xc8] sm:$0xff]
    %v980 = vld [vmem:[#allocation2 + $0xd0] sm:$0xff]
    %v981 = vld [vmem:[#allocation2 + $0xd8] sm:$0xff]
    %v982 = vld [vmem:[#allocation2 + $0xe0] sm:$0xff]
    %v983 = vld [vmem:[#allocation2 + $0xe8] sm:$0xff]
    %v984 = vld [vmem:[#allocation2 + $0xf0] sm:$0xff]
    %v985 = vld [vmem:[#allocation2 + $0xf8] sm:$0xff]
    %v986 = vunpack.c.l.bf16 %v950
    %v987 = vunpack.c.h.bf16 %v950
    %v988 = vunpack.c.l.bf16 %v951
    %v989 = vunpack.c.h.bf16 %v951
    %v990 = vpack.c.bf16 %v952, %v952
    %v1023 = vunpack.c.l.b16 %v954
    %v1024 = vunpack.c.h.b16 %v954
    %v1025 = vunpack.c.l.b16 %v955
    %v1026 = vunpack.c.h.b16 %v955
    %v1027 = vunpack.c.l.b16 %v956
    %v1028 = vunpack.c.h.b16 %v956
    %v1029 = vunpack.c.l.b16 %v957
    %v1030 = vunpack.c.h.b16 %v957
    %v1031 = vunpack.c.l.b16 %v958
    %v1032 = vunpack.c.h.b16 %v958
    %v1033 = vunpack.c.l.b16 %v959
    %v1034 = vunpack.c.h.b16 %v959
    %v1035 = vunpack.c.l.b16 %v960
    %v1036 = vunpack.c.h.b16 %v960
    %v1037 = vunpack.c.l.b16 %v961
    %v1038 = vunpack.c.h.b16 %v961
    %v1039 = vunpack.c.l.b16 %v962
    %v1040 = vunpack.c.h.b16 %v962
    %v1041 = vunpack.c.l.b16 %v963
    %v1042 = vunpack.c.h.b16 %v963
    %v1043 = vunpack.c.l.b16 %v964
    %v1044 = vunpack.c.h.b16 %v964
    %v1045 = vunpack.c.l.b16 %v965
    %v1046 = vunpack.c.h.b16 %v965
    %v1047 = vunpack.c.l.b16 %v966
    %v1048 = vunpack.c.h.b16 %v966
    %v1049 = vunpack.c.l.b16 %v967
    %v1050 = vunpack.c.h.b16 %v967
    %v1051 = vunpack.c.l.b16 %v968
    %v1052 = vunpack.c.h.b16 %v968
    %v1053 = vunpack.c.l.b16 %v969
    %v1054 = vunpack.c.h.b16 %v969
    %v1055 = vunpack.c.l.b16 %v970
    %v1056 = vunpack.c.h.b16 %v970
    %v1057 = vunpack.c.l.b16 %v971
    %v1058 = vunpack.c.h.b16 %v971
    %v1059 = vunpack.c.l.b16 %v972
    %v1060 = vunpack.c.h.b16 %v972
    %v1061 = vunpack.c.l.b16 %v973
    %v1062 = vunpack.c.h.b16 %v973
    %v1063 = vunpack.c.l.b16 %v974
    %v1064 = vunpack.c.h.b16 %v974
    %v1065 = vunpack.c.l.b16 %v975
    %v1066 = vunpack.c.h.b16 %v975
    %v1067 = vunpack.c.l.b16 %v976
    %v1068 = vunpack.c.h.b16 %v976
    %v1069 = vunpack.c.l.b16 %v977
    %v1070 = vunpack.c.h.b16 %v977
    %v1071 = vunpack.c.l.b16 %v978
    %v1072 = vunpack.c.h.b16 %v978
    %v1073 = vunpack.c.l.b16 %v979
    %v1074 = vunpack.c.h.b16 %v979
    %v1075 = vunpack.c.l.b16 %v980
    %v1076 = vunpack.c.h.b16 %v980
    %v1077 = vunpack.c.l.b16 %v981
    %v1078 = vunpack.c.h.b16 %v981
    %v1079 = vunpack.c.l.b16 %v982
    %v1080 = vunpack.c.h.b16 %v982
    %v1081 = vunpack.c.l.b16 %v983
    %v1082 = vunpack.c.h.b16 %v983
    %v1083 = vunpack.c.l.b16 %v984
    %v1084 = vunpack.c.h.b16 %v984
    %v1085 = vunpack.c.l.b16 %v985
    %v1086 = vunpack.c.h.b16 %v985
    %v1087 = vpack.c.b16 %v1027, %v1023
    %v1088 = vpack.c.b16 %v1028, %v1024
    %v1089 = vpack.c.b16 %v1029, %v1025
    %v1090 = vpack.c.b16 %v1030, %v1026
    %v1091 = vpack.c.b16 %v1035, %v1031
    %v1092 = vpack.c.b16 %v1036, %v1032
    %v1093 = vpack.c.b16 %v1037, %v1033
    %v1094 = vpack.c.b16 %v1038, %v1034
    %v1095 = vpack.c.b16 %v1043, %v1039
    %v1096 = vpack.c.b16 %v1044, %v1040
    %v1097 = vpack.c.b16 %v1045, %v1041
    %v1098 = vpack.c.b16 %v1046, %v1042
    %v1099 = vpack.c.b16 %v1051, %v1047
    %v1100 = vpack.c.b16 %v1052, %v1048
    %v1101 = vpack.c.b16 %v1053, %v1049
    %v1102 = vpack.c.b16 %v1054, %v1050
    %v1103 = vpack.c.b16 %v1059, %v1055
    %v1104 = vpack.c.b16 %v1060, %v1056
    %v1105 = vpack.c.b16 %v1061, %v1057
    %v1106 = vpack.c.b16 %v1062, %v1058
    %v1107 = vpack.c.b16 %v1067, %v1063
    %v1108 = vpack.c.b16 %v1068, %v1064
    %v1109 = vpack.c.b16 %v1069, %v1065
    %v1110 = vpack.c.b16 %v1070, %v1066
    %v1111 = vpack.c.b16 %v1075, %v1071
    %v1112 = vpack.c.b16 %v1076, %v1072
    %v1113 = vpack.c.b16 %v1077, %v1073
    %v1114 = vpack.c.b16 %v1078, %v1074
    %v1115 = vpack.c.b16 %v1083, %v1079
    %v1116 = vpack.c.b16 %v1084, %v1080
    %v1117 = vpack.c.b16 %v1085, %v1081
    %v1118 = vpack.c.b16 %v1086, %v1082
    %1151 = vmatprep.subr.bf16.mxu0 %v1116
    %1152 = vmatpush1.bf16.msra.mxu0 %v1115
    %1153 = vmatprep.subr.bf16.mxu0 %v1112
    %1154 = vmatpush1.bf16.msra.mxu0 %v1111
    %1155 = vmatprep.subr.bf16.mxu0 %v1108
    %1156 = vmatpush1.bf16.msra.mxu0 %v1107
    %1157 = vmatprep.subr.bf16.mxu0 %v1104
    %1158 = vmatpush1.bf16.msra.mxu0 %v1103
    %1159 = vmatprep.subr.bf16.mxu0 %v1100
    %1160 = vmatpush1.bf16.msra.mxu0 %v1099
    %1161 = vmatprep.subr.bf16.mxu0 %v1096
    %1162 = vmatpush1.bf16.msra.mxu0 %v1095
    %1163 = vmatprep.subr.bf16.mxu0 %v1092
    %1164 = vmatpush1.bf16.msra.mxu0 %v1091
    %1165 = vmatprep.subr.bf16.mxu0 %v1088
    %1166 = vmatpush1.bf16.msra.mxu0 %v1087
    %1167 = vmatprep.subr.bf16.mxu0 0
    %1168 = vmatpush2.bf16.msra.mxu0 0
    %1169 = vmatprep.subr.bf16.mxu0 0
    %1170 = vmatpush2.bf16.msra.mxu0 0
    %1171 = vmatprep.subr.bf16.mxu0 0
    %1172 = vmatpush2.bf16.msra.mxu0 0
    %1173 = vmatprep.subr.bf16.mxu0 0
    %1174 = vmatpush2.bf16.msra.mxu0 0
    %1175 = vmatprep.subr.bf16.mxu0 0
    %1176 = vmatpush2.bf16.msra.mxu0 0
    %1177 = vmatprep.subr.bf16.mxu0 0
    %1178 = vmatpush2.bf16.msra.mxu0 0
    %1179 = vmatprep.subr.bf16.mxu0 0
    %1180 = vmatpush2.bf16.msra.mxu0 0
    %1181 = vmatprep.subr.bf16.mxu0 0
    %1182 = vmatpush2.bf16.msra.mxu0 0
    %1183 = vmatprep.mubr.bf16.mxu0 0
    %1184 = vmatmul.mubr.bf16.gmra.mxu0 %v990
    %v1185 = vpop.f32.mrf.mxu0
    %v1186 = vadd.f32 0.0, %v1185
    %v1187 = vpop.f32.mrf.mxu0
    %v1188 = vadd.f32 0.0, %v1187
    %v1189 = vpop.f32.mrf.mxu0
    %v1190 = vpop.f32.mrf.mxu0
    %1191 = vdwg.mxu0
    %1192 = vmatprep.subr.bf16.mxu0 %v1118
    %1193 = vmatpush1.bf16.msra.mxu0 %v1117
    %1194 = vmatprep.subr.bf16.mxu0 %v1114
    %1195 = vmatpush1.bf16.msra.mxu0 %v1113
    %1196 = vmatprep.subr.bf16.mxu0 %v1110
    %1197 = vmatpush1.bf16.msra.mxu0 %v1109
    %1198 = vmatprep.subr.bf16.mxu0 %v1106
    %1199 = vmatpush1.bf16.msra.mxu0 %v1105
    %1200 = vmatprep.subr.bf16.mxu0 %v1102
    %1201 = vmatpush1.bf16.msra.mxu0 %v1101
    %1202 = vmatprep.subr.bf16.mxu0 %v1098
    %1203 = vmatpush1.bf16.msra.mxu0 %v1097
    %1204 = vmatprep.subr.bf16.mxu0 %v1094
    %1205 = vmatpush1.bf16.msra.mxu0 %v1093
    %1206 = vmatprep.subr.bf16.mxu0 %v1090
    %1207 = vmatpush1.bf16.msra.mxu0 %v1089
    %1208 = vmatprep.subr.bf16.mxu0 0
    %1209 = vmatpush2.bf16.msra.mxu0 0
    %1210 = vmatprep.subr.bf16.mxu0 0
    %1211 = vmatpush2.bf16.msra.mxu0 0
    %1212 = vmatprep.subr.bf16.mxu0 0
    %1213 = vmatpush2.bf16.msra.mxu0 0
    %1214 = vmatprep.subr.bf16.mxu0 0
    %1215 = vmatpush2.bf16.msra.mxu0 0
    %1216 = vmatprep.subr.bf16.mxu0 0
    %1217 = vmatpush2.bf16.msra.mxu0 0
    %1218 = vmatprep.subr.bf16.mxu0 0
    %1219 = vmatpush2.bf16.msra.mxu0 0
    %1220 = vmatprep.subr.bf16.mxu0 0
    %1221 = vmatpush2.bf16.msra.mxu0 0
    %1222 = vmatprep.subr.bf16.mxu0 0
    %1223 = vmatpush2.bf16.msra.mxu0 0
    %1224 = vmatprep.mubr.bf16.mxu0 0
    %1225 = vmatmul.mubr.bf16.gmra.mxu0 %v990
    %v1226 = vpop.f32.mrf.mxu0
    %v1227 = vadd.f32 0.0, %v1226
    %v1228 = vpop.f32.mrf.mxu0
    %v1229 = vadd.f32 0.0, %v1228
    %v1230 = vpop.f32.mrf.mxu0
    %v1231 = vpop.f32.mrf.mxu0
    %1232 = vdwg.mxu0
    %v1233 = vadd.f32 %v986, %v1186
    %v1234 = vadd.f32 %v987, %v1188
    %v1235 = vadd.f32 %v988, %v1227
    %v1236 = vadd.f32 %v989, %v1229
    %v1237 = vmul.f32 %v1233, 0.5
    %v1238 = vtanh.pop %v1237
    %v1239 = vmul.f32 %v1238, 0.5
    %v1240 = vadd.f32 %v1239, 0.5
    %v1241 = vmul.f32 %v1234, 0.5
    %v1242 = vtanh.pop %v1241
    %v1243 = vmul.f32 %v1242, 0.5
    %v1244 = vadd.f32 %v1243, 0.5
    %v1245 = vtanh.pop %v1235
    %v1246 = vmul.f32 %v1236, 0.5
    %v1247 = vtanh.pop %v1246
    %v1248 = vmul.f32 %v1247, 0.5
    %v1249 = vadd.f32 %v1248, 0.5
    %v1250 = vmul.f32 %v1244, %v953
    %v1251 = vmul.f32 %v1240, %v1245
    %v1252 = vadd.f32 %v1250, %v1251
    %v1253 = vtanh.pop %v1252
    %v1254 = vmul.f32 %v1249, %v1253
    %s1255 = scalar_lea.vmem [#allocation7], 96
    %v1256 = vld [vmem:[%s1255] sm:$0xff]
    %v1257 = vld [vmem:[%s1255 + $0x8] sm:$0xff]
    %v1258 = vld [vmem:[%s625] sm:$0xff]
    %v1259 = vld [vmem:[%s627] sm:$0xff]
    %v1260 = vld [vmem:[%s629] sm:$0xff]
    %v1261 = vld [vmem:[%s629 + $0x8] sm:$0xff]
    %v1262 = vld [vmem:[%s629 + $0x10] sm:$0xff]
    %v1263 = vld [vmem:[%s629 + $0x18] sm:$0xff]
    %v1264 = vld [vmem:[%s629 + $0x20] sm:$0xff]
    %v1265 = vld [vmem:[%s629 + $0x28] sm:$0xff]
    %v1266 = vld [vmem:[%s629 + $0x30] sm:$0xff]
    %v1267 = vld [vmem:[%s629 + $0x38] sm:$0xff]
    %v1268 = vld [vmem:[%s629 + $0x40] sm:$0xff]
    %v1269 = vld [vmem:[%s629 + $0x48] sm:$0xff]
    %v1270 = vld [vmem:[%s629 + $0x50] sm:$0xff]
    %v1271 = vld [vmem:[%s629 + $0x58] sm:$0xff]
    %v1272 = vld [vmem:[%s629 + $0x60] sm:$0xff]
    %v1273 = vld [vmem:[%s629 + $0x68] sm:$0xff]
    %v1274 = vld [vmem:[%s629 + $0x70] sm:$0xff]
    %v1275 = vld [vmem:[%s629 + $0x78] sm:$0xff]
    %v1276 = vld [vmem:[%s629 + $0x80] sm:$0xff]
    %v1277 = vld [vmem:[%s629 + $0x88] sm:$0xff]
    %v1278 = vld [vmem:[%s629 + $0x90] sm:$0xff]
    %v1279 = vld [vmem:[%s629 + $0x98] sm:$0xff]
    %v1280 = vld [vmem:[%s629 + $0xa0] sm:$0xff]
    %v1281 = vld [vmem:[%s629 + $0xa8] sm:$0xff]
    %v1282 = vld [vmem:[%s629 + $0xb0] sm:$0xff]
    %v1283 = vld [vmem:[%s629 + $0xb8] sm:$0xff]
    %v1284 = vld [vmem:[%s629 + $0xc0] sm:$0xff]
    %v1285 = vld [vmem:[%s629 + $0xc8] sm:$0xff]
    %v1286 = vld [vmem:[%s629 + $0xd0] sm:$0xff]
    %v1287 = vld [vmem:[%s629 + $0xd8] sm:$0xff]
    %v1288 = vld [vmem:[%s629 + $0xe0] sm:$0xff]
    %v1289 = vld [vmem:[%s629 + $0xe8] sm:$0xff]
    %v1290 = vld [vmem:[%s629 + $0xf0] sm:$0xff]
    %v1291 = vld [vmem:[%s629 + $0xf8] sm:$0xff]
    %v1292 = vunpack.c.l.bf16 %v1256
    %v1293 = vunpack.c.h.bf16 %v1256
    %v1294 = vunpack.c.l.bf16 %v1257
    %v1295 = vunpack.c.h.bf16 %v1257
    %v1296 = vpack.c.bf16 %v1258, %v1258
    %v1329 = vunpack.c.l.b16 %v1260
    %v1330 = vunpack.c.h.b16 %v1260
    %v1331 = vunpack.c.l.b16 %v1261
    %v1332 = vunpack.c.h.b16 %v1261
    %v1333 = vunpack.c.l.b16 %v1262
    %v1334 = vunpack.c.h.b16 %v1262
    %v1335 = vunpack.c.l.b16 %v1263
    %v1336 = vunpack.c.h.b16 %v1263
    %v1337 = vunpack.c.l.b16 %v1264
    %v1338 = vunpack.c.h.b16 %v1264
    %v1339 = vunpack.c.l.b16 %v1265
    %v1340 = vunpack.c.h.b16 %v1265
    %v1341 = vunpack.c.l.b16 %v1266
    %v1342 = vunpack.c.h.b16 %v1266
    %v1343 = vunpack.c.l.b16 %v1267
    %v1344 = vunpack.c.h.b16 %v1267
    %v1345 = vunpack.c.l.b16 %v1268
    %v1346 = vunpack.c.h.b16 %v1268
    %v1347 = vunpack.c.l.b16 %v1269
    %v1348 = vunpack.c.h.b16 %v1269
    %v1349 = vunpack.c.l.b16 %v1270
    %v1350 = vunpack.c.h.b16 %v1270
    %v1351 = vunpack.c.l.b16 %v1271
    %v1352 = vunpack.c.h.b16 %v1271
    %v1353 = vunpack.c.l.b16 %v1272
    %v1354 = vunpack.c.h.b16 %v1272
    %v1355 = vunpack.c.l.b16 %v1273
    %v1356 = vunpack.c.h.b16 %v1273
    %v1357 = vunpack.c.l.b16 %v1274
    %v1358 = vunpack.c.h.b16 %v1274
    %v1359 = vunpack.c.l.b16 %v1275
    %v1360 = vunpack.c.h.b16 %v1275
    %v1361 = vunpack.c.l.b16 %v1276
    %v1362 = vunpack.c.h.b16 %v1276
    %v1363 = vunpack.c.l.b16 %v1277
    %v1364 = vunpack.c.h.b16 %v1277
    %v1365 = vunpack.c.l.b16 %v1278
    %v1366 = vunpack.c.h.b16 %v1278
    %v1367 = vunpack.c.l.b16 %v1279
    %v1368 = vunpack.c.h.b16 %v1279
    %v1369 = vunpack.c.l.b16 %v1280
    %v1370 = vunpack.c.h.b16 %v1280
    %v1371 = vunpack.c.l.b16 %v1281
    %v1372 = vunpack.c.h.b16 %v1281
    %v1373 = vunpack.c.l.b16 %v1282
    %v1374 = vunpack.c.h.b16 %v1282
    %v1375 = vunpack.c.l.b16 %v1283
    %v1376 = vunpack.c.h.b16 %v1283
    %v1377 = vunpack.c.l.b16 %v1284
    %v1378 = vunpack.c.h.b16 %v1284
    %v1379 = vunpack.c.l.b16 %v1285
    %v1380 = vunpack.c.h.b16 %v1285
    %v1381 = vunpack.c.l.b16 %v1286
    %v1382 = vunpack.c.h.b16 %v1286
    %v1383 = vunpack.c.l.b16 %v1287
    %v1384 = vunpack.c.h.b16 %v1287
    %v1385 = vunpack.c.l.b16 %v1288
    %v1386 = vunpack.c.h.b16 %v1288
    %v1387 = vunpack.c.l.b16 %v1289
    %v1388 = vunpack.c.h.b16 %v1289
    %v1389 = vunpack.c.l.b16 %v1290
    %v1390 = vunpack.c.h.b16 %v1290
    %v1391 = vunpack.c.l.b16 %v1291
    %v1392 = vunpack.c.h.b16 %v1291
    %v1393 = vpack.c.b16 %v1333, %v1329
    %v1394 = vpack.c.b16 %v1334, %v1330
    %v1395 = vpack.c.b16 %v1335, %v1331
    %v1396 = vpack.c.b16 %v1336, %v1332
    %v1397 = vpack.c.b16 %v1341, %v1337
    %v1398 = vpack.c.b16 %v1342, %v1338
    %v1399 = vpack.c.b16 %v1343, %v1339
    %v1400 = vpack.c.b16 %v1344, %v1340
    %v1401 = vpack.c.b16 %v1349, %v1345
    %v1402 = vpack.c.b16 %v1350, %v1346
    %v1403 = vpack.c.b16 %v1351, %v1347
    %v1404 = vpack.c.b16 %v1352, %v1348
    %v1405 = vpack.c.b16 %v1357, %v1353
    %v1406 = vpack.c.b16 %v1358, %v1354
    %v1407 = vpack.c.b16 %v1359, %v1355
    %v1408 = vpack.c.b16 %v1360, %v1356
    %v1409 = vpack.c.b16 %v1365, %v1361
    %v1410 = vpack.c.b16 %v1366, %v1362
    %v1411 = vpack.c.b16 %v1367, %v1363
    %v1412 = vpack.c.b16 %v1368, %v1364
    %v1413 = vpack.c.b16 %v1373, %v1369
    %v1414 = vpack.c.b16 %v1374, %v1370
    %v1415 = vpack.c.b16 %v1375, %v1371
    %v1416 = vpack.c.b16 %v1376, %v1372
    %v1417 = vpack.c.b16 %v1381, %v1377
    %v1418 = vpack.c.b16 %v1382, %v1378
    %v1419 = vpack.c.b16 %v1383, %v1379
    %v1420 = vpack.c.b16 %v1384, %v1380
    %v1421 = vpack.c.b16 %v1389, %v1385
    %v1422 = vpack.c.b16 %v1390, %v1386
    %v1423 = vpack.c.b16 %v1391, %v1387
    %v1424 = vpack.c.b16 %v1392, %v1388
    %1457 = vmatprep.subr.bf16.mxu0 %v1422
    %1458 = vmatpush1.bf16.msra.mxu0 %v1421
    %1459 = vmatprep.subr.bf16.mxu0 %v1418
    %1460 = vmatpush1.bf16.msra.mxu0 %v1417
    %1461 = vmatprep.subr.bf16.mxu0 %v1414
    %1462 = vmatpush1.bf16.msra.mxu0 %v1413
    %1463 = vmatprep.subr.bf16.mxu0 %v1410
    %1464 = vmatpush1.bf16.msra.mxu0 %v1409
    %1465 = vmatprep.subr.bf16.mxu0 %v1406
    %1466 = vmatpush1.bf16.msra.mxu0 %v1405
    %1467 = vmatprep.subr.bf16.mxu0 %v1402
    %1468 = vmatpush1.bf16.msra.mxu0 %v1401
    %1469 = vmatprep.subr.bf16.mxu0 %v1398
    %1470 = vmatpush1.bf16.msra.mxu0 %v1397
    %1471 = vmatprep.subr.bf16.mxu0 %v1394
    %1472 = vmatpush1.bf16.msra.mxu0 %v1393
    %1473 = vmatprep.subr.bf16.mxu0 0
    %1474 = vmatpush2.bf16.msra.mxu0 0
    %1475 = vmatprep.subr.bf16.mxu0 0
    %1476 = vmatpush2.bf16.msra.mxu0 0
    %1477 = vmatprep.subr.bf16.mxu0 0
    %1478 = vmatpush2.bf16.msra.mxu0 0
    %1479 = vmatprep.subr.bf16.mxu0 0
    %1480 = vmatpush2.bf16.msra.mxu0 0
    %1481 = vmatprep.subr.bf16.mxu0 0
    %1482 = vmatpush2.bf16.msra.mxu0 0
    %1483 = vmatprep.subr.bf16.mxu0 0
    %1484 = vmatpush2.bf16.msra.mxu0 0
    %1485 = vmatprep.subr.bf16.mxu0 0
    %1486 = vmatpush2.bf16.msra.mxu0 0
    %1487 = vmatprep.subr.bf16.mxu0 0
    %1488 = vmatpush2.bf16.msra.mxu0 0
    %1489 = vmatprep.mubr.bf16.mxu0 0
    %1490 = vmatmul.mubr.bf16.gmra.mxu0 %v1296
    %v1491 = vpop.f32.mrf.mxu0
    %v1492 = vadd.f32 0.0, %v1491
    %v1493 = vpop.f32.mrf.mxu0
    %v1494 = vadd.f32 0.0, %v1493
    %v1495 = vpop.f32.mrf.mxu0
    %v1496 = vpop.f32.mrf.mxu0
    %1497 = vdwg.mxu0
    %1498 = vmatprep.subr.bf16.mxu0 %v1424
    %1499 = vmatpush1.bf16.msra.mxu0 %v1423
    %1500 = vmatprep.subr.bf16.mxu0 %v1420
    %1501 = vmatpush1.bf16.msra.mxu0 %v1419
    %1502 = vmatprep.subr.bf16.mxu0 %v1416
    %1503 = vmatpush1.bf16.msra.mxu0 %v1415
    %1504 = vmatprep.subr.bf16.mxu0 %v1412
    %1505 = vmatpush1.bf16.msra.mxu0 %v1411
    %1506 = vmatprep.subr.bf16.mxu0 %v1408
    %1507 = vmatpush1.bf16.msra.mxu0 %v1407
    %1508 = vmatprep.subr.bf16.mxu0 %v1404
    %1509 = vmatpush1.bf16.msra.mxu0 %v1403
    %1510 = vmatprep.subr.bf16.mxu0 %v1400
    %1511 = vmatpush1.bf16.msra.mxu0 %v1399
    %1512 = vmatprep.subr.bf16.mxu0 %v1396
    %1513 = vmatpush1.bf16.msra.mxu0 %v1395
    %1514 = vmatprep.subr.bf16.mxu0 0
    %1515 = vmatpush2.bf16.msra.mxu0 0
    %1516 = vmatprep.subr.bf16.mxu0 0
    %1517 = vmatpush2.bf16.msra.mxu0 0
    %1518 = vmatprep.subr.bf16.mxu0 0
    %1519 = vmatpush2.bf16.msra.mxu0 0
    %1520 = vmatprep.subr.bf16.mxu0 0
    %1521 = vmatpush2.bf16.msra.mxu0 0
    %1522 = vmatprep.subr.bf16.mxu0 0
    %1523 = vmatpush2.bf16.msra.mxu0 0
    %1524 = vmatprep.subr.bf16.mxu0 0
    %1525 = vmatpush2.bf16.msra.mxu0 0
    %1526 = vmatprep.subr.bf16.mxu0 0
    %1527 = vmatpush2.bf16.msra.mxu0 0
    %1528 = vmatprep.subr.bf16.mxu0 0
    %1529 = vmatpush2.bf16.msra.mxu0 0
    %1530 = vmatprep.mubr.bf16.mxu0 0
    %1531 = vmatmul.mubr.bf16.gmra.mxu0 %v1296
    %v1532 = vpop.f32.mrf.mxu0
    %v1533 = vadd.f32 0.0, %v1532
    %v1534 = vpop.f32.mrf.mxu0
    %v1535 = vadd.f32 0.0, %v1534
    %v1536 = vpop.f32.mrf.mxu0
    %v1537 = vpop.f32.mrf.mxu0
    %1538 = vdwg.mxu0
    %v1539 = vadd.f32 %v1292, %v1492
    %v1540 = vadd.f32 %v1293, %v1494
    %v1541 = vadd.f32 %v1294, %v1533
    %v1542 = vadd.f32 %v1295, %v1535
    %v1543 = vmul.f32 %v1539, 0.5
    %v1544 = vtanh.pop %v1543
    %v1545 = vmul.f32 %v1544, 0.5
    %v1546 = vadd.f32 %v1545, 0.5
    %v1547 = vmul.f32 %v1540, 0.5
    %v1548 = vtanh.pop %v1547
    %v1549 = vmul.f32 %v1548, 0.5
    %v1550 = vadd.f32 %v1549, 0.5
    %v1551 = vtanh.pop %v1541
    %v1552 = vmul.f32 %v1542, 0.5
    %v1553 = vtanh.pop %v1552
    %v1554 = vmul.f32 %v1553, 0.5
    %v1555 = vadd.f32 %v1554, 0.5
    %v1556 = vmul.f32 %v1550, %v1259
    %v1557 = vmul.f32 %v1546, %v1551
    %v1558 = vadd.f32 %v1556, %v1557
    %v1559 = vtanh.pop %v1558
    %v1560 = vmul.f32 %v1555, %v1559
    %s1561 = sadd.s32 %s932, 6
    %p1562 = scmp.lt.s32.totalorder %s1561, 8
    %s1563 = scalar_select %p1562, 1, 0
    %s1564 = scvt.s32.f32 %s1563
    %v1565 = vstv %s1564
    %v1566 = vmul.f32 %v1560, %v1565
    %v1567 = vmul.f32 %v1558, %v1565
    %1568 = vst [vmem:[#allocation3] sm:$0xff] %v1254
    %1569 = vst [vmem:[#allocation4] sm:$0xff] %v1252
    %1570 = vst [vmem:[%s625] sm:$0xff] %v1566
    %1571 = vst [vmem:[%s627] sm:$0xff] %v1567
    %v1572 = vpack.c.bf16 %v1254, %v1254
    %s1573 = scalar_lea.vmem %s3, 4
    %1574 = vst [vmem:[%s1573] sm:$0xf] %v1572
    %v1575 = vpack.c.bf16 %v1566, %v1566
    %s1576 = scalar_lea.vmem %s131, 24
    %1577 = vst [vmem:[%s1576] sm:$0xf] %v1575
    %s1578 = scalar_lea.vmem [#allocation6], 32
    %v1579 = vld [vmem:[%s1578] sm:$0xff]
    %v1580 = vld [vmem:[%s1578 + $0x8] sm:$0xff]
    %v1581 = vld [vmem:[#allocation3] sm:$0xff]
    %v1582 = vld [vmem:[#allocation4] sm:$0xff]
    %v1583 = vld [vmem:[#allocation2] sm:$0xff]
    %v1584 = vld [vmem:[#allocation2 + $0x8] sm:$0xff]
    %v1585 = vld [vmem:[#allocation2 + $0x10] sm:$0xff]
    %v1586 = vld [vmem:[#allocation2 + $0x18] sm:$0xff]
    %v1587 = vld [vmem:[#allocation2 + $0x20] sm:$0xff]
    %v1588 = vld [vmem:[#allocation2 + $0x28] sm:$0xff]
    %v1589 = vld [vmem:[#allocation2 + $0x30] sm:$0xff]
    %v1590 = vld [vmem:[#allocation2 + $0x38] sm:$0xff]
    %v1591 = vld [vmem:[#allocation2 + $0x40] sm:$0xff]
    %v1592 = vld [vmem:[#allocation2 + $0x48] sm:$0xff]
    %v1593 = vld [vmem:[#allocation2 + $0x50] sm:$0xff]
    %v1594 = vld [vmem:[#allocation2 + $0x58] sm:$0xff]
    %v1595 = vld [vmem:[#allocation2 + $0x60] sm:$0xff]
    %v1596 = vld [vmem:[#allocation2 + $0x68] sm:$0xff]
    %v1597 = vld [vmem:[#allocation2 + $0x70] sm:$0xff]
    %v1598 = vld [vmem:[#allocation2 + $0x78] sm:$0xff]
    %v1599 = vld [vmem:[#allocation2 + $0x80] sm:$0xff]
    %v1600 = vld [vmem:[#allocation2 + $0x88] sm:$0xff]
    %v1601 = vld [vmem:[#allocation2 + $0x90] sm:$0xff]
    %v1602 = vld [vmem:[#allocation2 + $0x98] sm:$0xff]
    %v1603 = vld [vmem:[#allocation2 + $0xa0] sm:$0xff]
    %v1604 = vld [vmem:[#allocation2 + $0xa8] sm:$0xff]
    %v1605 = vld [vmem:[#allocation2 + $0xb0] sm:$0xff]
    %v1606 = vld [vmem:[#allocation2 + $0xb8] sm:$0xff]
    %v1607 = vld [vmem:[#allocation2 + $0xc0] sm:$0xff]
    %v1608 = vld [vmem:[#allocation2 + $0xc8] sm:$0xff]
    %v1609 = vld [vmem:[#allocation2 + $0xd0] sm:$0xff]
    %v1610 = vld [vmem:[#allocation2 + $0xd8] sm:$0xff]
    %v1611 = vld [vmem:[#allocation2 + $0xe0] sm:$0xff]
    %v1612 = vld [vmem:[#allocation2 + $0xe8] sm:$0xff]
    %v1613 = vld [vmem:[#allocation2 + $0xf0] sm:$0xff]
    %v1614 = vld [vmem:[#allocation2 + $0xf8] sm:$0xff]
    %v1615 = vunpack.c.l.bf16 %v1579
    %v1616 = vunpack.c.h.bf16 %v1579
    %v1617 = vunpack.c.l.bf16 %v1580
    %v1618 = vunpack.c.h.bf16 %v1580
    %v1619 = vpack.c.bf16 %v1581, %v1581
    %v1652 = vunpack.c.l.b16 %v1583
    %v1653 = vunpack.c.h.b16 %v1583
    %v1654 = vunpack.c.l.b16 %v1584
    %v1655 = vunpack.c.h.b16 %v1584
    %v1656 = vunpack.c.l.b16 %v1585
    %v1657 = vunpack.c.h.b16 %v1585
    %v1658 = vunpack.c.l.b16 %v1586
    %v1659 = vunpack.c.h.b16 %v1586
    %v1660 = vunpack.c.l.b16 %v1587
    %v1661 = vunpack.c.h.b16 %v1587
    %v1662 = vunpack.c.l.b16 %v1588
    %v1663 = vunpack.c.h.b16 %v1588
    %v1664 = vunpack.c.l.b16 %v1589
    %v1665 = vunpack.c.h.b16 %v1589
    %v1666 = vunpack.c.l.b16 %v1590
    %v1667 = vunpack.c.h.b16 %v1590
    %v1668 = vunpack.c.l.b16 %v1591
    %v1669 = vunpack.c.h.b16 %v1591
    %v1670 = vunpack.c.l.b16 %v1592
    %v1671 = vunpack.c.h.b16 %v1592
    %v1672 = vunpack.c.l.b16 %v1593
    %v1673 = vunpack.c.h.b16 %v1593
    %v1674 = vunpack.c.l.b16 %v1594
    %v1675 = vunpack.c.h.b16 %v1594
    %v1676 = vunpack.c.l.b16 %v1595
    %v1677 = vunpack.c.h.b16 %v1595
    %v1678 = vunpack.c.l.b16 %v1596
    %v1679 = vunpack.c.h.b16 %v1596
    %v1680 = vunpack.c.l.b16 %v1597
    %v1681 = vunpack.c.h.b16 %v1597
    %v1682 = vunpack.c.l.b16 %v1598
    %v1683 = vunpack.c.h.b16 %v1598
    %v1684 = vunpack.c.l.b16 %v1599
    %v1685 = vunpack.c.h.b16 %v1599
    %v1686 = vunpack.c.l.b16 %v1600
    %v1687 = vunpack.c.h.b16 %v1600
    %v1688 = vunpack.c.l.b16 %v1601
    %v1689 = vunpack.c.h.b16 %v1601
    %v1690 = vunpack.c.l.b16 %v1602
    %v1691 = vunpack.c.h.b16 %v1602
    %v1692 = vunpack.c.l.b16 %v1603
    %v1693 = vunpack.c.h.b16 %v1603
    %v1694 = vunpack.c.l.b16 %v1604
    %v1695 = vunpack.c.h.b16 %v1604
    %v1696 = vunpack.c.l.b16 %v1605
    %v1697 = vunpack.c.h.b16 %v1605
    %v1698 = vunpack.c.l.b16 %v1606
    %v1699 = vunpack.c.h.b16 %v1606
    %v1700 = vunpack.c.l.b16 %v1607
    %v1701 = vunpack.c.h.b16 %v1607
    %v1702 = vunpack.c.l.b16 %v1608
    %v1703 = vunpack.c.h.b16 %v1608
    %v1704 = vunpack.c.l.b16 %v1609
    %v1705 = vunpack.c.h.b16 %v1609
    %v1706 = vunpack.c.l.b16 %v1610
    %v1707 = vunpack.c.h.b16 %v1610
    %v1708 = vunpack.c.l.b16 %v1611
    %v1709 = vunpack.c.h.b16 %v1611
    %v1710 = vunpack.c.l.b16 %v1612
    %v1711 = vunpack.c.h.b16 %v1612
    %v1712 = vunpack.c.l.b16 %v1613
    %v1713 = vunpack.c.h.b16 %v1613
    %v1714 = vunpack.c.l.b16 %v1614
    %v1715 = vunpack.c.h.b16 %v1614
    %v1716 = vpack.c.b16 %v1656, %v1652
    %v1717 = vpack.c.b16 %v1657, %v1653
    %v1718 = vpack.c.b16 %v1658, %v1654
    %v1719 = vpack.c.b16 %v1659, %v1655
    %v1720 = vpack.c.b16 %v1664, %v1660
    %v1721 = vpack.c.b16 %v1665, %v1661
    %v1722 = vpack.c.b16 %v1666, %v1662
    %v1723 = vpack.c.b16 %v1667, %v1663
    %v1724 = vpack.c.b16 %v1672, %v1668
    %v1725 = vpack.c.b16 %v1673, %v1669
    %v1726 = vpack.c.b16 %v1674, %v1670
    %v1727 = vpack.c.b16 %v1675, %v1671
    %v1728 = vpack.c.b16 %v1680, %v1676
    %v1729 = vpack.c.b16 %v1681, %v1677
    %v1730 = vpack.c.b16 %v1682, %v1678
    %v1731 = vpack.c.b16 %v1683, %v1679
    %v1732 = vpack.c.b16 %v1688, %v1684
    %v1733 = vpack.c.b16 %v1689, %v1685
    %v1734 = vpack.c.b16 %v1690, %v1686
    %v1735 = vpack.c.b16 %v1691, %v1687
    %v1736 = vpack.c.b16 %v1696, %v1692
    %v1737 = vpack.c.b16 %v1697, %v1693
    %v1738 = vpack.c.b16 %v1698, %v1694
    %v1739 = vpack.c.b16 %v1699, %v1695
    %v1740 = vpack.c.b16 %v1704, %v1700
    %v1741 = vpack.c.b16 %v1705, %v1701
    %v1742 = vpack.c.b16 %v1706, %v1702
    %v1743 = vpack.c.b16 %v1707, %v1703
    %v1744 = vpack.c.b16 %v1712, %v1708
    %v1745 = vpack.c.b16 %v1713, %v1709
    %v1746 = vpack.c.b16 %v1714, %v1710
    %v1747 = vpack.c.b16 %v1715, %v1711
    %1780 = vmatprep.subr.bf16.mxu0 %v1745
    %1781 = vmatpush1.bf16.msra.mxu0 %v1744
    %1782 = vmatprep.subr.bf16.mxu0 %v1741
    %1783 = vmatpush1.bf16.msra.mxu0 %v1740
    %1784 = vmatprep.subr.bf16.mxu0 %v1737
    %1785 = vmatpush1.bf16.msra.mxu0 %v1736
    %1786 = vmatprep.subr.bf16.mxu0 %v1733
    %1787 = vmatpush1.bf16.msra.mxu0 %v1732
    %1788 = vmatprep.subr.bf16.mxu0 %v1729
    %1789 = vmatpush1.bf16.msra.mxu0 %v1728
    %1790 = vmatprep.subr.bf16.mxu0 %v1725
    %1791 = vmatpush1.bf16.msra.mxu0 %v1724
    %1792 = vmatprep.subr.bf16.mxu0 %v1721
    %1793 = vmatpush1.bf16.msra.mxu0 %v1720
    %1794 = vmatprep.subr.bf16.mxu0 %v1717
    %1795 = vmatpush1.bf16.msra.mxu0 %v1716
    %1796 = vmatprep.subr.bf16.mxu0 0
    %1797 = vmatpush2.bf16.msra.mxu0 0
    %1798 = vmatprep.subr.bf16.mxu0 0
    %1799 = vmatpush2.bf16.msra.mxu0 0
    %1800 = vmatprep.subr.bf16.mxu0 0
    %1801 = vmatpush2.bf16.msra.mxu0 0
    %1802 = vmatprep.subr.bf16.mxu0 0
    %1803 = vmatpush2.bf16.msra.mxu0 0
    %1804 = vmatprep.subr.bf16.mxu0 0
    %1805 = vmatpush2.bf16.msra.mxu0 0
    %1806 = vmatprep.subr.bf16.mxu0 0
    %1807 = vmatpush2.bf16.msra.mxu0 0
    %1808 = vmatprep.subr.bf16.mxu0 0
    %1809 = vmatpush2.bf16.msra.mxu0 0
    %1810 = vmatprep.subr.bf16.mxu0 0
    %1811 = vmatpush2.bf16.msra.mxu0 0
    %1812 = vmatprep.mubr.bf16.mxu0 0
    %1813 = vmatmul.mubr.bf16.gmra.mxu0 %v1619
    %v1814 = vpop.f32.mrf.mxu0
    %v1815 = vadd.f32 0.0, %v1814
    %v1816 = vpop.f32.mrf.mxu0
    %v1817 = vadd.f32 0.0, %v1816
    %v1818 = vpop.f32.mrf.mxu0
    %v1819 = vpop.f32.mrf.mxu0
    %1820 = vdwg.mxu0
    %1821 = vmatprep.subr.bf16.mxu0 %v1747
    %1822 = vmatpush1.bf16.msra.mxu0 %v1746
    %1823 = vmatprep.subr.bf16.mxu0 %v1743
    %1824 = vmatpush1.bf16.msra.mxu0 %v1742
    %1825 = vmatprep.subr.bf16.mxu0 %v1739
    %1826 = vmatpush1.bf16.msra.mxu0 %v1738
    %1827 = vmatprep.subr.bf16.mxu0 %v1735
    %1828 = vmatpush1.bf16.msra.mxu0 %v1734
    %1829 = vmatprep.subr.bf16.mxu0 %v1731
    %1830 = vmatpush1.bf16.msra.mxu0 %v1730
    %1831 = vmatprep.subr.bf16.mxu0 %v1727
    %1832 = vmatpush1.bf16.msra.mxu0 %v1726
    %1833 = vmatprep.subr.bf16.mxu0 %v1723
    %1834 = vmatpush1.bf16.msra.mxu0 %v1722
    %1835 = vmatprep.subr.bf16.mxu0 %v1719
    %1836 = vmatpush1.bf16.msra.mxu0 %v1718
    %1837 = vmatprep.subr.bf16.mxu0 0
    %1838 = vmatpush2.bf16.msra.mxu0 0
    %1839 = vmatprep.subr.bf16.mxu0 0
    %1840 = vmatpush2.bf16.msra.mxu0 0
    %1841 = vmatprep.subr.bf16.mxu0 0
    %1842 = vmatpush2.bf16.msra.mxu0 0
    %1843 = vmatprep.subr.bf16.mxu0 0
    %1844 = vmatpush2.bf16.msra.mxu0 0
    %1845 = vmatprep.subr.bf16.mxu0 0
    %1846 = vmatpush2.bf16.msra.mxu0 0
    %1847 = vmatprep.subr.bf16.mxu0 0
    %1848 = vmatpush2.bf16.msra.mxu0 0
    %1849 = vmatprep.subr.bf16.mxu0 0
    %1850 = vmatpush2.bf16.msra.mxu0 0
    %1851 = vmatprep.subr.bf16.mxu0 0
    %1852 = vmatpush2.bf16.msra.mxu0 0
    %1853 = vmatprep.mubr.bf16.mxu0 0
    %1854 = vmatmul.mubr.bf16.gmra.mxu0 %v1619
    %v1855 = vpop.f32.mrf.mxu0
    %v1856 = vadd.f32 0.0, %v1855
    %v1857 = vpop.f32.mrf.mxu0
    %v1858 = vadd.f32 0.0, %v1857
    %v1859 = vpop.f32.mrf.mxu0
    %v1860 = vpop.f32.mrf.mxu0
    %1861 = vdwg.mxu0
    %v1862 = vadd.f32 %v1615, %v1815
    %v1863 = vadd.f32 %v1616, %v1817
    %v1864 = vadd.f32 %v1617, %v1856
    %v1865 = vadd.f32 %v1618, %v1858
    %v1866 = vmul.f32 %v1862, 0.5
    %v1867 = vtanh.pop %v1866
    %v1868 = vmul.f32 %v1867, 0.5
    %v1869 = vadd.f32 %v1868, 0.5
    %v1870 = vmul.f32 %v1863, 0.5
    %v1871 = vtanh.pop %v1870
    %v1872 = vmul.f32 %v1871, 0.5
    %v1873 = vadd.f32 %v1872, 0.5
    %v1874 = vtanh.pop %v1864
    %v1875 = vmul.f32 %v1865, 0.5
    %v1876 = vtanh.pop %v1875
    %v1877 = vmul.f32 %v1876, 0.5
    %v1878 = vadd.f32 %v1877, 0.5
    %v1879 = vmul.f32 %v1873, %v1582
    %v1880 = vmul.f32 %v1869, %v1874
    %v1881 = vadd.f32 %v1879, %v1880
    %v1882 = vtanh.pop %v1881
    %v1883 = vmul.f32 %v1878, %v1882
    %s1884 = scalar_lea.vmem [#allocation7], 80
    %v1885 = vld [vmem:[%s1884] sm:$0xff]
    %v1886 = vld [vmem:[%s1884 + $0x8] sm:$0xff]
    %v1887 = vld [vmem:[%s625] sm:$0xff]
    %v1888 = vld [vmem:[%s627] sm:$0xff]
    %v1889 = vld [vmem:[%s629] sm:$0xff]
    %v1890 = vld [vmem:[%s629 + $0x8] sm:$0xff]
    %v1891 = vld [vmem:[%s629 + $0x10] sm:$0xff]
    %v1892 = vld [vmem:[%s629 + $0x18] sm:$0xff]
    %v1893 = vld [vmem:[%s629 + $0x20] sm:$0xff]
    %v1894 = vld [vmem:[%s629 + $0x28] sm:$0xff]
    %v1895 = vld [vmem:[%s629 + $0x30] sm:$0xff]
    %v1896 = vld [vmem:[%s629 + $0x38] sm:$0xff]
    %v1897 = vld [vmem:[%s629 + $0x40] sm:$0xff]
    %v1898 = vld [vmem:[%s629 + $0x48] sm:$0xff]
    %v1899 = vld [vmem:[%s629 + $0x50] sm:$0xff]
    %v1900 = vld [vmem:[%s629 + $0x58] sm:$0xff]
    %v1901 = vld [vmem:[%s629 + $0x60] sm:$0xff]
    %v1902 = vld [vmem:[%s629 + $0x68] sm:$0xff]
    %v1903 = vld [vmem:[%s629 + $0x70] sm:$0xff]
    %v1904 = vld [vmem:[%s629 + $0x78] sm:$0xff]
    %v1905 = vld [vmem:[%s629 + $0x80] sm:$0xff]
    %v1906 = vld [vmem:[%s629 + $0x88] sm:$0xff]
    %v1907 = vld [vmem:[%s629 + $0x90] sm:$0xff]
    %v1908 = vld [vmem:[%s629 + $0x98] sm:$0xff]
    %v1909 = vld [vmem:[%s629 + $0xa0] sm:$0xff]
    %v1910 = vld [vmem:[%s629 + $0xa8] sm:$0xff]
    %v1911 = vld [vmem:[%s629 + $0xb0] sm:$0xff]
    %v1912 = vld [vmem:[%s629 + $0xb8] sm:$0xff]
    %v1913 = vld [vmem:[%s629 + $0xc0] sm:$0xff]
    %v1914 = vld [vmem:[%s629 + $0xc8] sm:$0xff]
    %v1915 = vld [vmem:[%s629 + $0xd0] sm:$0xff]
    %v1916 = vld [vmem:[%s629 + $0xd8] sm:$0xff]
    %v1917 = vld [vmem:[%s629 + $0xe0] sm:$0xff]
    %v1918 = vld [vmem:[%s629 + $0xe8] sm:$0xff]
    %v1919 = vld [vmem:[%s629 + $0xf0] sm:$0xff]
    %v1920 = vld [vmem:[%s629 + $0xf8] sm:$0xff]
    %v1921 = vunpack.c.l.bf16 %v1885
    %v1922 = vunpack.c.h.bf16 %v1885
    %v1923 = vunpack.c.l.bf16 %v1886
    %v1924 = vunpack.c.h.bf16 %v1886
    %v1925 = vpack.c.bf16 %v1887, %v1887
    %v1958 = vunpack.c.l.b16 %v1889
    %v1959 = vunpack.c.h.b16 %v1889
    %v1960 = vunpack.c.l.b16 %v1890
    %v1961 = vunpack.c.h.b16 %v1890
    %v1962 = vunpack.c.l.b16 %v1891
    %v1963 = vunpack.c.h.b16 %v1891
    %v1964 = vunpack.c.l.b16 %v1892
    %v1965 = vunpack.c.h.b16 %v1892
    %v1966 = vunpack.c.l.b16 %v1893
    %v1967 = vunpack.c.h.b16 %v1893
    %v1968 = vunpack.c.l.b16 %v1894
    %v1969 = vunpack.c.h.b16 %v1894
    %v1970 = vunpack.c.l.b16 %v1895
    %v1971 = vunpack.c.h.b16 %v1895
    %v1972 = vunpack.c.l.b16 %v1896
    %v1973 = vunpack.c.h.b16 %v1896
    %v1974 = vunpack.c.l.b16 %v1897
    %v1975 = vunpack.c.h.b16 %v1897
    %v1976 = vunpack.c.l.b16 %v1898
    %v1977 = vunpack.c.h.b16 %v1898
    %v1978 = vunpack.c.l.b16 %v1899
    %v1979 = vunpack.c.h.b16 %v1899
    %v1980 = vunpack.c.l.b16 %v1900
    %v1981 = vunpack.c.h.b16 %v1900
    %v1982 = vunpack.c.l.b16 %v1901
    %v1983 = vunpack.c.h.b16 %v1901
    %v1984 = vunpack.c.l.b16 %v1902
    %v1985 = vunpack.c.h.b16 %v1902
    %v1986 = vunpack.c.l.b16 %v1903
    %v1987 = vunpack.c.h.b16 %v1903
    %v1988 = vunpack.c.l.b16 %v1904
    %v1989 = vunpack.c.h.b16 %v1904
    %v1990 = vunpack.c.l.b16 %v1905
    %v1991 = vunpack.c.h.b16 %v1905
    %v1992 = vunpack.c.l.b16 %v1906
    %v1993 = vunpack.c.h.b16 %v1906
    %v1994 = vunpack.c.l.b16 %v1907
    %v1995 = vunpack.c.h.b16 %v1907
    %v1996 = vunpack.c.l.b16 %v1908
    %v1997 = vunpack.c.h.b16 %v1908
    %v1998 = vunpack.c.l.b16 %v1909
    %v1999 = vunpack.c.h.b16 %v1909
    %v2000 = vunpack.c.l.b16 %v1910
    %v2001 = vunpack.c.h.b16 %v1910
    %v2002 = vunpack.c.l.b16 %v1911
    %v2003 = vunpack.c.h.b16 %v1911
    %v2004 = vunpack.c.l.b16 %v1912
    %v2005 = vunpack.c.h.b16 %v1912
    %v2006 = vunpack.c.l.b16 %v1913
    %v2007 = vunpack.c.h.b16 %v1913
    %v2008 = vunpack.c.l.b16 %v1914
    %v2009 = vunpack.c.h.b16 %v1914
    %v2010 = vunpack.c.l.b16 %v1915
    %v2011 = vunpack.c.h.b16 %v1915
    %v2012 = vunpack.c.l.b16 %v1916
    %v2013 = vunpack.c.h.b16 %v1916
    %v2014 = vunpack.c.l.b16 %v1917
    %v2015 = vunpack.c.h.b16 %v1917
    %v2016 = vunpack.c.l.b16 %v1918
    %v2017 = vunpack.c.h.b16 %v1918
    %v2018 = vunpack.c.l.b16 %v1919
    %v2019 = vunpack.c.h.b16 %v1919
    %v2020 = vunpack.c.l.b16 %v1920
    %v2021 = vunpack.c.h.b16 %v1920
    %v2022 = vpack.c.b16 %v1962, %v1958
    %v2023 = vpack.c.b16 %v1963, %v1959
    %v2024 = vpack.c.b16 %v1964, %v1960
    %v2025 = vpack.c.b16 %v1965, %v1961
    %v2026 = vpack.c.b16 %v1970, %v1966
    %v2027 = vpack.c.b16 %v1971, %v1967
    %v2028 = vpack.c.b16 %v1972, %v1968
    %v2029 = vpack.c.b16 %v1973, %v1969
    %v2030 = vpack.c.b16 %v1978, %v1974
    %v2031 = vpack.c.b16 %v1979, %v1975
    %v2032 = vpack.c.b16 %v1980, %v1976
    %v2033 = vpack.c.b16 %v1981, %v1977
    %v2034 = vpack.c.b16 %v1986, %v1982
    %v2035 = vpack.c.b16 %v1987, %v1983
    %v2036 = vpack.c.b16 %v1988, %v1984
    %v2037 = vpack.c.b16 %v1989, %v1985
    %v2038 = vpack.c.b16 %v1994, %v1990
    %v2039 = vpack.c.b16 %v1995, %v1991
    %v2040 = vpack.c.b16 %v1996, %v1992
    %v2041 = vpack.c.b16 %v1997, %v1993
    %v2042 = vpack.c.b16 %v2002, %v1998
    %v2043 = vpack.c.b16 %v2003, %v1999
    %v2044 = vpack.c.b16 %v2004, %v2000
    %v2045 = vpack.c.b16 %v2005, %v2001
    %v2046 = vpack.c.b16 %v2010, %v2006
    %v2047 = vpack.c.b16 %v2011, %v2007
    %v2048 = vpack.c.b16 %v2012, %v2008
    %v2049 = vpack.c.b16 %v2013, %v2009
    %v2050 = vpack.c.b16 %v2018, %v2014
    %v2051 = vpack.c.b16 %v2019, %v2015
    %v2052 = vpack.c.b16 %v2020, %v2016
    %v2053 = vpack.c.b16 %v2021, %v2017
    %2086 = vmatprep.subr.bf16.mxu0 %v2051
    %2087 = vmatpush1.bf16.msra.mxu0 %v2050
    %2088 = vmatprep.subr.bf16.mxu0 %v2047
    %2089 = vmatpush1.bf16.msra.mxu0 %v2046
    %2090 = vmatprep.subr.bf16.mxu0 %v2043
    %2091 = vmatpush1.bf16.msra.mxu0 %v2042
    %2092 = vmatprep.subr.bf16.mxu0 %v2039
    %2093 = vmatpush1.bf16.msra.mxu0 %v2038
    %2094 = vmatprep.subr.bf16.mxu0 %v2035
    %2095 = vmatpush1.bf16.msra.mxu0 %v2034
    %2096 = vmatprep.subr.bf16.mxu0 %v2031
    %2097 = vmatpush1.bf16.msra.mxu0 %v2030
    %2098 = vmatprep.subr.bf16.mxu0 %v2027
    %2099 = vmatpush1.bf16.msra.mxu0 %v2026
    %2100 = vmatprep.subr.bf16.mxu0 %v2023
    %2101 = vmatpush1.bf16.msra.mxu0 %v2022
    %2102 = vmatprep.subr.bf16.mxu0 0
    %2103 = vmatpush2.bf16.msra.mxu0 0
    %2104 = vmatprep.subr.bf16.mxu0 0
    %2105 = vmatpush2.bf16.msra.mxu0 0
    %2106 = vmatprep.subr.bf16.mxu0 0
    %2107 = vmatpush2.bf16.msra.mxu0 0
    %2108 = vmatprep.subr.bf16.mxu0 0
    %2109 = vmatpush2.bf16.msra.mxu0 0
    %2110 = vmatprep.subr.bf16.mxu0 0
    %2111 = vmatpush2.bf16.msra.mxu0 0
    %2112 = vmatprep.subr.bf16.mxu0 0
    %2113 = vmatpush2.bf16.msra.mxu0 0
    %2114 = vmatprep.subr.bf16.mxu0 0
    %2115 = vmatpush2.bf16.msra.mxu0 0
    %2116 = vmatprep.subr.bf16.mxu0 0
    %2117 = vmatpush2.bf16.msra.mxu0 0
    %2118 = vmatprep.mubr.bf16.mxu0 0
    %2119 = vmatmul.mubr.bf16.gmra.mxu0 %v1925
    %v2120 = vpop.f32.mrf.mxu0
    %v2121 = vadd.f32 0.0, %v2120
    %v2122 = vpop.f32.mrf.mxu0
    %v2123 = vadd.f32 0.0, %v2122
    %v2124 = vpop.f32.mrf.mxu0
    %v2125 = vpop.f32.mrf.mxu0
    %2126 = vdwg.mxu0
    %2127 = vmatprep.subr.bf16.mxu0 %v2053
    %2128 = vmatpush1.bf16.msra.mxu0 %v2052
    %2129 = vmatprep.subr.bf16.mxu0 %v2049
    %2130 = vmatpush1.bf16.msra.mxu0 %v2048
    %2131 = vmatprep.subr.bf16.mxu0 %v2045
    %2132 = vmatpush1.bf16.msra.mxu0 %v2044
    %2133 = vmatprep.subr.bf16.mxu0 %v2041
    %2134 = vmatpush1.bf16.msra.mxu0 %v2040
    %2135 = vmatprep.subr.bf16.mxu0 %v2037
    %2136 = vmatpush1.bf16.msra.mxu0 %v2036
    %2137 = vmatprep.subr.bf16.mxu0 %v2033
    %2138 = vmatpush1.bf16.msra.mxu0 %v2032
    %2139 = vmatprep.subr.bf16.mxu0 %v2029
    %2140 = vmatpush1.bf16.msra.mxu0 %v2028
    %2141 = vmatprep.subr.bf16.mxu0 %v2025
    %2142 = vmatpush1.bf16.msra.mxu0 %v2024
    %2143 = vmatprep.subr.bf16.mxu0 0
    %2144 = vmatpush2.bf16.msra.mxu0 0
    %2145 = vmatprep.subr.bf16.mxu0 0
    %2146 = vmatpush2.bf16.msra.mxu0 0
    %2147 = vmatprep.subr.bf16.mxu0 0
    %2148 = vmatpush2.bf16.msra.mxu0 0
    %2149 = vmatprep.subr.bf16.mxu0 0
    %2150 = vmatpush2.bf16.msra.mxu0 0
    %2151 = vmatprep.subr.bf16.mxu0 0
    %2152 = vmatpush2.bf16.msra.mxu0 0
    %2153 = vmatprep.subr.bf16.mxu0 0
    %2154 = vmatpush2.bf16.msra.mxu0 0
    %2155 = vmatprep.subr.bf16.mxu0 0
    %2156 = vmatpush2.bf16.msra.mxu0 0
    %2157 = vmatprep.subr.bf16.mxu0 0
    %2158 = vmatpush2.bf16.msra.mxu0 0
    %2159 = vmatprep.mubr.bf16.mxu0 0
    %2160 = vmatmul.mubr.bf16.gmra.mxu0 %v1925
    %v2161 = vpop.f32.mrf.mxu0
    %v2162 = vadd.f32 0.0, %v2161
    %v2163 = vpop.f32.mrf.mxu0
    %v2164 = vadd.f32 0.0, %v2163
    %v2165 = vpop.f32.mrf.mxu0
    %v2166 = vpop.f32.mrf.mxu0
    %2167 = vdwg.mxu0
    %v2168 = vadd.f32 %v1921, %v2121
    %v2169 = vadd.f32 %v1922, %v2123
    %v2170 = vadd.f32 %v1923, %v2162
    %v2171 = vadd.f32 %v1924, %v2164
    %v2172 = vmul.f32 %v2168, 0.5
    %v2173 = vtanh.pop %v2172
    %v2174 = vmul.f32 %v2173, 0.5
    %v2175 = vadd.f32 %v2174, 0.5
    %v2176 = vmul.f32 %v2169, 0.5
    %v2177 = vtanh.pop %v2176
    %v2178 = vmul.f32 %v2177, 0.5
    %v2179 = vadd.f32 %v2178, 0.5
    %v2180 = vtanh.pop %v2170
    %v2181 = vmul.f32 %v2171, 0.5
    %v2182 = vtanh.pop %v2181
    %v2183 = vmul.f32 %v2182, 0.5
    %v2184 = vadd.f32 %v2183, 0.5
    %v2185 = vmul.f32 %v2179, %v1888
    %v2186 = vmul.f32 %v2175, %v2180
    %v2187 = vadd.f32 %v2185, %v2186
    %v2188 = vtanh.pop %v2187
    %v2189 = vmul.f32 %v2184, %v2188
    %s2190 = sadd.s32 %s932, 5
    %p2191 = scmp.lt.s32.totalorder %s2190, 8
    %s2192 = scalar_select %p2191, 1, 0
    %s2193 = scvt.s32.f32 %s2192
    %v2194 = vstv %s2193
    %v2195 = vmul.f32 %v2189, %v2194
    %v2196 = vmul.f32 %v2187, %v2194
    %2197 = vst [vmem:[#allocation3] sm:$0xff] %v1883
    %2198 = vst [vmem:[#allocation4] sm:$0xff] %v1881
    %2199 = vst [vmem:[%s625] sm:$0xff] %v2195
    %2200 = vst [vmem:[%s627] sm:$0xff] %v2196
    %v2201 = vpack.c.bf16 %v1883, %v1883
    %s2202 = scalar_lea.vmem %s3, 8
    %2203 = vst [vmem:[%s2202] sm:$0xf] %v2201
    %v2204 = vpack.c.bf16 %v2195, %v2195
    %s2205 = scalar_lea.vmem %s131, 20
    %2206 = vst [vmem:[%s2205] sm:$0xf] %v2204
    %s2207 = scalar_lea.vmem [#allocation6], 48
    %v2208 = vld [vmem:[%s2207] sm:$0xff]
    %v2209 = vld [vmem:[%s2207 + $0x8] sm:$0xff]
    %v2210 = vld [vmem:[#allocation3] sm:$0xff]
    %v2211 = vld [vmem:[#allocation4] sm:$0xff]
    %v2212 = vld [vmem:[#allocation2] sm:$0xff]
    %v2213 = vld [vmem:[#allocation2 + $0x8] sm:$0xff]
    %v2214 = vld [vmem:[#allocation2 + $0x10] sm:$0xff]
    %v2215 = vld [vmem:[#allocation2 + $0x18] sm:$0xff]
    %v2216 = vld [vmem:[#allocation2 + $0x20] sm:$0xff]
    %v2217 = vld [vmem:[#allocation2 + $0x28] sm:$0xff]
    %v2218 = vld [vmem:[#allocation2 + $0x30] sm:$0xff]
    %v2219 = vld [vmem:[#allocation2 + $0x38] sm:$0xff]
    %v2220 = vld [vmem:[#allocation2 + $0x40] sm:$0xff]
    %v2221 = vld [vmem:[#allocation2 + $0x48] sm:$0xff]
    %v2222 = vld [vmem:[#allocation2 + $0x50] sm:$0xff]
    %v2223 = vld [vmem:[#allocation2 + $0x58] sm:$0xff]
    %v2224 = vld [vmem:[#allocation2 + $0x60] sm:$0xff]
    %v2225 = vld [vmem:[#allocation2 + $0x68] sm:$0xff]
    %v2226 = vld [vmem:[#allocation2 + $0x70] sm:$0xff]
    %v2227 = vld [vmem:[#allocation2 + $0x78] sm:$0xff]
    %v2228 = vld [vmem:[#allocation2 + $0x80] sm:$0xff]
    %v2229 = vld [vmem:[#allocation2 + $0x88] sm:$0xff]
    %v2230 = vld [vmem:[#allocation2 + $0x90] sm:$0xff]
    %v2231 = vld [vmem:[#allocation2 + $0x98] sm:$0xff]
    %v2232 = vld [vmem:[#allocation2 + $0xa0] sm:$0xff]
    %v2233 = vld [vmem:[#allocation2 + $0xa8] sm:$0xff]
    %v2234 = vld [vmem:[#allocation2 + $0xb0] sm:$0xff]
    %v2235 = vld [vmem:[#allocation2 + $0xb8] sm:$0xff]
    %v2236 = vld [vmem:[#allocation2 + $0xc0] sm:$0xff]
    %v2237 = vld [vmem:[#allocation2 + $0xc8] sm:$0xff]
    %v2238 = vld [vmem:[#allocation2 + $0xd0] sm:$0xff]
    %v2239 = vld [vmem:[#allocation2 + $0xd8] sm:$0xff]
    %v2240 = vld [vmem:[#allocation2 + $0xe0] sm:$0xff]
    %v2241 = vld [vmem:[#allocation2 + $0xe8] sm:$0xff]
    %v2242 = vld [vmem:[#allocation2 + $0xf0] sm:$0xff]
    %v2243 = vld [vmem:[#allocation2 + $0xf8] sm:$0xff]
    %v2244 = vunpack.c.l.bf16 %v2208
    %v2245 = vunpack.c.h.bf16 %v2208
    %v2246 = vunpack.c.l.bf16 %v2209
    %v2247 = vunpack.c.h.bf16 %v2209
    %v2248 = vpack.c.bf16 %v2210, %v2210
    %v2281 = vunpack.c.l.b16 %v2212
    %v2282 = vunpack.c.h.b16 %v2212
    %v2283 = vunpack.c.l.b16 %v2213
    %v2284 = vunpack.c.h.b16 %v2213
    %v2285 = vunpack.c.l.b16 %v2214
    %v2286 = vunpack.c.h.b16 %v2214
    %v2287 = vunpack.c.l.b16 %v2215
    %v2288 = vunpack.c.h.b16 %v2215
    %v2289 = vunpack.c.l.b16 %v2216
    %v2290 = vunpack.c.h.b16 %v2216
    %v2291 = vunpack.c.l.b16 %v2217
    %v2292 = vunpack.c.h.b16 %v2217
    %v2293 = vunpack.c.l.b16 %v2218
    %v2294 = vunpack.c.h.b16 %v2218
    %v2295 = vunpack.c.l.b16 %v2219
    %v2296 = vunpack.c.h.b16 %v2219
    %v2297 = vunpack.c.l.b16 %v2220
    %v2298 = vunpack.c.h.b16 %v2220
    %v2299 = vunpack.c.l.b16 %v2221
    %v2300 = vunpack.c.h.b16 %v2221
    %v2301 = vunpack.c.l.b16 %v2222
    %v2302 = vunpack.c.h.b16 %v2222
    %v2303 = vunpack.c.l.b16 %v2223
    %v2304 = vunpack.c.h.b16 %v2223
    %v2305 = vunpack.c.l.b16 %v2224
    %v2306 = vunpack.c.h.b16 %v2224
    %v2307 = vunpack.c.l.b16 %v2225
    %v2308 = vunpack.c.h.b16 %v2225
    %v2309 = vunpack.c.l.b16 %v2226
    %v2310 = vunpack.c.h.b16 %v2226
    %v2311 = vunpack.c.l.b16 %v2227
    %v2312 = vunpack.c.h.b16 %v2227
    %v2313 = vunpack.c.l.b16 %v2228
    %v2314 = vunpack.c.h.b16 %v2228
    %v2315 = vunpack.c.l.b16 %v2229
    %v2316 = vunpack.c.h.b16 %v2229
    %v2317 = vunpack.c.l.b16 %v2230
    %v2318 = vunpack.c.h.b16 %v2230
    %v2319 = vunpack.c.l.b16 %v2231
    %v2320 = vunpack.c.h.b16 %v2231
    %v2321 = vunpack.c.l.b16 %v2232
    %v2322 = vunpack.c.h.b16 %v2232
    %v2323 = vunpack.c.l.b16 %v2233
    %v2324 = vunpack.c.h.b16 %v2233
    %v2325 = vunpack.c.l.b16 %v2234
    %v2326 = vunpack.c.h.b16 %v2234
    %v2327 = vunpack.c.l.b16 %v2235
    %v2328 = vunpack.c.h.b16 %v2235
    %v2329 = vunpack.c.l.b16 %v2236
    %v2330 = vunpack.c.h.b16 %v2236
    %v2331 = vunpack.c.l.b16 %v2237
    %v2332 = vunpack.c.h.b16 %v2237
    %v2333 = vunpack.c.l.b16 %v2238
    %v2334 = vunpack.c.h.b16 %v2238
    %v2335 = vunpack.c.l.b16 %v2239
    %v2336 = vunpack.c.h.b16 %v2239
    %v2337 = vunpack.c.l.b16 %v2240
    %v2338 = vunpack.c.h.b16 %v2240
    %v2339 = vunpack.c.l.b16 %v2241
    %v2340 = vunpack.c.h.b16 %v2241
    %v2341 = vunpack.c.l.b16 %v2242
    %v2342 = vunpack.c.h.b16 %v2242
    %v2343 = vunpack.c.l.b16 %v2243
    %v2344 = vunpack.c.h.b16 %v2243
    %v2345 = vpack.c.b16 %v2285, %v2281
    %v2346 = vpack.c.b16 %v2286, %v2282
    %v2347 = vpack.c.b16 %v2287, %v2283
    %v2348 = vpack.c.b16 %v2288, %v2284
    %v2349 = vpack.c.b16 %v2293, %v2289
    %v2350 = vpack.c.b16 %v2294, %v2290
    %v2351 = vpack.c.b16 %v2295, %v2291
    %v2352 = vpack.c.b16 %v2296, %v2292
    %v2353 = vpack.c.b16 %v2301, %v2297
    %v2354 = vpack.c.b16 %v2302, %v2298
    %v2355 = vpack.c.b16 %v2303, %v2299
    %v2356 = vpack.c.b16 %v2304, %v2300
    %v2357 = vpack.c.b16 %v2309, %v2305
    %v2358 = vpack.c.b16 %v2310, %v2306
    %v2359 = vpack.c.b16 %v2311, %v2307
    %v2360 = vpack.c.b16 %v2312, %v2308
    %v2361 = vpack.c.b16 %v2317, %v2313
    %v2362 = vpack.c.b16 %v2318, %v2314
    %v2363 = vpack.c.b16 %v2319, %v2315
    %v2364 = vpack.c.b16 %v2320, %v2316
    %v2365 = vpack.c.b16 %v2325, %v2321
    %v2366 = vpack.c.b16 %v2326, %v2322
    %v2367 = vpack.c.b16 %v2327, %v2323
    %v2368 = vpack.c.b16 %v2328, %v2324
    %v2369 = vpack.c.b16 %v2333, %v2329
    %v2370 = vpack.c.b16 %v2334, %v2330
    %v2371 = vpack.c.b16 %v2335, %v2331
    %v2372 = vpack.c.b16 %v2336, %v2332
    %v2373 = vpack.c.b16 %v2341, %v2337
    %v2374 = vpack.c.b16 %v2342, %v2338
    %v2375 = vpack.c.b16 %v2343, %v2339
    %v2376 = vpack.c.b16 %v2344, %v2340
    %2409 = vmatprep.subr.bf16.mxu0 %v2374
    %2410 = vmatpush1.bf16.msra.mxu0 %v2373
    %2411 = vmatprep.subr.bf16.mxu0 %v2370
    %2412 = vmatpush1.bf16.msra.mxu0 %v2369
    %2413 = vmatprep.subr.bf16.mxu0 %v2366
    %2414 = vmatpush1.bf16.msra.mxu0 %v2365
    %2415 = vmatprep.subr.bf16.mxu0 %v2362
    %2416 = vmatpush1.bf16.msra.mxu0 %v2361
    %2417 = vmatprep.subr.bf16.mxu0 %v2358
    %2418 = vmatpush1.bf16.msra.mxu0 %v2357
    %2419 = vmatprep.subr.bf16.mxu0 %v2354
    %2420 = vmatpush1.bf16.msra.mxu0 %v2353
    %2421 = vmatprep.subr.bf16.mxu0 %v2350
    %2422 = vmatpush1.bf16.msra.mxu0 %v2349
    %2423 = vmatprep.subr.bf16.mxu0 %v2346
    %2424 = vmatpush1.bf16.msra.mxu0 %v2345
    %2425 = vmatprep.subr.bf16.mxu0 0
    %2426 = vmatpush2.bf16.msra.mxu0 0
    %2427 = vmatprep.subr.bf16.mxu0 0
    %2428 = vmatpush2.bf16.msra.mxu0 0
    %2429 = vmatprep.subr.bf16.mxu0 0
    %2430 = vmatpush2.bf16.msra.mxu0 0
    %2431 = vmatprep.subr.bf16.mxu0 0
    %2432 = vmatpush2.bf16.msra.mxu0 0
    %2433 = vmatprep.subr.bf16.mxu0 0
    %2434 = vmatpush2.bf16.msra.mxu0 0
    %2435 = vmatprep.subr.bf16.mxu0 0
    %2436 = vmatpush2.bf16.msra.mxu0 0
    %2437 = vmatprep.subr.bf16.mxu0 0
    %2438 = vmatpush2.bf16.msra.mxu0 0
    %2439 = vmatprep.subr.bf16.mxu0 0
    %2440 = vmatpush2.bf16.msra.mxu0 0
    %2441 = vmatprep.mubr.bf16.mxu0 0
    %2442 = vmatmul.mubr.bf16.gmra.mxu0 %v2248
    %v2443 = vpop.f32.mrf.mxu0
    %v2444 = vadd.f32 0.0, %v2443
    %v2445 = vpop.f32.mrf.mxu0
    %v2446 = vadd.f32 0.0, %v2445
    %v2447 = vpop.f32.mrf.mxu0
    %v2448 = vpop.f32.mrf.mxu0
    %2449 = vdwg.mxu0
    %2450 = vmatprep.subr.bf16.mxu0 %v2376
    %2451 = vmatpush1.bf16.msra.mxu0 %v2375
    %2452 = vmatprep.subr.bf16.mxu0 %v2372
    %2453 = vmatpush1.bf16.msra.mxu0 %v2371
    %2454 = vmatprep.subr.bf16.mxu0 %v2368
    %2455 = vmatpush1.bf16.msra.mxu0 %v2367
    %2456 = vmatprep.subr.bf16.mxu0 %v2364
    %2457 = vmatpush1.bf16.msra.mxu0 %v2363
    %2458 = vmatprep.subr.bf16.mxu0 %v2360
    %2459 = vmatpush1.bf16.msra.mxu0 %v2359
    %2460 = vmatprep.subr.bf16.mxu0 %v2356
    %2461 = vmatpush1.bf16.msra.mxu0 %v2355
    %2462 = vmatprep.subr.bf16.mxu0 %v2352
    %2463 = vmatpush1.bf16.msra.mxu0 %v2351
    %2464 = vmatprep.subr.bf16.mxu0 %v2348
    %2465 = vmatpush1.bf16.msra.mxu0 %v2347
    %2466 = vmatprep.subr.bf16.mxu0 0
    %2467 = vmatpush2.bf16.msra.mxu0 0
    %2468 = vmatprep.subr.bf16.mxu0 0
    %2469 = vmatpush2.bf16.msra.mxu0 0
    %2470 = vmatprep.subr.bf16.mxu0 0
    %2471 = vmatpush2.bf16.msra.mxu0 0
    %2472 = vmatprep.subr.bf16.mxu0 0
    %2473 = vmatpush2.bf16.msra.mxu0 0
    %2474 = vmatprep.subr.bf16.mxu0 0
    %2475 = vmatpush2.bf16.msra.mxu0 0
    %2476 = vmatprep.subr.bf16.mxu0 0
    %2477 = vmatpush2.bf16.msra.mxu0 0
    %2478 = vmatprep.subr.bf16.mxu0 0
    %2479 = vmatpush2.bf16.msra.mxu0 0
    %2480 = vmatprep.subr.bf16.mxu0 0
    %2481 = vmatpush2.bf16.msra.mxu0 0
    %2482 = vmatprep.mubr.bf16.mxu0 0
    %2483 = vmatmul.mubr.bf16.gmra.mxu0 %v2248
    %v2484 = vpop.f32.mrf.mxu0
    %v2485 = vadd.f32 0.0, %v2484
    %v2486 = vpop.f32.mrf.mxu0
    %v2487 = vadd.f32 0.0, %v2486
    %v2488 = vpop.f32.mrf.mxu0
    %v2489 = vpop.f32.mrf.mxu0
    %2490 = vdwg.mxu0
    %v2491 = vadd.f32 %v2244, %v2444
    %v2492 = vadd.f32 %v2245, %v2446
    %v2493 = vadd.f32 %v2246, %v2485
    %v2494 = vadd.f32 %v2247, %v2487
    %v2495 = vmul.f32 %v2491, 0.5
    %v2496 = vtanh.pop %v2495
    %v2497 = vmul.f32 %v2496, 0.5
    %v2498 = vadd.f32 %v2497, 0.5
    %v2499 = vmul.f32 %v2492, 0.5
    %v2500 = vtanh.pop %v2499
    %v2501 = vmul.f32 %v2500, 0.5
    %v2502 = vadd.f32 %v2501, 0.5
    %v2503 = vtanh.pop %v2493
    %v2504 = vmul.f32 %v2494, 0.5
    %v2505 = vtanh.pop %v2504
    %v2506 = vmul.f32 %v2505, 0.5
    %v2507 = vadd.f32 %v2506, 0.5
    %v2508 = vmul.f32 %v2502, %v2211
    %v2509 = vmul.f32 %v2498, %v2503
    %v2510 = vadd.f32 %v2508, %v2509
    %v2511 = vtanh.pop %v2510
    %v2512 = vmul.f32 %v2507, %v2511
    %s2513 = scalar_lea.vmem [#allocation7], 64
    %v2514 = vld [vmem:[%s2513] sm:$0xff]
    %v2515 = vld [vmem:[%s2513 + $0x8] sm:$0xff]
    %v2516 = vld [vmem:[%s625] sm:$0xff]
    %v2517 = vld [vmem:[%s627] sm:$0xff]
    %v2518 = vld [vmem:[%s629] sm:$0xff]
    %v2519 = vld [vmem:[%s629 + $0x8] sm:$0xff]
    %v2520 = vld [vmem:[%s629 + $0x10] sm:$0xff]
    %v2521 = vld [vmem:[%s629 + $0x18] sm:$0xff]
    %v2522 = vld [vmem:[%s629 + $0x20] sm:$0xff]
    %v2523 = vld [vmem:[%s629 + $0x28] sm:$0xff]
    %v2524 = vld [vmem:[%s629 + $0x30] sm:$0xff]
    %v2525 = vld [vmem:[%s629 + $0x38] sm:$0xff]
    %v2526 = vld [vmem:[%s629 + $0x40] sm:$0xff]
    %v2527 = vld [vmem:[%s629 + $0x48] sm:$0xff]
    %v2528 = vld [vmem:[%s629 + $0x50] sm:$0xff]
    %v2529 = vld [vmem:[%s629 + $0x58] sm:$0xff]
    %v2530 = vld [vmem:[%s629 + $0x60] sm:$0xff]
    %v2531 = vld [vmem:[%s629 + $0x68] sm:$0xff]
    %v2532 = vld [vmem:[%s629 + $0x70] sm:$0xff]
    %v2533 = vld [vmem:[%s629 + $0x78] sm:$0xff]
    %v2534 = vld [vmem:[%s629 + $0x80] sm:$0xff]
    %v2535 = vld [vmem:[%s629 + $0x88] sm:$0xff]
    %v2536 = vld [vmem:[%s629 + $0x90] sm:$0xff]
    %v2537 = vld [vmem:[%s629 + $0x98] sm:$0xff]
    %v2538 = vld [vmem:[%s629 + $0xa0] sm:$0xff]
    %v2539 = vld [vmem:[%s629 + $0xa8] sm:$0xff]
    %v2540 = vld [vmem:[%s629 + $0xb0] sm:$0xff]
    %v2541 = vld [vmem:[%s629 + $0xb8] sm:$0xff]
    %v2542 = vld [vmem:[%s629 + $0xc0] sm:$0xff]
    %v2543 = vld [vmem:[%s629 + $0xc8] sm:$0xff]
    %v2544 = vld [vmem:[%s629 + $0xd0] sm:$0xff]
    %v2545 = vld [vmem:[%s629 + $0xd8] sm:$0xff]
    %v2546 = vld [vmem:[%s629 + $0xe0] sm:$0xff]
    %v2547 = vld [vmem:[%s629 + $0xe8] sm:$0xff]
    %v2548 = vld [vmem:[%s629 + $0xf0] sm:$0xff]
    %v2549 = vld [vmem:[%s629 + $0xf8] sm:$0xff]
    %v2550 = vunpack.c.l.bf16 %v2514
    %v2551 = vunpack.c.h.bf16 %v2514
    %v2552 = vunpack.c.l.bf16 %v2515
    %v2553 = vunpack.c.h.bf16 %v2515
    %v2554 = vpack.c.bf16 %v2516, %v2516
    %v2587 = vunpack.c.l.b16 %v2518
    %v2588 = vunpack.c.h.b16 %v2518
    %v2589 = vunpack.c.l.b16 %v2519
    %v2590 = vunpack.c.h.b16 %v2519
    %v2591 = vunpack.c.l.b16 %v2520
    %v2592 = vunpack.c.h.b16 %v2520
    %v2593 = vunpack.c.l.b16 %v2521
    %v2594 = vunpack.c.h.b16 %v2521
    %v2595 = vunpack.c.l.b16 %v2522
    %v2596 = vunpack.c.h.b16 %v2522
    %v2597 = vunpack.c.l.b16 %v2523
    %v2598 = vunpack.c.h.b16 %v2523
    %v2599 = vunpack.c.l.b16 %v2524
    %v2600 = vunpack.c.h.b16 %v2524
    %v2601 = vunpack.c.l.b16 %v2525
    %v2602 = vunpack.c.h.b16 %v2525
    %v2603 = vunpack.c.l.b16 %v2526
    %v2604 = vunpack.c.h.b16 %v2526
    %v2605 = vunpack.c.l.b16 %v2527
    %v2606 = vunpack.c.h.b16 %v2527
    %v2607 = vunpack.c.l.b16 %v2528
    %v2608 = vunpack.c.h.b16 %v2528
    %v2609 = vunpack.c.l.b16 %v2529
    %v2610 = vunpack.c.h.b16 %v2529
    %v2611 = vunpack.c.l.b16 %v2530
    %v2612 = vunpack.c.h.b16 %v2530
    %v2613 = vunpack.c.l.b16 %v2531
    %v2614 = vunpack.c.h.b16 %v2531
    %v2615 = vunpack.c.l.b16 %v2532
    %v2616 = vunpack.c.h.b16 %v2532
    %v2617 = vunpack.c.l.b16 %v2533
    %v2618 = vunpack.c.h.b16 %v2533
    %v2619 = vunpack.c.l.b16 %v2534
    %v2620 = vunpack.c.h.b16 %v2534
    %v2621 = vunpack.c.l.b16 %v2535
    %v2622 = vunpack.c.h.b16 %v2535
    %v2623 = vunpack.c.l.b16 %v2536
    %v2624 = vunpack.c.h.b16 %v2536
    %v2625 = vunpack.c.l.b16 %v2537
    %v2626 = vunpack.c.h.b16 %v2537
    %v2627 = vunpack.c.l.b16 %v2538
    %v2628 = vunpack.c.h.b16 %v2538
    %v2629 = vunpack.c.l.b16 %v2539
    %v2630 = vunpack.c.h.b16 %v2539
    %v2631 = vunpack.c.l.b16 %v2540
    %v2632 = vunpack.c.h.b16 %v2540
    %v2633 = vunpack.c.l.b16 %v2541
    %v2634 = vunpack.c.h.b16 %v2541
    %v2635 = vunpack.c.l.b16 %v2542
    %v2636 = vunpack.c.h.b16 %v2542
    %v2637 = vunpack.c.l.b16 %v2543
    %v2638 = vunpack.c.h.b16 %v2543
    %v2639 = vunpack.c.l.b16 %v2544
    %v2640 = vunpack.c.h.b16 %v2544
    %v2641 = vunpack.c.l.b16 %v2545
    %v2642 = vunpack.c.h.b16 %v2545
    %v2643 = vunpack.c.l.b16 %v2546
    %v2644 = vunpack.c.h.b16 %v2546
    %v2645 = vunpack.c.l.b16 %v2547
    %v2646 = vunpack.c.h.b16 %v2547
    %v2647 = vunpack.c.l.b16 %v2548
    %v2648 = vunpack.c.h.b16 %v2548
    %v2649 = vunpack.c.l.b16 %v2549
    %v2650 = vunpack.c.h.b16 %v2549
    %v2651 = vpack.c.b16 %v2591, %v2587
    %v2652 = vpack.c.b16 %v2592, %v2588
    %v2653 = vpack.c.b16 %v2593, %v2589
    %v2654 = vpack.c.b16 %v2594, %v2590
    %v2655 = vpack.c.b16 %v2599, %v2595
    %v2656 = vpack.c.b16 %v2600, %v2596
    %v2657 = vpack.c.b16 %v2601, %v2597
    %v2658 = vpack.c.b16 %v2602, %v2598
    %v2659 = vpack.c.b16 %v2607, %v2603
    %v2660 = vpack.c.b16 %v2608, %v2604
    %v2661 = vpack.c.b16 %v2609, %v2605
    %v2662 = vpack.c.b16 %v2610, %v2606
    %v2663 = vpack.c.b16 %v2615, %v2611
    %v2664 = vpack.c.b16 %v2616, %v2612
    %v2665 = vpack.c.b16 %v2617, %v2613
    %v2666 = vpack.c.b16 %v2618, %v2614
    %v2667 = vpack.c.b16 %v2623, %v2619
    %v2668 = vpack.c.b16 %v2624, %v2620
    %v2669 = vpack.c.b16 %v2625, %v2621
    %v2670 = vpack.c.b16 %v2626, %v2622
    %v2671 = vpack.c.b16 %v2631, %v2627
    %v2672 = vpack.c.b16 %v2632, %v2628
    %v2673 = vpack.c.b16 %v2633, %v2629
    %v2674 = vpack.c.b16 %v2634, %v2630
    %v2675 = vpack.c.b16 %v2639, %v2635
    %v2676 = vpack.c.b16 %v2640, %v2636
    %v2677 = vpack.c.b16 %v2641, %v2637
    %v2678 = vpack.c.b16 %v2642, %v2638
    %v2679 = vpack.c.b16 %v2647, %v2643
    %v2680 = vpack.c.b16 %v2648, %v2644
    %v2681 = vpack.c.b16 %v2649, %v2645
    %v2682 = vpack.c.b16 %v2650, %v2646
    %2715 = vmatprep.subr.bf16.mxu0 %v2680
    %2716 = vmatpush1.bf16.msra.mxu0 %v2679
    %2717 = vmatprep.subr.bf16.mxu0 %v2676
    %2718 = vmatpush1.bf16.msra.mxu0 %v2675
    %2719 = vmatprep.subr.bf16.mxu0 %v2672
    %2720 = vmatpush1.bf16.msra.mxu0 %v2671
    %2721 = vmatprep.subr.bf16.mxu0 %v2668
    %2722 = vmatpush1.bf16.msra.mxu0 %v2667
    %2723 = vmatprep.subr.bf16.mxu0 %v2664
    %2724 = vmatpush1.bf16.msra.mxu0 %v2663
    %2725 = vmatprep.subr.bf16.mxu0 %v2660
    %2726 = vmatpush1.bf16.msra.mxu0 %v2659
    %2727 = vmatprep.subr.bf16.mxu0 %v2656
    %2728 = vmatpush1.bf16.msra.mxu0 %v2655
    %2729 = vmatprep.subr.bf16.mxu0 %v2652
    %2730 = vmatpush1.bf16.msra.mxu0 %v2651
    %2731 = vmatprep.subr.bf16.mxu0 0
    %2732 = vmatpush2.bf16.msra.mxu0 0
    %2733 = vmatprep.subr.bf16.mxu0 0
    %2734 = vmatpush2.bf16.msra.mxu0 0
    %2735 = vmatprep.subr.bf16.mxu0 0
    %2736 = vmatpush2.bf16.msra.mxu0 0
    %2737 = vmatprep.subr.bf16.mxu0 0
    %2738 = vmatpush2.bf16.msra.mxu0 0
    %2739 = vmatprep.subr.bf16.mxu0 0
    %2740 = vmatpush2.bf16.msra.mxu0 0
    %2741 = vmatprep.subr.bf16.mxu0 0
    %2742 = vmatpush2.bf16.msra.mxu0 0
    %2743 = vmatprep.subr.bf16.mxu0 0
    %2744 = vmatpush2.bf16.msra.mxu0 0
    %2745 = vmatprep.subr.bf16.mxu0 0
    %2746 = vmatpush2.bf16.msra.mxu0 0
    %2747 = vmatprep.mubr.bf16.mxu0 0
    %2748 = vmatmul.mubr.bf16.gmra.mxu0 %v2554
    %v2749 = vpop.f32.mrf.mxu0
    %v2750 = vadd.f32 0.0, %v2749
    %v2751 = vpop.f32.mrf.mxu0
    %v2752 = vadd.f32 0.0, %v2751
    %v2753 = vpop.f32.mrf.mxu0
    %v2754 = vpop.f32.mrf.mxu0
    %2755 = vdwg.mxu0
    %2756 = vmatprep.subr.bf16.mxu0 %v2682
    %2757 = vmatpush1.bf16.msra.mxu0 %v2681
    %2758 = vmatprep.subr.bf16.mxu0 %v2678
    %2759 = vmatpush1.bf16.msra.mxu0 %v2677
    %2760 = vmatprep.subr.bf16.mxu0 %v2674
    %2761 = vmatpush1.bf16.msra.mxu0 %v2673
    %2762 = vmatprep.subr.bf16.mxu0 %v2670
    %2763 = vmatpush1.bf16.msra.mxu0 %v2669
    %2764 = vmatprep.subr.bf16.mxu0 %v2666
    %2765 = vmatpush1.bf16.msra.mxu0 %v2665
    %2766 = vmatprep.subr.bf16.mxu0 %v2662
    %2767 = vmatpush1.bf16.msra.mxu0 %v2661
    %2768 = vmatprep.subr.bf16.mxu0 %v2658
    %2769 = vmatpush1.bf16.msra.mxu0 %v2657
    %2770 = vmatprep.subr.bf16.mxu0 %v2654
    %2771 = vmatpush1.bf16.msra.mxu0 %v2653
    %2772 = vmatprep.subr.bf16.mxu0 0
    %2773 = vmatpush2.bf16.msra.mxu0 0
    %2774 = vmatprep.subr.bf16.mxu0 0
    %2775 = vmatpush2.bf16.msra.mxu0 0
    %2776 = vmatprep.subr.bf16.mxu0 0
    %2777 = vmatpush2.bf16.msra.mxu0 0
    %2778 = vmatprep.subr.bf16.mxu0 0
    %2779 = vmatpush2.bf16.msra.mxu0 0
    %2780 = vmatprep.subr.bf16.mxu0 0
    %2781 = vmatpush2.bf16.msra.mxu0 0
    %2782 = vmatprep.subr.bf16.mxu0 0
    %2783 = vmatpush2.bf16.msra.mxu0 0
    %2784 = vmatprep.subr.bf16.mxu0 0
    %2785 = vmatpush2.bf16.msra.mxu0 0
    %2786 = vmatprep.subr.bf16.mxu0 0
    %2787 = vmatpush2.bf16.msra.mxu0 0
    %2788 = vmatprep.mubr.bf16.mxu0 0
    %2789 = vmatmul.mubr.bf16.gmra.mxu0 %v2554
    %v2790 = vpop.f32.mrf.mxu0
    %v2791 = vadd.f32 0.0, %v2790
    %v2792 = vpop.f32.mrf.mxu0
    %v2793 = vadd.f32 0.0, %v2792
    %v2794 = vpop.f32.mrf.mxu0
    %v2795 = vpop.f32.mrf.mxu0
    %2796 = vdwg.mxu0
    %v2797 = vadd.f32 %v2550, %v2750
    %v2798 = vadd.f32 %v2551, %v2752
    %v2799 = vadd.f32 %v2552, %v2791
    %v2800 = vadd.f32 %v2553, %v2793
    %v2801 = vmul.f32 %v2797, 0.5
    %v2802 = vtanh.pop %v2801
    %v2803 = vmul.f32 %v2802, 0.5
    %v2804 = vadd.f32 %v2803, 0.5
    %v2805 = vmul.f32 %v2798, 0.5
    %v2806 = vtanh.pop %v2805
    %v2807 = vmul.f32 %v2806, 0.5
    %v2808 = vadd.f32 %v2807, 0.5
    %v2809 = vtanh.pop %v2799
    %v2810 = vmul.f32 %v2800, 0.5
    %v2811 = vtanh.pop %v2810
    %v2812 = vmul.f32 %v2811, 0.5
    %v2813 = vadd.f32 %v2812, 0.5
    %v2814 = vmul.f32 %v2808, %v2517
    %v2815 = vmul.f32 %v2804, %v2809
    %v2816 = vadd.f32 %v2814, %v2815
    %v2817 = vtanh.pop %v2816
    %v2818 = vmul.f32 %v2813, %v2817
    %s2819 = sadd.s32 %s932, 4
    %p2820 = scmp.lt.s32.totalorder %s2819, 8
    %s2821 = scalar_select %p2820, 1, 0
    %s2822 = scvt.s32.f32 %s2821
    %v2823 = vstv %s2822
    %v2824 = vmul.f32 %v2818, %v2823
    %v2825 = vmul.f32 %v2816, %v2823
    %2826 = vst [vmem:[#allocation3] sm:$0xff] %v2512
    %2827 = vst [vmem:[#allocation4] sm:$0xff] %v2510
    %2828 = vst [vmem:[%s625] sm:$0xff] %v2824
    %2829 = vst [vmem:[%s627] sm:$0xff] %v2825
    %v2830 = vpack.c.bf16 %v2512, %v2512
    %s2831 = scalar_lea.vmem %s3, 12
    %2832 = vst [vmem:[%s2831] sm:$0xf] %v2830
    %v2833 = vpack.c.bf16 %v2824, %v2824
    %s2834 = scalar_lea.vmem %s131, 16
    %2835 = vst [vmem:[%s2834] sm:$0xf] %v2833
    %s2836 = scalar_lea.vmem [#allocation6], 64
    %v2837 = vld [vmem:[%s2836] sm:$0xff]
    %v2838 = vld [vmem:[%s2836 + $0x8] sm:$0xff]
    %v2839 = vld [vmem:[#allocation3] sm:$0xff]
    %v2840 = vld [vmem:[#allocation4] sm:$0xff]
    %v2841 = vld [vmem:[#allocation2] sm:$0xff]
    %v2842 = vld [vmem:[#allocation2 + $0x8] sm:$0xff]
    %v2843 = vld [vmem:[#allocation2 + $0x10] sm:$0xff]
    %v2844 = vld [vmem:[#allocation2 + $0x18] sm:$0xff]
    %v2845 = vld [vmem:[#allocation2 + $0x20] sm:$0xff]
    %v2846 = vld [vmem:[#allocation2 + $0x28] sm:$0xff]
    %v2847 = vld [vmem:[#allocation2 + $0x30] sm:$0xff]
    %v2848 = vld [vmem:[#allocation2 + $0x38] sm:$0xff]
    %v2849 = vld [vmem:[#allocation2 + $0x40] sm:$0xff]
    %v2850 = vld [vmem:[#allocation2 + $0x48] sm:$0xff]
    %v2851 = vld [vmem:[#allocation2 + $0x50] sm:$0xff]
    %v2852 = vld [vmem:[#allocation2 + $0x58] sm:$0xff]
    %v2853 = vld [vmem:[#allocation2 + $0x60] sm:$0xff]
    %v2854 = vld [vmem:[#allocation2 + $0x68] sm:$0xff]
    %v2855 = vld [vmem:[#allocation2 + $0x70] sm:$0xff]
    %v2856 = vld [vmem:[#allocation2 + $0x78] sm:$0xff]
    %v2857 = vld [vmem:[#allocation2 + $0x80] sm:$0xff]
    %v2858 = vld [vmem:[#allocation2 + $0x88] sm:$0xff]
    %v2859 = vld [vmem:[#allocation2 + $0x90] sm:$0xff]
    %v2860 = vld [vmem:[#allocation2 + $0x98] sm:$0xff]
    %v2861 = vld [vmem:[#allocation2 + $0xa0] sm:$0xff]
    %v2862 = vld [vmem:[#allocation2 + $0xa8] sm:$0xff]
    %v2863 = vld [vmem:[#allocation2 + $0xb0] sm:$0xff]
    %v2864 = vld [vmem:[#allocation2 + $0xb8] sm:$0xff]
    %v2865 = vld [vmem:[#allocation2 + $0xc0] sm:$0xff]
    %v2866 = vld [vmem:[#allocation2 + $0xc8] sm:$0xff]
    %v2867 = vld [vmem:[#allocation2 + $0xd0] sm:$0xff]
    %v2868 = vld [vmem:[#allocation2 + $0xd8] sm:$0xff]
    %v2869 = vld [vmem:[#allocation2 + $0xe0] sm:$0xff]
    %v2870 = vld [vmem:[#allocation2 + $0xe8] sm:$0xff]
    %v2871 = vld [vmem:[#allocation2 + $0xf0] sm:$0xff]
    %v2872 = vld [vmem:[#allocation2 + $0xf8] sm:$0xff]
    %v2873 = vunpack.c.l.bf16 %v2837
    %v2874 = vunpack.c.h.bf16 %v2837
    %v2875 = vunpack.c.l.bf16 %v2838
    %v2876 = vunpack.c.h.bf16 %v2838
    %v2877 = vpack.c.bf16 %v2839, %v2839
    %v2910 = vunpack.c.l.b16 %v2841
    %v2911 = vunpack.c.h.b16 %v2841
    %v2912 = vunpack.c.l.b16 %v2842
    %v2913 = vunpack.c.h.b16 %v2842
    %v2914 = vunpack.c.l.b16 %v2843
    %v2915 = vunpack.c.h.b16 %v2843
    %v2916 = vunpack.c.l.b16 %v2844
    %v2917 = vunpack.c.h.b16 %v2844
    %v2918 = vunpack.c.l.b16 %v2845
    %v2919 = vunpack.c.h.b16 %v2845
    %v2920 = vunpack.c.l.b16 %v2846
    %v2921 = vunpack.c.h.b16 %v2846
    %v2922 = vunpack.c.l.b16 %v2847
    %v2923 = vunpack.c.h.b16 %v2847
    %v2924 = vunpack.c.l.b16 %v2848
    %v2925 = vunpack.c.h.b16 %v2848
    %v2926 = vunpack.c.l.b16 %v2849
    %v2927 = vunpack.c.h.b16 %v2849
    %v2928 = vunpack.c.l.b16 %v2850
    %v2929 = vunpack.c.h.b16 %v2850
    %v2930 = vunpack.c.l.b16 %v2851
    %v2931 = vunpack.c.h.b16 %v2851
    %v2932 = vunpack.c.l.b16 %v2852
    %v2933 = vunpack.c.h.b16 %v2852
    %v2934 = vunpack.c.l.b16 %v2853
    %v2935 = vunpack.c.h.b16 %v2853
    %v2936 = vunpack.c.l.b16 %v2854
    %v2937 = vunpack.c.h.b16 %v2854
    %v2938 = vunpack.c.l.b16 %v2855
    %v2939 = vunpack.c.h.b16 %v2855
    %v2940 = vunpack.c.l.b16 %v2856
    %v2941 = vunpack.c.h.b16 %v2856
    %v2942 = vunpack.c.l.b16 %v2857
    %v2943 = vunpack.c.h.b16 %v2857
    %v2944 = vunpack.c.l.b16 %v2858
    %v2945 = vunpack.c.h.b16 %v2858
    %v2946 = vunpack.c.l.b16 %v2859
    %v2947 = vunpack.c.h.b16 %v2859
    %v2948 = vunpack.c.l.b16 %v2860
    %v2949 = vunpack.c.h.b16 %v2860
    %v2950 = vunpack.c.l.b16 %v2861
    %v2951 = vunpack.c.h.b16 %v2861
    %v2952 = vunpack.c.l.b16 %v2862
    %v2953 = vunpack.c.h.b16 %v2862
    %v2954 = vunpack.c.l.b16 %v2863
    %v2955 = vunpack.c.h.b16 %v2863
    %v2956 = vunpack.c.l.b16 %v2864
    %v2957 = vunpack.c.h.b16 %v2864
    %v2958 = vunpack.c.l.b16 %v2865
    %v2959 = vunpack.c.h.b16 %v2865
    %v2960 = vunpack.c.l.b16 %v2866
    %v2961 = vunpack.c.h.b16 %v2866
    %v2962 = vunpack.c.l.b16 %v2867
    %v2963 = vunpack.c.h.b16 %v2867
    %v2964 = vunpack.c.l.b16 %v2868
    %v2965 = vunpack.c.h.b16 %v2868
    %v2966 = vunpack.c.l.b16 %v2869
    %v2967 = vunpack.c.h.b16 %v2869
    %v2968 = vunpack.c.l.b16 %v2870
    %v2969 = vunpack.c.h.b16 %v2870
    %v2970 = vunpack.c.l.b16 %v2871
    %v2971 = vunpack.c.h.b16 %v2871
    %v2972 = vunpack.c.l.b16 %v2872
    %v2973 = vunpack.c.h.b16 %v2872
    %v2974 = vpack.c.b16 %v2914, %v2910
    %v2975 = vpack.c.b16 %v2915, %v2911
    %v2976 = vpack.c.b16 %v2916, %v2912
    %v2977 = vpack.c.b16 %v2917, %v2913
    %v2978 = vpack.c.b16 %v2922, %v2918
    %v2979 = vpack.c.b16 %v2923, %v2919
    %v2980 = vpack.c.b16 %v2924, %v2920
    %v2981 = vpack.c.b16 %v2925, %v2921
    %v2982 = vpack.c.b16 %v2930, %v2926
    %v2983 = vpack.c.b16 %v2931, %v2927
    %v2984 = vpack.c.b16 %v2932, %v2928
    %v2985 = vpack.c.b16 %v2933, %v2929
    %v2986 = vpack.c.b16 %v2938, %v2934
    %v2987 = vpack.c.b16 %v2939, %v2935
    %v2988 = vpack.c.b16 %v2940, %v2936
    %v2989 = vpack.c.b16 %v2941, %v2937
    %v2990 = vpack.c.b16 %v2946, %v2942
    %v2991 = vpack.c.b16 %v2947, %v2943
    %v2992 = vpack.c.b16 %v2948, %v2944
    %v2993 = vpack.c.b16 %v2949, %v2945
    %v2994 = vpack.c.b16 %v2954, %v2950
    %v2995 = vpack.c.b16 %v2955, %v2951
    %v2996 = vpack.c.b16 %v2956, %v2952
    %v2997 = vpack.c.b16 %v2957, %v2953
    %v2998 = vpack.c.b16 %v2962, %v2958
    %v2999 = vpack.c.b16 %v2963, %v2959
    %v3000 = vpack.c.b16 %v2964, %v2960
    %v3001 = vpack.c.b16 %v2965, %v2961
    %v3002 = vpack.c.b16 %v2970, %v2966
    %v3003 = vpack.c.b16 %v2971, %v2967
    %v3004 = vpack.c.b16 %v2972, %v2968
    %v3005 = vpack.c.b16 %v2973, %v2969
    %3038 = vmatprep.subr.bf16.mxu0 %v3003
    %3039 = vmatpush1.bf16.msra.mxu0 %v3002
    %3040 = vmatprep.subr.bf16.mxu0 %v2999
    %3041 = vmatpush1.bf16.msra.mxu0 %v2998
    %3042 = vmatprep.subr.bf16.mxu0 %v2995
    %3043 = vmatpush1.bf16.msra.mxu0 %v2994
    %3044 = vmatprep.subr.bf16.mxu0 %v2991
    %3045 = vmatpush1.bf16.msra.mxu0 %v2990
    %3046 = vmatprep.subr.bf16.mxu0 %v2987
    %3047 = vmatpush1.bf16.msra.mxu0 %v2986
    %3048 = vmatprep.subr.bf16.mxu0 %v2983
    %3049 = vmatpush1.bf16.msra.mxu0 %v2982
    %3050 = vmatprep.subr.bf16.mxu0 %v2979
    %3051 = vmatpush1.bf16.msra.mxu0 %v2978
    %3052 = vmatprep.subr.bf16.mxu0 %v2975
    %3053 = vmatpush1.bf16.msra.mxu0 %v2974
    %3054 = vmatprep.subr.bf16.mxu0 0
    %3055 = vmatpush2.bf16.msra.mxu0 0
    %3056 = vmatprep.subr.bf16.mxu0 0
    %3057 = vmatpush2.bf16.msra.mxu0 0
    %3058 = vmatprep.subr.bf16.mxu0 0
    %3059 = vmatpush2.bf16.msra.mxu0 0
    %3060 = vmatprep.subr.bf16.mxu0 0
    %3061 = vmatpush2.bf16.msra.mxu0 0
    %3062 = vmatprep.subr.bf16.mxu0 0
    %3063 = vmatpush2.bf16.msra.mxu0 0
    %3064 = vmatprep.subr.bf16.mxu0 0
    %3065 = vmatpush2.bf16.msra.mxu0 0
    %3066 = vmatprep.subr.bf16.mxu0 0
    %3067 = vmatpush2.bf16.msra.mxu0 0
    %3068 = vmatprep.subr.bf16.mxu0 0
    %3069 = vmatpush2.bf16.msra.mxu0 0
    %3070 = vmatprep.mubr.bf16.mxu0 0
    %3071 = vmatmul.mubr.bf16.gmra.mxu0 %v2877
    %v3072 = vpop.f32.mrf.mxu0
    %v3073 = vadd.f32 0.0, %v3072
    %v3074 = vpop.f32.mrf.mxu0
    %v3075 = vadd.f32 0.0, %v3074
    %v3076 = vpop.f32.mrf.mxu0
    %v3077 = vpop.f32.mrf.mxu0
    %3078 = vdwg.mxu0
    %3079 = vmatprep.subr.bf16.mxu0 %v3005
    %3080 = vmatpush1.bf16.msra.mxu0 %v3004
    %3081 = vmatprep.subr.bf16.mxu0 %v3001
    %3082 = vmatpush1.bf16.msra.mxu0 %v3000
    %3083 = vmatprep.subr.bf16.mxu0 %v2997
    %3084 = vmatpush1.bf16.msra.mxu0 %v2996
    %3085 = vmatprep.subr.bf16.mxu0 %v2993
    %3086 = vmatpush1.bf16.msra.mxu0 %v2992
    %3087 = vmatprep.subr.bf16.mxu0 %v2989
    %3088 = vmatpush1.bf16.msra.mxu0 %v2988
    %3089 = vmatprep.subr.bf16.mxu0 %v2985
    %3090 = vmatpush1.bf16.msra.mxu0 %v2984
    %3091 = vmatprep.subr.bf16.mxu0 %v2981
    %3092 = vmatpush1.bf16.msra.mxu0 %v2980
    %3093 = vmatprep.subr.bf16.mxu0 %v2977
    %3094 = vmatpush1.bf16.msra.mxu0 %v2976
    %3095 = vmatprep.subr.bf16.mxu0 0
    %3096 = vmatpush2.bf16.msra.mxu0 0
    %3097 = vmatprep.subr.bf16.mxu0 0
    %3098 = vmatpush2.bf16.msra.mxu0 0
    %3099 = vmatprep.subr.bf16.mxu0 0
    %3100 = vmatpush2.bf16.msra.mxu0 0
    %3101 = vmatprep.subr.bf16.mxu0 0
    %3102 = vmatpush2.bf16.msra.mxu0 0
    %3103 = vmatprep.subr.bf16.mxu0 0
    %3104 = vmatpush2.bf16.msra.mxu0 0
    %3105 = vmatprep.subr.bf16.mxu0 0
    %3106 = vmatpush2.bf16.msra.mxu0 0
    %3107 = vmatprep.subr.bf16.mxu0 0
    %3108 = vmatpush2.bf16.msra.mxu0 0
    %3109 = vmatprep.subr.bf16.mxu0 0
    %3110 = vmatpush2.bf16.msra.mxu0 0
    %3111 = vmatprep.mubr.bf16.mxu0 0
    %3112 = vmatmul.mubr.bf16.gmra.mxu0 %v2877
    %v3113 = vpop.f32.mrf.mxu0
    %v3114 = vadd.f32 0.0, %v3113
    %v3115 = vpop.f32.mrf.mxu0
    %v3116 = vadd.f32 0.0, %v3115
    %v3117 = vpop.f32.mrf.mxu0
    %v3118 = vpop.f32.mrf.mxu0
    %3119 = vdwg.mxu0
    %v3120 = vadd.f32 %v2873, %v3073
    %v3121 = vadd.f32 %v2874, %v3075
    %v3122 = vadd.f32 %v2875, %v3114
    %v3123 = vadd.f32 %v2876, %v3116
    %v3124 = vmul.f32 %v3120, 0.5
    %v3125 = vtanh.pop %v3124
    %v3126 = vmul.f32 %v3125, 0.5
    %v3127 = vadd.f32 %v3126, 0.5
    %v3128 = vmul.f32 %v3121, 0.5
    %v3129 = vtanh.pop %v3128
    %v3130 = vmul.f32 %v3129, 0.5
    %v3131 = vadd.f32 %v3130, 0.5
    %v3132 = vtanh.pop %v3122
    %v3133 = vmul.f32 %v3123, 0.5
    %v3134 = vtanh.pop %v3133
    %v3135 = vmul.f32 %v3134, 0.5
    %v3136 = vadd.f32 %v3135, 0.5
    %v3137 = vmul.f32 %v3131, %v2840
    %v3138 = vmul.f32 %v3127, %v3132
    %v3139 = vadd.f32 %v3137, %v3138
    %v3140 = vtanh.pop %v3139
    %v3141 = vmul.f32 %v3136, %v3140
    %s3142 = scalar_lea.vmem [#allocation7], 48
    %v3143 = vld [vmem:[%s3142] sm:$0xff]
    %v3144 = vld [vmem:[%s3142 + $0x8] sm:$0xff]
    %v3145 = vld [vmem:[%s625] sm:$0xff]
    %v3146 = vld [vmem:[%s627] sm:$0xff]
    %v3147 = vld [vmem:[%s629] sm:$0xff]
    %v3148 = vld [vmem:[%s629 + $0x8] sm:$0xff]
    %v3149 = vld [vmem:[%s629 + $0x10] sm:$0xff]
    %v3150 = vld [vmem:[%s629 + $0x18] sm:$0xff]
    %v3151 = vld [vmem:[%s629 + $0x20] sm:$0xff]
    %v3152 = vld [vmem:[%s629 + $0x28] sm:$0xff]
    %v3153 = vld [vmem:[%s629 + $0x30] sm:$0xff]
    %v3154 = vld [vmem:[%s629 + $0x38] sm:$0xff]
    %v3155 = vld [vmem:[%s629 + $0x40] sm:$0xff]
    %v3156 = vld [vmem:[%s629 + $0x48] sm:$0xff]
    %v3157 = vld [vmem:[%s629 + $0x50] sm:$0xff]
    %v3158 = vld [vmem:[%s629 + $0x58] sm:$0xff]
    %v3159 = vld [vmem:[%s629 + $0x60] sm:$0xff]
    %v3160 = vld [vmem:[%s629 + $0x68] sm:$0xff]
    %v3161 = vld [vmem:[%s629 + $0x70] sm:$0xff]
    %v3162 = vld [vmem:[%s629 + $0x78] sm:$0xff]
    %v3163 = vld [vmem:[%s629 + $0x80] sm:$0xff]
    %v3164 = vld [vmem:[%s629 + $0x88] sm:$0xff]
    %v3165 = vld [vmem:[%s629 + $0x90] sm:$0xff]
    %v3166 = vld [vmem:[%s629 + $0x98] sm:$0xff]
    %v3167 = vld [vmem:[%s629 + $0xa0] sm:$0xff]
    %v3168 = vld [vmem:[%s629 + $0xa8] sm:$0xff]
    %v3169 = vld [vmem:[%s629 + $0xb0] sm:$0xff]
    %v3170 = vld [vmem:[%s629 + $0xb8] sm:$0xff]
    %v3171 = vld [vmem:[%s629 + $0xc0] sm:$0xff]
    %v3172 = vld [vmem:[%s629 + $0xc8] sm:$0xff]
    %v3173 = vld [vmem:[%s629 + $0xd0] sm:$0xff]
    %v3174 = vld [vmem:[%s629 + $0xd8] sm:$0xff]
    %v3175 = vld [vmem:[%s629 + $0xe0] sm:$0xff]
    %v3176 = vld [vmem:[%s629 + $0xe8] sm:$0xff]
    %v3177 = vld [vmem:[%s629 + $0xf0] sm:$0xff]
    %v3178 = vld [vmem:[%s629 + $0xf8] sm:$0xff]
    %v3179 = vunpack.c.l.bf16 %v3143
    %v3180 = vunpack.c.h.bf16 %v3143
    %v3181 = vunpack.c.l.bf16 %v3144
    %v3182 = vunpack.c.h.bf16 %v3144
    %v3183 = vpack.c.bf16 %v3145, %v3145
    %v3216 = vunpack.c.l.b16 %v3147
    %v3217 = vunpack.c.h.b16 %v3147
    %v3218 = vunpack.c.l.b16 %v3148
    %v3219 = vunpack.c.h.b16 %v3148
    %v3220 = vunpack.c.l.b16 %v3149
    %v3221 = vunpack.c.h.b16 %v3149
    %v3222 = vunpack.c.l.b16 %v3150
    %v3223 = vunpack.c.h.b16 %v3150
    %v3224 = vunpack.c.l.b16 %v3151
    %v3225 = vunpack.c.h.b16 %v3151
    %v3226 = vunpack.c.l.b16 %v3152
    %v3227 = vunpack.c.h.b16 %v3152
    %v3228 = vunpack.c.l.b16 %v3153
    %v3229 = vunpack.c.h.b16 %v3153
    %v3230 = vunpack.c.l.b16 %v3154
    %v3231 = vunpack.c.h.b16 %v3154
    %v3232 = vunpack.c.l.b16 %v3155
    %v3233 = vunpack.c.h.b16 %v3155
    %v3234 = vunpack.c.l.b16 %v3156
    %v3235 = vunpack.c.h.b16 %v3156
    %v3236 = vunpack.c.l.b16 %v3157
    %v3237 = vunpack.c.h.b16 %v3157
    %v3238 = vunpack.c.l.b16 %v3158
    %v3239 = vunpack.c.h.b16 %v3158
    %v3240 = vunpack.c.l.b16 %v3159
    %v3241 = vunpack.c.h.b16 %v3159
    %v3242 = vunpack.c.l.b16 %v3160
    %v3243 = vunpack.c.h.b16 %v3160
    %v3244 = vunpack.c.l.b16 %v3161
    %v3245 = vunpack.c.h.b16 %v3161
    %v3246 = vunpack.c.l.b16 %v3162
    %v3247 = vunpack.c.h.b16 %v3162
    %v3248 = vunpack.c.l.b16 %v3163
    %v3249 = vunpack.c.h.b16 %v3163
    %v3250 = vunpack.c.l.b16 %v3164
    %v3251 = vunpack.c.h.b16 %v3164
    %v3252 = vunpack.c.l.b16 %v3165
    %v3253 = vunpack.c.h.b16 %v3165
    %v3254 = vunpack.c.l.b16 %v3166
    %v3255 = vunpack.c.h.b16 %v3166
    %v3256 = vunpack.c.l.b16 %v3167
    %v3257 = vunpack.c.h.b16 %v3167
    %v3258 = vunpack.c.l.b16 %v3168
    %v3259 = vunpack.c.h.b16 %v3168
    %v3260 = vunpack.c.l.b16 %v3169
    %v3261 = vunpack.c.h.b16 %v3169
    %v3262 = vunpack.c.l.b16 %v3170
    %v3263 = vunpack.c.h.b16 %v3170
    %v3264 = vunpack.c.l.b16 %v3171
    %v3265 = vunpack.c.h.b16 %v3171
    %v3266 = vunpack.c.l.b16 %v3172
    %v3267 = vunpack.c.h.b16 %v3172
    %v3268 = vunpack.c.l.b16 %v3173
    %v3269 = vunpack.c.h.b16 %v3173
    %v3270 = vunpack.c.l.b16 %v3174
    %v3271 = vunpack.c.h.b16 %v3174
    %v3272 = vunpack.c.l.b16 %v3175
    %v3273 = vunpack.c.h.b16 %v3175
    %v3274 = vunpack.c.l.b16 %v3176
    %v3275 = vunpack.c.h.b16 %v3176
    %v3276 = vunpack.c.l.b16 %v3177
    %v3277 = vunpack.c.h.b16 %v3177
    %v3278 = vunpack.c.l.b16 %v3178
    %v3279 = vunpack.c.h.b16 %v3178
    %v3280 = vpack.c.b16 %v3220, %v3216
    %v3281 = vpack.c.b16 %v3221, %v3217
    %v3282 = vpack.c.b16 %v3222, %v3218
    %v3283 = vpack.c.b16 %v3223, %v3219
    %v3284 = vpack.c.b16 %v3228, %v3224
    %v3285 = vpack.c.b16 %v3229, %v3225
    %v3286 = vpack.c.b16 %v3230, %v3226
    %v3287 = vpack.c.b16 %v3231, %v3227
    %v3288 = vpack.c.b16 %v3236, %v3232
    %v3289 = vpack.c.b16 %v3237, %v3233
    %v3290 = vpack.c.b16 %v3238, %v3234
    %v3291 = vpack.c.b16 %v3239, %v3235
    %v3292 = vpack.c.b16 %v3244, %v3240
    %v3293 = vpack.c.b16 %v3245, %v3241
    %v3294 = vpack.c.b16 %v3246, %v3242
    %v3295 = vpack.c.b16 %v3247, %v3243
    %v3296 = vpack.c.b16 %v3252, %v3248
    %v3297 = vpack.c.b16 %v3253, %v3249
    %v3298 = vpack.c.b16 %v3254, %v3250
    %v3299 = vpack.c.b16 %v3255, %v3251
    %v3300 = vpack.c.b16 %v3260, %v3256
    %v3301 = vpack.c.b16 %v3261, %v3257
    %v3302 = vpack.c.b16 %v3262, %v3258
    %v3303 = vpack.c.b16 %v3263, %v3259
    %v3304 = vpack.c.b16 %v3268, %v3264
    %v3305 = vpack.c.b16 %v3269, %v3265
    %v3306 = vpack.c.b16 %v3270, %v3266
    %v3307 = vpack.c.b16 %v3271, %v3267
    %v3308 = vpack.c.b16 %v3276, %v3272
    %v3309 = vpack.c.b16 %v3277, %v3273
    %v3310 = vpack.c.b16 %v3278, %v3274
    %v3311 = vpack.c.b16 %v3279, %v3275
    %3344 = vmatprep.subr.bf16.mxu0 %v3309
    %3345 = vmatpush1.bf16.msra.mxu0 %v3308
    %3346 = vmatprep.subr.bf16.mxu0 %v3305
    %3347 = vmatpush1.bf16.msra.mxu0 %v3304
    %3348 = vmatprep.subr.bf16.mxu0 %v3301
    %3349 = vmatpush1.bf16.msra.mxu0 %v3300
    %3350 = vmatprep.subr.bf16.mxu0 %v3297
    %3351 = vmatpush1.bf16.msra.mxu0 %v3296
    %3352 = vmatprep.subr.bf16.mxu0 %v3293
    %3353 = vmatpush1.bf16.msra.mxu0 %v3292
    %3354 = vmatprep.subr.bf16.mxu0 %v3289
    %3355 = vmatpush1.bf16.msra.mxu0 %v3288
    %3356 = vmatprep.subr.bf16.mxu0 %v3285
    %3357 = vmatpush1.bf16.msra.mxu0 %v3284
    %3358 = vmatprep.subr.bf16.mxu0 %v3281
    %3359 = vmatpush1.bf16.msra.mxu0 %v3280
    %3360 = vmatprep.subr.bf16.mxu0 0
    %3361 = vmatpush2.bf16.msra.mxu0 0
    %3362 = vmatprep.subr.bf16.mxu0 0
    %3363 = vmatpush2.bf16.msra.mxu0 0
    %3364 = vmatprep.subr.bf16.mxu0 0
    %3365 = vmatpush2.bf16.msra.mxu0 0
    %3366 = vmatprep.subr.bf16.mxu0 0
    %3367 = vmatpush2.bf16.msra.mxu0 0
    %3368 = vmatprep.subr.bf16.mxu0 0
    %3369 = vmatpush2.bf16.msra.mxu0 0
    %3370 = vmatprep.subr.bf16.mxu0 0
    %3371 = vmatpush2.bf16.msra.mxu0 0
    %3372 = vmatprep.subr.bf16.mxu0 0
    %3373 = vmatpush2.bf16.msra.mxu0 0
    %3374 = vmatprep.subr.bf16.mxu0 0
    %3375 = vmatpush2.bf16.msra.mxu0 0
    %3376 = vmatprep.mubr.bf16.mxu0 0
    %3377 = vmatmul.mubr.bf16.gmra.mxu0 %v3183
    %v3378 = vpop.f32.mrf.mxu0
    %v3379 = vadd.f32 0.0, %v3378
    %v3380 = vpop.f32.mrf.mxu0
    %v3381 = vadd.f32 0.0, %v3380
    %v3382 = vpop.f32.mrf.mxu0
    %v3383 = vpop.f32.mrf.mxu0
    %3384 = vdwg.mxu0
    %3385 = vmatprep.subr.bf16.mxu0 %v3311
    %3386 = vmatpush1.bf16.msra.mxu0 %v3310
    %3387 = vmatprep.subr.bf16.mxu0 %v3307
    %3388 = vmatpush1.bf16.msra.mxu0 %v3306
    %3389 = vmatprep.subr.bf16.mxu0 %v3303
    %3390 = vmatpush1.bf16.msra.mxu0 %v3302
    %3391 = vmatprep.subr.bf16.mxu0 %v3299
    %3392 = vmatpush1.bf16.msra.mxu0 %v3298
    %3393 = vmatprep.subr.bf16.mxu0 %v3295
    %3394 = vmatpush1.bf16.msra.mxu0 %v3294
    %3395 = vmatprep.subr.bf16.mxu0 %v3291
    %3396 = vmatpush1.bf16.msra.mxu0 %v3290
    %3397 = vmatprep.subr.bf16.mxu0 %v3287
    %3398 = vmatpush1.bf16.msra.mxu0 %v3286
    %3399 = vmatprep.subr.bf16.mxu0 %v3283
    %3400 = vmatpush1.bf16.msra.mxu0 %v3282
    %3401 = vmatprep.subr.bf16.mxu0 0
    %3402 = vmatpush2.bf16.msra.mxu0 0
    %3403 = vmatprep.subr.bf16.mxu0 0
    %3404 = vmatpush2.bf16.msra.mxu0 0
    %3405 = vmatprep.subr.bf16.mxu0 0
    %3406 = vmatpush2.bf16.msra.mxu0 0
    %3407 = vmatprep.subr.bf16.mxu0 0
    %3408 = vmatpush2.bf16.msra.mxu0 0
    %3409 = vmatprep.subr.bf16.mxu0 0
    %3410 = vmatpush2.bf16.msra.mxu0 0
    %3411 = vmatprep.subr.bf16.mxu0 0
    %3412 = vmatpush2.bf16.msra.mxu0 0
    %3413 = vmatprep.subr.bf16.mxu0 0
    %3414 = vmatpush2.bf16.msra.mxu0 0
    %3415 = vmatprep.subr.bf16.mxu0 0
    %3416 = vmatpush2.bf16.msra.mxu0 0
    %3417 = vmatprep.mubr.bf16.mxu0 0
    %3418 = vmatmul.mubr.bf16.gmra.mxu0 %v3183
    %v3419 = vpop.f32.mrf.mxu0
    %v3420 = vadd.f32 0.0, %v3419
    %v3421 = vpop.f32.mrf.mxu0
    %v3422 = vadd.f32 0.0, %v3421
    %v3423 = vpop.f32.mrf.mxu0
    %v3424 = vpop.f32.mrf.mxu0
    %3425 = vdwg.mxu0
    %v3426 = vadd.f32 %v3179, %v3379
    %v3427 = vadd.f32 %v3180, %v3381
    %v3428 = vadd.f32 %v3181, %v3420
    %v3429 = vadd.f32 %v3182, %v3422
    %v3430 = vmul.f32 %v3426, 0.5
    %v3431 = vtanh.pop %v3430
    %v3432 = vmul.f32 %v3431, 0.5
    %v3433 = vadd.f32 %v3432, 0.5
    %v3434 = vmul.f32 %v3427, 0.5
    %v3435 = vtanh.pop %v3434
    %v3436 = vmul.f32 %v3435, 0.5
    %v3437 = vadd.f32 %v3436, 0.5
    %v3438 = vtanh.pop %v3428
    %v3439 = vmul.f32 %v3429, 0.5
    %v3440 = vtanh.pop %v3439
    %v3441 = vmul.f32 %v3440, 0.5
    %v3442 = vadd.f32 %v3441, 0.5
    %v3443 = vmul.f32 %v3437, %v3146
    %v3444 = vmul.f32 %v3433, %v3438
    %v3445 = vadd.f32 %v3443, %v3444
    %v3446 = vtanh.pop %v3445
    %v3447 = vmul.f32 %v3442, %v3446
    %s3448 = sadd.s32 %s932, 3
    %p3449 = scmp.lt.s32.totalorder %s3448, 8
    %s3450 = scalar_select %p3449, 1, 0
    %s3451 = scvt.s32.f32 %s3450
    %v3452 = vstv %s3451
    %v3453 = vmul.f32 %v3447, %v3452
    %v3454 = vmul.f32 %v3445, %v3452
    %3455 = vst [vmem:[#allocation3] sm:$0xff] %v3141
    %3456 = vst [vmem:[#allocation4] sm:$0xff] %v3139
    %3457 = vst [vmem:[%s625] sm:$0xff] %v3453
    %3458 = vst [vmem:[%s627] sm:$0xff] %v3454
    %v3459 = vpack.c.bf16 %v3141, %v3141
    %s3460 = scalar_lea.vmem %s3, 16
    %3461 = vst [vmem:[%s3460] sm:$0xf] %v3459
    %v3462 = vpack.c.bf16 %v3453, %v3453
    %s3463 = scalar_lea.vmem %s131, 12
    %3464 = vst [vmem:[%s3463] sm:$0xf] %v3462
    %s3465 = scalar_lea.vmem [#allocation6], 80
    %v3466 = vld [vmem:[%s3465] sm:$0xff]
    %v3467 = vld [vmem:[%s3465 + $0x8] sm:$0xff]
    %v3468 = vld [vmem:[#allocation3] sm:$0xff]
    %v3469 = vld [vmem:[#allocation4] sm:$0xff]
    %v3470 = vld [vmem:[#allocation2] sm:$0xff]
    %v3471 = vld [vmem:[#allocation2 + $0x8] sm:$0xff]
    %v3472 = vld [vmem:[#allocation2 + $0x10] sm:$0xff]
    %v3473 = vld [vmem:[#allocation2 + $0x18] sm:$0xff]
    %v3474 = vld [vmem:[#allocation2 + $0x20] sm:$0xff]
    %v3475 = vld [vmem:[#allocation2 + $0x28] sm:$0xff]
    %v3476 = vld [vmem:[#allocation2 + $0x30] sm:$0xff]
    %v3477 = vld [vmem:[#allocation2 + $0x38] sm:$0xff]
    %v3478 = vld [vmem:[#allocation2 + $0x40] sm:$0xff]
    %v3479 = vld [vmem:[#allocation2 + $0x48] sm:$0xff]
    %v3480 = vld [vmem:[#allocation2 + $0x50] sm:$0xff]
    %v3481 = vld [vmem:[#allocation2 + $0x58] sm:$0xff]
    %v3482 = vld [vmem:[#allocation2 + $0x60] sm:$0xff]
    %v3483 = vld [vmem:[#allocation2 + $0x68] sm:$0xff]
    %v3484 = vld [vmem:[#allocation2 + $0x70] sm:$0xff]
    %v3485 = vld [vmem:[#allocation2 + $0x78] sm:$0xff]
    %v3486 = vld [vmem:[#allocation2 + $0x80] sm:$0xff]
    %v3487 = vld [vmem:[#allocation2 + $0x88] sm:$0xff]
    %v3488 = vld [vmem:[#allocation2 + $0x90] sm:$0xff]
    %v3489 = vld [vmem:[#allocation2 + $0x98] sm:$0xff]
    %v3490 = vld [vmem:[#allocation2 + $0xa0] sm:$0xff]
    %v3491 = vld [vmem:[#allocation2 + $0xa8] sm:$0xff]
    %v3492 = vld [vmem:[#allocation2 + $0xb0] sm:$0xff]
    %v3493 = vld [vmem:[#allocation2 + $0xb8] sm:$0xff]
    %v3494 = vld [vmem:[#allocation2 + $0xc0] sm:$0xff]
    %v3495 = vld [vmem:[#allocation2 + $0xc8] sm:$0xff]
    %v3496 = vld [vmem:[#allocation2 + $0xd0] sm:$0xff]
    %v3497 = vld [vmem:[#allocation2 + $0xd8] sm:$0xff]
    %v3498 = vld [vmem:[#allocation2 + $0xe0] sm:$0xff]
    %v3499 = vld [vmem:[#allocation2 + $0xe8] sm:$0xff]
    %v3500 = vld [vmem:[#allocation2 + $0xf0] sm:$0xff]
    %v3501 = vld [vmem:[#allocation2 + $0xf8] sm:$0xff]
    %v3502 = vunpack.c.l.bf16 %v3466
    %v3503 = vunpack.c.h.bf16 %v3466
    %v3504 = vunpack.c.l.bf16 %v3467
    %v3505 = vunpack.c.h.bf16 %v3467
    %v3506 = vpack.c.bf16 %v3468, %v3468
    %v3539 = vunpack.c.l.b16 %v3470
    %v3540 = vunpack.c.h.b16 %v3470
    %v3541 = vunpack.c.l.b16 %v3471
    %v3542 = vunpack.c.h.b16 %v3471
    %v3543 = vunpack.c.l.b16 %v3472
    %v3544 = vunpack.c.h.b16 %v3472
    %v3545 = vunpack.c.l.b16 %v3473
    %v3546 = vunpack.c.h.b16 %v3473
    %v3547 = vunpack.c.l.b16 %v3474
    %v3548 = vunpack.c.h.b16 %v3474
    %v3549 = vunpack.c.l.b16 %v3475
    %v3550 = vunpack.c.h.b16 %v3475
    %v3551 = vunpack.c.l.b16 %v3476
    %v3552 = vunpack.c.h.b16 %v3476
    %v3553 = vunpack.c.l.b16 %v3477
    %v3554 = vunpack.c.h.b16 %v3477
    %v3555 = vunpack.c.l.b16 %v3478
    %v3556 = vunpack.c.h.b16 %v3478
    %v3557 = vunpack.c.l.b16 %v3479
    %v3558 = vunpack.c.h.b16 %v3479
    %v3559 = vunpack.c.l.b16 %v3480
    %v3560 = vunpack.c.h.b16 %v3480
    %v3561 = vunpack.c.l.b16 %v3481
    %v3562 = vunpack.c.h.b16 %v3481
    %v3563 = vunpack.c.l.b16 %v3482
    %v3564 = vunpack.c.h.b16 %v3482
    %v3565 = vunpack.c.l.b16 %v3483
    %v3566 = vunpack.c.h.b16 %v3483
    %v3567 = vunpack.c.l.b16 %v3484
    %v3568 = vunpack.c.h.b16 %v3484
    %v3569 = vunpack.c.l.b16 %v3485
    %v3570 = vunpack.c.h.b16 %v3485
    %v3571 = vunpack.c.l.b16 %v3486
    %v3572 = vunpack.c.h.b16 %v3486
    %v3573 = vunpack.c.l.b16 %v3487
    %v3574 = vunpack.c.h.b16 %v3487
    %v3575 = vunpack.c.l.b16 %v3488
    %v3576 = vunpack.c.h.b16 %v3488
    %v3577 = vunpack.c.l.b16 %v3489
    %v3578 = vunpack.c.h.b16 %v3489
    %v3579 = vunpack.c.l.b16 %v3490
    %v3580 = vunpack.c.h.b16 %v3490
    %v3581 = vunpack.c.l.b16 %v3491
    %v3582 = vunpack.c.h.b16 %v3491
    %v3583 = vunpack.c.l.b16 %v3492
    %v3584 = vunpack.c.h.b16 %v3492
    %v3585 = vunpack.c.l.b16 %v3493
    %v3586 = vunpack.c.h.b16 %v3493
    %v3587 = vunpack.c.l.b16 %v3494
    %v3588 = vunpack.c.h.b16 %v3494
    %v3589 = vunpack.c.l.b16 %v3495
    %v3590 = vunpack.c.h.b16 %v3495
    %v3591 = vunpack.c.l.b16 %v3496
    %v3592 = vunpack.c.h.b16 %v3496
    %v3593 = vunpack.c.l.b16 %v3497
    %v3594 = vunpack.c.h.b16 %v3497
    %v3595 = vunpack.c.l.b16 %v3498
    %v3596 = vunpack.c.h.b16 %v3498
    %v3597 = vunpack.c.l.b16 %v3499
    %v3598 = vunpack.c.h.b16 %v3499
    %v3599 = vunpack.c.l.b16 %v3500
    %v3600 = vunpack.c.h.b16 %v3500
    %v3601 = vunpack.c.l.b16 %v3501
    %v3602 = vunpack.c.h.b16 %v3501
    %v3603 = vpack.c.b16 %v3543, %v3539
    %v3604 = vpack.c.b16 %v3544, %v3540
    %v3605 = vpack.c.b16 %v3545, %v3541
    %v3606 = vpack.c.b16 %v3546, %v3542
    %v3607 = vpack.c.b16 %v3551, %v3547
    %v3608 = vpack.c.b16 %v3552, %v3548
    %v3609 = vpack.c.b16 %v3553, %v3549
    %v3610 = vpack.c.b16 %v3554, %v3550
    %v3611 = vpack.c.b16 %v3559, %v3555
    %v3612 = vpack.c.b16 %v3560, %v3556
    %v3613 = vpack.c.b16 %v3561, %v3557
    %v3614 = vpack.c.b16 %v3562, %v3558
    %v3615 = vpack.c.b16 %v3567, %v3563
    %v3616 = vpack.c.b16 %v3568, %v3564
    %v3617 = vpack.c.b16 %v3569, %v3565
    %v3618 = vpack.c.b16 %v3570, %v3566
    %v3619 = vpack.c.b16 %v3575, %v3571
    %v3620 = vpack.c.b16 %v3576, %v3572
    %v3621 = vpack.c.b16 %v3577, %v3573
    %v3622 = vpack.c.b16 %v3578, %v3574
    %v3623 = vpack.c.b16 %v3583, %v3579
    %v3624 = vpack.c.b16 %v3584, %v3580
    %v3625 = vpack.c.b16 %v3585, %v3581
    %v3626 = vpack.c.b16 %v3586, %v3582
    %v3627 = vpack.c.b16 %v3591, %v3587
    %v3628 = vpack.c.b16 %v3592, %v3588
    %v3629 = vpack.c.b16 %v3593, %v3589
    %v3630 = vpack.c.b16 %v3594, %v3590
    %v3631 = vpack.c.b16 %v3599, %v3595
    %v3632 = vpack.c.b16 %v3600, %v3596
    %v3633 = vpack.c.b16 %v3601, %v3597
    %v3634 = vpack.c.b16 %v3602, %v3598
    %3667 = vmatprep.subr.bf16.mxu0 %v3632
    %3668 = vmatpush1.bf16.msra.mxu0 %v3631
    %3669 = vmatprep.subr.bf16.mxu0 %v3628
    %3670 = vmatpush1.bf16.msra.mxu0 %v3627
    %3671 = vmatprep.subr.bf16.mxu0 %v3624
    %3672 = vmatpush1.bf16.msra.mxu0 %v3623
    %3673 = vmatprep.subr.bf16.mxu0 %v3620
    %3674 = vmatpush1.bf16.msra.mxu0 %v3619
    %3675 = vmatprep.subr.bf16.mxu0 %v3616
    %3676 = vmatpush1.bf16.msra.mxu0 %v3615
    %3677 = vmatprep.subr.bf16.mxu0 %v3612
    %3678 = vmatpush1.bf16.msra.mxu0 %v3611
    %3679 = vmatprep.subr.bf16.mxu0 %v3608
    %3680 = vmatpush1.bf16.msra.mxu0 %v3607
    %3681 = vmatprep.subr.bf16.mxu0 %v3604
    %3682 = vmatpush1.bf16.msra.mxu0 %v3603
    %3683 = vmatprep.subr.bf16.mxu0 0
    %3684 = vmatpush2.bf16.msra.mxu0 0
    %3685 = vmatprep.subr.bf16.mxu0 0
    %3686 = vmatpush2.bf16.msra.mxu0 0
    %3687 = vmatprep.subr.bf16.mxu0 0
    %3688 = vmatpush2.bf16.msra.mxu0 0
    %3689 = vmatprep.subr.bf16.mxu0 0
    %3690 = vmatpush2.bf16.msra.mxu0 0
    %3691 = vmatprep.subr.bf16.mxu0 0
    %3692 = vmatpush2.bf16.msra.mxu0 0
    %3693 = vmatprep.subr.bf16.mxu0 0
    %3694 = vmatpush2.bf16.msra.mxu0 0
    %3695 = vmatprep.subr.bf16.mxu0 0
    %3696 = vmatpush2.bf16.msra.mxu0 0
    %3697 = vmatprep.subr.bf16.mxu0 0
    %3698 = vmatpush2.bf16.msra.mxu0 0
    %3699 = vmatprep.mubr.bf16.mxu0 0
    %3700 = vmatmul.mubr.bf16.gmra.mxu0 %v3506
    %v3701 = vpop.f32.mrf.mxu0
    %v3702 = vadd.f32 0.0, %v3701
    %v3703 = vpop.f32.mrf.mxu0
    %v3704 = vadd.f32 0.0, %v3703
    %v3705 = vpop.f32.mrf.mxu0
    %v3706 = vpop.f32.mrf.mxu0
    %3707 = vdwg.mxu0
    %3708 = vmatprep.subr.bf16.mxu0 %v3634
    %3709 = vmatpush1.bf16.msra.mxu0 %v3633
    %3710 = vmatprep.subr.bf16.mxu0 %v3630
    %3711 = vmatpush1.bf16.msra.mxu0 %v3629
    %3712 = vmatprep.subr.bf16.mxu0 %v3626
    %3713 = vmatpush1.bf16.msra.mxu0 %v3625
    %3714 = vmatprep.subr.bf16.mxu0 %v3622
    %3715 = vmatpush1.bf16.msra.mxu0 %v3621
    %3716 = vmatprep.subr.bf16.mxu0 %v3618
    %3717 = vmatpush1.bf16.msra.mxu0 %v3617
    %3718 = vmatprep.subr.bf16.mxu0 %v3614
    %3719 = vmatpush1.bf16.msra.mxu0 %v3613
    %3720 = vmatprep.subr.bf16.mxu0 %v3610
    %3721 = vmatpush1.bf16.msra.mxu0 %v3609
    %3722 = vmatprep.subr.bf16.mxu0 %v3606
    %3723 = vmatpush1.bf16.msra.mxu0 %v3605
    %3724 = vmatprep.subr.bf16.mxu0 0
    %3725 = vmatpush2.bf16.msra.mxu0 0
    %3726 = vmatprep.subr.bf16.mxu0 0
    %3727 = vmatpush2.bf16.msra.mxu0 0
    %3728 = vmatprep.subr.bf16.mxu0 0
    %3729 = vmatpush2.bf16.msra.mxu0 0
    %3730 = vmatprep.subr.bf16.mxu0 0
    %3731 = vmatpush2.bf16.msra.mxu0 0
    %3732 = vmatprep.subr.bf16.mxu0 0
    %3733 = vmatpush2.bf16.msra.mxu0 0
    %3734 = vmatprep.subr.bf16.mxu0 0
    %3735 = vmatpush2.bf16.msra.mxu0 0
    %3736 = vmatprep.subr.bf16.mxu0 0
    %3737 = vmatpush2.bf16.msra.mxu0 0
    %3738 = vmatprep.subr.bf16.mxu0 0
    %3739 = vmatpush2.bf16.msra.mxu0 0
    %3740 = vmatprep.mubr.bf16.mxu0 0
    %3741 = vmatmul.mubr.bf16.gmra.mxu0 %v3506
    %v3742 = vpop.f32.mrf.mxu0
    %v3743 = vadd.f32 0.0, %v3742
    %v3744 = vpop.f32.mrf.mxu0
    %v3745 = vadd.f32 0.0, %v3744
    %v3746 = vpop.f32.mrf.mxu0
    %v3747 = vpop.f32.mrf.mxu0
    %3748 = vdwg.mxu0
    %v3749 = vadd.f32 %v3502, %v3702
    %v3750 = vadd.f32 %v3503, %v3704
    %v3751 = vadd.f32 %v3504, %v3743
    %v3752 = vadd.f32 %v3505, %v3745
    %v3753 = vmul.f32 %v3749, 0.5
    %v3754 = vtanh.pop %v3753
    %v3755 = vmul.f32 %v3754, 0.5
    %v3756 = vadd.f32 %v3755, 0.5
    %v3757 = vmul.f32 %v3750, 0.5
    %v3758 = vtanh.pop %v3757
    %v3759 = vmul.f32 %v3758, 0.5
    %v3760 = vadd.f32 %v3759, 0.5
    %v3761 = vtanh.pop %v3751
    %v3762 = vmul.f32 %v3752, 0.5
    %v3763 = vtanh.pop %v3762
    %v3764 = vmul.f32 %v3763, 0.5
    %v3765 = vadd.f32 %v3764, 0.5
    %v3766 = vmul.f32 %v3760, %v3469
    %v3767 = vmul.f32 %v3756, %v3761
    %v3768 = vadd.f32 %v3766, %v3767
    %v3769 = vtanh.pop %v3768
    %v3770 = vmul.f32 %v3765, %v3769
    %s3771 = scalar_lea.vmem [#allocation7], 32
    %v3772 = vld [vmem:[%s3771] sm:$0xff]
    %v3773 = vld [vmem:[%s3771 + $0x8] sm:$0xff]
    %v3774 = vld [vmem:[%s625] sm:$0xff]
    %v3775 = vld [vmem:[%s627] sm:$0xff]
    %v3776 = vld [vmem:[%s629] sm:$0xff]
    %v3777 = vld [vmem:[%s629 + $0x8] sm:$0xff]
    %v3778 = vld [vmem:[%s629 + $0x10] sm:$0xff]
    %v3779 = vld [vmem:[%s629 + $0x18] sm:$0xff]
    %v3780 = vld [vmem:[%s629 + $0x20] sm:$0xff]
    %v3781 = vld [vmem:[%s629 + $0x28] sm:$0xff]
    %v3782 = vld [vmem:[%s629 + $0x30] sm:$0xff]
    %v3783 = vld [vmem:[%s629 + $0x38] sm:$0xff]
    %v3784 = vld [vmem:[%s629 + $0x40] sm:$0xff]
    %v3785 = vld [vmem:[%s629 + $0x48] sm:$0xff]
    %v3786 = vld [vmem:[%s629 + $0x50] sm:$0xff]
    %v3787 = vld [vmem:[%s629 + $0x58] sm:$0xff]
    %v3788 = vld [vmem:[%s629 + $0x60] sm:$0xff]
    %v3789 = vld [vmem:[%s629 + $0x68] sm:$0xff]
    %v3790 = vld [vmem:[%s629 + $0x70] sm:$0xff]
    %v3791 = vld [vmem:[%s629 + $0x78] sm:$0xff]
    %v3792 = vld [vmem:[%s629 + $0x80] sm:$0xff]
    %v3793 = vld [vmem:[%s629 + $0x88] sm:$0xff]
    %v3794 = vld [vmem:[%s629 + $0x90] sm:$0xff]
    %v3795 = vld [vmem:[%s629 + $0x98] sm:$0xff]
    %v3796 = vld [vmem:[%s629 + $0xa0] sm:$0xff]
    %v3797 = vld [vmem:[%s629 + $0xa8] sm:$0xff]
    %v3798 = vld [vmem:[%s629 + $0xb0] sm:$0xff]
    %v3799 = vld [vmem:[%s629 + $0xb8] sm:$0xff]
    %v3800 = vld [vmem:[%s629 + $0xc0] sm:$0xff]
    %v3801 = vld [vmem:[%s629 + $0xc8] sm:$0xff]
    %v3802 = vld [vmem:[%s629 + $0xd0] sm:$0xff]
    %v3803 = vld [vmem:[%s629 + $0xd8] sm:$0xff]
    %v3804 = vld [vmem:[%s629 + $0xe0] sm:$0xff]
    %v3805 = vld [vmem:[%s629 + $0xe8] sm:$0xff]
    %v3806 = vld [vmem:[%s629 + $0xf0] sm:$0xff]
    %v3807 = vld [vmem:[%s629 + $0xf8] sm:$0xff]
    %v3808 = vunpack.c.l.bf16 %v3772
    %v3809 = vunpack.c.h.bf16 %v3772
    %v3810 = vunpack.c.l.bf16 %v3773
    %v3811 = vunpack.c.h.bf16 %v3773
    %v3812 = vpack.c.bf16 %v3774, %v3774
    %v3845 = vunpack.c.l.b16 %v3776
    %v3846 = vunpack.c.h.b16 %v3776
    %v3847 = vunpack.c.l.b16 %v3777
    %v3848 = vunpack.c.h.b16 %v3777
    %v3849 = vunpack.c.l.b16 %v3778
    %v3850 = vunpack.c.h.b16 %v3778
    %v3851 = vunpack.c.l.b16 %v3779
    %v3852 = vunpack.c.h.b16 %v3779
    %v3853 = vunpack.c.l.b16 %v3780
    %v3854 = vunpack.c.h.b16 %v3780
    %v3855 = vunpack.c.l.b16 %v3781
    %v3856 = vunpack.c.h.b16 %v3781
    %v3857 = vunpack.c.l.b16 %v3782
    %v3858 = vunpack.c.h.b16 %v3782
    %v3859 = vunpack.c.l.b16 %v3783
    %v3860 = vunpack.c.h.b16 %v3783
    %v3861 = vunpack.c.l.b16 %v3784
    %v3862 = vunpack.c.h.b16 %v3784
    %v3863 = vunpack.c.l.b16 %v3785
    %v3864 = vunpack.c.h.b16 %v3785
    %v3865 = vunpack.c.l.b16 %v3786
    %v3866 = vunpack.c.h.b16 %v3786
    %v3867 = vunpack.c.l.b16 %v3787
    %v3868 = vunpack.c.h.b16 %v3787
    %v3869 = vunpack.c.l.b16 %v3788
    %v3870 = vunpack.c.h.b16 %v3788
    %v3871 = vunpack.c.l.b16 %v3789
    %v3872 = vunpack.c.h.b16 %v3789
    %v3873 = vunpack.c.l.b16 %v3790
    %v3874 = vunpack.c.h.b16 %v3790
    %v3875 = vunpack.c.l.b16 %v3791
    %v3876 = vunpack.c.h.b16 %v3791
    %v3877 = vunpack.c.l.b16 %v3792
    %v3878 = vunpack.c.h.b16 %v3792
    %v3879 = vunpack.c.l.b16 %v3793
    %v3880 = vunpack.c.h.b16 %v3793
    %v3881 = vunpack.c.l.b16 %v3794
    %v3882 = vunpack.c.h.b16 %v3794
    %v3883 = vunpack.c.l.b16 %v3795
    %v3884 = vunpack.c.h.b16 %v3795
    %v3885 = vunpack.c.l.b16 %v3796
    %v3886 = vunpack.c.h.b16 %v3796
    %v3887 = vunpack.c.l.b16 %v3797
    %v3888 = vunpack.c.h.b16 %v3797
    %v3889 = vunpack.c.l.b16 %v3798
    %v3890 = vunpack.c.h.b16 %v3798
    %v3891 = vunpack.c.l.b16 %v3799
    %v3892 = vunpack.c.h.b16 %v3799
    %v3893 = vunpack.c.l.b16 %v3800
    %v3894 = vunpack.c.h.b16 %v3800
    %v3895 = vunpack.c.l.b16 %v3801
    %v3896 = vunpack.c.h.b16 %v3801
    %v3897 = vunpack.c.l.b16 %v3802
    %v3898 = vunpack.c.h.b16 %v3802
    %v3899 = vunpack.c.l.b16 %v3803
    %v3900 = vunpack.c.h.b16 %v3803
    %v3901 = vunpack.c.l.b16 %v3804
    %v3902 = vunpack.c.h.b16 %v3804
    %v3903 = vunpack.c.l.b16 %v3805
    %v3904 = vunpack.c.h.b16 %v3805
    %v3905 = vunpack.c.l.b16 %v3806
    %v3906 = vunpack.c.h.b16 %v3806
    %v3907 = vunpack.c.l.b16 %v3807
    %v3908 = vunpack.c.h.b16 %v3807
    %v3909 = vpack.c.b16 %v3849, %v3845
    %v3910 = vpack.c.b16 %v3850, %v3846
    %v3911 = vpack.c.b16 %v3851, %v3847
    %v3912 = vpack.c.b16 %v3852, %v3848
    %v3913 = vpack.c.b16 %v3857, %v3853
    %v3914 = vpack.c.b16 %v3858, %v3854
    %v3915 = vpack.c.b16 %v3859, %v3855
    %v3916 = vpack.c.b16 %v3860, %v3856
    %v3917 = vpack.c.b16 %v3865, %v3861
    %v3918 = vpack.c.b16 %v3866, %v3862
    %v3919 = vpack.c.b16 %v3867, %v3863
    %v3920 = vpack.c.b16 %v3868, %v3864
    %v3921 = vpack.c.b16 %v3873, %v3869
    %v3922 = vpack.c.b16 %v3874, %v3870
    %v3923 = vpack.c.b16 %v3875, %v3871
    %v3924 = vpack.c.b16 %v3876, %v3872
    %v3925 = vpack.c.b16 %v3881, %v3877
    %v3926 = vpack.c.b16 %v3882, %v3878
    %v3927 = vpack.c.b16 %v3883, %v3879
    %v3928 = vpack.c.b16 %v3884, %v3880
    %v3929 = vpack.c.b16 %v3889, %v3885
    %v3930 = vpack.c.b16 %v3890, %v3886
    %v3931 = vpack.c.b16 %v3891, %v3887
    %v3932 = vpack.c.b16 %v3892, %v3888
    %v3933 = vpack.c.b16 %v3897, %v3893
    %v3934 = vpack.c.b16 %v3898, %v3894
    %v3935 = vpack.c.b16 %v3899, %v3895
    %v3936 = vpack.c.b16 %v3900, %v3896
    %v3937 = vpack.c.b16 %v3905, %v3901
    %v3938 = vpack.c.b16 %v3906, %v3902
    %v3939 = vpack.c.b16 %v3907, %v3903
    %v3940 = vpack.c.b16 %v3908, %v3904
    %3973 = vmatprep.subr.bf16.mxu0 %v3938
    %3974 = vmatpush1.bf16.msra.mxu0 %v3937
    %3975 = vmatprep.subr.bf16.mxu0 %v3934
    %3976 = vmatpush1.bf16.msra.mxu0 %v3933
    %3977 = vmatprep.subr.bf16.mxu0 %v3930
    %3978 = vmatpush1.bf16.msra.mxu0 %v3929
    %3979 = vmatprep.subr.bf16.mxu0 %v3926
    %3980 = vmatpush1.bf16.msra.mxu0 %v3925
    %3981 = vmatprep.subr.bf16.mxu0 %v3922
    %3982 = vmatpush1.bf16.msra.mxu0 %v3921
    %3983 = vmatprep.subr.bf16.mxu0 %v3918
    %3984 = vmatpush1.bf16.msra.mxu0 %v3917
    %3985 = vmatprep.subr.bf16.mxu0 %v3914
    %3986 = vmatpush1.bf16.msra.mxu0 %v3913
    %3987 = vmatprep.subr.bf16.mxu0 %v3910
    %3988 = vmatpush1.bf16.msra.mxu0 %v3909
    %3989 = vmatprep.subr.bf16.mxu0 0
    %3990 = vmatpush2.bf16.msra.mxu0 0
    %3991 = vmatprep.subr.bf16.mxu0 0
    %3992 = vmatpush2.bf16.msra.mxu0 0
    %3993 = vmatprep.subr.bf16.mxu0 0
    %3994 = vmatpush2.bf16.msra.mxu0 0
    %3995 = vmatprep.subr.bf16.mxu0 0
    %3996 = vmatpush2.bf16.msra.mxu0 0
    %3997 = vmatprep.subr.bf16.mxu0 0
    %3998 = vmatpush2.bf16.msra.mxu0 0
    %3999 = vmatprep.subr.bf16.mxu0 0
    %4000 = vmatpush2.bf16.msra.mxu0 0
    %4001 = vmatprep.subr.bf16.mxu0 0
    %4002 = vmatpush2.bf16.msra.mxu0 0
    %4003 = vmatprep.subr.bf16.mxu0 0
    %4004 = vmatpush2.bf16.msra.mxu0 0
    %4005 = vmatprep.mubr.bf16.mxu0 0
    %4006 = vmatmul.mubr.bf16.gmra.mxu0 %v3812
    %v4007 = vpop.f32.mrf.mxu0
    %v4008 = vadd.f32 0.0, %v4007
    %v4009 = vpop.f32.mrf.mxu0
    %v4010 = vadd.f32 0.0, %v4009
    %v4011 = vpop.f32.mrf.mxu0
    %v4012 = vpop.f32.mrf.mxu0
    %4013 = vdwg.mxu0
    %4014 = vmatprep.subr.bf16.mxu0 %v3940
    %4015 = vmatpush1.bf16.msra.mxu0 %v3939
    %4016 = vmatprep.subr.bf16.mxu0 %v3936
    %4017 = vmatpush1.bf16.msra.mxu0 %v3935
    %4018 = vmatprep.subr.bf16.mxu0 %v3932
    %4019 = vmatpush1.bf16.msra.mxu0 %v3931
    %4020 = vmatprep.subr.bf16.mxu0 %v3928
    %4021 = vmatpush1.bf16.msra.mxu0 %v3927
    %4022 = vmatprep.subr.bf16.mxu0 %v3924
    %4023 = vmatpush1.bf16.msra.mxu0 %v3923
    %4024 = vmatprep.subr.bf16.mxu0 %v3920
    %4025 = vmatpush1.bf16.msra.mxu0 %v3919
    %4026 = vmatprep.subr.bf16.mxu0 %v3916
    %4027 = vmatpush1.bf16.msra.mxu0 %v3915
    %4028 = vmatprep.subr.bf16.mxu0 %v3912
    %4029 = vmatpush1.bf16.msra.mxu0 %v3911
    %4030 = vmatprep.subr.bf16.mxu0 0
    %4031 = vmatpush2.bf16.msra.mxu0 0
    %4032 = vmatprep.subr.bf16.mxu0 0
    %4033 = vmatpush2.bf16.msra.mxu0 0
    %4034 = vmatprep.subr.bf16.mxu0 0
    %4035 = vmatpush2.bf16.msra.mxu0 0
    %4036 = vmatprep.subr.bf16.mxu0 0
    %4037 = vmatpush2.bf16.msra.mxu0 0
    %4038 = vmatprep.subr.bf16.mxu0 0
    %4039 = vmatpush2.bf16.msra.mxu0 0
    %4040 = vmatprep.subr.bf16.mxu0 0
    %4041 = vmatpush2.bf16.msra.mxu0 0
    %4042 = vmatprep.subr.bf16.mxu0 0
    %4043 = vmatpush2.bf16.msra.mxu0 0
    %4044 = vmatprep.subr.bf16.mxu0 0
    %4045 = vmatpush2.bf16.msra.mxu0 0
    %4046 = vmatprep.mubr.bf16.mxu0 0
    %4047 = vmatmul.mubr.bf16.gmra.mxu0 %v3812
    %v4048 = vpop.f32.mrf.mxu0
    %v4049 = vadd.f32 0.0, %v4048
    %v4050 = vpop.f32.mrf.mxu0
    %v4051 = vadd.f32 0.0, %v4050
    %v4052 = vpop.f32.mrf.mxu0
    %v4053 = vpop.f32.mrf.mxu0
    %4054 = vdwg.mxu0
    %v4055 = vadd.f32 %v3808, %v4008
    %v4056 = vadd.f32 %v3809, %v4010
    %v4057 = vadd.f32 %v3810, %v4049
    %v4058 = vadd.f32 %v3811, %v4051
    %v4059 = vmul.f32 %v4055, 0.5
    %v4060 = vtanh.pop %v4059
    %v4061 = vmul.f32 %v4060, 0.5
    %v4062 = vadd.f32 %v4061, 0.5
    %v4063 = vmul.f32 %v4056, 0.5
    %v4064 = vtanh.pop %v4063
    %v4065 = vmul.f32 %v4064, 0.5
    %v4066 = vadd.f32 %v4065, 0.5
    %v4067 = vtanh.pop %v4057
    %v4068 = vmul.f32 %v4058, 0.5
    %v4069 = vtanh.pop %v4068
    %v4070 = vmul.f32 %v4069, 0.5
    %v4071 = vadd.f32 %v4070, 0.5
    %v4072 = vmul.f32 %v4066, %v3775
    %v4073 = vmul.f32 %v4062, %v4067
    %v4074 = vadd.f32 %v4072, %v4073
    %v4075 = vtanh.pop %v4074
    %v4076 = vmul.f32 %v4071, %v4075
    %s4077 = sadd.s32 %s932, 2
    %p4078 = scmp.lt.s32.totalorder %s4077, 8
    %s4079 = scalar_select %p4078, 1, 0
    %s4080 = scvt.s32.f32 %s4079
    %v4081 = vstv %s4080
    %v4082 = vmul.f32 %v4076, %v4081
    %v4083 = vmul.f32 %v4074, %v4081
    %4084 = vst [vmem:[#allocation3] sm:$0xff] %v3770
    %4085 = vst [vmem:[#allocation4] sm:$0xff] %v3768
    %4086 = vst [vmem:[%s625] sm:$0xff] %v4082
    %4087 = vst [vmem:[%s627] sm:$0xff] %v4083
    %v4088 = vpack.c.bf16 %v3770, %v3770
    %s4089 = scalar_lea.vmem %s3, 20
    %4090 = vst [vmem:[%s4089] sm:$0xf] %v4088
    %v4091 = vpack.c.bf16 %v4082, %v4082
    %s4092 = scalar_lea.vmem %s131, 8
    %4093 = vst [vmem:[%s4092] sm:$0xf] %v4091
    %s4094 = scalar_lea.vmem [#allocation6], 96
    %v4095 = vld [vmem:[%s4094] sm:$0xff]
    %v4096 = vld [vmem:[%s4094 + $0x8] sm:$0xff]
    %v4097 = vld [vmem:[#allocation3] sm:$0xff]
    %v4098 = vld [vmem:[#allocation4] sm:$0xff]
    %v4099 = vld [vmem:[#allocation2] sm:$0xff]
    %v4100 = vld [vmem:[#allocation2 + $0x8] sm:$0xff]
    %v4101 = vld [vmem:[#allocation2 + $0x10] sm:$0xff]
    %v4102 = vld [vmem:[#allocation2 + $0x18] sm:$0xff]
    %v4103 = vld [vmem:[#allocation2 + $0x20] sm:$0xff]
    %v4104 = vld [vmem:[#allocation2 + $0x28] sm:$0xff]
    %v4105 = vld [vmem:[#allocation2 + $0x30] sm:$0xff]
    %v4106 = vld [vmem:[#allocation2 + $0x38] sm:$0xff]
    %v4107 = vld [vmem:[#allocation2 + $0x40] sm:$0xff]
    %v4108 = vld [vmem:[#allocation2 + $0x48] sm:$0xff]
    %v4109 = vld [vmem:[#allocation2 + $0x50] sm:$0xff]
    %v4110 = vld [vmem:[#allocation2 + $0x58] sm:$0xff]
    %v4111 = vld [vmem:[#allocation2 + $0x60] sm:$0xff]
    %v4112 = vld [vmem:[#allocation2 + $0x68] sm:$0xff]
    %v4113 = vld [vmem:[#allocation2 + $0x70] sm:$0xff]
    %v4114 = vld [vmem:[#allocation2 + $0x78] sm:$0xff]
    %v4115 = vld [vmem:[#allocation2 + $0x80] sm:$0xff]
    %v4116 = vld [vmem:[#allocation2 + $0x88] sm:$0xff]
    %v4117 = vld [vmem:[#allocation2 + $0x90] sm:$0xff]
    %v4118 = vld [vmem:[#allocation2 + $0x98] sm:$0xff]
    %v4119 = vld [vmem:[#allocation2 + $0xa0] sm:$0xff]
    %v4120 = vld [vmem:[#allocation2 + $0xa8] sm:$0xff]
    %v4121 = vld [vmem:[#allocation2 + $0xb0] sm:$0xff]
    %v4122 = vld [vmem:[#allocation2 + $0xb8] sm:$0xff]
    %v4123 = vld [vmem:[#allocation2 + $0xc0] sm:$0xff]
    %v4124 = vld [vmem:[#allocation2 + $0xc8] sm:$0xff]
    %v4125 = vld [vmem:[#allocation2 + $0xd0] sm:$0xff]
    %v4126 = vld [vmem:[#allocation2 + $0xd8] sm:$0xff]
    %v4127 = vld [vmem:[#allocation2 + $0xe0] sm:$0xff]
    %v4128 = vld [vmem:[#allocation2 + $0xe8] sm:$0xff]
    %v4129 = vld [vmem:[#allocation2 + $0xf0] sm:$0xff]
    %v4130 = vld [vmem:[#allocation2 + $0xf8] sm:$0xff]
    %v4131 = vunpack.c.l.bf16 %v4095
    %v4132 = vunpack.c.h.bf16 %v4095
    %v4133 = vunpack.c.l.bf16 %v4096
    %v4134 = vunpack.c.h.bf16 %v4096
    %v4135 = vpack.c.bf16 %v4097, %v4097
    %v4168 = vunpack.c.l.b16 %v4099
    %v4169 = vunpack.c.h.b16 %v4099
    %v4170 = vunpack.c.l.b16 %v4100
    %v4171 = vunpack.c.h.b16 %v4100
    %v4172 = vunpack.c.l.b16 %v4101
    %v4173 = vunpack.c.h.b16 %v4101
    %v4174 = vunpack.c.l.b16 %v4102
    %v4175 = vunpack.c.h.b16 %v4102
    %v4176 = vunpack.c.l.b16 %v4103
    %v4177 = vunpack.c.h.b16 %v4103
    %v4178 = vunpack.c.l.b16 %v4104
    %v4179 = vunpack.c.h.b16 %v4104
    %v4180 = vunpack.c.l.b16 %v4105
    %v4181 = vunpack.c.h.b16 %v4105
    %v4182 = vunpack.c.l.b16 %v4106
    %v4183 = vunpack.c.h.b16 %v4106
    %v4184 = vunpack.c.l.b16 %v4107
    %v4185 = vunpack.c.h.b16 %v4107
    %v4186 = vunpack.c.l.b16 %v4108
    %v4187 = vunpack.c.h.b16 %v4108
    %v4188 = vunpack.c.l.b16 %v4109
    %v4189 = vunpack.c.h.b16 %v4109
    %v4190 = vunpack.c.l.b16 %v4110
    %v4191 = vunpack.c.h.b16 %v4110
    %v4192 = vunpack.c.l.b16 %v4111
    %v4193 = vunpack.c.h.b16 %v4111
    %v4194 = vunpack.c.l.b16 %v4112
    %v4195 = vunpack.c.h.b16 %v4112
    %v4196 = vunpack.c.l.b16 %v4113
    %v4197 = vunpack.c.h.b16 %v4113
    %v4198 = vunpack.c.l.b16 %v4114
    %v4199 = vunpack.c.h.b16 %v4114
    %v4200 = vunpack.c.l.b16 %v4115
    %v4201 = vunpack.c.h.b16 %v4115
    %v4202 = vunpack.c.l.b16 %v4116
    %v4203 = vunpack.c.h.b16 %v4116
    %v4204 = vunpack.c.l.b16 %v4117
    %v4205 = vunpack.c.h.b16 %v4117
    %v4206 = vunpack.c.l.b16 %v4118
    %v4207 = vunpack.c.h.b16 %v4118
    %v4208 = vunpack.c.l.b16 %v4119
    %v4209 = vunpack.c.h.b16 %v4119
    %v4210 = vunpack.c.l.b16 %v4120
    %v4211 = vunpack.c.h.b16 %v4120
    %v4212 = vunpack.c.l.b16 %v4121
    %v4213 = vunpack.c.h.b16 %v4121
    %v4214 = vunpack.c.l.b16 %v4122
    %v4215 = vunpack.c.h.b16 %v4122
    %v4216 = vunpack.c.l.b16 %v4123
    %v4217 = vunpack.c.h.b16 %v4123
    %v4218 = vunpack.c.l.b16 %v4124
    %v4219 = vunpack.c.h.b16 %v4124
    %v4220 = vunpack.c.l.b16 %v4125
    %v4221 = vunpack.c.h.b16 %v4125
    %v4222 = vunpack.c.l.b16 %v4126
    %v4223 = vunpack.c.h.b16 %v4126
    %v4224 = vunpack.c.l.b16 %v4127
    %v4225 = vunpack.c.h.b16 %v4127
    %v4226 = vunpack.c.l.b16 %v4128
    %v4227 = vunpack.c.h.b16 %v4128
    %v4228 = vunpack.c.l.b16 %v4129
    %v4229 = vunpack.c.h.b16 %v4129
    %v4230 = vunpack.c.l.b16 %v4130
    %v4231 = vunpack.c.h.b16 %v4130
    %v4232 = vpack.c.b16 %v4172, %v4168
    %v4233 = vpack.c.b16 %v4173, %v4169
    %v4234 = vpack.c.b16 %v4174, %v4170
    %v4235 = vpack.c.b16 %v4175, %v4171
    %v4236 = vpack.c.b16 %v4180, %v4176
    %v4237 = vpack.c.b16 %v4181, %v4177
    %v4238 = vpack.c.b16 %v4182, %v4178
    %v4239 = vpack.c.b16 %v4183, %v4179
    %v4240 = vpack.c.b16 %v4188, %v4184
    %v4241 = vpack.c.b16 %v4189, %v4185
    %v4242 = vpack.c.b16 %v4190, %v4186
    %v4243 = vpack.c.b16 %v4191, %v4187
    %v4244 = vpack.c.b16 %v4196, %v4192
    %v4245 = vpack.c.b16 %v4197, %v4193
    %v4246 = vpack.c.b16 %v4198, %v4194
    %v4247 = vpack.c.b16 %v4199, %v4195
    %v4248 = vpack.c.b16 %v4204, %v4200
    %v4249 = vpack.c.b16 %v4205, %v4201
    %v4250 = vpack.c.b16 %v4206, %v4202
    %v4251 = vpack.c.b16 %v4207, %v4203
    %v4252 = vpack.c.b16 %v4212, %v4208
    %v4253 = vpack.c.b16 %v4213, %v4209
    %v4254 = vpack.c.b16 %v4214, %v4210
    %v4255 = vpack.c.b16 %v4215, %v4211
    %v4256 = vpack.c.b16 %v4220, %v4216
    %v4257 = vpack.c.b16 %v4221, %v4217
    %v4258 = vpack.c.b16 %v4222, %v4218
    %v4259 = vpack.c.b16 %v4223, %v4219
    %v4260 = vpack.c.b16 %v4228, %v4224
    %v4261 = vpack.c.b16 %v4229, %v4225
    %v4262 = vpack.c.b16 %v4230, %v4226
    %v4263 = vpack.c.b16 %v4231, %v4227
    %4296 = vmatprep.subr.bf16.mxu0 %v4261
    %4297 = vmatpush1.bf16.msra.mxu0 %v4260
    %4298 = vmatprep.subr.bf16.mxu0 %v4257
    %4299 = vmatpush1.bf16.msra.mxu0 %v4256
    %4300 = vmatprep.subr.bf16.mxu0 %v4253
    %4301 = vmatpush1.bf16.msra.mxu0 %v4252
    %4302 = vmatprep.subr.bf16.mxu0 %v4249
    %4303 = vmatpush1.bf16.msra.mxu0 %v4248
    %4304 = vmatprep.subr.bf16.mxu0 %v4245
    %4305 = vmatpush1.bf16.msra.mxu0 %v4244
    %4306 = vmatprep.subr.bf16.mxu0 %v4241
    %4307 = vmatpush1.bf16.msra.mxu0 %v4240
    %4308 = vmatprep.subr.bf16.mxu0 %v4237
    %4309 = vmatpush1.bf16.msra.mxu0 %v4236
    %4310 = vmatprep.subr.bf16.mxu0 %v4233
    %4311 = vmatpush1.bf16.msra.mxu0 %v4232
    %4312 = vmatprep.subr.bf16.mxu0 0
    %4313 = vmatpush2.bf16.msra.mxu0 0
    %4314 = vmatprep.subr.bf16.mxu0 0
    %4315 = vmatpush2.bf16.msra.mxu0 0
    %4316 = vmatprep.subr.bf16.mxu0 0
    %4317 = vmatpush2.bf16.msra.mxu0 0
    %4318 = vmatprep.subr.bf16.mxu0 0
    %4319 = vmatpush2.bf16.msra.mxu0 0
    %4320 = vmatprep.subr.bf16.mxu0 0
    %4321 = vmatpush2.bf16.msra.mxu0 0
    %4322 = vmatprep.subr.bf16.mxu0 0
    %4323 = vmatpush2.bf16.msra.mxu0 0
    %4324 = vmatprep.subr.bf16.mxu0 0
    %4325 = vmatpush2.bf16.msra.mxu0 0
    %4326 = vmatprep.subr.bf16.mxu0 0
    %4327 = vmatpush2.bf16.msra.mxu0 0
    %4328 = vmatprep.mubr.bf16.mxu0 0
    %4329 = vmatmul.mubr.bf16.gmra.mxu0 %v4135
    %v4330 = vpop.f32.mrf.mxu0
    %v4331 = vadd.f32 0.0, %v4330
    %v4332 = vpop.f32.mrf.mxu0
    %v4333 = vadd.f32 0.0, %v4332
    %v4334 = vpop.f32.mrf.mxu0
    %v4335 = vpop.f32.mrf.mxu0
    %4336 = vdwg.mxu0
    %4337 = vmatprep.subr.bf16.mxu0 %v4263
    %4338 = vmatpush1.bf16.msra.mxu0 %v4262
    %4339 = vmatprep.subr.bf16.mxu0 %v4259
    %4340 = vmatpush1.bf16.msra.mxu0 %v4258
    %4341 = vmatprep.subr.bf16.mxu0 %v4255
    %4342 = vmatpush1.bf16.msra.mxu0 %v4254
    %4343 = vmatprep.subr.bf16.mxu0 %v4251
    %4344 = vmatpush1.bf16.msra.mxu0 %v4250
    %4345 = vmatprep.subr.bf16.mxu0 %v4247
    %4346 = vmatpush1.bf16.msra.mxu0 %v4246
    %4347 = vmatprep.subr.bf16.mxu0 %v4243
    %4348 = vmatpush1.bf16.msra.mxu0 %v4242
    %4349 = vmatprep.subr.bf16.mxu0 %v4239
    %4350 = vmatpush1.bf16.msra.mxu0 %v4238
    %4351 = vmatprep.subr.bf16.mxu0 %v4235
    %4352 = vmatpush1.bf16.msra.mxu0 %v4234
    %4353 = vmatprep.subr.bf16.mxu0 0
    %4354 = vmatpush2.bf16.msra.mxu0 0
    %4355 = vmatprep.subr.bf16.mxu0 0
    %4356 = vmatpush2.bf16.msra.mxu0 0
    %4357 = vmatprep.subr.bf16.mxu0 0
    %4358 = vmatpush2.bf16.msra.mxu0 0
    %4359 = vmatprep.subr.bf16.mxu0 0
    %4360 = vmatpush2.bf16.msra.mxu0 0
    %4361 = vmatprep.subr.bf16.mxu0 0
    %4362 = vmatpush2.bf16.msra.mxu0 0
    %4363 = vmatprep.subr.bf16.mxu0 0
    %4364 = vmatpush2.bf16.msra.mxu0 0
    %4365 = vmatprep.subr.bf16.mxu0 0
    %4366 = vmatpush2.bf16.msra.mxu0 0
    %4367 = vmatprep.subr.bf16.mxu0 0
    %4368 = vmatpush2.bf16.msra.mxu0 0
    %4369 = vmatprep.mubr.bf16.mxu0 0
    %4370 = vmatmul.mubr.bf16.gmra.mxu0 %v4135
    %v4371 = vpop.f32.mrf.mxu0
    %v4372 = vadd.f32 0.0, %v4371
    %v4373 = vpop.f32.mrf.mxu0
    %v4374 = vadd.f32 0.0, %v4373
    %v4375 = vpop.f32.mrf.mxu0
    %v4376 = vpop.f32.mrf.mxu0
    %4377 = vdwg.mxu0
    %v4378 = vadd.f32 %v4131, %v4331
    %v4379 = vadd.f32 %v4132, %v4333
    %v4380 = vadd.f32 %v4133, %v4372
    %v4381 = vadd.f32 %v4134, %v4374
    %v4382 = vmul.f32 %v4378, 0.5
    %v4383 = vtanh.pop %v4382
    %v4384 = vmul.f32 %v4383, 0.5
    %v4385 = vadd.f32 %v4384, 0.5
    %v4386 = vmul.f32 %v4379, 0.5
    %v4387 = vtanh.pop %v4386
    %v4388 = vmul.f32 %v4387, 0.5
    %v4389 = vadd.f32 %v4388, 0.5
    %v4390 = vtanh.pop %v4380
    %v4391 = vmul.f32 %v4381, 0.5
    %v4392 = vtanh.pop %v4391
    %v4393 = vmul.f32 %v4392, 0.5
    %v4394 = vadd.f32 %v4393, 0.5
    %v4395 = vmul.f32 %v4389, %v4098
    %v4396 = vmul.f32 %v4385, %v4390
    %v4397 = vadd.f32 %v4395, %v4396
    %v4398 = vtanh.pop %v4397
    %v4399 = vmul.f32 %v4394, %v4398
    %s4400 = scalar_lea.vmem [#allocation7], 16
    %v4401 = vld [vmem:[%s4400] sm:$0xff]
    %v4402 = vld [vmem:[%s4400 + $0x8] sm:$0xff]
    %v4403 = vld [vmem:[%s625] sm:$0xff]
    %v4404 = vld [vmem:[%s627] sm:$0xff]
    %v4405 = vld [vmem:[%s629] sm:$0xff]
    %v4406 = vld [vmem:[%s629 + $0x8] sm:$0xff]
    %v4407 = vld [vmem:[%s629 + $0x10] sm:$0xff]
    %v4408 = vld [vmem:[%s629 + $0x18] sm:$0xff]
    %v4409 = vld [vmem:[%s629 + $0x20] sm:$0xff]
    %v4410 = vld [vmem:[%s629 + $0x28] sm:$0xff]
    %v4411 = vld [vmem:[%s629 + $0x30] sm:$0xff]
    %v4412 = vld [vmem:[%s629 + $0x38] sm:$0xff]
    %v4413 = vld [vmem:[%s629 + $0x40] sm:$0xff]
    %v4414 = vld [vmem:[%s629 + $0x48] sm:$0xff]
    %v4415 = vld [vmem:[%s629 + $0x50] sm:$0xff]
    %v4416 = vld [vmem:[%s629 + $0x58] sm:$0xff]
    %v4417 = vld [vmem:[%s629 + $0x60] sm:$0xff]
    %v4418 = vld [vmem:[%s629 + $0x68] sm:$0xff]
    %v4419 = vld [vmem:[%s629 + $0x70] sm:$0xff]
    %v4420 = vld [vmem:[%s629 + $0x78] sm:$0xff]
    %v4421 = vld [vmem:[%s629 + $0x80] sm:$0xff]
    %v4422 = vld [vmem:[%s629 + $0x88] sm:$0xff]
    %v4423 = vld [vmem:[%s629 + $0x90] sm:$0xff]
    %v4424 = vld [vmem:[%s629 + $0x98] sm:$0xff]
    %v4425 = vld [vmem:[%s629 + $0xa0] sm:$0xff]
    %v4426 = vld [vmem:[%s629 + $0xa8] sm:$0xff]
    %v4427 = vld [vmem:[%s629 + $0xb0] sm:$0xff]
    %v4428 = vld [vmem:[%s629 + $0xb8] sm:$0xff]
    %v4429 = vld [vmem:[%s629 + $0xc0] sm:$0xff]
    %v4430 = vld [vmem:[%s629 + $0xc8] sm:$0xff]
    %v4431 = vld [vmem:[%s629 + $0xd0] sm:$0xff]
    %v4432 = vld [vmem:[%s629 + $0xd8] sm:$0xff]
    %v4433 = vld [vmem:[%s629 + $0xe0] sm:$0xff]
    %v4434 = vld [vmem:[%s629 + $0xe8] sm:$0xff]
    %v4435 = vld [vmem:[%s629 + $0xf0] sm:$0xff]
    %v4436 = vld [vmem:[%s629 + $0xf8] sm:$0xff]
    %v4437 = vunpack.c.l.bf16 %v4401
    %v4438 = vunpack.c.h.bf16 %v4401
    %v4439 = vunpack.c.l.bf16 %v4402
    %v4440 = vunpack.c.h.bf16 %v4402
    %v4441 = vpack.c.bf16 %v4403, %v4403
    %v4474 = vunpack.c.l.b16 %v4405
    %v4475 = vunpack.c.h.b16 %v4405
    %v4476 = vunpack.c.l.b16 %v4406
    %v4477 = vunpack.c.h.b16 %v4406
    %v4478 = vunpack.c.l.b16 %v4407
    %v4479 = vunpack.c.h.b16 %v4407
    %v4480 = vunpack.c.l.b16 %v4408
    %v4481 = vunpack.c.h.b16 %v4408
    %v4482 = vunpack.c.l.b16 %v4409
    %v4483 = vunpack.c.h.b16 %v4409
    %v4484 = vunpack.c.l.b16 %v4410
    %v4485 = vunpack.c.h.b16 %v4410
    %v4486 = vunpack.c.l.b16 %v4411
    %v4487 = vunpack.c.h.b16 %v4411
    %v4488 = vunpack.c.l.b16 %v4412
    %v4489 = vunpack.c.h.b16 %v4412
    %v4490 = vunpack.c.l.b16 %v4413
    %v4491 = vunpack.c.h.b16 %v4413
    %v4492 = vunpack.c.l.b16 %v4414
    %v4493 = vunpack.c.h.b16 %v4414
    %v4494 = vunpack.c.l.b16 %v4415
    %v4495 = vunpack.c.h.b16 %v4415
    %v4496 = vunpack.c.l.b16 %v4416
    %v4497 = vunpack.c.h.b16 %v4416
    %v4498 = vunpack.c.l.b16 %v4417
    %v4499 = vunpack.c.h.b16 %v4417
    %v4500 = vunpack.c.l.b16 %v4418
    %v4501 = vunpack.c.h.b16 %v4418
    %v4502 = vunpack.c.l.b16 %v4419
    %v4503 = vunpack.c.h.b16 %v4419
    %v4504 = vunpack.c.l.b16 %v4420
    %v4505 = vunpack.c.h.b16 %v4420
    %v4506 = vunpack.c.l.b16 %v4421
    %v4507 = vunpack.c.h.b16 %v4421
    %v4508 = vunpack.c.l.b16 %v4422
    %v4509 = vunpack.c.h.b16 %v4422
    %v4510 = vunpack.c.l.b16 %v4423
    %v4511 = vunpack.c.h.b16 %v4423
    %v4512 = vunpack.c.l.b16 %v4424
    %v4513 = vunpack.c.h.b16 %v4424
    %v4514 = vunpack.c.l.b16 %v4425
    %v4515 = vunpack.c.h.b16 %v4425
    %v4516 = vunpack.c.l.b16 %v4426
    %v4517 = vunpack.c.h.b16 %v4426
    %v4518 = vunpack.c.l.b16 %v4427
    %v4519 = vunpack.c.h.b16 %v4427
    %v4520 = vunpack.c.l.b16 %v4428
    %v4521 = vunpack.c.h.b16 %v4428
    %v4522 = vunpack.c.l.b16 %v4429
    %v4523 = vunpack.c.h.b16 %v4429
    %v4524 = vunpack.c.l.b16 %v4430
    %v4525 = vunpack.c.h.b16 %v4430
    %v4526 = vunpack.c.l.b16 %v4431
    %v4527 = vunpack.c.h.b16 %v4431
    %v4528 = vunpack.c.l.b16 %v4432
    %v4529 = vunpack.c.h.b16 %v4432
    %v4530 = vunpack.c.l.b16 %v4433
    %v4531 = vunpack.c.h.b16 %v4433
    %v4532 = vunpack.c.l.b16 %v4434
    %v4533 = vunpack.c.h.b16 %v4434
    %v4534 = vunpack.c.l.b16 %v4435
    %v4535 = vunpack.c.h.b16 %v4435
    %v4536 = vunpack.c.l.b16 %v4436
    %v4537 = vunpack.c.h.b16 %v4436
    %v4538 = vpack.c.b16 %v4478, %v4474
    %v4539 = vpack.c.b16 %v4479, %v4475
    %v4540 = vpack.c.b16 %v4480, %v4476
    %v4541 = vpack.c.b16 %v4481, %v4477
    %v4542 = vpack.c.b16 %v4486, %v4482
    %v4543 = vpack.c.b16 %v4487, %v4483
    %v4544 = vpack.c.b16 %v4488, %v4484
    %v4545 = vpack.c.b16 %v4489, %v4485
    %v4546 = vpack.c.b16 %v4494, %v4490
    %v4547 = vpack.c.b16 %v4495, %v4491
    %v4548 = vpack.c.b16 %v4496, %v4492
    %v4549 = vpack.c.b16 %v4497, %v4493
    %v4550 = vpack.c.b16 %v4502, %v4498
    %v4551 = vpack.c.b16 %v4503, %v4499
    %v4552 = vpack.c.b16 %v4504, %v4500
    %v4553 = vpack.c.b16 %v4505, %v4501
    %v4554 = vpack.c.b16 %v4510, %v4506
    %v4555 = vpack.c.b16 %v4511, %v4507
    %v4556 = vpack.c.b16 %v4512, %v4508
    %v4557 = vpack.c.b16 %v4513, %v4509
    %v4558 = vpack.c.b16 %v4518, %v4514
    %v4559 = vpack.c.b16 %v4519, %v4515
    %v4560 = vpack.c.b16 %v4520, %v4516
    %v4561 = vpack.c.b16 %v4521, %v4517
    %v4562 = vpack.c.b16 %v4526, %v4522
    %v4563 = vpack.c.b16 %v4527, %v4523
    %v4564 = vpack.c.b16 %v4528, %v4524
    %v4565 = vpack.c.b16 %v4529, %v4525
    %v4566 = vpack.c.b16 %v4534, %v4530
    %v4567 = vpack.c.b16 %v4535, %v4531
    %v4568 = vpack.c.b16 %v4536, %v4532
    %v4569 = vpack.c.b16 %v4537, %v4533
    %4602 = vmatprep.subr.bf16.mxu0 %v4567
    %4603 = vmatpush1.bf16.msra.mxu0 %v4566
    %4604 = vmatprep.subr.bf16.mxu0 %v4563
    %4605 = vmatpush1.bf16.msra.mxu0 %v4562
    %4606 = vmatprep.subr.bf16.mxu0 %v4559
    %4607 = vmatpush1.bf16.msra.mxu0 %v4558
    %4608 = vmatprep.subr.bf16.mxu0 %v4555
    %4609 = vmatpush1.bf16.msra.mxu0 %v4554
    %4610 = vmatprep.subr.bf16.mxu0 %v4551
    %4611 = vmatpush1.bf16.msra.mxu0 %v4550
    %4612 = vmatprep.subr.bf16.mxu0 %v4547
    %4613 = vmatpush1.bf16.msra.mxu0 %v4546
    %4614 = vmatprep.subr.bf16.mxu0 %v4543
    %4615 = vmatpush1.bf16.msra.mxu0 %v4542
    %4616 = vmatprep.subr.bf16.mxu0 %v4539
    %4617 = vmatpush1.bf16.msra.mxu0 %v4538
    %4618 = vmatprep.subr.bf16.mxu0 0
    %4619 = vmatpush2.bf16.msra.mxu0 0
    %4620 = vmatprep.subr.bf16.mxu0 0
    %4621 = vmatpush2.bf16.msra.mxu0 0
    %4622 = vmatprep.subr.bf16.mxu0 0
    %4623 = vmatpush2.bf16.msra.mxu0 0
    %4624 = vmatprep.subr.bf16.mxu0 0
    %4625 = vmatpush2.bf16.msra.mxu0 0
    %4626 = vmatprep.subr.bf16.mxu0 0
    %4627 = vmatpush2.bf16.msra.mxu0 0
    %4628 = vmatprep.subr.bf16.mxu0 0
    %4629 = vmatpush2.bf16.msra.mxu0 0
    %4630 = vmatprep.subr.bf16.mxu0 0
    %4631 = vmatpush2.bf16.msra.mxu0 0
    %4632 = vmatprep.subr.bf16.mxu0 0
    %4633 = vmatpush2.bf16.msra.mxu0 0
    %4634 = vmatprep.mubr.bf16.mxu0 0
    %4635 = vmatmul.mubr.bf16.gmra.mxu0 %v4441
    %v4636 = vpop.f32.mrf.mxu0
    %v4637 = vadd.f32 0.0, %v4636
    %v4638 = vpop.f32.mrf.mxu0
    %v4639 = vadd.f32 0.0, %v4638
    %v4640 = vpop.f32.mrf.mxu0
    %v4641 = vpop.f32.mrf.mxu0
    %4642 = vdwg.mxu0
    %4643 = vmatprep.subr.bf16.mxu0 %v4569
    %4644 = vmatpush1.bf16.msra.mxu0 %v4568
    %4645 = vmatprep.subr.bf16.mxu0 %v4565
    %4646 = vmatpush1.bf16.msra.mxu0 %v4564
    %4647 = vmatprep.subr.bf16.mxu0 %v4561
    %4648 = vmatpush1.bf16.msra.mxu0 %v4560
    %4649 = vmatprep.subr.bf16.mxu0 %v4557
    %4650 = vmatpush1.bf16.msra.mxu0 %v4556
    %4651 = vmatprep.subr.bf16.mxu0 %v4553
    %4652 = vmatpush1.bf16.msra.mxu0 %v4552
    %4653 = vmatprep.subr.bf16.mxu0 %v4549
    %4654 = vmatpush1.bf16.msra.mxu0 %v4548
    %4655 = vmatprep.subr.bf16.mxu0 %v4545
    %4656 = vmatpush1.bf16.msra.mxu0 %v4544
    %4657 = vmatprep.subr.bf16.mxu0 %v4541
    %4658 = vmatpush1.bf16.msra.mxu0 %v4540
    %4659 = vmatprep.subr.bf16.mxu0 0
    %4660 = vmatpush2.bf16.msra.mxu0 0
    %4661 = vmatprep.subr.bf16.mxu0 0
    %4662 = vmatpush2.bf16.msra.mxu0 0
    %4663 = vmatprep.subr.bf16.mxu0 0
    %4664 = vmatpush2.bf16.msra.mxu0 0
    %4665 = vmatprep.subr.bf16.mxu0 0
    %4666 = vmatpush2.bf16.msra.mxu0 0
    %4667 = vmatprep.subr.bf16.mxu0 0
    %4668 = vmatpush2.bf16.msra.mxu0 0
    %4669 = vmatprep.subr.bf16.mxu0 0
    %4670 = vmatpush2.bf16.msra.mxu0 0
    %4671 = vmatprep.subr.bf16.mxu0 0
    %4672 = vmatpush2.bf16.msra.mxu0 0
    %4673 = vmatprep.subr.bf16.mxu0 0
    %4674 = vmatpush2.bf16.msra.mxu0 0
    %4675 = vmatprep.mubr.bf16.mxu0 0
    %4676 = vmatmul.mubr.bf16.gmra.mxu0 %v4441
    %v4677 = vpop.f32.mrf.mxu0
    %v4678 = vadd.f32 0.0, %v4677
    %v4679 = vpop.f32.mrf.mxu0
    %v4680 = vadd.f32 0.0, %v4679
    %v4681 = vpop.f32.mrf.mxu0
    %v4682 = vpop.f32.mrf.mxu0
    %4683 = vdwg.mxu0
    %v4684 = vadd.f32 %v4437, %v4637
    %v4685 = vadd.f32 %v4438, %v4639
    %v4686 = vadd.f32 %v4439, %v4678
    %v4687 = vadd.f32 %v4440, %v4680
    %v4688 = vmul.f32 %v4684, 0.5
    %v4689 = vtanh.pop %v4688
    %v4690 = vmul.f32 %v4689, 0.5
    %v4691 = vadd.f32 %v4690, 0.5
    %v4692 = vmul.f32 %v4685, 0.5
    %v4693 = vtanh.pop %v4692
    %v4694 = vmul.f32 %v4693, 0.5
    %v4695 = vadd.f32 %v4694, 0.5
    %v4696 = vtanh.pop %v4686
    %v4697 = vmul.f32 %v4687, 0.5
    %v4698 = vtanh.pop %v4697
    %v4699 = vmul.f32 %v4698, 0.5
    %v4700 = vadd.f32 %v4699, 0.5
    %v4701 = vmul.f32 %v4695, %v4404
    %v4702 = vmul.f32 %v4691, %v4696
    %v4703 = vadd.f32 %v4701, %v4702
    %v4704 = vtanh.pop %v4703
    %v4705 = vmul.f32 %v4700, %v4704
    %s4706 = sadd.s32 %s932, 1
    %p4707 = scmp.lt.s32.totalorder %s4706, 8
    %s4708 = scalar_select %p4707, 1, 0
    %s4709 = scvt.s32.f32 %s4708
    %v4710 = vstv %s4709
    %v4711 = vmul.f32 %v4705, %v4710
    %v4712 = vmul.f32 %v4703, %v4710
    %4713 = vst [vmem:[#allocation3] sm:$0xff] %v4399
    %4714 = vst [vmem:[#allocation4] sm:$0xff] %v4397
    %4715 = vst [vmem:[%s625] sm:$0xff] %v4711
    %4716 = vst [vmem:[%s627] sm:$0xff] %v4712
    %v4717 = vpack.c.bf16 %v4399, %v4399
    %s4718 = scalar_lea.vmem %s3, 24
    %4719 = vst [vmem:[%s4718] sm:$0xf] %v4717
    %v4720 = vpack.c.bf16 %v4711, %v4711
    %s4721 = scalar_lea.vmem %s131, 4
    %4722 = vst [vmem:[%s4721] sm:$0xf] %v4720
    %s4723 = scalar_lea.vmem [#allocation6], 112
    %v4724 = vld [vmem:[%s4723] sm:$0xff]
    %v4725 = vld [vmem:[%s4723 + $0x8] sm:$0xff]
    %v4726 = vld [vmem:[#allocation3] sm:$0xff]
    %v4727 = vld [vmem:[#allocation4] sm:$0xff]
    %v4728 = vld [vmem:[#allocation2] sm:$0xff]
    %v4729 = vld [vmem:[#allocation2 + $0x8] sm:$0xff]
    %v4730 = vld [vmem:[#allocation2 + $0x10] sm:$0xff]
    %v4731 = vld [vmem:[#allocation2 + $0x18] sm:$0xff]
    %v4732 = vld [vmem:[#allocation2 + $0x20] sm:$0xff]
    %v4733 = vld [vmem:[#allocation2 + $0x28] sm:$0xff]
    %v4734 = vld [vmem:[#allocation2 + $0x30] sm:$0xff]
    %v4735 = vld [vmem:[#allocation2 + $0x38] sm:$0xff]
    %v4736 = vld [vmem:[#allocation2 + $0x40] sm:$0xff]
    %v4737 = vld [vmem:[#allocation2 + $0x48] sm:$0xff]
    %v4738 = vld [vmem:[#allocation2 + $0x50] sm:$0xff]
    %v4739 = vld [vmem:[#allocation2 + $0x58] sm:$0xff]
    %v4740 = vld [vmem:[#allocation2 + $0x60] sm:$0xff]
    %v4741 = vld [vmem:[#allocation2 + $0x68] sm:$0xff]
    %v4742 = vld [vmem:[#allocation2 + $0x70] sm:$0xff]
    %v4743 = vld [vmem:[#allocation2 + $0x78] sm:$0xff]
    %v4744 = vld [vmem:[#allocation2 + $0x80] sm:$0xff]
    %v4745 = vld [vmem:[#allocation2 + $0x88] sm:$0xff]
    %v4746 = vld [vmem:[#allocation2 + $0x90] sm:$0xff]
    %v4747 = vld [vmem:[#allocation2 + $0x98] sm:$0xff]
    %v4748 = vld [vmem:[#allocation2 + $0xa0] sm:$0xff]
    %v4749 = vld [vmem:[#allocation2 + $0xa8] sm:$0xff]
    %v4750 = vld [vmem:[#allocation2 + $0xb0] sm:$0xff]
    %v4751 = vld [vmem:[#allocation2 + $0xb8] sm:$0xff]
    %v4752 = vld [vmem:[#allocation2 + $0xc0] sm:$0xff]
    %v4753 = vld [vmem:[#allocation2 + $0xc8] sm:$0xff]
    %v4754 = vld [vmem:[#allocation2 + $0xd0] sm:$0xff]
    %v4755 = vld [vmem:[#allocation2 + $0xd8] sm:$0xff]
    %v4756 = vld [vmem:[#allocation2 + $0xe0] sm:$0xff]
    %v4757 = vld [vmem:[#allocation2 + $0xe8] sm:$0xff]
    %v4758 = vld [vmem:[#allocation2 + $0xf0] sm:$0xff]
    %v4759 = vld [vmem:[#allocation2 + $0xf8] sm:$0xff]
    %v4760 = vunpack.c.l.bf16 %v4724
    %v4761 = vunpack.c.h.bf16 %v4724
    %v4762 = vunpack.c.l.bf16 %v4725
    %v4763 = vunpack.c.h.bf16 %v4725
    %v4764 = vpack.c.bf16 %v4726, %v4726
    %v4797 = vunpack.c.l.b16 %v4728
    %v4798 = vunpack.c.h.b16 %v4728
    %v4799 = vunpack.c.l.b16 %v4729
    %v4800 = vunpack.c.h.b16 %v4729
    %v4801 = vunpack.c.l.b16 %v4730
    %v4802 = vunpack.c.h.b16 %v4730
    %v4803 = vunpack.c.l.b16 %v4731
    %v4804 = vunpack.c.h.b16 %v4731
    %v4805 = vunpack.c.l.b16 %v4732
    %v4806 = vunpack.c.h.b16 %v4732
    %v4807 = vunpack.c.l.b16 %v4733
    %v4808 = vunpack.c.h.b16 %v4733
    %v4809 = vunpack.c.l.b16 %v4734
    %v4810 = vunpack.c.h.b16 %v4734
    %v4811 = vunpack.c.l.b16 %v4735
    %v4812 = vunpack.c.h.b16 %v4735
    %v4813 = vunpack.c.l.b16 %v4736
    %v4814 = vunpack.c.h.b16 %v4736
    %v4815 = vunpack.c.l.b16 %v4737
    %v4816 = vunpack.c.h.b16 %v4737
    %v4817 = vunpack.c.l.b16 %v4738
    %v4818 = vunpack.c.h.b16 %v4738
    %v4819 = vunpack.c.l.b16 %v4739
    %v4820 = vunpack.c.h.b16 %v4739
    %v4821 = vunpack.c.l.b16 %v4740
    %v4822 = vunpack.c.h.b16 %v4740
    %v4823 = vunpack.c.l.b16 %v4741
    %v4824 = vunpack.c.h.b16 %v4741
    %v4825 = vunpack.c.l.b16 %v4742
    %v4826 = vunpack.c.h.b16 %v4742
    %v4827 = vunpack.c.l.b16 %v4743
    %v4828 = vunpack.c.h.b16 %v4743
    %v4829 = vunpack.c.l.b16 %v4744
    %v4830 = vunpack.c.h.b16 %v4744
    %v4831 = vunpack.c.l.b16 %v4745
    %v4832 = vunpack.c.h.b16 %v4745
    %v4833 = vunpack.c.l.b16 %v4746
    %v4834 = vunpack.c.h.b16 %v4746
    %v4835 = vunpack.c.l.b16 %v4747
    %v4836 = vunpack.c.h.b16 %v4747
    %v4837 = vunpack.c.l.b16 %v4748
    %v4838 = vunpack.c.h.b16 %v4748
    %v4839 = vunpack.c.l.b16 %v4749
    %v4840 = vunpack.c.h.b16 %v4749
    %v4841 = vunpack.c.l.b16 %v4750
    %v4842 = vunpack.c.h.b16 %v4750
    %v4843 = vunpack.c.l.b16 %v4751
    %v4844 = vunpack.c.h.b16 %v4751
    %v4845 = vunpack.c.l.b16 %v4752
    %v4846 = vunpack.c.h.b16 %v4752
    %v4847 = vunpack.c.l.b16 %v4753
    %v4848 = vunpack.c.h.b16 %v4753
    %v4849 = vunpack.c.l.b16 %v4754
    %v4850 = vunpack.c.h.b16 %v4754
    %v4851 = vunpack.c.l.b16 %v4755
    %v4852 = vunpack.c.h.b16 %v4755
    %v4853 = vunpack.c.l.b16 %v4756
    %v4854 = vunpack.c.h.b16 %v4756
    %v4855 = vunpack.c.l.b16 %v4757
    %v4856 = vunpack.c.h.b16 %v4757
    %v4857 = vunpack.c.l.b16 %v4758
    %v4858 = vunpack.c.h.b16 %v4758
    %v4859 = vunpack.c.l.b16 %v4759
    %v4860 = vunpack.c.h.b16 %v4759
    %v4861 = vpack.c.b16 %v4801, %v4797
    %v4862 = vpack.c.b16 %v4802, %v4798
    %v4863 = vpack.c.b16 %v4803, %v4799
    %v4864 = vpack.c.b16 %v4804, %v4800
    %v4865 = vpack.c.b16 %v4809, %v4805
    %v4866 = vpack.c.b16 %v4810, %v4806
    %v4867 = vpack.c.b16 %v4811, %v4807
    %v4868 = vpack.c.b16 %v4812, %v4808
    %v4869 = vpack.c.b16 %v4817, %v4813
    %v4870 = vpack.c.b16 %v4818, %v4814
    %v4871 = vpack.c.b16 %v4819, %v4815
    %v4872 = vpack.c.b16 %v4820, %v4816
    %v4873 = vpack.c.b16 %v4825, %v4821
    %v4874 = vpack.c.b16 %v4826, %v4822
    %v4875 = vpack.c.b16 %v4827, %v4823
    %v4876 = vpack.c.b16 %v4828, %v4824
    %v4877 = vpack.c.b16 %v4833, %v4829
    %v4878 = vpack.c.b16 %v4834, %v4830
    %v4879 = vpack.c.b16 %v4835, %v4831
    %v4880 = vpack.c.b16 %v4836, %v4832
    %v4881 = vpack.c.b16 %v4841, %v4837
    %v4882 = vpack.c.b16 %v4842, %v4838
    %v4883 = vpack.c.b16 %v4843, %v4839
    %v4884 = vpack.c.b16 %v4844, %v4840
    %v4885 = vpack.c.b16 %v4849, %v4845
    %v4886 = vpack.c.b16 %v4850, %v4846
    %v4887 = vpack.c.b16 %v4851, %v4847
    %v4888 = vpack.c.b16 %v4852, %v4848
    %v4889 = vpack.c.b16 %v4857, %v4853
    %v4890 = vpack.c.b16 %v4858, %v4854
    %v4891 = vpack.c.b16 %v4859, %v4855
    %v4892 = vpack.c.b16 %v4860, %v4856
    %4925 = vmatprep.subr.bf16.mxu0 %v4890
    %4926 = vmatpush1.bf16.msra.mxu0 %v4889
    %4927 = vmatprep.subr.bf16.mxu0 %v4886
    %4928 = vmatpush1.bf16.msra.mxu0 %v4885
    %4929 = vmatprep.subr.bf16.mxu0 %v4882
    %4930 = vmatpush1.bf16.msra.mxu0 %v4881
    %4931 = vmatprep.subr.bf16.mxu0 %v4878
    %4932 = vmatpush1.bf16.msra.mxu0 %v4877
    %4933 = vmatprep.subr.bf16.mxu0 %v4874
    %4934 = vmatpush1.bf16.msra.mxu0 %v4873
    %4935 = vmatprep.subr.bf16.mxu0 %v4870
    %4936 = vmatpush1.bf16.msra.mxu0 %v4869
    %4937 = vmatprep.subr.bf16.mxu0 %v4866
    %4938 = vmatpush1.bf16.msra.mxu0 %v4865
    %4939 = vmatprep.subr.bf16.mxu0 %v4862
    %4940 = vmatpush1.bf16.msra.mxu0 %v4861
    %4941 = vmatprep.subr.bf16.mxu0 0
    %4942 = vmatpush2.bf16.msra.mxu0 0
    %4943 = vmatprep.subr.bf16.mxu0 0
    %4944 = vmatpush2.bf16.msra.mxu0 0
    %4945 = vmatprep.subr.bf16.mxu0 0
    %4946 = vmatpush2.bf16.msra.mxu0 0
    %4947 = vmatprep.subr.bf16.mxu0 0
    %4948 = vmatpush2.bf16.msra.mxu0 0
    %4949 = vmatprep.subr.bf16.mxu0 0
    %4950 = vmatpush2.bf16.msra.mxu0 0
    %4951 = vmatprep.subr.bf16.mxu0 0
    %4952 = vmatpush2.bf16.msra.mxu0 0
    %4953 = vmatprep.subr.bf16.mxu0 0
    %4954 = vmatpush2.bf16.msra.mxu0 0
    %4955 = vmatprep.subr.bf16.mxu0 0
    %4956 = vmatpush2.bf16.msra.mxu0 0
    %4957 = vmatprep.mubr.bf16.mxu0 0
    %4958 = vmatmul.mubr.bf16.gmra.mxu0 %v4764
    %v4959 = vpop.f32.mrf.mxu0
    %v4960 = vadd.f32 0.0, %v4959
    %v4961 = vpop.f32.mrf.mxu0
    %v4962 = vadd.f32 0.0, %v4961
    %v4963 = vpop.f32.mrf.mxu0
    %v4964 = vpop.f32.mrf.mxu0
    %4965 = vdwg.mxu0
    %4966 = vmatprep.subr.bf16.mxu0 %v4892
    %4967 = vmatpush1.bf16.msra.mxu0 %v4891
    %4968 = vmatprep.subr.bf16.mxu0 %v4888
    %4969 = vmatpush1.bf16.msra.mxu0 %v4887
    %4970 = vmatprep.subr.bf16.mxu0 %v4884
    %4971 = vmatpush1.bf16.msra.mxu0 %v4883
    %4972 = vmatprep.subr.bf16.mxu0 %v4880
    %4973 = vmatpush1.bf16.msra.mxu0 %v4879
    %4974 = vmatprep.subr.bf16.mxu0 %v4876
    %4975 = vmatpush1.bf16.msra.mxu0 %v4875
    %4976 = vmatprep.subr.bf16.mxu0 %v4872
    %4977 = vmatpush1.bf16.msra.mxu0 %v4871
    %4978 = vmatprep.subr.bf16.mxu0 %v4868
    %4979 = vmatpush1.bf16.msra.mxu0 %v4867
    %4980 = vmatprep.subr.bf16.mxu0 %v4864
    %4981 = vmatpush1.bf16.msra.mxu0 %v4863
    %4982 = vmatprep.subr.bf16.mxu0 0
    %4983 = vmatpush2.bf16.msra.mxu0 0
    %4984 = vmatprep.subr.bf16.mxu0 0
    %4985 = vmatpush2.bf16.msra.mxu0 0
    %4986 = vmatprep.subr.bf16.mxu0 0
    %4987 = vmatpush2.bf16.msra.mxu0 0
    %4988 = vmatprep.subr.bf16.mxu0 0
    %4989 = vmatpush2.bf16.msra.mxu0 0
    %4990 = vmatprep.subr.bf16.mxu0 0
    %4991 = vmatpush2.bf16.msra.mxu0 0
    %4992 = vmatprep.subr.bf16.mxu0 0
    %4993 = vmatpush2.bf16.msra.mxu0 0
    %4994 = vmatprep.subr.bf16.mxu0 0
    %4995 = vmatpush2.bf16.msra.mxu0 0
    %4996 = vmatprep.subr.bf16.mxu0 0
    %4997 = vmatpush2.bf16.msra.mxu0 0
    %4998 = vmatprep.mubr.bf16.mxu0 0
    %4999 = vmatmul.mubr.bf16.gmra.mxu0 %v4764
    %v5000 = vpop.f32.mrf.mxu0
    %v5001 = vadd.f32 0.0, %v5000
    %v5002 = vpop.f32.mrf.mxu0
    %v5003 = vadd.f32 0.0, %v5002
    %v5004 = vpop.f32.mrf.mxu0
    %v5005 = vpop.f32.mrf.mxu0
    %5006 = vdwg.mxu0
    %v5007 = vadd.f32 %v4760, %v4960
    %v5008 = vadd.f32 %v4761, %v4962
    %v5009 = vadd.f32 %v4762, %v5001
    %v5010 = vadd.f32 %v4763, %v5003
    %v5011 = vmul.f32 %v5007, 0.5
    %v5012 = vtanh.pop %v5011
    %v5013 = vmul.f32 %v5012, 0.5
    %v5014 = vadd.f32 %v5013, 0.5
    %v5015 = vmul.f32 %v5008, 0.5
    %v5016 = vtanh.pop %v5015
    %v5017 = vmul.f32 %v5016, 0.5
    %v5018 = vadd.f32 %v5017, 0.5
    %v5019 = vtanh.pop %v5009
    %v5020 = vmul.f32 %v5010, 0.5
    %v5021 = vtanh.pop %v5020
    %v5022 = vmul.f32 %v5021, 0.5
    %v5023 = vadd.f32 %v5022, 0.5
    %v5024 = vmul.f32 %v5018, %v4727
    %v5025 = vmul.f32 %v5014, %v5019
    %v5026 = vadd.f32 %v5024, %v5025
    %v5027 = vtanh.pop %v5026
    %v5028 = vmul.f32 %v5023, %v5027
    %v5029 = vld [vmem:[#allocation7] sm:$0xff]
    %v5030 = vld [vmem:[#allocation7 + $0x8] sm:$0xff]
    %v5031 = vld [vmem:[%s625] sm:$0xff]
    %v5032 = vld [vmem:[%s627] sm:$0xff]
    %v5033 = vld [vmem:[%s629] sm:$0xff]
    %v5034 = vld [vmem:[%s629 + $0x8] sm:$0xff]
    %v5035 = vld [vmem:[%s629 + $0x10] sm:$0xff]
    %v5036 = vld [vmem:[%s629 + $0x18] sm:$0xff]
    %v5037 = vld [vmem:[%s629 + $0x20] sm:$0xff]
    %v5038 = vld [vmem:[%s629 + $0x28] sm:$0xff]
    %v5039 = vld [vmem:[%s629 + $0x30] sm:$0xff]
    %v5040 = vld [vmem:[%s629 + $0x38] sm:$0xff]
    %v5041 = vld [vmem:[%s629 + $0x40] sm:$0xff]
    %v5042 = vld [vmem:[%s629 + $0x48] sm:$0xff]
    %v5043 = vld [vmem:[%s629 + $0x50] sm:$0xff]
    %v5044 = vld [vmem:[%s629 + $0x58] sm:$0xff]
    %v5045 = vld [vmem:[%s629 + $0x60] sm:$0xff]
    %v5046 = vld [vmem:[%s629 + $0x68] sm:$0xff]
    %v5047 = vld [vmem:[%s629 + $0x70] sm:$0xff]
    %v5048 = vld [vmem:[%s629 + $0x78] sm:$0xff]
    %v5049 = vld [vmem:[%s629 + $0x80] sm:$0xff]
    %v5050 = vld [vmem:[%s629 + $0x88] sm:$0xff]
    %v5051 = vld [vmem:[%s629 + $0x90] sm:$0xff]
    %v5052 = vld [vmem:[%s629 + $0x98] sm:$0xff]
    %v5053 = vld [vmem:[%s629 + $0xa0] sm:$0xff]
    %v5054 = vld [vmem:[%s629 + $0xa8] sm:$0xff]
    %v5055 = vld [vmem:[%s629 + $0xb0] sm:$0xff]
    %v5056 = vld [vmem:[%s629 + $0xb8] sm:$0xff]
    %v5057 = vld [vmem:[%s629 + $0xc0] sm:$0xff]
    %v5058 = vld [vmem:[%s629 + $0xc8] sm:$0xff]
    %v5059 = vld [vmem:[%s629 + $0xd0] sm:$0xff]
    %v5060 = vld [vmem:[%s629 + $0xd8] sm:$0xff]
    %v5061 = vld [vmem:[%s629 + $0xe0] sm:$0xff]
    %v5062 = vld [vmem:[%s629 + $0xe8] sm:$0xff]
    %v5063 = vld [vmem:[%s629 + $0xf0] sm:$0xff]
    %v5064 = vld [vmem:[%s629 + $0xf8] sm:$0xff]
    %v5065 = vunpack.c.l.bf16 %v5029
    %v5066 = vunpack.c.h.bf16 %v5029
    %v5067 = vunpack.c.l.bf16 %v5030
    %v5068 = vunpack.c.h.bf16 %v5030
    %v5069 = vpack.c.bf16 %v5031, %v5031
    %v5102 = vunpack.c.l.b16 %v5033
    %v5103 = vunpack.c.h.b16 %v5033
    %v5104 = vunpack.c.l.b16 %v5034
    %v5105 = vunpack.c.h.b16 %v5034
    %v5106 = vunpack.c.l.b16 %v5035
    %v5107 = vunpack.c.h.b16 %v5035
    %v5108 = vunpack.c.l.b16 %v5036
    %v5109 = vunpack.c.h.b16 %v5036
    %v5110 = vunpack.c.l.b16 %v5037
    %v5111 = vunpack.c.h.b16 %v5037
    %v5112 = vunpack.c.l.b16 %v5038
    %v5113 = vunpack.c.h.b16 %v5038
    %v5114 = vunpack.c.l.b16 %v5039
    %v5115 = vunpack.c.h.b16 %v5039
    %v5116 = vunpack.c.l.b16 %v5040
    %v5117 = vunpack.c.h.b16 %v5040
    %v5118 = vunpack.c.l.b16 %v5041
    %v5119 = vunpack.c.h.b16 %v5041
    %v5120 = vunpack.c.l.b16 %v5042
    %v5121 = vunpack.c.h.b16 %v5042
    %v5122 = vunpack.c.l.b16 %v5043
    %v5123 = vunpack.c.h.b16 %v5043
    %v5124 = vunpack.c.l.b16 %v5044
    %v5125 = vunpack.c.h.b16 %v5044
    %v5126 = vunpack.c.l.b16 %v5045
    %v5127 = vunpack.c.h.b16 %v5045
    %v5128 = vunpack.c.l.b16 %v5046
    %v5129 = vunpack.c.h.b16 %v5046
    %v5130 = vunpack.c.l.b16 %v5047
    %v5131 = vunpack.c.h.b16 %v5047
    %v5132 = vunpack.c.l.b16 %v5048
    %v5133 = vunpack.c.h.b16 %v5048
    %v5134 = vunpack.c.l.b16 %v5049
    %v5135 = vunpack.c.h.b16 %v5049
    %v5136 = vunpack.c.l.b16 %v5050
    %v5137 = vunpack.c.h.b16 %v5050
    %v5138 = vunpack.c.l.b16 %v5051
    %v5139 = vunpack.c.h.b16 %v5051
    %v5140 = vunpack.c.l.b16 %v5052
    %v5141 = vunpack.c.h.b16 %v5052
    %v5142 = vunpack.c.l.b16 %v5053
    %v5143 = vunpack.c.h.b16 %v5053
    %v5144 = vunpack.c.l.b16 %v5054
    %v5145 = vunpack.c.h.b16 %v5054
    %v5146 = vunpack.c.l.b16 %v5055
    %v5147 = vunpack.c.h.b16 %v5055
    %v5148 = vunpack.c.l.b16 %v5056
    %v5149 = vunpack.c.h.b16 %v5056
    %v5150 = vunpack.c.l.b16 %v5057
    %v5151 = vunpack.c.h.b16 %v5057
    %v5152 = vunpack.c.l.b16 %v5058
    %v5153 = vunpack.c.h.b16 %v5058
    %v5154 = vunpack.c.l.b16 %v5059
    %v5155 = vunpack.c.h.b16 %v5059
    %v5156 = vunpack.c.l.b16 %v5060
    %v5157 = vunpack.c.h.b16 %v5060
    %v5158 = vunpack.c.l.b16 %v5061
    %v5159 = vunpack.c.h.b16 %v5061
    %v5160 = vunpack.c.l.b16 %v5062
    %v5161 = vunpack.c.h.b16 %v5062
    %v5162 = vunpack.c.l.b16 %v5063
    %v5163 = vunpack.c.h.b16 %v5063
    %v5164 = vunpack.c.l.b16 %v5064
    %v5165 = vunpack.c.h.b16 %v5064
    %v5166 = vpack.c.b16 %v5106, %v5102
    %v5167 = vpack.c.b16 %v5107, %v5103
    %v5168 = vpack.c.b16 %v5108, %v5104
    %v5169 = vpack.c.b16 %v5109, %v5105
    %v5170 = vpack.c.b16 %v5114, %v5110
    %v5171 = vpack.c.b16 %v5115, %v5111
    %v5172 = vpack.c.b16 %v5116, %v5112
    %v5173 = vpack.c.b16 %v5117, %v5113
    %v5174 = vpack.c.b16 %v5122, %v5118
    %v5175 = vpack.c.b16 %v5123, %v5119
    %v5176 = vpack.c.b16 %v5124, %v5120
    %v5177 = vpack.c.b16 %v5125, %v5121
    %v5178 = vpack.c.b16 %v5130, %v5126
    %v5179 = vpack.c.b16 %v5131, %v5127
    %v5180 = vpack.c.b16 %v5132, %v5128
    %v5181 = vpack.c.b16 %v5133, %v5129
    %v5182 = vpack.c.b16 %v5138, %v5134
    %v5183 = vpack.c.b16 %v5139, %v5135
    %v5184 = vpack.c.b16 %v5140, %v5136
    %v5185 = vpack.c.b16 %v5141, %v5137
    %v5186 = vpack.c.b16 %v5146, %v5142
    %v5187 = vpack.c.b16 %v5147, %v5143
    %v5188 = vpack.c.b16 %v5148, %v5144
    %v5189 = vpack.c.b16 %v5149, %v5145
    %v5190 = vpack.c.b16 %v5154, %v5150
    %v5191 = vpack.c.b16 %v5155, %v5151
    %v5192 = vpack.c.b16 %v5156, %v5152
    %v5193 = vpack.c.b16 %v5157, %v5153
    %v5194 = vpack.c.b16 %v5162, %v5158
    %v5195 = vpack.c.b16 %v5163, %v5159
    %v5196 = vpack.c.b16 %v5164, %v5160
    %v5197 = vpack.c.b16 %v5165, %v5161
    %5230 = vmatprep.subr.bf16.mxu0 %v5195
    %5231 = vmatpush1.bf16.msra.mxu0 %v5194
    %5232 = vmatprep.subr.bf16.mxu0 %v5191
    %5233 = vmatpush1.bf16.msra.mxu0 %v5190
    %5234 = vmatprep.subr.bf16.mxu0 %v5187
    %5235 = vmatpush1.bf16.msra.mxu0 %v5186
    %5236 = vmatprep.subr.bf16.mxu0 %v5183
    %5237 = vmatpush1.bf16.msra.mxu0 %v5182
    %5238 = vmatprep.subr.bf16.mxu0 %v5179
    %5239 = vmatpush1.bf16.msra.mxu0 %v5178
    %5240 = vmatprep.subr.bf16.mxu0 %v5175
    %5241 = vmatpush1.bf16.msra.mxu0 %v5174
    %5242 = vmatprep.subr.bf16.mxu0 %v5171
    %5243 = vmatpush1.bf16.msra.mxu0 %v5170
    %5244 = vmatprep.subr.bf16.mxu0 %v5167
    %5245 = vmatpush1.bf16.msra.mxu0 %v5166
    %5246 = vmatprep.subr.bf16.mxu0 0
    %5247 = vmatpush2.bf16.msra.mxu0 0
    %5248 = vmatprep.subr.bf16.mxu0 0
    %5249 = vmatpush2.bf16.msra.mxu0 0
    %5250 = vmatprep.subr.bf16.mxu0 0
    %5251 = vmatpush2.bf16.msra.mxu0 0
    %5252 = vmatprep.subr.bf16.mxu0 0
    %5253 = vmatpush2.bf16.msra.mxu0 0
    %5254 = vmatprep.subr.bf16.mxu0 0
    %5255 = vmatpush2.bf16.msra.mxu0 0
    %5256 = vmatprep.subr.bf16.mxu0 0
    %5257 = vmatpush2.bf16.msra.mxu0 0
    %5258 = vmatprep.subr.bf16.mxu0 0
    %5259 = vmatpush2.bf16.msra.mxu0 0
    %5260 = vmatprep.subr.bf16.mxu0 0
    %5261 = vmatpush2.bf16.msra.mxu0 0
    %5262 = vmatprep.mubr.bf16.mxu0 0
    %5263 = vmatmul.mubr.bf16.gmra.mxu0 %v5069
    %v5264 = vpop.f32.mrf.mxu0
    %v5265 = vadd.f32 0.0, %v5264
    %v5266 = vpop.f32.mrf.mxu0
    %v5267 = vadd.f32 0.0, %v5266
    %v5268 = vpop.f32.mrf.mxu0
    %v5269 = vpop.f32.mrf.mxu0
    %5270 = vdwg.mxu0
    %5271 = vmatprep.subr.bf16.mxu0 %v5197
    %5272 = vmatpush1.bf16.msra.mxu0 %v5196
    %5273 = vmatprep.subr.bf16.mxu0 %v5193
    %5274 = vmatpush1.bf16.msra.mxu0 %v5192
    %5275 = vmatprep.subr.bf16.mxu0 %v5189
    %5276 = vmatpush1.bf16.msra.mxu0 %v5188
    %5277 = vmatprep.subr.bf16.mxu0 %v5185
    %5278 = vmatpush1.bf16.msra.mxu0 %v5184
    %5279 = vmatprep.subr.bf16.mxu0 %v5181
    %5280 = vmatpush1.bf16.msra.mxu0 %v5180
    %5281 = vmatprep.subr.bf16.mxu0 %v5177
    %5282 = vmatpush1.bf16.msra.mxu0 %v5176
    %5283 = vmatprep.subr.bf16.mxu0 %v5173
    %5284 = vmatpush1.bf16.msra.mxu0 %v5172
    %5285 = vmatprep.subr.bf16.mxu0 %v5169
    %5286 = vmatpush1.bf16.msra.mxu0 %v5168
    %5287 = vmatprep.subr.bf16.mxu0 0
    %5288 = vmatpush2.bf16.msra.mxu0 0
    %5289 = vmatprep.subr.bf16.mxu0 0
    %5290 = vmatpush2.bf16.msra.mxu0 0
    %5291 = vmatprep.subr.bf16.mxu0 0
    %5292 = vmatpush2.bf16.msra.mxu0 0
    %5293 = vmatprep.subr.bf16.mxu0 0
    %5294 = vmatpush2.bf16.msra.mxu0 0
    %5295 = vmatprep.subr.bf16.mxu0 0
    %5296 = vmatpush2.bf16.msra.mxu0 0
    %5297 = vmatprep.subr.bf16.mxu0 0
    %5298 = vmatpush2.bf16.msra.mxu0 0
    %5299 = vmatprep.subr.bf16.mxu0 0
    %5300 = vmatpush2.bf16.msra.mxu0 0
    %5301 = vmatprep.subr.bf16.mxu0 0
    %5302 = vmatpush2.bf16.msra.mxu0 0
    %5303 = vmatprep.mubr.bf16.mxu0 0
    %5304 = vmatmul.mubr.bf16.gmra.mxu0 %v5069
    %v5305 = vpop.f32.mrf.mxu0
    %v5306 = vadd.f32 0.0, %v5305
    %v5307 = vpop.f32.mrf.mxu0
    %v5308 = vadd.f32 0.0, %v5307
    %v5309 = vpop.f32.mrf.mxu0
    %v5310 = vpop.f32.mrf.mxu0
    %5311 = vdwg.mxu0
    %v5312 = vadd.f32 %v5065, %v5265
    %v5313 = vadd.f32 %v5066, %v5267
    %v5314 = vadd.f32 %v5067, %v5306
    %v5315 = vadd.f32 %v5068, %v5308
    %v5316 = vmul.f32 %v5312, 0.5
    %v5317 = vtanh.pop %v5316
    %v5318 = vmul.f32 %v5317, 0.5
    %v5319 = vadd.f32 %v5318, 0.5
    %v5320 = vmul.f32 %v5313, 0.5
    %v5321 = vtanh.pop %v5320
    %v5322 = vmul.f32 %v5321, 0.5
    %v5323 = vadd.f32 %v5322, 0.5
    %v5324 = vtanh.pop %v5314
    %v5325 = vmul.f32 %v5315, 0.5
    %v5326 = vtanh.pop %v5325
    %v5327 = vmul.f32 %v5326, 0.5
    %v5328 = vadd.f32 %v5327, 0.5
    %v5329 = vmul.f32 %v5323, %v5032
    %v5330 = vmul.f32 %v5319, %v5324
    %v5331 = vadd.f32 %v5329, %v5330
    %v5332 = vtanh.pop %v5331
    %v5333 = vmul.f32 %v5328, %v5332
    %p5334 = scmp.lt.s32.totalorder %s932, 8
    %s5335 = scalar_select %p5334, 1, 0
    %s5336 = scvt.s32.f32 %s5335
    %v5337 = vstv %s5336
    %v5338 = vmul.f32 %v5333, %v5337
    %v5339 = vmul.f32 %v5331, %v5337
    %5340 = vst [vmem:[#allocation3] sm:$0xff] %v5028
    %5341 = vst [vmem:[#allocation4] sm:$0xff] %v5026
    %5342 = vst [vmem:[%s625] sm:$0xff] %v5338
    %5343 = vst [vmem:[%s627] sm:$0xff] %v5339
    %v5344 = vpack.c.bf16 %v5028, %v5028
    %s5345 = scalar_lea.vmem %s3, 28
    %5346 = vst [vmem:[%s5345] sm:$0xf] %v5344
    %v5347 = vpack.c.bf16 %v5338, %v5338
    %5348 = vst [vmem:[%s131] sm:$0xf] %v5347
    %s5349 = ssub.s32 0, 0
    %s5350 = smul.u32 8, %s5349
    %p5351 = scmp.lt.s32.totalorder %s5350, 7
    %s5352 = scalar_select %p5351, %s5350, 7
    %s5353 = smul.addr %s5352, 4
    %s5354 = scalar_lea.vmem %s4, %s5353
    // Predicated region
    $region94: #{_lambda_.6} parent=1 // pred_check
      _
    $region95: #{_lambda_.6} parent=1 // pred_check_branch
      %5356 = sbr.rel (0) target = $region97
    $region96: #{_lambda_.6} parent=1 // pred_region
      _
    $region97: #{_lambda_.6} parent=1 // pred_fallthru
      _
    // Predicated region
    $region98: #{_lambda_.6} parent=1 // pred_check
      _
    $region99: #{_lambda_.6} parent=1 // pred_check_branch
      %5358 = sbr.rel (0) target = $region101
    $region100: #{_lambda_.6} parent=1 // pred_region
      %s5359 = ssub.s32 0, 0
      %s5360 = smul.u32 8, %s5359
    $region101: #{_lambda_.6} parent=1 // pred_fallthru
      _
    // Predicated region
    $region102: #{_lambda_.6} parent=1 // pred_check
      _
    $region103: #{_lambda_.6} parent=1 // pred_check_branch
      %5362 = sbr.rel (0) target = $region105
    $region104: #{_lambda_.6} parent=1 // pred_region
      _
    $region105: #{_lambda_.6} parent=1 // pred_fallthru
      _
    // Predicated region
    $region106: #{_lambda_.6} parent=1 // pred_check
      _
    $region107: #{_lambda_.6} parent=1 // pred_check_branch
      %5364 = sbr.rel (0) target = $region109
    $region108: #{_lambda_.6} parent=1 // pred_region
      %s5365 = ssub.s32 0, 0
      %s5366 = smul.u32 8, %s5365
      %p5367 = scmp.lt.s32.totalorder %s5366, 7
      %s5368 = scalar_select %p5367, %s5366, 7
      %s5369 = smul.addr %s5368, 4
      %s5370 = scalar_lea.vmem %s4, %s5369
    $region109: #{_lambda_.6} parent=1 // pred_fallthru
      _
  %5371 = vsyncmov [#allocation5]
  %s5372 = vpop.sfrf %5371
  %p5373 = scmp.eq.s32.totalorder %s5372, 0
  %p5374 = pneg %p5373
  %5376 = shalt.err (%p5374)

</llo_original>
